<compile_context>
chip_gen: v7x
topology: tpu7x:2x2x1
jax: 0.10.0
libtpu: 0.0.40
codegen_flags: <defaults>
</compile_context>

<pallas_src>
import jax
import jax.numpy as jnp
from jax import lax
from jax.experimental import pallas as pl
from jax.experimental.pallas import tpu as pltpu

# ----------------------------- configuration ------------------------------
B = 2              # batch
S = 8              # sequence length
F = 128            # feature_size (BERT hidden replaced by this)
H = 256            # LSTM hidden size (fixed to 256 in the module)
NUM_CLASSES = 6
OUT_PAD = 128      # lane-dense padded output width
VOCAB = 128        # substitute vocabulary (128-lane aligned)
BN_EPS = 1e-5

CDT = jnp.bfloat16                       # MXU operand dtype (f32 accumulation)
_VMEM = pl.BlockSpec(memory_space=pltpu.MemorySpace.VMEM)


# --------------------------- fused forward kernel --------------------------
def _fused_forward_kernel(
    ids_ref,                                    # (B*S, 1) int32
    emb_ref,                                    # (VOCAB, F)   bf16
    wqkv_ref, bqkv_ref,                         # (F, 3F) bf16, (1, 3F) f32
    wih_ref,                                    # (F, 8H) bf16  [fwd 4H | bwd 4H]
    whh_ref,                                    # (2H, 4H) bf16 block-diag stack
    bg_ref,                                     # (1, 8H) f32   [fwd | bwd] gate bias
    w1_ref, b1_ref,                             # (2H, 256) bf16, (1,256) f32  (BN folded)
    w2_ref, b2_ref,                             # (256, 128) bf16, (1,128) f32 (BN folded)
    w3_ref, b3_ref,                             # (128, OUT_PAD) bf16, (1, OUT_PAD) f32
    o_ref,                                      # (B, OUT_PAD) f32
    gx_ref,                                     # scratch (S*2B, 4H) f32
):
    f32 = jnp.float32

    # ---- "BERT" embedding lookup (one-hot matmul on the MXU) --------------
    ids = ids_ref[...]                                             # (B*S, 1)
    vocab_iota = lax.broadcasted_iota(jnp.int32, (B * S, VOCAB), 1)
    one_hot = (ids == vocab_iota).astype(CDT)                      # (B*S, VOCAB)
    emb = jnp.dot(one_hot, emb_ref[...],
                  preferred_element_type=f32)                      # (B*S, F)
    emb_bf = emb.astype(CDT)

    # ---- fused QKV projection, whole batch in one push ---------------------
    qkv = jnp.dot(emb_bf, wqkv_ref[...],
                  preferred_element_type=f32) + bqkv_ref[...]      # (B*S, 3F)
    qkv_bf = qkv.astype(CDT)                                       # single pack

    # ---- self-attention per batch element ----------------------------------
    inv_sqrt_f = 1.0 / (float(F) ** 0.5)
    attn_rows = []
    for b in range(B):
        q = qkv_bf[b * S:(b + 1) * S, 0 * F:1 * F]                 # (S, F)
        k = qkv_bf[b * S:(b + 1) * S, 1 * F:2 * F]
        v = qkv_bf[b * S:(b + 1) * S, 2 * F:3 * F]
        # scores = q @ k^T / sqrt(F)  (contract last dims, no transpose)
        scores = lax.dot_general(
            q, k, (((1,), (1,)), ((), ())),
            preferred_element_type=f32) * inv_sqrt_f               # (S, S)
        scores = scores - jnp.max(scores, axis=-1, keepdims=True)
        p = jnp.exp(scores)
        attn = p / jnp.sum(p, axis=-1, keepdims=True)              # exact softmax
        attn_rows.append(
            jnp.dot(attn.astype(CDT), v, preferred_element_type=f32))  # (S, F)

    # Time-major attention output (row index = t*B + b); one-time interleave
    # on the narrow (F=128) tensor, outside the recurrent loop.
    a_tm = jnp.concatenate(
        [attn_rows[b][t:t + 1, :] for t in range(S) for b in range(B)],
        axis=0)                                                    # (S*B, F)
    a_tm_bf = a_tm.astype(CDT)

    # ---- LSTM input projections, both directions fused ---------------------
    gx_all = jnp.dot(a_tm_bf, wih_ref[...],
                     preferred_element_type=f32) + bg_ref[...]     # (S*B, 8H)

    # Stage per-step combined gate inputs in VMEM scratch, interleaved so the
    # recurrence reads ONE contiguous (2B, 4H) slice per step:
    #   rows [t*2B, t*2B+B)      -> forward direction, time t
    #   rows [t*2B+B, (t+1)*2B)  -> backward direction, time S-1-t
    for t in range(S):
        gx_ref[t * 2 * B:t * 2 * B + B, :] = \
            gx_all[t * B:(t + 1) * B, 0:4 * H]
        gx_ref[t * 2 * B + B:(t + 1) * 2 * B, :] = \
            gx_all[(S - 1 - t) * B:(S - t) * B, 4 * H:8 * H]

    # ---- merged bidirectional recurrence: ONE matmul per timestep ----------
    row_idx = lax.broadcasted_iota(jnp.int32, (2 * B, 1), 0)
    mask_f = (row_idx < B).astype(f32)                             # fwd rows
    mask_b = 1.0 - mask_f                                          # bwd rows

    h = jnp.zeros((2 * B, H), f32)     # rows [h_f ; h_b]
    c = jnp.zeros((2 * B, H), f32)
    for t in range(S):
        g_in = gx_ref[t * 2 * B:(t + 1) * 2 * B, :]                # (2B, 4H)
        if t == 0:
            gates = g_in                       # h == 0: skip recurrent matmul
        else:
            # block-diagonal trick: [h_f|0] rows use whh_f, [0|h_b] rows whh_b
            h2 = jnp.concatenate([h * mask_f, h * mask_b],
                                 axis=1).astype(CDT)               # (2B, 2H)
            gates = g_in + jnp.dot(h2, whh_ref[...],
                                   preferred_element_type=f32)     # (2B, 4H)
        # PyTorch gate order: i, f, g, o  (both directions at once)
        i_g = jax.nn.sigmoid(gates[:, 0 * H:1 * H])
        f_g = jax.nn.sigmoid(gates[:, 1 * H:2 * H])
        g_g = jnp.tanh(gates[:, 2 * H:3 * H])
        o_g = jax.nn.sigmoid(gates[:, 3 * H:4 * H])
        c = f_g * c + i_g * g_g
        h = o_g * jnp.tanh(c)

    # final h_n of both directions -> concat([hidden[-2], hidden[-1]])
    hidden = jnp.concatenate([h[0:B, :], h[B:2 * B, :]], axis=1)   # (B, 2H)

    # ---- MLP head (BN folded into weights; dropout = identity) -------------
    x = jnp.dot(hidden.astype(CDT), w1_ref[...],
                preferred_element_type=f32) + b1_ref[...]          # (B, 256)
    x = jnp.maximum(x, 0.0)
    x = jnp.dot(x.astype(CDT), w2_ref[...],
                preferred_element_type=f32) + b2_ref[...]          # (B, 128)
    x = jnp.maximum(x, 0.0)
    logits = jnp.dot(x.astype(CDT), w3_ref[...],
                     preferred_element_type=f32) + b3_ref[...]     # (B, OUT_PAD)
    logits = jnp.maximum(logits, 0.0)        # ReLU before softmax, per spec

    # softmax over the 6 real classes only (padded lanes masked out); exact
    # division so probabilities sum to 1 at f32 precision.
    lane = lax.broadcasted_iota(jnp.int32, (B, OUT_PAD), 1)
    masked = jnp.where(lane < NUM_CLASSES, logits, -1e30)
    masked = masked - jnp.max(masked, axis=1, keepdims=True)
    pexp = jnp.exp(masked)
    o_ref[...] = pexp / jnp.sum(pexp, axis=1, keepdims=True)


# --------------------------- parameter setup --------------------------------
def init_params(key):
    ks = jax.random.split(key, 12)

    def lin(k, out_dim, in_dim, scale=0.05):
        kw, kb = jax.random.split(k)
        return (scale * jax.random.normal(kw, (out_dim, in_dim), jnp.float32),
                scale * jax.random.normal(kb, (out_dim,), jnp.float32))

    p = {}
    p["emb_table"] = 0.1 * jax.random.normal(ks[0], (VOCAB, F), jnp.float32)
    p["wq"], p["bq"] = lin(ks[1], F, F)
    p["wk"], p["bk"] = lin(ks[2], F, F)
    p["wv"], p["bv"] = lin(ks[3], F, F)
    # single-layer bidirectional LSTM, hidden = 256 (torch layout (4H, in))
    p["wih_f"], p["bih_f"] = lin(ks[4], 4 * H, F)
    p["whh_f"], p["bhh_f"] = lin(ks[5], 4 * H, H)
    p["wih_b"], p["bih_b"] = lin(ks[6], 4 * H, F)
    p["whh_b"], p["bhh_b"] = lin(ks[7], 4 * H, H)
    # head: linear(512->256), bn1(256), linear_1(256->128), bn2(128), linear_2(128->6)
    p["w_lin"], p["b_lin"] = lin(ks[8], 256, 2 * H)
    p["w_lin1"], p["b_lin1"] = lin(ks[9], 128, 256)
    p["w_lin2"], p["b_lin2"] = lin(ks[10], NUM_CLASSES, 128)
    # BatchNorm1d buffers (freshly initialized, eval mode)
    p["bn1_gamma"], p["bn1_beta"] = jnp.ones((256,)), jnp.zeros((256,))
    p["bn1_mean"], p["bn1_var"] = jnp.zeros((256,)), jnp.ones((256,))
    p["bn2_gamma"], p["bn2_beta"] = jnp.ones((128,)), jnp.zeros((128,))
    p["bn2_mean"], p["bn2_var"] = jnp.zeros((128,)), jnp.ones((128,))
    return p


def pack_params(p):
    """Host-side repack (done once, outside the hot path):
       * transpose weights to (in, out) layout, cast matmul weights to bf16
       * fuse Q/K/V into one (F, 3F) matrix
       * fuse forward/backward LSTM input weights into one (F, 8H) matrix,
         stack forward/backward recurrent weights block-diagonally as (2H, 4H)
       * fold BatchNorm scale/shift into the adjacent linear layers
       * pad the 6-class head to a lane-dense (128, 128) matrix
    """
    f32 = jnp.float32

    wqkv = jnp.concatenate([p["wq"].T, p["wk"].T, p["wv"].T], axis=1).astype(CDT)
    bqkv = jnp.concatenate([p["bq"], p["bk"], p["bv"]]).reshape(1, 3 * F).astype(f32)

    wih_fb = jnp.concatenate([p["wih_f"].T, p["wih_b"].T], axis=1).astype(CDT)  # (F, 8H)
    whh_bd = jnp.concatenate([p["whh_f"].T, p["whh_b"].T], axis=0).astype(CDT)  # (2H, 4H)
    bg = jnp.concatenate([p["bih_f"] + p["bhh_f"],
                          p["bih_b"] + p["bhh_b"]]).reshape(1, 8 * H).astype(f32)

    # BN fold (eval mode): bn(Wx+b) = x @ (W^T * s) + (b*s + t)
    s1 = p["bn1_gamma"] / jnp.sqrt(p["bn1_var"] + BN_EPS)
    t1 = p["bn1_beta"] - p["bn1_mean"] * s1
    s2 = p["bn2_gamma"] / jnp.sqrt(p["bn2_var"] + BN_EPS)
    t2 = p["bn2_beta"] - p["bn2_mean"] * s2

    w1 = (p["w_lin"].T * s1[None, :]).astype(CDT)                  # (2H, 256)
    b1 = (p["b_lin"] * s1 + t1).reshape(1, -1).astype(f32)
    w2 = (p["w_lin1"].T * s2[None, :]).astype(CDT)                 # (256, 128)
    b2 = (p["b_lin1"] * s2 + t2).reshape(1, -1).astype(f32)

    w3 = jnp.zeros((128, OUT_PAD), f32).at[:, :NUM_CLASSES].set(
        p["w_lin2"].T).astype(CDT)
    b3 = jnp.zeros((1, OUT_PAD), f32).at[0, :NUM_CLASSES].set(p["b_lin2"])

    return (p["emb_table"].astype(CDT),
            wqkv, bqkv,
            wih_fb, whh_bd, bg,
            w1, b1, w2, b2, w3, b3)


# ------------------------------- forward ------------------------------------
@jax.jit
def forward(packed, token_ids, attention_mask):
    ids = token_ids.reshape(B * S, 1).astype(jnp.int32)            # batch-major rows
    out_pad = pl.pallas_call(
        _fused_forward_kernel,
        out_shape=jax.ShapeDtypeStruct((B, OUT_PAD), jnp.float32),
        in_specs=[_VMEM] * (1 + len(packed)),
        out_specs=_VMEM,
        scratch_shapes=[pltpu.VMEM((S * 2 * B, 4 * H), jnp.float32)],
    )(ids, *packed)
    return out_pad[:, :NUM_CLASSES], attention_mask


# -------------------------------- main ---------------------------------------
if __name__ == "__main__":
    key = jax.random.PRNGKey(0)
    kp, kx = jax.random.split(key)
    params = init_params(kp)
    packed = pack_params(params)

    token_ids = jax.random.randint(kx, (B, S), 0, VOCAB, dtype=jnp.int32)
    attention_mask = jnp.ones((B, S), dtype=jnp.int32)

    out, mask_out = forward(packed, token_ids, attention_mask)
    jax.block_until_ready(out)
    jax.block_until_ready(mask_out)

    assert out.shape == (B, NUM_CLASSES)
    assert jnp.all(jnp.isfinite(out))
    # rows of the final softmax must sum to 1
    assert jnp.allclose(jnp.sum(out, axis=1), 1.0, atol=1e-5)
    print("KERNEL_OK")
</pallas_src>

<mosaic_0001>
module attributes {stable_mosaic.version = 11 : i64} {
  func.func @_fused_forward_kernel(%arg0: memref<16x1xi32, #tpu.memory_space<vmem>>, %arg1: memref<128x128xbf16, #tpu.memory_space<vmem>>, %arg2: memref<128x384xbf16, #tpu.memory_space<vmem>>, %arg3: memref<1x384xf32, #tpu.memory_space<vmem>>, %arg4: memref<128x2048xbf16, #tpu.memory_space<vmem>>, %arg5: memref<512x1024xbf16, #tpu.memory_space<vmem>>, %arg6: memref<1x2048xf32, #tpu.memory_space<vmem>>, %arg7: memref<512x256xbf16, #tpu.memory_space<vmem>>, %arg8: memref<1x256xf32, #tpu.memory_space<vmem>>, %arg9: memref<256x128xbf16, #tpu.memory_space<vmem>>, %arg10: memref<1x128xf32, #tpu.memory_space<vmem>>, %arg11: memref<128x128xbf16, #tpu.memory_space<vmem>>, %arg12: memref<1x128xf32, #tpu.memory_space<vmem>>, %arg13: memref<2x128xf32, #tpu.memory_space<vmem>>, %arg14: memref<32x1024xf32, #tpu.memory_space<vmem>>) attributes {dimension_semantics = [], scalar_prefetch = 0 : i64, scratch_operands = 1 : i64, tpu.core_type = #tpu.core_type<tc>} {
    %c0 = arith.constant 0 : index
    %c0_0 = arith.constant 0 : index
    %0 = vector.load %arg0[%c0, %c0_0] : memref<16x1xi32, #tpu.memory_space<vmem>>, vector<16x1xi32>
    %1 = tpu.iota {dimensions = array<i32: 1>} : vector<16x128xi32>
    %2 = vector.broadcast %0 : vector<16x1xi32> to vector<16x128xi32>
    %3 = arith.cmpi eq, %2, %1 : vector<16x128xi32>
    %4 = arith.extui %3 : vector<16x128xi1> to vector<16x128xi32>
    %5 = arith.sitofp %4 : vector<16x128xi32> to vector<16x128xf32>
    %6 = arith.truncf %5 : vector<16x128xf32> to vector<16x128xbf16>
    %c0_1 = arith.constant 0 : index
    %c0_2 = arith.constant 0 : index
    %7 = vector.load %arg1[%c0_1, %c0_2] : memref<128x128xbf16, #tpu.memory_space<vmem>>, vector<128x128xbf16>
    %cst = arith.constant dense<0.000000e+00> : vector<16x128xf32>
    %8 = tpu.matmul %6, %7, %cst {dimension_numbers = #tpu.dot_dimension_numbers<[1], [0], [0], [1], [0, 0, 1, 1], [], []>} : vector<16x128xbf16>, vector<128x128xbf16>, vector<16x128xf32> -> vector<16x128xf32>
    %9 = arith.truncf %8 : vector<16x128xf32> to vector<16x128xbf16>
    %c0_3 = arith.constant 0 : index
    %c0_4 = arith.constant 0 : index
    %10 = vector.load %arg2[%c0_3, %c0_4] : memref<128x384xbf16, #tpu.memory_space<vmem>>, vector<128x384xbf16>
    %cst_5 = arith.constant dense<0.000000e+00> : vector<16x384xf32>
    %11 = tpu.matmul %9, %10, %cst_5 {dimension_numbers = #tpu.dot_dimension_numbers<[1], [0], [0], [1], [0, 0, 1, 1], [], []>} : vector<16x128xbf16>, vector<128x384xbf16>, vector<16x384xf32> -> vector<16x384xf32>
    %c0_6 = arith.constant 0 : index
    %c0_7 = arith.constant 0 : index
    %12 = vector.load %arg3[%c0_6, %c0_7] : memref<1x384xf32, #tpu.memory_space<vmem>>, vector<1x384xf32>
    %13 = vector.broadcast %12 : vector<1x384xf32> to vector<16x384xf32>
    %14 = arith.addf %11, %13 : vector<16x384xf32>
    %15 = arith.truncf %14 : vector<16x384xf32> to vector<16x384xbf16>
    %16 = vector.extract_strided_slice %15 {offsets = [0, 0], sizes = [8, 128], strides = [1, 1]} : vector<16x384xbf16> to vector<8x128xbf16>
    %17 = vector.extract_strided_slice %15 {offsets = [0, 128], sizes = [8, 128], strides = [1, 1]} : vector<16x384xbf16> to vector<8x128xbf16>
    %18 = vector.extract_strided_slice %15 {offsets = [0, 256], sizes = [8, 128], strides = [1, 1]} : vector<16x384xbf16> to vector<8x128xbf16>
    %cst_8 = arith.constant dense<0.000000e+00> : vector<8x8xf32>
    %19 = tpu.matmul %16, %17, %cst_8 {dimension_numbers = #tpu.dot_dimension_numbers<[1], [1], [0], [0], [0, 0, 1, 0], [], []>} : vector<8x128xbf16>, vector<8x128xbf16>, vector<8x8xf32> -> vector<8x8xf32>
    %cst_9 = arith.constant 0.0883883461 : f32
    %20 = vector.broadcast %cst_9 : f32 to vector<8x8xf32>
    %21 = arith.mulf %19, %20 : vector<8x8xf32>
    %cst_10 = arith.constant dense<0xFF800000> : vector<8xf32>
    %22 = vector.multi_reduction <maximumf>, %21, %cst_10 [1] : vector<8x8xf32> to vector<8xf32>
    %23 = vector.shape_cast %22 : vector<8xf32> to vector<8x1xf32>
    %24 = vector.broadcast %23 : vector<8x1xf32> to vector<8x8xf32>
    %25 = arith.subf %21, %24 : vector<8x8xf32>
    %26 = math.exp %25 : vector<8x8xf32>
    %cst_11 = arith.constant dense<0.000000e+00> : vector<8xf32>
    %27 = vector.multi_reduction <add>, %26, %cst_11 [1] : vector<8x8xf32> to vector<8xf32>
    %28 = vector.shape_cast %27 : vector<8xf32> to vector<8x1xf32>
    %29 = vector.broadcast %28 : vector<8x1xf32> to vector<8x8xf32>
    %30 = arith.divf %26, %29 : vector<8x8xf32>
    %31 = arith.truncf %30 : vector<8x8xf32> to vector<8x8xbf16>
    %cst_12 = arith.constant dense<0.000000e+00> : vector<8x128xf32>
    %32 = tpu.matmul %31, %18, %cst_12 {dimension_numbers = #tpu.dot_dimension_numbers<[1], [0], [0], [1], [0, 0, 1, 1], [], []>} : vector<8x8xbf16>, vector<8x128xbf16>, vector<8x128xf32> -> vector<8x128xf32>
    %33 = vector.extract_strided_slice %15 {offsets = [8, 0], sizes = [8, 128], strides = [1, 1]} : vector<16x384xbf16> to vector<8x128xbf16>
    %34 = vector.extract_strided_slice %15 {offsets = [8, 128], sizes = [8, 128], strides = [1, 1]} : vector<16x384xbf16> to vector<8x128xbf16>
    %35 = vector.extract_strided_slice %15 {offsets = [8, 256], sizes = [8, 128], strides = [1, 1]} : vector<16x384xbf16> to vector<8x128xbf16>
    %cst_13 = arith.constant dense<0.000000e+00> : vector<8x8xf32>
    %36 = tpu.matmul %33, %34, %cst_13 {dimension_numbers = #tpu.dot_dimension_numbers<[1], [1], [0], [0], [0, 0, 1, 0], [], []>} : vector<8x128xbf16>, vector<8x128xbf16>, vector<8x8xf32> -> vector<8x8xf32>
    %cst_14 = arith.constant 0.0883883461 : f32
    %37 = vector.broadcast %cst_14 : f32 to vector<8x8xf32>
    %38 = arith.mulf %36, %37 : vector<8x8xf32>
    %cst_15 = arith.constant dense<0xFF800000> : vector<8xf32>
    %39 = vector.multi_reduction <maximumf>, %38, %cst_15 [1] : vector<8x8xf32> to vector<8xf32>
    %40 = vector.shape_cast %39 : vector<8xf32> to vector<8x1xf32>
    %41 = vector.broadcast %40 : vector<8x1xf32> to vector<8x8xf32>
    %42 = arith.subf %38, %41 : vector<8x8xf32>
    %43 = math.exp %42 : vector<8x8xf32>
    %cst_16 = arith.constant dense<0.000000e+00> : vector<8xf32>
    %44 = vector.multi_reduction <add>, %43, %cst_16 [1] : vector<8x8xf32> to vector<8xf32>
    %45 = vector.shape_cast %44 : vector<8xf32> to vector<8x1xf32>
    %46 = vector.broadcast %45 : vector<8x1xf32> to vector<8x8xf32>
    %47 = arith.divf %43, %46 : vector<8x8xf32>
    %48 = arith.truncf %47 : vector<8x8xf32> to vector<8x8xbf16>
    %cst_17 = arith.constant dense<0.000000e+00> : vector<8x128xf32>
    %49 = tpu.matmul %48, %35, %cst_17 {dimension_numbers = #tpu.dot_dimension_numbers<[1], [0], [0], [1], [0, 0, 1, 1], [], []>} : vector<8x8xbf16>, vector<8x128xbf16>, vector<8x128xf32> -> vector<8x128xf32>
    %50 = vector.extract_strided_slice %32 {offsets = [0, 0], sizes = [1, 128], strides = [1, 1]} : vector<8x128xf32> to vector<1x128xf32>
    %51 = vector.extract_strided_slice %49 {offsets = [0, 0], sizes = [1, 128], strides = [1, 1]} : vector<8x128xf32> to vector<1x128xf32>
    %52 = vector.extract_strided_slice %32 {offsets = [1, 0], sizes = [1, 128], strides = [1, 1]} : vector<8x128xf32> to vector<1x128xf32>
    %53 = vector.extract_strided_slice %49 {offsets = [1, 0], sizes = [1, 128], strides = [1, 1]} : vector<8x128xf32> to vector<1x128xf32>
    %54 = vector.extract_strided_slice %32 {offsets = [2, 0], sizes = [1, 128], strides = [1, 1]} : vector<8x128xf32> to vector<1x128xf32>
    %55 = vector.extract_strided_slice %49 {offsets = [2, 0], sizes = [1, 128], strides = [1, 1]} : vector<8x128xf32> to vector<1x128xf32>
    %56 = vector.extract_strided_slice %32 {offsets = [3, 0], sizes = [1, 128], strides = [1, 1]} : vector<8x128xf32> to vector<1x128xf32>
    %57 = vector.extract_strided_slice %49 {offsets = [3, 0], sizes = [1, 128], strides = [1, 1]} : vector<8x128xf32> to vector<1x128xf32>
    %58 = vector.extract_strided_slice %32 {offsets = [4, 0], sizes = [1, 128], strides = [1, 1]} : vector<8x128xf32> to vector<1x128xf32>
    %59 = vector.extract_strided_slice %49 {offsets = [4, 0], sizes = [1, 128], strides = [1, 1]} : vector<8x128xf32> to vector<1x128xf32>
    %60 = vector.extract_strided_slice %32 {offsets = [5, 0], sizes = [1, 128], strides = [1, 1]} : vector<8x128xf32> to vector<1x128xf32>
    %61 = vector.extract_strided_slice %49 {offsets = [5, 0], sizes = [1, 128], strides = [1, 1]} : vector<8x128xf32> to vector<1x128xf32>
    %62 = vector.extract_strided_slice %32 {offsets = [6, 0], sizes = [1, 128], strides = [1, 1]} : vector<8x128xf32> to vector<1x128xf32>
    %63 = vector.extract_strided_slice %49 {offsets = [6, 0], sizes = [1, 128], strides = [1, 1]} : vector<8x128xf32> to vector<1x128xf32>
    %64 = vector.extract_strided_slice %32 {offsets = [7, 0], sizes = [1, 128], strides = [1, 1]} : vector<8x128xf32> to vector<1x128xf32>
    %65 = vector.extract_strided_slice %49 {offsets = [7, 0], sizes = [1, 128], strides = [1, 1]} : vector<8x128xf32> to vector<1x128xf32>
    %66 = tpu.concatenate %50, %51, %52, %53, %54, %55, %56, %57, %58, %59, %60, %61, %62, %63, %64, %65 in 0 : vector<1x128xf32>, vector<1x128xf32>, vector<1x128xf32>, vector<1x128xf32>, vector<1x128xf32>, vector<1x128xf32>, vector<1x128xf32>, vector<1x128xf32>, vector<1x128xf32>, vector<1x128xf32>, vector<1x128xf32>, vector<1x128xf32>, vector<1x128xf32>, vector<1x128xf32>, vector<1x128xf32>, vector<1x128xf32> -> vector<16x128xf32>
    %67 = arith.truncf %66 : vector<16x128xf32> to vector<16x128xbf16>
    %c0_18 = arith.constant 0 : index
    %c0_19 = arith.constant 0 : index
    %68 = vector.load %arg4[%c0_18, %c0_19] : memref<128x2048xbf16, #tpu.memory_space<vmem>>, vector<128x2048xbf16>
    %cst_20 = arith.constant dense<0.000000e+00> : vector<16x2048xf32>
    %69 = tpu.matmul %67, %68, %cst_20 {dimension_numbers = #tpu.dot_dimension_numbers<[1], [0], [0], [1], [0, 0, 1, 1], [], []>} : vector<16x128xbf16>, vector<128x2048xbf16>, vector<16x2048xf32> -> vector<16x2048xf32>
    %c0_21 = arith.constant 0 : index
    %c0_22 = arith.constant 0 : index
    %70 = vector.load %arg6[%c0_21, %c0_22] : memref<1x2048xf32, #tpu.memory_space<vmem>>, vector<1x2048xf32>
    %71 = vector.broadcast %70 : vector<1x2048xf32> to vector<16x2048xf32>
    %72 = arith.addf %69, %71 : vector<16x2048xf32>
    %73 = vector.extract_strided_slice %72 {offsets = [0, 0], sizes = [2, 1024], strides = [1, 1]} : vector<16x2048xf32> to vector<2x1024xf32>
    %c0_23 = arith.constant 0 : index
    %c0_24 = arith.constant 0 : index
    %74 = vector.load %arg14[%c0_23, %c0_24] : memref<32x1024xf32, #tpu.memory_space<vmem>>, vector<2x1024xf32>
    tpu.vector_store %arg14[%c0_23, %c0_24], %73 {strides = array<i32>} : memref<32x1024xf32, #tpu.memory_space<vmem>>, vector<2x1024xf32>,
    %75 = vector.extract_strided_slice %72 {offsets = [14, 1024], sizes = [2, 1024], strides = [1, 1]} : vector<16x2048xf32> to vector<2x1024xf32>
    %c2 = arith.constant 2 : index
    %c0_25 = arith.constant 0 : index
    %76 = vector.load %arg14[%c2, %c0_25] : memref<32x1024xf32, #tpu.memory_space<vmem>>, vector<2x1024xf32>
    tpu.vector_store %arg14[%c2, %c0_25], %75 {strides = array<i32>} : memref<32x1024xf32, #tpu.memory_space<vmem>>, vector<2x1024xf32>,
    %77 = vector.extract_strided_slice %72 {offsets = [2, 0], sizes = [2, 1024], strides = [1, 1]} : vector<16x2048xf32> to vector<2x1024xf32>
    %c4 = arith.constant 4 : index
    %c0_26 = arith.constant 0 : index
    %78 = vector.load %arg14[%c4, %c0_26] : memref<32x1024xf32, #tpu.memory_space<vmem>>, vector<2x1024xf32>
    tpu.vector_store %arg14[%c4, %c0_26], %77 {strides = array<i32>} : memref<32x1024xf32, #tpu.memory_space<vmem>>, vector<2x1024xf32>,
    %79 = vector.extract_strided_slice %72 {offsets = [12, 1024], sizes = [2, 1024], strides = [1, 1]} : vector<16x2048xf32> to vector<2x1024xf32>
    %c6 = arith.constant 6 : index
    %c0_27 = arith.constant 0 : index
    %80 = vector.load %arg14[%c6, %c0_27] : memref<32x1024xf32, #tpu.memory_space<vmem>>, vector<2x1024xf32>
    tpu.vector_store %arg14[%c6, %c0_27], %79 {strides = array<i32>} : memref<32x1024xf32, #tpu.memory_space<vmem>>, vector<2x1024xf32>,
    %81 = vector.extract_strided_slice %72 {offsets = [4, 0], sizes = [2, 1024], strides = [1, 1]} : vector<16x2048xf32> to vector<2x1024xf32>
    %c8 = arith.constant 8 : index
    %c0_28 = arith.constant 0 : index
    %82 = vector.load %arg14[%c8, %c0_28] : memref<32x1024xf32, #tpu.memory_space<vmem>>, vector<2x1024xf32>
    tpu.vector_store %arg14[%c8, %c0_28], %81 {strides = array<i32>} : memref<32x1024xf32, #tpu.memory_space<vmem>>, vector<2x1024xf32>,
    %83 = vector.extract_strided_slice %72 {offsets = [10, 1024], sizes = [2, 1024], strides = [1, 1]} : vector<16x2048xf32> to vector<2x1024xf32>
    %c10 = arith.constant 10 : index
    %c0_29 = arith.constant 0 : index
    %84 = vector.load %arg14[%c10, %c0_29] : memref<32x1024xf32, #tpu.memory_space<vmem>>, vector<2x1024xf32>
    tpu.vector_store %arg14[%c10, %c0_29], %83 {strides = array<i32>} : memref<32x1024xf32, #tpu.memory_space<vmem>>, vector<2x1024xf32>,
    %85 = vector.extract_strided_slice %72 {offsets = [6, 0], sizes = [2, 1024], strides = [1, 1]} : vector<16x2048xf32> to vector<2x1024xf32>
    %c12 = arith.constant 12 : index
    %c0_30 = arith.constant 0 : index
    %86 = vector.load %arg14[%c12, %c0_30] : memref<32x1024xf32, #tpu.memory_space<vmem>>, vector<2x1024xf32>
    tpu.vector_store %arg14[%c12, %c0_30], %85 {strides = array<i32>} : memref<32x1024xf32, #tpu.memory_space<vmem>>, vector<2x1024xf32>,
    %87 = vector.extract_strided_slice %72 {offsets = [8, 1024], sizes = [2, 1024], strides = [1, 1]} : vector<16x2048xf32> to vector<2x1024xf32>
    %c14 = arith.constant 14 : index
    %c0_31 = arith.constant 0 : index
    %88 = vector.load %arg14[%c14, %c0_31] : memref<32x1024xf32, #tpu.memory_space<vmem>>, vector<2x1024xf32>
    tpu.vector_store %arg14[%c14, %c0_31], %87 {strides = array<i32>} : memref<32x1024xf32, #tpu.memory_space<vmem>>, vector<2x1024xf32>,
    %89 = vector.extract_strided_slice %72 {offsets = [8, 0], sizes = [2, 1024], strides = [1, 1]} : vector<16x2048xf32> to vector<2x1024xf32>
    %c16 = arith.constant 16 : index
    %c0_32 = arith.constant 0 : index
    %90 = vector.load %arg14[%c16, %c0_32] : memref<32x1024xf32, #tpu.memory_space<vmem>>, vector<2x1024xf32>
    tpu.vector_store %arg14[%c16, %c0_32], %89 {strides = array<i32>} : memref<32x1024xf32, #tpu.memory_space<vmem>>, vector<2x1024xf32>,
    %91 = vector.extract_strided_slice %72 {offsets = [6, 1024], sizes = [2, 1024], strides = [1, 1]} : vector<16x2048xf32> to vector<2x1024xf32>
    %c18 = arith.constant 18 : index
    %c0_33 = arith.constant 0 : index
    %92 = vector.load %arg14[%c18, %c0_33] : memref<32x1024xf32, #tpu.memory_space<vmem>>, vector<2x1024xf32>
    tpu.vector_store %arg14[%c18, %c0_33], %91 {strides = array<i32>} : memref<32x1024xf32, #tpu.memory_space<vmem>>, vector<2x1024xf32>,
    %93 = vector.extract_strided_slice %72 {offsets = [10, 0], sizes = [2, 1024], strides = [1, 1]} : vector<16x2048xf32> to vector<2x1024xf32>
    %c20 = arith.constant 20 : index
    %c0_34 = arith.constant 0 : index
    %94 = vector.load %arg14[%c20, %c0_34] : memref<32x1024xf32, #tpu.memory_space<vmem>>, vector<2x1024xf32>
    tpu.vector_store %arg14[%c20, %c0_34], %93 {strides = array<i32>} : memref<32x1024xf32, #tpu.memory_space<vmem>>, vector<2x1024xf32>,
    %95 = vector.extract_strided_slice %72 {offsets = [4, 1024], sizes = [2, 1024], strides = [1, 1]} : vector<16x2048xf32> to vector<2x1024xf32>
    %c22 = arith.constant 22 : index
    %c0_35 = arith.constant 0 : index
    %96 = vector.load %arg14[%c22, %c0_35] : memref<32x1024xf32, #tpu.memory_space<vmem>>, vector<2x1024xf32>
    tpu.vector_store %arg14[%c22, %c0_35], %95 {strides = array<i32>} : memref<32x1024xf32, #tpu.memory_space<vmem>>, vector<2x1024xf32>,
    %97 = vector.extract_strided_slice %72 {offsets = [12, 0], sizes = [2, 1024], strides = [1, 1]} : vector<16x2048xf32> to vector<2x1024xf32>
    %c24 = arith.constant 24 : index
    %c0_36 = arith.constant 0 : index
    %98 = vector.load %arg14[%c24, %c0_36] : memref<32x1024xf32, #tpu.memory_space<vmem>>, vector<2x1024xf32>
    tpu.vector_store %arg14[%c24, %c0_36], %97 {strides = array<i32>} : memref<32x1024xf32, #tpu.memory_space<vmem>>, vector<2x1024xf32>,
    %99 = vector.extract_strided_slice %72 {offsets = [2, 1024], sizes = [2, 1024], strides = [1, 1]} : vector<16x2048xf32> to vector<2x1024xf32>
    %c26 = arith.constant 26 : index
    %c0_37 = arith.constant 0 : index
    %100 = vector.load %arg14[%c26, %c0_37] : memref<32x1024xf32, #tpu.memory_space<vmem>>, vector<2x1024xf32>
    tpu.vector_store %arg14[%c26, %c0_37], %99 {strides = array<i32>} : memref<32x1024xf32, #tpu.memory_space<vmem>>, vector<2x1024xf32>,
    %101 = vector.extract_strided_slice %72 {offsets = [14, 0], sizes = [2, 1024], strides = [1, 1]} : vector<16x2048xf32> to vector<2x1024xf32>
    %c28 = arith.constant 28 : index
    %c0_38 = arith.constant 0 : index
    %102 = vector.load %arg14[%c28, %c0_38] : memref<32x1024xf32, #tpu.memory_space<vmem>>, vector<2x1024xf32>
    tpu.vector_store %arg14[%c28, %c0_38], %101 {strides = array<i32>} : memref<32x1024xf32, #tpu.memory_space<vmem>>, vector<2x1024xf32>,
    %103 = vector.extract_strided_slice %72 {offsets = [0, 1024], sizes = [2, 1024], strides = [1, 1]} : vector<16x2048xf32> to vector<2x1024xf32>
    %c30 = arith.constant 30 : index
    %c0_39 = arith.constant 0 : index
    %104 = vector.load %arg14[%c30, %c0_39] : memref<32x1024xf32, #tpu.memory_space<vmem>>, vector<2x1024xf32>
    tpu.vector_store %arg14[%c30, %c0_39], %103 {strides = array<i32>} : memref<32x1024xf32, #tpu.memory_space<vmem>>, vector<2x1024xf32>,
    %105 = tpu.iota {dimensions = array<i32: 0>} : vector<4x1xi32>
    %c2_i32 = arith.constant 2 : i32
    %106 = vector.broadcast %c2_i32 : i32 to vector<4x1xi32>
    %107 = arith.cmpi slt, %105, %106 : vector<4x1xi32>
    %108 = arith.extui %107 : vector<4x1xi1> to vector<4x1xi32>
    %109 = arith.sitofp %108 : vector<4x1xi32> to vector<4x1xf32>
    %cst_40 = arith.constant 1.000000e+00 : f32
    %110 = vector.broadcast %cst_40 : f32 to vector<4x1xf32>
    %111 = arith.subf %110, %109 : vector<4x1xf32>
    %cst_41 = arith.constant 0.000000e+00 : f32
    %112 = vector.broadcast %cst_41 : f32 to vector<4x256xf32>
    %c0_42 = arith.constant 0 : index
    %c0_43 = arith.constant 0 : index
    %113 = vector.load %arg14[%c0_42, %c0_43] : memref<32x1024xf32, #tpu.memory_space<vmem>>, vector<4x1024xf32>
    %114 = vector.extract_strided_slice %113 {offsets = [0, 0], sizes = [4, 256], strides = [1, 1]} : vector<4x1024xf32> to vector<4x256xf32>
    %115 = arith.negf %114 : vector<4x256xf32>
    %116 = math.exp %115 : vector<4x256xf32>
    %cst_44 = arith.constant 1.000000e+00 : f32
    %117 = vector.broadcast %cst_44 : f32 to vector<4x256xf32>
    %118 = arith.addf %117, %116 : vector<4x256xf32>
    %119 = arith.divf %117, %118 : vector<4x256xf32>
    %120 = vector.extract_strided_slice %113 {offsets = [0, 256], sizes = [4, 256], strides = [1, 1]} : vector<4x1024xf32> to vector<4x256xf32>
    %121 = arith.negf %120 : vector<4x256xf32>
    %122 = math.exp %121 : vector<4x256xf32>
    %cst_45 = arith.constant 1.000000e+00 : f32
    %123 = vector.broadcast %cst_45 : f32 to vector<4x256xf32>
    %124 = arith.addf %123, %122 : vector<4x256xf32>
    %125 = arith.divf %123, %124 : vector<4x256xf32>
    %126 = vector.extract_strided_slice %113 {offsets = [0, 512], sizes = [4, 256], strides = [1, 1]} : vector<4x1024xf32> to vector<4x256xf32>
    %127 = math.tanh %126 : vector<4x256xf32>
    %128 = vector.extract_strided_slice %113 {offsets = [0, 768], sizes = [4, 256], strides = [1, 1]} : vector<4x1024xf32> to vector<4x256xf32>
    %129 = arith.negf %128 : vector<4x256xf32>
    %130 = math.exp %129 : vector<4x256xf32>
    %cst_46 = arith.constant 1.000000e+00 : f32
    %131 = vector.broadcast %cst_46 : f32 to vector<4x256xf32>
    %132 = arith.addf %131, %130 : vector<4x256xf32>
    %133 = arith.divf %131, %132 : vector<4x256xf32>
    %134 = arith.mulf %125, %112 : vector<4x256xf32>
    %135 = arith.mulf %119, %127 : vector<4x256xf32>
    %136 = arith.addf %134, %135 : vector<4x256xf32>
    %137 = math.tanh %136 : vector<4x256xf32>
    %138 = arith.mulf %133, %137 : vector<4x256xf32>
    %c4_47 = arith.constant 4 : index
    %c0_48 = arith.constant 0 : index
    %139 = vector.load %arg14[%c4_47, %c0_48] : memref<32x1024xf32, #tpu.memory_space<vmem>>, vector<4x1024xf32>
    %140 = vector.broadcast %109 : vector<4x1xf32> to vector<4x256xf32>
    %141 = arith.mulf %138, %140 : vector<4x256xf32>
    %142 = vector.broadcast %111 : vector<4x1xf32> to vector<4x256xf32>
    %143 = arith.mulf %138, %142 : vector<4x256xf32>
    %144 = tpu.concatenate %141, %143 in 1 : vector<4x256xf32>, vector<4x256xf32> -> vector<4x512xf32>
    %145 = arith.truncf %144 : vector<4x512xf32> to vector<4x512xbf16>
    %c0_49 = arith.constant 0 : index
    %c0_50 = arith.constant 0 : index
    %146 = vector.load %arg5[%c0_49, %c0_50] : memref<512x1024xbf16, #tpu.memory_space<vmem>>, vector<512x1024xbf16>
    %cst_51 = arith.constant dense<0.000000e+00> : vector<4x1024xf32>
    %147 = tpu.matmul %145, %146, %cst_51 {dimension_numbers = #tpu.dot_dimension_numbers<[1], [0], [0], [1], [0, 0, 1, 1], [], []>} : vector<4x512xbf16>, vector<512x1024xbf16>, vector<4x1024xf32> -> vector<4x1024xf32>
    %148 = arith.addf %139, %147 : vector<4x1024xf32>
    %149 = vector.extract_strided_slice %148 {offsets = [0, 0], sizes = [4, 256], strides = [1, 1]} : vector<4x1024xf32> to vector<4x256xf32>
    %150 = arith.negf %149 : vector<4x256xf32>
    %151 = math.exp %150 : vector<4x256xf32>
    %cst_52 = arith.constant 1.000000e+00 : f32
    %152 = vector.broadcast %cst_52 : f32 to vector<4x256xf32>
    %153 = arith.addf %152, %151 : vector<4x256xf32>
    %154 = arith.divf %152, %153 : vector<4x256xf32>
    %155 = vector.extract_strided_slice %148 {offsets = [0, 256], sizes = [4, 256], strides = [1, 1]} : vector<4x1024xf32> to vector<4x256xf32>
    %156 = arith.negf %155 : vector<4x256xf32>
    %157 = math.exp %156 : vector<4x256xf32>
    %cst_53 = arith.constant 1.000000e+00 : f32
    %158 = vector.broadcast %cst_53 : f32 to vector<4x256xf32>
    %159 = arith.addf %158, %157 : vector<4x256xf32>
    %160 = arith.divf %158, %159 : vector<4x256xf32>
    %161 = vector.extract_strided_slice %148 {offsets = [0, 512], sizes = [4, 256], strides = [1, 1]} : vector<4x1024xf32> to vector<4x256xf32>
    %162 = math.tanh %161 : vector<4x256xf32>
    %163 = vector.extract_strided_slice %148 {offsets = [0, 768], sizes = [4, 256], strides = [1, 1]} : vector<4x1024xf32> to vector<4x256xf32>
    %164 = arith.negf %163 : vector<4x256xf32>
    %165 = math.exp %164 : vector<4x256xf32>
    %cst_54 = arith.constant 1.000000e+00 : f32
    %166 = vector.broadcast %cst_54 : f32 to vector<4x256xf32>
    %167 = arith.addf %166, %165 : vector<4x256xf32>
    %168 = arith.divf %166, %167 : vector<4x256xf32>
    %169 = arith.mulf %160, %136 : vector<4x256xf32>
    %170 = arith.mulf %154, %162 : vector<4x256xf32>
    %171 = arith.addf %169, %170 : vector<4x256xf32>
    %172 = math.tanh %171 : vector<4x256xf32>
    %173 = arith.mulf %168, %172 : vector<4x256xf32>
    %c8_55 = arith.constant 8 : index
    %c0_56 = arith.constant 0 : index
    %174 = vector.load %arg14[%c8_55, %c0_56] : memref<32x1024xf32, #tpu.memory_space<vmem>>, vector<4x1024xf32>
    %175 = vector.broadcast %109 : vector<4x1xf32> to vector<4x256xf32>
    %176 = arith.mulf %173, %175 : vector<4x256xf32>
    %177 = vector.broadcast %111 : vector<4x1xf32> to vector<4x256xf32>
    %178 = arith.mulf %173, %177 : vector<4x256xf32>
    %179 = tpu.concatenate %176, %178 in 1 : vector<4x256xf32>, vector<4x256xf32> -> vector<4x512xf32>
    %180 = arith.truncf %179 : vector<4x512xf32> to vector<4x512xbf16>
    %c0_57 = arith.constant 0 : index
    %c0_58 = arith.constant 0 : index
    %181 = vector.load %arg5[%c0_57, %c0_58] : memref<512x1024xbf16, #tpu.memory_space<vmem>>, vector<512x1024xbf16>
    %cst_59 = arith.constant dense<0.000000e+00> : vector<4x1024xf32>
    %182 = tpu.matmul %180, %181, %cst_59 {dimension_numbers = #tpu.dot_dimension_numbers<[1], [0], [0], [1], [0, 0, 1, 1], [], []>} : vector<4x512xbf16>, vector<512x1024xbf16>, vector<4x1024xf32> -> vector<4x1024xf32>
    %183 = arith.addf %174, %182 : vector<4x1024xf32>
    %184 = vector.extract_strided_slice %183 {offsets = [0, 0], sizes = [4, 256], strides = [1, 1]} : vector<4x1024xf32> to vector<4x256xf32>
    %185 = arith.negf %184 : vector<4x256xf32>
    %186 = math.exp %185 : vector<4x256xf32>
    %cst_60 = arith.constant 1.000000e+00 : f32
    %187 = vector.broadcast %cst_60 : f32 to vector<4x256xf32>
    %188 = arith.addf %187, %186 : vector<4x256xf32>
    %189 = arith.divf %187, %188 : vector<4x256xf32>
    %190 = vector.extract_strided_slice %183 {offsets = [0, 256], sizes = [4, 256], strides = [1, 1]} : vector<4x1024xf32> to vector<4x256xf32>
    %191 = arith.negf %190 : vector<4x256xf32>
    %192 = math.exp %191 : vector<4x256xf32>
    %cst_61 = arith.constant 1.000000e+00 : f32
    %193 = vector.broadcast %cst_61 : f32 to vector<4x256xf32>
    %194 = arith.addf %193, %192 : vector<4x256xf32>
    %195 = arith.divf %193, %194 : vector<4x256xf32>
    %196 = vector.extract_strided_slice %183 {offsets = [0, 512], sizes = [4, 256], strides = [1, 1]} : vector<4x1024xf32> to vector<4x256xf32>
    %197 = math.tanh %196 : vector<4x256xf32>
    %198 = vector.extract_strided_slice %183 {offsets = [0, 768], sizes = [4, 256], strides = [1, 1]} : vector<4x1024xf32> to vector<4x256xf32>
    %199 = arith.negf %198 : vector<4x256xf32>
    %200 = math.exp %199 : vector<4x256xf32>
    %cst_62 = arith.constant 1.000000e+00 : f32
    %201 = vector.broadcast %cst_62 : f32 to vector<4x256xf32>
    %202 = arith.addf %201, %200 : vector<4x256xf32>
    %203 = arith.divf %201, %202 : vector<4x256xf32>
    %204 = arith.mulf %195, %171 : vector<4x256xf32>
    %205 = arith.mulf %189, %197 : vector<4x256xf32>
    %206 = arith.addf %204, %205 : vector<4x256xf32>
    %207 = math.tanh %206 : vector<4x256xf32>
    %208 = arith.mulf %203, %207 : vector<4x256xf32>
    %c12_63 = arith.constant 12 : index
    %c0_64 = arith.constant 0 : index
    %209 = vector.load %arg14[%c12_63, %c0_64] : memref<32x1024xf32, #tpu.memory_space<vmem>>, vector<4x1024xf32>
    %210 = vector.broadcast %109 : vector<4x1xf32> to vector<4x256xf32>
    %211 = arith.mulf %208, %210 : vector<4x256xf32>
    %212 = vector.broadcast %111 : vector<4x1xf32> to vector<4x256xf32>
    %213 = arith.mulf %208, %212 : vector<4x256xf32>
    %214 = tpu.concatenate %211, %213 in 1 : vector<4x256xf32>, vector<4x256xf32> -> vector<4x512xf32>
    %215 = arith.truncf %214 : vector<4x512xf32> to vector<4x512xbf16>
    %c0_65 = arith.constant 0 : index
    %c0_66 = arith.constant 0 : index
    %216 = vector.load %arg5[%c0_65, %c0_66] : memref<512x1024xbf16, #tpu.memory_space<vmem>>, vector<512x1024xbf16>
    %cst_67 = arith.constant dense<0.000000e+00> : vector<4x1024xf32>
    %217 = tpu.matmul %215, %216, %cst_67 {dimension_numbers = #tpu.dot_dimension_numbers<[1], [0], [0], [1], [0, 0, 1, 1], [], []>} : vector<4x512xbf16>, vector<512x1024xbf16>, vector<4x1024xf32> -> vector<4x1024xf32>
    %218 = arith.addf %209, %217 : vector<4x1024xf32>
    %219 = vector.extract_strided_slice %218 {offsets = [0, 0], sizes = [4, 256], strides = [1, 1]} : vector<4x1024xf32> to vector<4x256xf32>
    %220 = arith.negf %219 : vector<4x256xf32>
    %221 = math.exp %220 : vector<4x256xf32>
    %cst_68 = arith.constant 1.000000e+00 : f32
    %222 = vector.broadcast %cst_68 : f32 to vector<4x256xf32>
    %223 = arith.addf %222, %221 : vector<4x256xf32>
    %224 = arith.divf %222, %223 : vector<4x256xf32>
    %225 = vector.extract_strided_slice %218 {offsets = [0, 256], sizes = [4, 256], strides = [1, 1]} : vector<4x1024xf32> to vector<4x256xf32>
    %226 = arith.negf %225 : vector<4x256xf32>
    %227 = math.exp %226 : vector<4x256xf32>
    %cst_69 = arith.constant 1.000000e+00 : f32
    %228 = vector.broadcast %cst_69 : f32 to vector<4x256xf32>
    %229 = arith.addf %228, %227 : vector<4x256xf32>
    %230 = arith.divf %228, %229 : vector<4x256xf32>
    %231 = vector.extract_strided_slice %218 {offsets = [0, 512], sizes = [4, 256], strides = [1, 1]} : vector<4x1024xf32> to vector<4x256xf32>
    %232 = math.tanh %231 : vector<4x256xf32>
    %233 = vector.extract_strided_slice %218 {offsets = [0, 768], sizes = [4, 256], strides = [1, 1]} : vector<4x1024xf32> to vector<4x256xf32>
    %234 = arith.negf %233 : vector<4x256xf32>
    %235 = math.exp %234 : vector<4x256xf32>
    %cst_70 = arith.constant 1.000000e+00 : f32
    %236 = vector.broadcast %cst_70 : f32 to vector<4x256xf32>
    %237 = arith.addf %236, %235 : vector<4x256xf32>
    %238 = arith.divf %236, %237 : vector<4x256xf32>
    %239 = arith.mulf %230, %206 : vector<4x256xf32>
    %240 = arith.mulf %224, %232 : vector<4x256xf32>
    %241 = arith.addf %239, %240 : vector<4x256xf32>
    %242 = math.tanh %241 : vector<4x256xf32>
    %243 = arith.mulf %238, %242 : vector<4x256xf32>
    %c16_71 = arith.constant 16 : index
    %c0_72 = arith.constant 0 : index
    %244 = vector.load %arg14[%c16_71, %c0_72] : memref<32x1024xf32, #tpu.memory_space<vmem>>, vector<4x1024xf32>
    %245 = vector.broadcast %109 : vector<4x1xf32> to vector<4x256xf32>
    %246 = arith.mulf %243, %245 : vector<4x256xf32>
    %247 = vector.broadcast %111 : vector<4x1xf32> to vector<4x256xf32>
    %248 = arith.mulf %243, %247 : vector<4x256xf32>
    %249 = tpu.concatenate %246, %248 in 1 : vector<4x256xf32>, vector<4x256xf32> -> vector<4x512xf32>
    %250 = arith.truncf %249 : vector<4x512xf32> to vector<4x512xbf16>
    %c0_73 = arith.constant 0 : index
    %c0_74 = arith.constant 0 : index
    %251 = vector.load %arg5[%c0_73, %c0_74] : memref<512x1024xbf16, #tpu.memory_space<vmem>>, vector<512x1024xbf16>
    %cst_75 = arith.constant dense<0.000000e+00> : vector<4x1024xf32>
    %252 = tpu.matmul %250, %251, %cst_75 {dimension_numbers = #tpu.dot_dimension_numbers<[1], [0], [0], [1], [0, 0, 1, 1], [], []>} : vector<4x512xbf16>, vector<512x1024xbf16>, vector<4x1024xf32> -> vector<4x1024xf32>
    %253 = arith.addf %244, %252 : vector<4x1024xf32>
    %254 = vector.extract_strided_slice %253 {offsets = [0, 0], sizes = [4, 256], strides = [1, 1]} : vector<4x1024xf32> to vector<4x256xf32>
    %255 = arith.negf %254 : vector<4x256xf32>
    %256 = math.exp %255 : vector<4x256xf32>
    %cst_76 = arith.constant 1.000000e+00 : f32
    %257 = vector.broadcast %cst_76 : f32 to vector<4x256xf32>
    %258 = arith.addf %257, %256 : vector<4x256xf32>
    %259 = arith.divf %257, %258 : vector<4x256xf32>
    %260 = vector.extract_strided_slice %253 {offsets = [0, 256], sizes = [4, 256], strides = [1, 1]} : vector<4x1024xf32> to vector<4x256xf32>
    %261 = arith.negf %260 : vector<4x256xf32>
    %262 = math.exp %261 : vector<4x256xf32>
    %cst_77 = arith.constant 1.000000e+00 : f32
    %263 = vector.broadcast %cst_77 : f32 to vector<4x256xf32>
    %264 = arith.addf %263, %262 : vector<4x256xf32>
    %265 = arith.divf %263, %264 : vector<4x256xf32>
    %266 = vector.extract_strided_slice %253 {offsets = [0, 512], sizes = [4, 256], strides = [1, 1]} : vector<4x1024xf32> to vector<4x256xf32>
    %267 = math.tanh %266 : vector<4x256xf32>
    %268 = vector.extract_strided_slice %253 {offsets = [0, 768], sizes = [4, 256], strides = [1, 1]} : vector<4x1024xf32> to vector<4x256xf32>
    %269 = arith.negf %268 : vector<4x256xf32>
    %270 = math.exp %269 : vector<4x256xf32>
    %cst_78 = arith.constant 1.000000e+00 : f32
    %271 = vector.broadcast %cst_78 : f32 to vector<4x256xf32>
    %272 = arith.addf %271, %270 : vector<4x256xf32>
    %273 = arith.divf %271, %272 : vector<4x256xf32>
    %274 = arith.mulf %265, %241 : vector<4x256xf32>
    %275 = arith.mulf %259, %267 : vector<4x256xf32>
    %276 = arith.addf %274, %275 : vector<4x256xf32>
    %277 = math.tanh %276 : vector<4x256xf32>
    %278 = arith.mulf %273, %277 : vector<4x256xf32>
    %c20_79 = arith.constant 20 : index
    %c0_80 = arith.constant 0 : index
    %279 = vector.load %arg14[%c20_79, %c0_80] : memref<32x1024xf32, #tpu.memory_space<vmem>>, vector<4x1024xf32>
    %280 = vector.broadcast %109 : vector<4x1xf32> to vector<4x256xf32>
    %281 = arith.mulf %278, %280 : vector<4x256xf32>
    %282 = vector.broadcast %111 : vector<4x1xf32> to vector<4x256xf32>
    %283 = arith.mulf %278, %282 : vector<4x256xf32>
    %284 = tpu.concatenate %281, %283 in 1 : vector<4x256xf32>, vector<4x256xf32> -> vector<4x512xf32>
    %285 = arith.truncf %284 : vector<4x512xf32> to vector<4x512xbf16>
    %c0_81 = arith.constant 0 : index
    %c0_82 = arith.constant 0 : index
    %286 = vector.load %arg5[%c0_81, %c0_82] : memref<512x1024xbf16, #tpu.memory_space<vmem>>, vector<512x1024xbf16>
    %cst_83 = arith.constant dense<0.000000e+00> : vector<4x1024xf32>
    %287 = tpu.matmul %285, %286, %cst_83 {dimension_numbers = #tpu.dot_dimension_numbers<[1], [0], [0], [1], [0, 0, 1, 1], [], []>} : vector<4x512xbf16>, vector<512x1024xbf16>, vector<4x1024xf32> -> vector<4x1024xf32>
    %288 = arith.addf %279, %287 : vector<4x1024xf32>
    %289 = vector.extract_strided_slice %288 {offsets = [0, 0], sizes = [4, 256], strides = [1, 1]} : vector<4x1024xf32> to vector<4x256xf32>
    %290 = arith.negf %289 : vector<4x256xf32>
    %291 = math.exp %290 : vector<4x256xf32>
    %cst_84 = arith.constant 1.000000e+00 : f32
    %292 = vector.broadcast %cst_84 : f32 to vector<4x256xf32>
    %293 = arith.addf %292, %291 : vector<4x256xf32>
    %294 = arith.divf %292, %293 : vector<4x256xf32>
    %295 = vector.extract_strided_slice %288 {offsets = [0, 256], sizes = [4, 256], strides = [1, 1]} : vector<4x1024xf32> to vector<4x256xf32>
    %296 = arith.negf %295 : vector<4x256xf32>
    %297 = math.exp %296 : vector<4x256xf32>
    %cst_85 = arith.constant 1.000000e+00 : f32
    %298 = vector.broadcast %cst_85 : f32 to vector<4x256xf32>
    %299 = arith.addf %298, %297 : vector<4x256xf32>
    %300 = arith.divf %298, %299 : vector<4x256xf32>
    %301 = vector.extract_strided_slice %288 {offsets = [0, 512], sizes = [4, 256], strides = [1, 1]} : vector<4x1024xf32> to vector<4x256xf32>
    %302 = math.tanh %301 : vector<4x256xf32>
    %303 = vector.extract_strided_slice %288 {offsets = [0, 768], sizes = [4, 256], strides = [1, 1]} : vector<4x1024xf32> to vector<4x256xf32>
    %304 = arith.negf %303 : vector<4x256xf32>
    %305 = math.exp %304 : vector<4x256xf32>
    %cst_86 = arith.constant 1.000000e+00 : f32
    %306 = vector.broadcast %cst_86 : f32 to vector<4x256xf32>
    %307 = arith.addf %306, %305 : vector<4x256xf32>
    %308 = arith.divf %306, %307 : vector<4x256xf32>
    %309 = arith.mulf %300, %276 : vector<4x256xf32>
    %310 = arith.mulf %294, %302 : vector<4x256xf32>
    %311 = arith.addf %309, %310 : vector<4x256xf32>
    %312 = math.tanh %311 : vector<4x256xf32>
    %313 = arith.mulf %308, %312 : vector<4x256xf32>
    %c24_87 = arith.constant 24 : index
    %c0_88 = arith.constant 0 : index
    %314 = vector.load %arg14[%c24_87, %c0_88] : memref<32x1024xf32, #tpu.memory_space<vmem>>, vector<4x1024xf32>
    %315 = vector.broadcast %109 : vector<4x1xf32> to vector<4x256xf32>
    %316 = arith.mulf %313, %315 : vector<4x256xf32>
    %317 = vector.broadcast %111 : vector<4x1xf32> to vector<4x256xf32>
    %318 = arith.mulf %313, %317 : vector<4x256xf32>
    %319 = tpu.concatenate %316, %318 in 1 : vector<4x256xf32>, vector<4x256xf32> -> vector<4x512xf32>
    %320 = arith.truncf %319 : vector<4x512xf32> to vector<4x512xbf16>
    %c0_89 = arith.constant 0 : index
    %c0_90 = arith.constant 0 : index
    %321 = vector.load %arg5[%c0_89, %c0_90] : memref<512x1024xbf16, #tpu.memory_space<vmem>>, vector<512x1024xbf16>
    %cst_91 = arith.constant dense<0.000000e+00> : vector<4x1024xf32>
    %322 = tpu.matmul %320, %321, %cst_91 {dimension_numbers = #tpu.dot_dimension_numbers<[1], [0], [0], [1], [0, 0, 1, 1], [], []>} : vector<4x512xbf16>, vector<512x1024xbf16>, vector<4x1024xf32> -> vector<4x1024xf32>
    %323 = arith.addf %314, %322 : vector<4x1024xf32>
    %324 = vector.extract_strided_slice %323 {offsets = [0, 0], sizes = [4, 256], strides = [1, 1]} : vector<4x1024xf32> to vector<4x256xf32>
    %325 = arith.negf %324 : vector<4x256xf32>
    %326 = math.exp %325 : vector<4x256xf32>
    %cst_92 = arith.constant 1.000000e+00 : f32
    %327 = vector.broadcast %cst_92 : f32 to vector<4x256xf32>
    %328 = arith.addf %327, %326 : vector<4x256xf32>
    %329 = arith.divf %327, %328 : vector<4x256xf32>
    %330 = vector.extract_strided_slice %323 {offsets = [0, 256], sizes = [4, 256], strides = [1, 1]} : vector<4x1024xf32> to vector<4x256xf32>
    %331 = arith.negf %330 : vector<4x256xf32>
    %332 = math.exp %331 : vector<4x256xf32>
    %cst_93 = arith.constant 1.000000e+00 : f32
    %333 = vector.broadcast %cst_93 : f32 to vector<4x256xf32>
    %334 = arith.addf %333, %332 : vector<4x256xf32>
    %335 = arith.divf %333, %334 : vector<4x256xf32>
    %336 = vector.extract_strided_slice %323 {offsets = [0, 512], sizes = [4, 256], strides = [1, 1]} : vector<4x1024xf32> to vector<4x256xf32>
    %337 = math.tanh %336 : vector<4x256xf32>
    %338 = vector.extract_strided_slice %323 {offsets = [0, 768], sizes = [4, 256], strides = [1, 1]} : vector<4x1024xf32> to vector<4x256xf32>
    %339 = arith.negf %338 : vector<4x256xf32>
    %340 = math.exp %339 : vector<4x256xf32>
    %cst_94 = arith.constant 1.000000e+00 : f32
    %341 = vector.broadcast %cst_94 : f32 to vector<4x256xf32>
    %342 = arith.addf %341, %340 : vector<4x256xf32>
    %343 = arith.divf %341, %342 : vector<4x256xf32>
    %344 = arith.mulf %335, %311 : vector<4x256xf32>
    %345 = arith.mulf %329, %337 : vector<4x256xf32>
    %346 = arith.addf %344, %345 : vector<4x256xf32>
    %347 = math.tanh %346 : vector<4x256xf32>
    %348 = arith.mulf %343, %347 : vector<4x256xf32>
    %c28_95 = arith.constant 28 : index
    %c0_96 = arith.constant 0 : index
    %349 = vector.load %arg14[%c28_95, %c0_96] : memref<32x1024xf32, #tpu.memory_space<vmem>>, vector<4x1024xf32>
    %350 = vector.broadcast %109 : vector<4x1xf32> to vector<4x256xf32>
    %351 = arith.mulf %348, %350 : vector<4x256xf32>
    %352 = vector.broadcast %111 : vector<4x1xf32> to vector<4x256xf32>
    %353 = arith.mulf %348, %352 : vector<4x256xf32>
    %354 = tpu.concatenate %351, %353 in 1 : vector<4x256xf32>, vector<4x256xf32> -> vector<4x512xf32>
    %355 = arith.truncf %354 : vector<4x512xf32> to vector<4x512xbf16>
    %c0_97 = arith.constant 0 : index
    %c0_98 = arith.constant 0 : index
    %356 = vector.load %arg5[%c0_97, %c0_98] : memref<512x1024xbf16, #tpu.memory_space<vmem>>, vector<512x1024xbf16>
    %cst_99 = arith.constant dense<0.000000e+00> : vector<4x1024xf32>
    %357 = tpu.matmul %355, %356, %cst_99 {dimension_numbers = #tpu.dot_dimension_numbers<[1], [0], [0], [1], [0, 0, 1, 1], [], []>} : vector<4x512xbf16>, vector<512x1024xbf16>, vector<4x1024xf32> -> vector<4x1024xf32>
    %358 = arith.addf %349, %357 : vector<4x1024xf32>
    %359 = vector.extract_strided_slice %358 {offsets = [0, 0], sizes = [4, 256], strides = [1, 1]} : vector<4x1024xf32> to vector<4x256xf32>
    %360 = arith.negf %359 : vector<4x256xf32>
    %361 = math.exp %360 : vector<4x256xf32>
    %cst_100 = arith.constant 1.000000e+00 : f32
    %362 = vector.broadcast %cst_100 : f32 to vector<4x256xf32>
    %363 = arith.addf %362, %361 : vector<4x256xf32>
    %364 = arith.divf %362, %363 : vector<4x256xf32>
    %365 = vector.extract_strided_slice %358 {offsets = [0, 256], sizes = [4, 256], strides = [1, 1]} : vector<4x1024xf32> to vector<4x256xf32>
    %366 = arith.negf %365 : vector<4x256xf32>
    %367 = math.exp %366 : vector<4x256xf32>
    %cst_101 = arith.constant 1.000000e+00 : f32
    %368 = vector.broadcast %cst_101 : f32 to vector<4x256xf32>
    %369 = arith.addf %368, %367 : vector<4x256xf32>
    %370 = arith.divf %368, %369 : vector<4x256xf32>
    %371 = vector.extract_strided_slice %358 {offsets = [0, 512], sizes = [4, 256], strides = [1, 1]} : vector<4x1024xf32> to vector<4x256xf32>
    %372 = math.tanh %371 : vector<4x256xf32>
    %373 = vector.extract_strided_slice %358 {offsets = [0, 768], sizes = [4, 256], strides = [1, 1]} : vector<4x1024xf32> to vector<4x256xf32>
    %374 = arith.negf %373 : vector<4x256xf32>
    %375 = math.exp %374 : vector<4x256xf32>
    %cst_102 = arith.constant 1.000000e+00 : f32
    %376 = vector.broadcast %cst_102 : f32 to vector<4x256xf32>
    %377 = arith.addf %376, %375 : vector<4x256xf32>
    %378 = arith.divf %376, %377 : vector<4x256xf32>
    %379 = arith.mulf %370, %346 : vector<4x256xf32>
    %380 = arith.mulf %364, %372 : vector<4x256xf32>
    %381 = arith.addf %379, %380 : vector<4x256xf32>
    %382 = math.tanh %381 : vector<4x256xf32>
    %383 = arith.mulf %378, %382 : vector<4x256xf32>
    %384 = vector.extract_strided_slice %383 {offsets = [0, 0], sizes = [2, 256], strides = [1, 1]} : vector<4x256xf32> to vector<2x256xf32>
    %385 = vector.extract_strided_slice %383 {offsets = [2, 0], sizes = [2, 256], strides = [1, 1]} : vector<4x256xf32> to vector<2x256xf32>
    %386 = tpu.concatenate %384, %385 in 1 : vector<2x256xf32>, vector<2x256xf32> -> vector<2x512xf32>
    %387 = arith.truncf %386 : vector<2x512xf32> to vector<2x512xbf16>
    %c0_103 = arith.constant 0 : index
    %c0_104 = arith.constant 0 : index
    %388 = vector.load %arg7[%c0_103, %c0_104] : memref<512x256xbf16, #tpu.memory_space<vmem>>, vector<512x256xbf16>
    %cst_105 = arith.constant dense<0.000000e+00> : vector<2x256xf32>
    %389 = tpu.matmul %387, %388, %cst_105 {dimension_numbers = #tpu.dot_dimension_numbers<[1], [0], [0], [1], [0, 0, 1, 1], [], []>} : vector<2x512xbf16>, vector<512x256xbf16>, vector<2x256xf32> -> vector<2x256xf32>
    %c0_106 = arith.constant 0 : index
    %c0_107 = arith.constant 0 : index
    %390 = vector.load %arg8[%c0_106, %c0_107] : memref<1x256xf32, #tpu.memory_space<vmem>>, vector<1x256xf32>
    %391 = vector.broadcast %390 : vector<1x256xf32> to vector<2x256xf32>
    %392 = arith.addf %389, %391 : vector<2x256xf32>
    %cst_108 = arith.constant 0.000000e+00 : f32
    %393 = vector.broadcast %cst_108 : f32 to vector<2x256xf32>
    %394 = arith.maximumf %392, %393 : vector<2x256xf32>
    %395 = arith.truncf %394 : vector<2x256xf32> to vector<2x256xbf16>
    %c0_109 = arith.constant 0 : index
    %c0_110 = arith.constant 0 : index
    %396 = vector.load %arg9[%c0_109, %c0_110] : memref<256x128xbf16, #tpu.memory_space<vmem>>, vector<256x128xbf16>
    %cst_111 = arith.constant dense<0.000000e+00> : vector<2x128xf32>
    %397 = tpu.matmul %395, %396, %cst_111 {dimension_numbers = #tpu.dot_dimension_numbers<[1], [0], [0], [1], [0, 0, 1, 1], [], []>} : vector<2x256xbf16>, vector<256x128xbf16>, vector<2x128xf32> -> vector<2x128xf32>
    %c0_112 = arith.constant 0 : index
    %c0_113 = arith.constant 0 : index
    %398 = vector.load %arg10[%c0_112, %c0_113] : memref<1x128xf32, #tpu.memory_space<vmem>>, vector<1x128xf32>
    %399 = vector.broadcast %398 : vector<1x128xf32> to vector<2x128xf32>
    %400 = arith.addf %397, %399 : vector<2x128xf32>
    %cst_114 = arith.constant 0.000000e+00 : f32
    %401 = vector.broadcast %cst_114 : f32 to vector<2x128xf32>
    %402 = arith.maximumf %400, %401 : vector<2x128xf32>
    %403 = arith.truncf %402 : vector<2x128xf32> to vector<2x128xbf16>
    %c0_115 = arith.constant 0 : index
    %c0_116 = arith.constant 0 : index
    %404 = vector.load %arg11[%c0_115, %c0_116] : memref<128x128xbf16, #tpu.memory_space<vmem>>, vector<128x128xbf16>
    %cst_117 = arith.constant dense<0.000000e+00> : vector<2x128xf32>
    %405 = tpu.matmul %403, %404, %cst_117 {dimension_numbers = #tpu.dot_dimension_numbers<[1], [0], [0], [1], [0, 0, 1, 1], [], []>} : vector<2x128xbf16>, vector<128x128xbf16>, vector<2x128xf32> -> vector<2x128xf32>
    %c0_118 = arith.constant 0 : index
    %c0_119 = arith.constant 0 : index
    %406 = vector.load %arg12[%c0_118, %c0_119] : memref<1x128xf32, #tpu.memory_space<vmem>>, vector<1x128xf32>
    %407 = vector.broadcast %406 : vector<1x128xf32> to vector<2x128xf32>
    %408 = arith.addf %405, %407 : vector<2x128xf32>
    %cst_120 = arith.constant 0.000000e+00 : f32
    %409 = vector.broadcast %cst_120 : f32 to vector<2x128xf32>
    %410 = arith.maximumf %408, %409 : vector<2x128xf32>
    %411 = tpu.iota {dimensions = array<i32: 1>} : vector<2x128xi32>
    %c6_i32 = arith.constant 6 : i32
    %412 = vector.broadcast %c6_i32 : i32 to vector<2x128xi32>
    %413 = arith.cmpi slt, %411, %412 : vector<2x128xi32>
    %cst_121 = arith.constant -1.000000e+30 : f32
    %414 = vector.broadcast %cst_121 : f32 to vector<2x128xf32>
    %415 = arith.select %413, %410, %414 : vector<2x128xi1>, vector<2x128xf32>
    %cst_122 = arith.constant dense<0xFF800000> : vector<2xf32>
    %416 = vector.multi_reduction <maximumf>, %415, %cst_122 [1] : vector<2x128xf32> to vector<2xf32>
    %417 = vector.shape_cast %416 : vector<2xf32> to vector<2x1xf32>
    %418 = vector.broadcast %417 : vector<2x1xf32> to vector<2x128xf32>
    %419 = arith.subf %415, %418 : vector<2x128xf32>
    %420 = math.exp %419 : vector<2x128xf32>
    %cst_123 = arith.constant dense<0.000000e+00> : vector<2xf32>
    %421 = vector.multi_reduction <add>, %420, %cst_123 [1] : vector<2x128xf32> to vector<2xf32>
    %422 = vector.shape_cast %421 : vector<2xf32> to vector<2x1xf32>
    %423 = vector.broadcast %422 : vector<2x1xf32> to vector<2x128xf32>
    %424 = arith.divf %420, %423 : vector<2x128xf32>
    %c0_124 = arith.constant 0 : index
    %c0_125 = arith.constant 0 : index
    %425 = vector.load %arg13[%c0_124, %c0_125] : memref<2x128xf32, #tpu.memory_space<vmem>>, vector<2x128xf32>
    tpu.vector_store %arg13[%c0_124, %c0_125], %424 {strides = array<i32>} : memref<2x128xf32, #tpu.memory_space<vmem>>, vector<2x128xf32>,
    return
  }
}

</mosaic_0001>

<llo_original>
// kernel: forward.1
$region0: #{forward.1}
  #allocation0 [shape = 'u32[]', space=smem, size = 0x4, offset = 0x4, fixed_abs, tag = 'smem constant byte address 0x4 - core index']
  #allocation1 [shape = 'u32[144,128]{1,0:T(1,128)}', space=vmem, size = 0x12000, scoped, tag = 'internal scratch']
  #allocation2 [shape = 'f32[32,1024]{1,0:T(8,128)}', space=vmem, size = 0x20000, scoped, tag = 'scratch operand']
  %s0 = inlined_call_operand.vmem [shape: s32[16,1], index: 0, kind: input, shape index: {}]
  %s1 = inlined_call_operand.hbm [shape: bf16[128,128], index: 1, kind: input, shape index: {}]
  %s2 = inlined_call_operand.hbm [shape: bf16[128,384], index: 2, kind: input, shape index: {}]
  %s3 = inlined_call_operand.vmem [shape: f32[1,384], index: 3, kind: input, shape index: {}]
  %s4 = inlined_call_operand.hbm [shape: bf16[128,2048], index: 4, kind: input, shape index: {}]
  %s5 = inlined_call_operand.hbm [shape: bf16[512,1024], index: 5, kind: input, shape index: {}]
  %s6 = inlined_call_operand.vmem [shape: f32[1,2048], index: 6, kind: input, shape index: {}]
  %s7 = inlined_call_operand.hbm [shape: bf16[512,256], index: 7, kind: input, shape index: {}]
  %s8 = inlined_call_operand.vmem [shape: f32[1,256], index: 8, kind: input, shape index: {}]
  %s9 = inlined_call_operand.hbm [shape: bf16[256,128], index: 9, kind: input, shape index: {}]
  %s10 = inlined_call_operand.vmem [shape: f32[1,128], index: 10, kind: input, shape index: {}]
  %s11 = inlined_call_operand.hbm [shape: bf16[128,128], index: 11, kind: input, shape index: {}]
  %s12 = inlined_call_operand.vmem [shape: f32[1,128], index: 12, kind: input, shape index: {}]
  %s13 = inlined_call_operand.hbm [shape: f32[2,128], index: 13, kind: output, shape index: {}]
  %s14 = sld [smem:[#allocation0]]
  $region90: #{forward.1} parent=0
    _
  %s16 = ssub.s32 1, %s14
  %s17 = scalar_select 0, %s16, %s14
  $region1: #{forward.1} parent=0
    #allocation3 [shape = 'u8[32768]{0}', space=vmem, size = 0x8000, scoped, tag = 'input window, operand 1, single buffered']
    #allocation4 [shape = 's32[1]{0}', space=sflag, size = 0x4, scoped, tag = 'scoped memory for forward.1']
    #allocation5 [shape = 's32[1]{0}', space=sflag, size = 0x4, scoped, tag = 'scoped memory for forward.1']
    #allocation6 [shape = 'u8[98304]{0}', space=vmem, size = 0x18000, scoped, tag = 'input window, operand 2, single buffered']
    #allocation7 [shape = 's32[1]{0}', space=sflag, size = 0x4, scoped, tag = 'scoped memory for forward.1']
    #allocation8 [shape = 'u8[524288]{0}', space=vmem, size = 0x80000, scoped, tag = 'input window, operand 4, single buffered']
    #allocation9 [shape = 'u8[1048576]{0}', space=vmem, size = 0x100000, scoped, tag = 'input window, operand 5, single buffered']
    #allocation10 [shape = 's32[1]{0}', space=sflag, size = 0x4, scoped, tag = 'scoped memory for forward.1']
    #allocation11 [shape = 'u8[262144]{0}', space=vmem, size = 0x40000, scoped, tag = 'input window, operand 7, single buffered']
    #allocation12 [shape = 'u8[65536]{0}', space=vmem, size = 0x10000, scoped, tag = 'input window, operand 9, single buffered']
    #allocation13 [shape = 's32[1]{0}', space=sflag, size = 0x4, scoped, tag = 'scoped memory for forward.1']
    #allocation14 [shape = 'u8[32768]{0}', space=vmem, size = 0x8000, scoped, tag = 'input window, operand 11, single buffered']
    #allocation15 [shape = 'u8[1024]{0}', space=vmem, size = 0x400, scoped, tag = 'output window, operand 0, single buffered']
    %18 = vsyncpa [#allocation4], 0
    %19 = vsyncpa [#allocation7], 0
    %20 = vsyncpa [#allocation10], 0
    %21 = vsyncpa [#allocation13], 0
    %22 = vsyncpa [#allocation5], 0
    // Predicated region
    $region2: #{forward.1} parent=1 // pred_check
      _
    $region3: #{forward.1} parent=1 // pred_check_branch
      %24 = sbr.rel (0) target = $region5
    $region4: #{forward.1} parent=1 // pred_region
      _
    $region5: #{forward.1} parent=1 // pred_fallthru
      _
    // Predicated region
    $region6: #{forward.1} parent=1 // pred_check
      _
    $region7: #{forward.1} parent=1 // pred_check_branch
      %26 = sbr.rel (0) target = $region9
    $region8: #{forward.1} parent=1 // pred_region
      %s28 = ssub.s32 1024, 1024
      %29 = vsyncadd [#allocation4], %s28
      %s30 = sshll.u32 [#allocation3], 4
      %s31 = int_to_ptr.vmem [resolvable:$true] %s30
      %36 = dma.hbm_to_vmem [thread:$0]  %s1, 1024, %s31, [#allocation4], 64, 64, 4
    $region9: #{forward.1} parent=1 // pred_fallthru
      _
    // Predicated region
    $region10: #{forward.1} parent=1 // pred_check
      _
    $region11: #{forward.1} parent=1 // pred_check_branch
      %38 = sbr.rel (0) target = $region13
    $region12: #{forward.1} parent=1 // pred_region
      %s40 = ssub.s32 3072, 3072
      %41 = vsyncadd [#allocation7], %s40
      %s42 = sshll.u32 [#allocation6], 4
      %s43 = int_to_ptr.vmem [resolvable:$true] %s42
      %48 = dma.hbm_to_vmem [thread:$0]  %s2, 3072, %s43, [#allocation7], 192, 192, 12
    $region13: #{forward.1} parent=1 // pred_fallthru
      _
    // Predicated region
    $region14: #{forward.1} parent=1 // pred_check
      _
    $region15: #{forward.1} parent=1 // pred_check_branch
      %50 = sbr.rel (0) target = $region17
    $region16: #{forward.1} parent=1 // pred_region
      _
    $region17: #{forward.1} parent=1 // pred_fallthru
      _
    // Predicated region
    $region18: #{forward.1} parent=1 // pred_check
      _
    $region19: #{forward.1} parent=1 // pred_check_branch
      %52 = sbr.rel (0) target = $region21
    $region20: #{forward.1} parent=1 // pred_region
      %s54 = ssub.s32 16384, 16384
      %55 = vsyncadd [#allocation7], %s54
      %s56 = sshll.u32 [#allocation8], 4
      %s57 = int_to_ptr.vmem [resolvable:$true] %s56
      %62 = dma.hbm_to_vmem [thread:$0]  %s4, 16384, %s57, [#allocation7], 1024, 1024, 64
    $region21: #{forward.1} parent=1 // pred_fallthru
      _
    // Predicated region
    $region22: #{forward.1} parent=1 // pred_check
      _
    $region23: #{forward.1} parent=1 // pred_check_branch
      %64 = sbr.rel (0) target = $region25
    $region24: #{forward.1} parent=1 // pred_region
      %s66 = ssub.s32 32768, 32768
      %67 = vsyncadd [#allocation10], %s66
      %s68 = sshll.u32 [#allocation9], 4
      %s69 = int_to_ptr.vmem [resolvable:$true] %s68
      %74 = dma.hbm_to_vmem [thread:$0]  %s5, 32768, %s69, [#allocation10], 512, 512, 32
    $region25: #{forward.1} parent=1 // pred_fallthru
      _
    // Predicated region
    $region26: #{forward.1} parent=1 // pred_check
      _
    $region27: #{forward.1} parent=1 // pred_check_branch
      %76 = sbr.rel (0) target = $region29
    $region28: #{forward.1} parent=1 // pred_region
      _
    $region29: #{forward.1} parent=1 // pred_fallthru
      _
    // Predicated region
    $region30: #{forward.1} parent=1 // pred_check
      _
    $region31: #{forward.1} parent=1 // pred_check_branch
      %78 = sbr.rel (0) target = $region33
    $region32: #{forward.1} parent=1 // pred_region
      %s80 = ssub.s32 8192, 8192
      %81 = vsyncadd [#allocation10], %s80
      %s82 = sshll.u32 [#allocation11], 4
      %s83 = int_to_ptr.vmem [resolvable:$true] %s82
      %88 = dma.hbm_to_vmem [thread:$0]  %s7, 8192, %s83, [#allocation10], 128, 128, 8
    $region33: #{forward.1} parent=1 // pred_fallthru
      _
    // Predicated region
    $region34: #{forward.1} parent=1 // pred_check
      _
    $region35: #{forward.1} parent=1 // pred_check_branch
      %90 = sbr.rel (0) target = $region37
    $region36: #{forward.1} parent=1 // pred_region
      _
    $region37: #{forward.1} parent=1 // pred_fallthru
      _
    // Predicated region
    $region38: #{forward.1} parent=1 // pred_check
      _
    $region39: #{forward.1} parent=1 // pred_check_branch
      %92 = sbr.rel (0) target = $region41
    $region40: #{forward.1} parent=1 // pred_region
      %s94 = ssub.s32 2048, 2048
      %95 = vsyncadd [#allocation13], %s94
      %s96 = sshll.u32 [#allocation12], 4
      %s97 = int_to_ptr.vmem [resolvable:$true] %s96
      %102 = dma.hbm_to_vmem [thread:$0]  %s9, 2048, %s97, [#allocation13], 64, 64, 4
    $region41: #{forward.1} parent=1 // pred_fallthru
      _
    // Predicated region
    $region42: #{forward.1} parent=1 // pred_check
      _
    $region43: #{forward.1} parent=1 // pred_check_branch
      %104 = sbr.rel (0) target = $region45
    $region44: #{forward.1} parent=1 // pred_region
      _
    $region45: #{forward.1} parent=1 // pred_fallthru
      _
    // Predicated region
    $region46: #{forward.1} parent=1 // pred_check
      _
    $region47: #{forward.1} parent=1 // pred_check_branch
      %106 = sbr.rel (0) target = $region49
    $region48: #{forward.1} parent=1 // pred_region
      %s108 = ssub.s32 1024, 1024
      %109 = vsyncadd [#allocation13], %s108
      %s110 = sshll.u32 [#allocation14], 4
      %s111 = int_to_ptr.vmem [resolvable:$true] %s110
      %116 = dma.hbm_to_vmem [thread:$0]  %s11, 1024, %s111, [#allocation13], 64, 64, 4
    $region49: #{forward.1} parent=1 // pred_fallthru
      _
    // Predicated region
    $region50: #{forward.1} parent=1 // pred_check
      _
    $region51: #{forward.1} parent=1 // pred_check_branch
      %118 = sbr.rel (0) target = $region53
    $region52: #{forward.1} parent=1 // pred_region
      _
    $region53: #{forward.1} parent=1 // pred_fallthru
      _
    // Predicated region
    $region54: #{forward.1} parent=1 // pred_check
      _
    $region55: #{forward.1} parent=1 // pred_check_branch
      %120 = sbr.rel (0) target = $region57
    $region56: #{forward.1} parent=1 // pred_region
      %121 = dma.done [#allocation4], 1024
    $region57: #{forward.1} parent=1 // pred_fallthru
      _
    // Predicated region
    $region58: #{forward.1} parent=1 // pred_check
      _
    $region59: #{forward.1} parent=1 // pred_check_branch
      %123 = sbr.rel (0) target = $region61
    $region60: #{forward.1} parent=1 // pred_region
      %124 = dma.done [#allocation7], 3072
    $region61: #{forward.1} parent=1 // pred_fallthru
      _
    // Predicated region
    $region62: #{forward.1} parent=1 // pred_check
      _
    $region63: #{forward.1} parent=1 // pred_check_branch
      %126 = sbr.rel (0) target = $region65
    $region64: #{forward.1} parent=1 // pred_region
      %127 = dma.done [#allocation7], 16384
    $region65: #{forward.1} parent=1 // pred_fallthru
      _
    // Predicated region
    $region66: #{forward.1} parent=1 // pred_check
      _
    $region67: #{forward.1} parent=1 // pred_check_branch
      %129 = sbr.rel (0) target = $region69
    $region68: #{forward.1} parent=1 // pred_region
      %130 = dma.done [#allocation10], 32768
    $region69: #{forward.1} parent=1 // pred_fallthru
      _
    // Predicated region
    $region70: #{forward.1} parent=1 // pred_check
      _
    $region71: #{forward.1} parent=1 // pred_check_branch
      %132 = sbr.rel (0) target = $region73
    $region72: #{forward.1} parent=1 // pred_region
      %133 = dma.done [#allocation10], 8192
    $region73: #{forward.1} parent=1 // pred_fallthru
      _
    // Predicated region
    $region74: #{forward.1} parent=1 // pred_check
      _
    $region75: #{forward.1} parent=1 // pred_check_branch
      %135 = sbr.rel (0) target = $region77
    $region76: #{forward.1} parent=1 // pred_region
      %136 = dma.done [#allocation13], 2048
    $region77: #{forward.1} parent=1 // pred_fallthru
      _
    // Predicated region
    $region78: #{forward.1} parent=1 // pred_check
      _
    $region79: #{forward.1} parent=1 // pred_check_branch
      %138 = sbr.rel (0) target = $region81
    $region80: #{forward.1} parent=1 // pred_region
      %139 = dma.done [#allocation13], 1024
    $region81: #{forward.1} parent=1 // pred_fallthru
      _
    %v141 = vld [vmem:[%s0] sm:$0xff]
    %v142 = vld [vmem:[%s0 + $0x8] sm:$0xff]
    %v143 = vlaneseq
    %v144 = vand.u32 %v143, 127
    %145 = vset.pattern.permute.xlu0 0
    %146 = vperm.xlu0 %145, %v141
    %v147 = vpop.permute.xlu0 %146
    %148 = vset.pattern.permute.xlu0 0
    %149 = vperm.xlu0 %148, %v142
    %v150 = vpop.permute.xlu0 %149
    %vm151 = vcmp.eq.s32.totalorder %v147, %v144
    %vm152 = vcmp.eq.s32.totalorder %v150, %v144
    %v153 = vsel %vm151, 1, 0
    %v154 = vsel %vm152, 1, 0
    %v155 = vcvt.s32.f32 %v153
    %v156 = vcvt.s32.f32 %v154
    %v157 = vpack.c.bf16 %v156, %v155
    %v158 = vld [vmem:[#allocation3] sm:$0xf]
    %v159 = vld [vmem:[#allocation3 + $0x4] sm:$0xf]
    %v160 = vld [vmem:[#allocation3 + $0x8] sm:$0xf]
    %v161 = vld [vmem:[#allocation3 + $0xc] sm:$0xf]
    %v162 = vld [vmem:[#allocation3 + $0x10] sm:$0xf]
    %v163 = vld [vmem:[#allocation3 + $0x14] sm:$0xf]
    %v164 = vld [vmem:[#allocation3 + $0x18] sm:$0xf]
    %v165 = vld [vmem:[#allocation3 + $0x1c] sm:$0xf]
    %v166 = vld [vmem:[#allocation3 + $0x20] sm:$0xf]
    %v167 = vld [vmem:[#allocation3 + $0x24] sm:$0xf]
    %v168 = vld [vmem:[#allocation3 + $0x28] sm:$0xf]
    %v169 = vld [vmem:[#allocation3 + $0x2c] sm:$0xf]
    %v170 = vld [vmem:[#allocation3 + $0x30] sm:$0xf]
    %v171 = vld [vmem:[#allocation3 + $0x34] sm:$0xf]
    %v172 = vld [vmem:[#allocation3 + $0x38] sm:$0xf]
    %v173 = vld [vmem:[#allocation3 + $0x3c] sm:$0xf]
    %v190 = vunpack.c.l.b16 %v158
    %v191 = vunpack.c.l.b16 %v159
    %v192 = vunpack.c.l.b16 %v160
    %v193 = vunpack.c.l.b16 %v161
    %v194 = vunpack.c.l.b16 %v162
    %v195 = vunpack.c.l.b16 %v163
    %v196 = vunpack.c.l.b16 %v164
    %v197 = vunpack.c.l.b16 %v165
    %v198 = vunpack.c.l.b16 %v166
    %v199 = vunpack.c.l.b16 %v167
    %v200 = vunpack.c.l.b16 %v168
    %v201 = vunpack.c.l.b16 %v169
    %v202 = vunpack.c.l.b16 %v170
    %v203 = vunpack.c.l.b16 %v171
    %v204 = vunpack.c.l.b16 %v172
    %v205 = vunpack.c.l.b16 %v173
    %v206 = vpack.c.b16 %v191, %v190
    %v207 = vpack.c.b16 %v193, %v192
    %v208 = vpack.c.b16 %v195, %v194
    %v209 = vpack.c.b16 %v197, %v196
    %v210 = vpack.c.b16 %v199, %v198
    %v211 = vpack.c.b16 %v201, %v200
    %v212 = vpack.c.b16 %v203, %v202
    %v213 = vpack.c.b16 %v205, %v204
    %222 = vmatprep.subr.bf16.mxu0 0
    %223 = vmatpush1.bf16.msra.mxu0 %v206
    %224 = vmatprep.subr.bf16.mxu0 0
    %225 = vmatpush1.bf16.msra.mxu0 %v207
    %226 = vmatprep.subr.bf16.mxu0 0
    %227 = vmatpush1.bf16.msra.mxu0 %v208
    %228 = vmatprep.subr.bf16.mxu0 0
    %229 = vmatpush1.bf16.msra.mxu0 %v209
    %230 = vmatprep.subr.bf16.mxu0 0
    %231 = vmatpush1.bf16.msra.mxu0 %v210
    %232 = vmatprep.subr.bf16.mxu0 0
    %233 = vmatpush1.bf16.msra.mxu0 %v211
    %234 = vmatprep.subr.bf16.mxu0 0
    %235 = vmatpush1.bf16.msra.mxu0 %v212
    %236 = vmatprep.subr.bf16.mxu0 0
    %237 = vmatpush1.bf16.msra.mxu0 %v213
    %238 = vmatprep.subr.bf16.mxu0 0
    %239 = vmatpush1.bf16.msra.mxu0 0
    %240 = vmatprep.subr.bf16.mxu0 0
    %241 = vmatpush1.bf16.msra.mxu0 0
    %242 = vmatprep.subr.bf16.mxu0 0
    %243 = vmatpush1.bf16.msra.mxu0 0
    %244 = vmatprep.subr.bf16.mxu0 0
    %245 = vmatpush1.bf16.msra.mxu0 0
    %246 = vmatprep.subr.bf16.mxu0 0
    %247 = vmatpush1.bf16.msra.mxu0 0
    %248 = vmatprep.subr.bf16.mxu0 0
    %249 = vmatpush1.bf16.msra.mxu0 0
    %250 = vmatprep.subr.bf16.mxu0 0
    %251 = vmatpush1.bf16.msra.mxu0 0
    %252 = vmatprep.subr.bf16.mxu0 0
    %253 = vmatpush1.bf16.msra.mxu0 0
    %254 = vmatprep.mubr.bf16.mxu0 0
    %255 = vmatmul.mubr.bf16.gmra.mrb[0].mxu0 %v157
    %v256 = vpop.f32.mrb[0].mxu0
    %v257 = vadd.f32 0.0, %v256
    %v258 = vpop.f32.mrb[0].mxu0
    %v259 = vpop.f32.mrb[0].mxu0
    %v260 = vadd.f32 0.0, %v259
    %v261 = vpop.f32.mrb[0].mxu0
    %262 = vdwg.mxu0
    %v263 = vpack.c.bf16 %v260, %v257
    %v264 = vld [vmem:[#allocation6] sm:$0xff]
    %v265 = vld [vmem:[#allocation6 + $0x8] sm:$0xf]
    %v266 = vld [vmem:[#allocation6 + $0xc] sm:$0xff]
    %v267 = vld [vmem:[#allocation6 + $0x14] sm:$0xf]
    %v268 = vld [vmem:[#allocation6 + $0x18] sm:$0xff]
    %v269 = vld [vmem:[#allocation6 + $0x20] sm:$0xf]
    %v270 = vld [vmem:[#allocation6 + $0x24] sm:$0xff]
    %v271 = vld [vmem:[#allocation6 + $0x2c] sm:$0xf]
    %v272 = vld [vmem:[#allocation6 + $0x30] sm:$0xff]
    %v273 = vld [vmem:[#allocation6 + $0x38] sm:$0xf]
    %v274 = vld [vmem:[#allocation6 + $0x3c] sm:$0xff]
    %v275 = vld [vmem:[#allocation6 + $0x44] sm:$0xf]
    %v276 = vld [vmem:[#allocation6 + $0x48] sm:$0xff]
    %v277 = vld [vmem:[#allocation6 + $0x50] sm:$0xf]
    %v278 = vld [vmem:[#allocation6 + $0x54] sm:$0xff]
    %v279 = vld [vmem:[#allocation6 + $0x5c] sm:$0xf]
    %v280 = vld [vmem:[#allocation6 + $0x60] sm:$0xff]
    %v281 = vld [vmem:[#allocation6 + $0x68] sm:$0xf]
    %v282 = vld [vmem:[#allocation6 + $0x6c] sm:$0xff]
    %v283 = vld [vmem:[#allocation6 + $0x74] sm:$0xf]
    %v284 = vld [vmem:[#allocation6 + $0x78] sm:$0xff]
    %v285 = vld [vmem:[#allocation6 + $0x80] sm:$0xf]
    %v286 = vld [vmem:[#allocation6 + $0x84] sm:$0xff]
    %v287 = vld [vmem:[#allocation6 + $0x8c] sm:$0xf]
    %v288 = vld [vmem:[#allocation6 + $0x90] sm:$0xff]
    %v289 = vld [vmem:[#allocation6 + $0x98] sm:$0xf]
    %v290 = vld [vmem:[#allocation6 + $0x9c] sm:$0xff]
    %v291 = vld [vmem:[#allocation6 + $0xa4] sm:$0xf]
    %v292 = vld [vmem:[#allocation6 + $0xa8] sm:$0xff]
    %v293 = vld [vmem:[#allocation6 + $0xb0] sm:$0xf]
    %v294 = vld [vmem:[#allocation6 + $0xb4] sm:$0xff]
    %v295 = vld [vmem:[#allocation6 + $0xbc] sm:$0xf]
    %v296 = vld [vmem:[%s3] sm:$0x7]
    %v298 = vlaneseq
    %v299 = vshrl.u32 %v298, 7
    %v300 = vsub.s32 0, %v299
    %v301 = vrot.slane %v296, %v300
    %v302 = vlaneseq
    %v303 = vshrl.u32 %v302, 7
    %v304 = vsub.s32 1, %v303
    %v305 = vrot.slane %v296, %v304
    %v306 = vlaneseq
    %v307 = vshrl.u32 %v306, 7
    %v308 = vsub.s32 2, %v307
    %v309 = vrot.slane %v296, %v308
    %v345 = vunpack.c.l.b16 %v264
    %v346 = vunpack.c.h.b16 %v264
    %v347 = vunpack.c.l.b16 %v265
    %v348 = vunpack.c.l.b16 %v266
    %v349 = vunpack.c.h.b16 %v266
    %v350 = vunpack.c.l.b16 %v267
    %v351 = vunpack.c.l.b16 %v268
    %v352 = vunpack.c.h.b16 %v268
    %v353 = vunpack.c.l.b16 %v269
    %v354 = vunpack.c.l.b16 %v270
    %v355 = vunpack.c.h.b16 %v270
    %v356 = vunpack.c.l.b16 %v271
    %v357 = vunpack.c.l.b16 %v272
    %v358 = vunpack.c.h.b16 %v272
    %v359 = vunpack.c.l.b16 %v273
    %v360 = vunpack.c.l.b16 %v274
    %v361 = vunpack.c.h.b16 %v274
    %v362 = vunpack.c.l.b16 %v275
    %v363 = vunpack.c.l.b16 %v276
    %v364 = vunpack.c.h.b16 %v276
    %v365 = vunpack.c.l.b16 %v277
    %v366 = vunpack.c.l.b16 %v278
    %v367 = vunpack.c.h.b16 %v278
    %v368 = vunpack.c.l.b16 %v279
    %v369 = vunpack.c.l.b16 %v280
    %v370 = vunpack.c.h.b16 %v280
    %v371 = vunpack.c.l.b16 %v281
    %v372 = vunpack.c.l.b16 %v282
    %v373 = vunpack.c.h.b16 %v282
    %v374 = vunpack.c.l.b16 %v283
    %v375 = vunpack.c.l.b16 %v284
    %v376 = vunpack.c.h.b16 %v284
    %v377 = vunpack.c.l.b16 %v285
    %v378 = vunpack.c.l.b16 %v286
    %v379 = vunpack.c.h.b16 %v286
    %v380 = vunpack.c.l.b16 %v287
    %v381 = vunpack.c.l.b16 %v288
    %v382 = vunpack.c.h.b16 %v288
    %v383 = vunpack.c.l.b16 %v289
    %v384 = vunpack.c.l.b16 %v290
    %v385 = vunpack.c.h.b16 %v290
    %v386 = vunpack.c.l.b16 %v291
    %v387 = vunpack.c.l.b16 %v292
    %v388 = vunpack.c.h.b16 %v292
    %v389 = vunpack.c.l.b16 %v293
    %v390 = vunpack.c.l.b16 %v294
    %v391 = vunpack.c.h.b16 %v294
    %v392 = vunpack.c.l.b16 %v295
    %v393 = vpack.c.b16 %v348, %v345
    %v394 = vpack.c.b16 %v349, %v346
    %v395 = vpack.c.b16 %v350, %v347
    %v396 = vpack.c.b16 %v354, %v351
    %v397 = vpack.c.b16 %v355, %v352
    %v398 = vpack.c.b16 %v356, %v353
    %v399 = vpack.c.b16 %v360, %v357
    %v400 = vpack.c.b16 %v361, %v358
    %v401 = vpack.c.b16 %v362, %v359
    %v402 = vpack.c.b16 %v366, %v363
    %v403 = vpack.c.b16 %v367, %v364
    %v404 = vpack.c.b16 %v368, %v365
    %v405 = vpack.c.b16 %v372, %v369
    %v406 = vpack.c.b16 %v373, %v370
    %v407 = vpack.c.b16 %v374, %v371
    %v408 = vpack.c.b16 %v378, %v375
    %v409 = vpack.c.b16 %v379, %v376
    %v410 = vpack.c.b16 %v380, %v377
    %v411 = vpack.c.b16 %v384, %v381
    %v412 = vpack.c.b16 %v385, %v382
    %v413 = vpack.c.b16 %v386, %v383
    %v414 = vpack.c.b16 %v390, %v387
    %v415 = vpack.c.b16 %v391, %v388
    %v416 = vpack.c.b16 %v392, %v389
    %441 = vmatprep.subr.bf16.mxu0 %v394
    %442 = vmatpush1.bf16.msra.mxu0 %v393
    %443 = vmatprep.subr.bf16.mxu0 %v397
    %444 = vmatpush1.bf16.msra.mxu0 %v396
    %445 = vmatprep.subr.bf16.mxu0 %v400
    %446 = vmatpush1.bf16.msra.mxu0 %v399
    %447 = vmatprep.subr.bf16.mxu0 %v403
    %448 = vmatpush1.bf16.msra.mxu0 %v402
    %449 = vmatprep.subr.bf16.mxu0 %v406
    %450 = vmatpush1.bf16.msra.mxu0 %v405
    %451 = vmatprep.subr.bf16.mxu0 %v409
    %452 = vmatpush1.bf16.msra.mxu0 %v408
    %453 = vmatprep.subr.bf16.mxu0 %v412
    %454 = vmatpush1.bf16.msra.mxu0 %v411
    %455 = vmatprep.subr.bf16.mxu0 %v415
    %456 = vmatpush1.bf16.msra.mxu0 %v414
    %457 = vmatprep.subr.bf16.mxu0 0
    %458 = vmatpush1.bf16.msra.mxu0 0
    %459 = vmatprep.subr.bf16.mxu0 0
    %460 = vmatpush1.bf16.msra.mxu0 0
    %461 = vmatprep.subr.bf16.mxu0 0
    %462 = vmatpush1.bf16.msra.mxu0 0
    %463 = vmatprep.subr.bf16.mxu0 0
    %464 = vmatpush1.bf16.msra.mxu0 0
    %465 = vmatprep.subr.bf16.mxu0 0
    %466 = vmatpush1.bf16.msra.mxu0 0
    %467 = vmatprep.subr.bf16.mxu0 0
    %468 = vmatpush1.bf16.msra.mxu0 0
    %469 = vmatprep.subr.bf16.mxu0 0
    %470 = vmatpush1.bf16.msra.mxu0 0
    %471 = vmatprep.subr.bf16.mxu0 0
    %472 = vmatpush1.bf16.msra.mxu0 0
    %473 = vmatprep.mubr.bf16.mxu0 0
    %474 = vmatmul.mubr.bf16.gmra.mrb[0].mxu0 %v263
    %v475 = vpop.f32.mrb[0].mxu0
    %v476 = vadd.f32 %v301, %v475
    %v477 = vpop.f32.mrb[0].mxu0
    %v478 = vadd.f32 %v305, %v477
    %v479 = vpop.f32.mrb[0].mxu0
    %v480 = vadd.f32 %v301, %v479
    %v481 = vpop.f32.mrb[0].mxu0
    %v482 = vadd.f32 %v305, %v481
    %483 = vdwg.mxu0
    %484 = vmatprep.subr.bf16.mxu0 0
    %485 = vmatpush1.bf16.msra.mxu0 %v395
    %486 = vmatprep.subr.bf16.mxu0 0
    %487 = vmatpush1.bf16.msra.mxu0 %v398
    %488 = vmatprep.subr.bf16.mxu0 0
    %489 = vmatpush1.bf16.msra.mxu0 %v401
    %490 = vmatprep.subr.bf16.mxu0 0
    %491 = vmatpush1.bf16.msra.mxu0 %v404
    %492 = vmatprep.subr.bf16.mxu0 0
    %493 = vmatpush1.bf16.msra.mxu0 %v407
    %494 = vmatprep.subr.bf16.mxu0 0
    %495 = vmatpush1.bf16.msra.mxu0 %v410
    %496 = vmatprep.subr.bf16.mxu0 0
    %497 = vmatpush1.bf16.msra.mxu0 %v413
    %498 = vmatprep.subr.bf16.mxu0 0
    %499 = vmatpush1.bf16.msra.mxu0 %v416
    %500 = vmatprep.subr.bf16.mxu0 0
    %501 = vmatpush1.bf16.msra.mxu0 0
    %502 = vmatprep.subr.bf16.mxu0 0
    %503 = vmatpush1.bf16.msra.mxu0 0
    %504 = vmatprep.subr.bf16.mxu0 0
    %505 = vmatpush1.bf16.msra.mxu0 0
    %506 = vmatprep.subr.bf16.mxu0 0
    %507 = vmatpush1.bf16.msra.mxu0 0
    %508 = vmatprep.subr.bf16.mxu0 0
    %509 = vmatpush1.bf16.msra.mxu0 0
    %510 = vmatprep.subr.bf16.mxu0 0
    %511 = vmatpush1.bf16.msra.mxu0 0
    %512 = vmatprep.subr.bf16.mxu0 0
    %513 = vmatpush1.bf16.msra.mxu0 0
    %514 = vmatprep.subr.bf16.mxu0 0
    %515 = vmatpush1.bf16.msra.mxu0 0
    %516 = vmatprep.mubr.bf16.mxu0 0
    %517 = vmatmul.mubr.bf16.gmra.mrb[0].mxu0 %v263
    %v518 = vpop.f32.mrb[0].mxu0
    %v519 = vadd.f32 %v309, %v518
    %v520 = vpop.f32.mrb[0].mxu0
    %v521 = vpop.f32.mrb[0].mxu0
    %v522 = vadd.f32 %v309, %v521
    %v523 = vpop.f32.mrb[0].mxu0
    %524 = vdwg.mxu0
    %v525 = vpack.c.bf16 %v480, %v476
    %v526 = vpack.c.bf16 %v482, %v478
    %v527 = vpack.c.bf16 %v522, %v519
    %528 = vmatprep.subr.bf16.mxu0 0
    %529 = vmatpush1.bf16.xpose.msra.mxu0 %v526
    %530 = vmatprep.subr.bf16.mxu0 0
    %531 = vmatpush1.bf16.xpose.msra.mxu0 0
    %532 = vmatprep.subr.bf16.mxu0 0
    %533 = vmatpush1.bf16.xpose.msra.mxu0 0
    %534 = vmatprep.subr.bf16.mxu0 0
    %535 = vmatpush1.bf16.xpose.msra.mxu0 0
    %536 = vmatprep.subr.bf16.mxu0 0
    %537 = vmatpush1.bf16.xpose.msra.mxu0 0
    %538 = vmatprep.subr.bf16.mxu0 0
    %539 = vmatpush1.bf16.xpose.msra.mxu0 0
    %540 = vmatprep.subr.bf16.mxu0 0
    %541 = vmatpush1.bf16.xpose.msra.mxu0 0
    %542 = vmatprep.subr.bf16.mxu0 0
    %543 = vmatpush1.bf16.xpose.msra.mxu0 0
    %544 = vmatprep.subr.bf16.mxu0 0
    %545 = vmatpush1.bf16.xpose.msra.mxu0 0
    %546 = vmatprep.subr.bf16.mxu0 0
    %547 = vmatpush1.bf16.xpose.msra.mxu0 0
    %548 = vmatprep.subr.bf16.mxu0 0
    %549 = vmatpush1.bf16.xpose.msra.mxu0 0
    %550 = vmatprep.subr.bf16.mxu0 0
    %551 = vmatpush1.bf16.xpose.msra.mxu0 0
    %552 = vmatprep.subr.bf16.mxu0 0
    %553 = vmatpush1.bf16.xpose.msra.mxu0 0
    %554 = vmatprep.subr.bf16.mxu0 0
    %555 = vmatpush1.bf16.xpose.msra.mxu0 0
    %556 = vmatprep.subr.bf16.mxu0 0
    %557 = vmatpush1.bf16.xpose.msra.mxu0 0
    %558 = vmatprep.subr.bf16.mxu0 0
    %559 = vmatpush1.bf16.xpose.msra.mxu0 0
    %560 = vmatprep.mubr.bf16.mxu0 0
    %561 = vmatmul.mubr.bf16.gmra.mrb[0].mxu0 %v525
    %v562 = vpop.f32.mrb[0].mxu0
    %v563 = vadd.f32 0.0, %v562
    %v564 = vpop.f32.mrb[0].mxu0
    %v565 = vpop.f32.mrb[0].mxu0
    %v566 = vpop.f32.mrb[0].mxu0
    %567 = vdwg.mxu0
    %v568 = vmul.f32 %v563, 0.088388346
    %vm569 = vcmask 64512
    %v570 = vsel %vm569, %v568, -inf
    %571 = vmax.xlane.f32.xlu0 %v570
    %v572 = vpop.xlane.xlu0 %571
    %v573 = vsub.f32 %v568, %v572
    %v574 = vmul.f32 %v573, 1.442695
    %v575 = vpow.pop %v574
    %v576 = vsel %vm569, %v575, 0.0
    %577 = vadd.xlane.f32.xlu0 %v576
    %v578 = vpop.xlane.xlu0 %577
    %v579 = vrcp.pop %v578
    %v580 = vmul.f32 %v575, %v579
    %v581 = vpack.c.bf16 %v580, %v580
    %v583 = vsel %vm569, %v581, 0
    %vm585 = vcmask 1043456
    %v587 = vsel %vm585, %v527, 0
    %589 = vmatprep.subr.bf16.mxu0 0
    %590 = vmatpush1.bf16.msra.mxu0 %v587
    %591 = vmatprep.subr.bf16.mxu0 0
    %592 = vmatpush1.bf16.msra.mxu0 0
    %593 = vmatprep.subr.bf16.mxu0 0
    %594 = vmatpush1.bf16.msra.mxu0 0
    %595 = vmatprep.subr.bf16.mxu0 0
    %596 = vmatpush1.bf16.msra.mxu0 0
    %597 = vmatprep.subr.bf16.mxu0 0
    %598 = vmatpush1.bf16.msra.mxu0 0
    %599 = vmatprep.subr.bf16.mxu0 0
    %600 = vmatpush1.bf16.msra.mxu0 0
    %601 = vmatprep.subr.bf16.mxu0 0
    %602 = vmatpush1.bf16.msra.mxu0 0
    %603 = vmatprep.subr.bf16.mxu0 0
    %604 = vmatpush1.bf16.msra.mxu0 0
    %605 = vmatprep.subr.bf16.mxu0 0
    %606 = vmatpush1.bf16.msra.mxu0 0
    %607 = vmatprep.subr.bf16.mxu0 0
    %608 = vmatpush1.bf16.msra.mxu0 0
    %609 = vmatprep.subr.bf16.mxu0 0
    %610 = vmatpush1.bf16.msra.mxu0 0
    %611 = vmatprep.subr.bf16.mxu0 0
    %612 = vmatpush1.bf16.msra.mxu0 0
    %613 = vmatprep.subr.bf16.mxu0 0
    %614 = vmatpush1.bf16.msra.mxu0 0
    %615 = vmatprep.subr.bf16.mxu0 0
    %616 = vmatpush1.bf16.msra.mxu0 0
    %617 = vmatprep.subr.bf16.mxu0 0
    %618 = vmatpush1.bf16.msra.mxu0 0
    %619 = vmatprep.subr.bf16.mxu0 0
    %620 = vmatpush1.bf16.msra.mxu0 0
    %621 = vmatprep.mubr.bf16.mxu0 0
    %622 = vmatmul.mubr.bf16.gmra.mrb[0].mxu0 %v583
    %v623 = vpop.f32.mrb[0].mxu0
    %v624 = vadd.f32 0.0, %v623
    %v625 = vpop.f32.mrb[0].mxu0
    %v626 = vpop.f32.mrb[0].mxu0
    %v627 = vpop.f32.mrb[0].mxu0
    %628 = vdwg.mxu0
    %v630 = vrot.slane %v525, 4
    %v633 = vrot.slane %v526, 4
    %635 = vmatprep.subr.bf16.mxu0 0
    %636 = vmatpush1.bf16.xpose.msra.mxu0 %v633
    %637 = vmatprep.subr.bf16.mxu0 0
    %638 = vmatpush1.bf16.xpose.msra.mxu0 0
    %639 = vmatprep.subr.bf16.mxu0 0
    %640 = vmatpush1.bf16.xpose.msra.mxu0 0
    %641 = vmatprep.subr.bf16.mxu0 0
    %642 = vmatpush1.bf16.xpose.msra.mxu0 0
    %643 = vmatprep.subr.bf16.mxu0 0
    %644 = vmatpush1.bf16.xpose.msra.mxu0 0
    %645 = vmatprep.subr.bf16.mxu0 0
    %646 = vmatpush1.bf16.xpose.msra.mxu0 0
    %647 = vmatprep.subr.bf16.mxu0 0
    %648 = vmatpush1.bf16.xpose.msra.mxu0 0
    %649 = vmatprep.subr.bf16.mxu0 0
    %650 = vmatpush1.bf16.xpose.msra.mxu0 0
    %651 = vmatprep.subr.bf16.mxu0 0
    %652 = vmatpush1.bf16.xpose.msra.mxu0 0
    %653 = vmatprep.subr.bf16.mxu0 0
    %654 = vmatpush1.bf16.xpose.msra.mxu0 0
    %655 = vmatprep.subr.bf16.mxu0 0
    %656 = vmatpush1.bf16.xpose.msra.mxu0 0
    %657 = vmatprep.subr.bf16.mxu0 0
    %658 = vmatpush1.bf16.xpose.msra.mxu0 0
    %659 = vmatprep.subr.bf16.mxu0 0
    %660 = vmatpush1.bf16.xpose.msra.mxu0 0
    %661 = vmatprep.subr.bf16.mxu0 0
    %662 = vmatpush1.bf16.xpose.msra.mxu0 0
    %663 = vmatprep.subr.bf16.mxu0 0
    %664 = vmatpush1.bf16.xpose.msra.mxu0 0
    %665 = vmatprep.subr.bf16.mxu0 0
    %666 = vmatpush1.bf16.xpose.msra.mxu0 0
    %667 = vmatprep.mubr.bf16.mxu0 0
    %668 = vmatmul.mubr.bf16.gmra.mrb[0].mxu0 %v630
    %v669 = vpop.f32.mrb[0].mxu0
    %v670 = vadd.f32 0.0, %v669
    %v671 = vpop.f32.mrb[0].mxu0
    %v672 = vpop.f32.mrb[0].mxu0
    %v673 = vpop.f32.mrb[0].mxu0
    %674 = vdwg.mxu0
    %v675 = vmul.f32 %v670, 0.088388346
    %v676 = vsel %vm569, %v675, -inf
    %677 = vmax.xlane.f32.xlu0 %v676
    %v678 = vpop.xlane.xlu0 %677
    %v679 = vsub.f32 %v675, %v678
    %v680 = vmul.f32 %v679, 1.442695
    %v681 = vpow.pop %v680
    %v682 = vsel %vm569, %v681, 0.0
    %683 = vadd.xlane.f32.xlu0 %v682
    %v684 = vpop.xlane.xlu0 %683
    %v685 = vrcp.pop %v684
    %v686 = vmul.f32 %v681, %v685
    %v687 = vpack.c.bf16 %v686, %v686
    %v689 = vrot.slane %v527, 4
    %v691 = vsel %vm569, %v687, 0
    %v694 = vsel %vm585, %v689, 0
    %696 = vmatprep.subr.bf16.mxu0 0
    %697 = vmatpush1.bf16.msra.mxu0 %v694
    %698 = vmatprep.subr.bf16.mxu0 0
    %699 = vmatpush1.bf16.msra.mxu0 0
    %700 = vmatprep.subr.bf16.mxu0 0
    %701 = vmatpush1.bf16.msra.mxu0 0
    %702 = vmatprep.subr.bf16.mxu0 0
    %703 = vmatpush1.bf16.msra.mxu0 0
    %704 = vmatprep.subr.bf16.mxu0 0
    %705 = vmatpush1.bf16.msra.mxu0 0
    %706 = vmatprep.subr.bf16.mxu0 0
    %707 = vmatpush1.bf16.msra.mxu0 0
    %708 = vmatprep.subr.bf16.mxu0 0
    %709 = vmatpush1.bf16.msra.mxu0 0
    %710 = vmatprep.subr.bf16.mxu0 0
    %711 = vmatpush1.bf16.msra.mxu0 0
    %712 = vmatprep.subr.bf16.mxu0 0
    %713 = vmatpush1.bf16.msra.mxu0 0
    %714 = vmatprep.subr.bf16.mxu0 0
    %715 = vmatpush1.bf16.msra.mxu0 0
    %716 = vmatprep.subr.bf16.mxu0 0
    %717 = vmatpush1.bf16.msra.mxu0 0
    %718 = vmatprep.subr.bf16.mxu0 0
    %719 = vmatpush1.bf16.msra.mxu0 0
    %720 = vmatprep.subr.bf16.mxu0 0
    %721 = vmatpush1.bf16.msra.mxu0 0
    %722 = vmatprep.subr.bf16.mxu0 0
    %723 = vmatpush1.bf16.msra.mxu0 0
    %724 = vmatprep.subr.bf16.mxu0 0
    %725 = vmatpush1.bf16.msra.mxu0 0
    %726 = vmatprep.subr.bf16.mxu0 0
    %727 = vmatpush1.bf16.msra.mxu0 0
    %728 = vmatprep.mubr.bf16.mxu0 0
    %729 = vmatmul.mubr.bf16.gmra.mrb[0].mxu0 %v691
    %v730 = vpop.f32.mrb[0].mxu0
    %v731 = vadd.f32 0.0, %v730
    %v732 = vpop.f32.mrb[0].mxu0
    %v733 = vpop.f32.mrb[0].mxu0
    %v734 = vpop.f32.mrb[0].mxu0
    %735 = vdwg.mxu0
    %v737 = vrot.slane %v731, 7
    %v740 = vrot.slane %v624, 7
    %v742 = vrot.slane %v731, 6
    %v744 = vrot.slane %v624, 6
    %v746 = vrot.slane %v731, 5
    %v748 = vrot.slane %v624, 5
    %v750 = vrot.slane %v731, 4
    %v752 = vrot.slane %v624, 4
    %v754 = vrot.slane %v731, 3
    %v756 = vrot.slane %v624, 3
    %v758 = vrot.slane %v731, 2
    %v760 = vrot.slane %v624, 2
    %v762 = vrot.slane %v731, 1
    %v764 = vrot.slane %v624, 1
    %vm766 = vcmask 1040384
    %v767 = vsel %vm766, %v624, %v737
    %vm768 = vcmask 1041408
    %v769 = vsel %vm768, %v767, %v740
    %vm770 = vcmask 1042432
    %v771 = vsel %vm770, %v769, %v742
    %v772 = vsel %vm585, %v771, %v744
    %vm773 = vcmask 1044480
    %v774 = vsel %vm773, %v772, %v746
    %vm775 = vcmask 1045504
    %v776 = vsel %vm775, %v774, %v748
    %vm777 = vcmask 1046528
    %v778 = vsel %vm777, %v776, %v750
    %v779 = vsel %vm766, %v752, %v754
    %v780 = vsel %vm768, %v779, %v756
    %v781 = vsel %vm770, %v780, %v758
    %v782 = vsel %vm585, %v781, %v760
    %v783 = vsel %vm773, %v782, %v762
    %v784 = vsel %vm775, %v783, %v764
    %v785 = vsel %vm777, %v784, %v731
    %v786 = vpack.c.bf16 %v785, %v778
    %v787 = vld [vmem:[#allocation8] sm:$0xff]
    %v788 = vld [vmem:[#allocation8 + $0x8] sm:$0xff]
    %v789 = vld [vmem:[#allocation8 + $0x10] sm:$0xff]
    %v790 = vld [vmem:[#allocation8 + $0x18] sm:$0xff]
    %v791 = vld [vmem:[#allocation8 + $0x20] sm:$0xff]
    %v792 = vld [vmem:[#allocation8 + $0x28] sm:$0xff]
    %v793 = vld [vmem:[#allocation8 + $0x30] sm:$0xff]
    %v794 = vld [vmem:[#allocation8 + $0x38] sm:$0xff]
    %v795 = vld [vmem:[#allocation8 + $0x40] sm:$0xff]
    %v796 = vld [vmem:[#allocation8 + $0x48] sm:$0xff]
    %v797 = vld [vmem:[#allocation8 + $0x50] sm:$0xff]
    %v798 = vld [vmem:[#allocation8 + $0x58] sm:$0xff]
    %v799 = vld [vmem:[#allocation8 + $0x60] sm:$0xff]
    %v800 = vld [vmem:[#allocation8 + $0x68] sm:$0xff]
    %v801 = vld [vmem:[#allocation8 + $0x70] sm:$0xff]
    %v802 = vld [vmem:[#allocation8 + $0x78] sm:$0xff]
    %v803 = vld [vmem:[#allocation8 + $0x80] sm:$0xff]
    %v804 = vld [vmem:[#allocation8 + $0x88] sm:$0xff]
    %v805 = vld [vmem:[#allocation8 + $0x90] sm:$0xff]
    %v806 = vld [vmem:[#allocation8 + $0x98] sm:$0xff]
    %v807 = vld [vmem:[#allocation8 + $0xa0] sm:$0xff]
    %v808 = vld [vmem:[#allocation8 + $0xa8] sm:$0xff]
    %v809 = vld [vmem:[#allocation8 + $0xb0] sm:$0xff]
    %v810 = vld [vmem:[#allocation8 + $0xb8] sm:$0xff]
    %v811 = vld [vmem:[#allocation8 + $0xc0] sm:$0xff]
    %v812 = vld [vmem:[#allocation8 + $0xc8] sm:$0xff]
    %v813 = vld [vmem:[#allocation8 + $0xd0] sm:$0xff]
    %v814 = vld [vmem:[#allocation8 + $0xd8] sm:$0xff]
    %v815 = vld [vmem:[#allocation8 + $0xe0] sm:$0xff]
    %v816 = vld [vmem:[#allocation8 + $0xe8] sm:$0xff]
    %v817 = vld [vmem:[#allocation8 + $0xf0] sm:$0xff]
    %v818 = vld [vmem:[#allocation8 + $0xf8] sm:$0xff]
    %v819 = vld [vmem:[#allocation8 + $0x100] sm:$0xff]
    %v820 = vld [vmem:[#allocation8 + $0x108] sm:$0xff]
    %v821 = vld [vmem:[#allocation8 + $0x110] sm:$0xff]
    %v822 = vld [vmem:[#allocation8 + $0x118] sm:$0xff]
    %v823 = vld [vmem:[#allocation8 + $0x120] sm:$0xff]
    %v824 = vld [vmem:[#allocation8 + $0x128] sm:$0xff]
    %v825 = vld [vmem:[#allocation8 + $0x130] sm:$0xff]
    %v826 = vld [vmem:[#allocation8 + $0x138] sm:$0xff]
    %v827 = vld [vmem:[#allocation8 + $0x140] sm:$0xff]
    %v828 = vld [vmem:[#allocation8 + $0x148] sm:$0xff]
    %v829 = vld [vmem:[#allocation8 + $0x150] sm:$0xff]
    %v830 = vld [vmem:[#allocation8 + $0x158] sm:$0xff]
    %v831 = vld [vmem:[#allocation8 + $0x160] sm:$0xff]
    %v832 = vld [vmem:[#allocation8 + $0x168] sm:$0xff]
    %v833 = vld [vmem:[#allocation8 + $0x170] sm:$0xff]
    %v834 = vld [vmem:[#allocation8 + $0x178] sm:$0xff]
    %v835 = vld [vmem:[#allocation8 + $0x180] sm:$0xff]
    %v836 = vld [vmem:[#allocation8 + $0x188] sm:$0xff]
    %v837 = vld [vmem:[#allocation8 + $0x190] sm:$0xff]
    %v838 = vld [vmem:[#allocation8 + $0x198] sm:$0xff]
    %v839 = vld [vmem:[#allocation8 + $0x1a0] sm:$0xff]
    %v840 = vld [vmem:[#allocation8 + $0x1a8] sm:$0xff]
    %v841 = vld [vmem:[#allocation8 + $0x1b0] sm:$0xff]
    %v842 = vld [vmem:[#allocation8 + $0x1b8] sm:$0xff]
    %v843 = vld [vmem:[#allocation8 + $0x1c0] sm:$0xff]
    %v844 = vld [vmem:[#allocation8 + $0x1c8] sm:$0xff]
    %v845 = vld [vmem:[#allocation8 + $0x1d0] sm:$0xff]
    %v846 = vld [vmem:[#allocation8 + $0x1d8] sm:$0xff]
    %v847 = vld [vmem:[#allocation8 + $0x1e0] sm:$0xff]
    %v848 = vld [vmem:[#allocation8 + $0x1e8] sm:$0xff]
    %v849 = vld [vmem:[#allocation8 + $0x1f0] sm:$0xff]
    %v850 = vld [vmem:[#allocation8 + $0x1f8] sm:$0xff]
    %v851 = vld [vmem:[#allocation8 + $0x200] sm:$0xff]
    %v852 = vld [vmem:[#allocation8 + $0x208] sm:$0xff]
    %v853 = vld [vmem:[#allocation8 + $0x210] sm:$0xff]
    %v854 = vld [vmem:[#allocation8 + $0x218] sm:$0xff]
    %v855 = vld [vmem:[#allocation8 + $0x220] sm:$0xff]
    %v856 = vld [vmem:[#allocation8 + $0x228] sm:$0xff]
    %v857 = vld [vmem:[#allocation8 + $0x230] sm:$0xff]
    %v858 = vld [vmem:[#allocation8 + $0x238] sm:$0xff]
    %v859 = vld [vmem:[#allocation8 + $0x240] sm:$0xff]
    %v860 = vld [vmem:[#allocation8 + $0x248] sm:$0xff]
    %v861 = vld [vmem:[#allocation8 + $0x250] sm:$0xff]
    %v862 = vld [vmem:[#allocation8 + $0x258] sm:$0xff]
    %v863 = vld [vmem:[#allocation8 + $0x260] sm:$0xff]
    %v864 = vld [vmem:[#allocation8 + $0x268] sm:$0xff]
    %v865 = vld [vmem:[#allocation8 + $0x270] sm:$0xff]
    %v866 = vld [vmem:[#allocation8 + $0x278] sm:$0xff]
    %v867 = vld [vmem:[#allocation8 + $0x280] sm:$0xff]
    %v868 = vld [vmem:[#allocation8 + $0x288] sm:$0xff]
    %v869 = vld [vmem:[#allocation8 + $0x290] sm:$0xff]
    %v870 = vld [vmem:[#allocation8 + $0x298] sm:$0xff]
    %v871 = vld [vmem:[#allocation8 + $0x2a0] sm:$0xff]
    %v872 = vld [vmem:[#allocation8 + $0x2a8] sm:$0xff]
    %v873 = vld [vmem:[#allocation8 + $0x2b0] sm:$0xff]
    %v874 = vld [vmem:[#allocation8 + $0x2b8] sm:$0xff]
    %v875 = vld [vmem:[#allocation8 + $0x2c0] sm:$0xff]
    %v876 = vld [vmem:[#allocation8 + $0x2c8] sm:$0xff]
    %v877 = vld [vmem:[#allocation8 + $0x2d0] sm:$0xff]
    %v878 = vld [vmem:[#allocation8 + $0x2d8] sm:$0xff]
    %v879 = vld [vmem:[#allocation8 + $0x2e0] sm:$0xff]
    %v880 = vld [vmem:[#allocation8 + $0x2e8] sm:$0xff]
    %v881 = vld [vmem:[#allocation8 + $0x2f0] sm:$0xff]
    %v882 = vld [vmem:[#allocation8 + $0x2f8] sm:$0xff]
    %v883 = vld [vmem:[#allocation8 + $0x300] sm:$0xff]
    %v884 = vld [vmem:[#allocation8 + $0x308] sm:$0xff]
    %v885 = vld [vmem:[#allocation8 + $0x310] sm:$0xff]
    %v886 = vld [vmem:[#allocation8 + $0x318] sm:$0xff]
    %v887 = vld [vmem:[#allocation8 + $0x320] sm:$0xff]
    %v888 = vld [vmem:[#allocation8 + $0x328] sm:$0xff]
    %v889 = vld [vmem:[#allocation8 + $0x330] sm:$0xff]
    %v890 = vld [vmem:[#allocation8 + $0x338] sm:$0xff]
    %v891 = vld [vmem:[#allocation8 + $0x340] sm:$0xff]
    %v892 = vld [vmem:[#allocation8 + $0x348] sm:$0xff]
    %v893 = vld [vmem:[#allocation8 + $0x350] sm:$0xff]
    %v894 = vld [vmem:[#allocation8 + $0x358] sm:$0xff]
    %v895 = vld [vmem:[#allocation8 + $0x360] sm:$0xff]
    %v896 = vld [vmem:[#allocation8 + $0x368] sm:$0xff]
    %v897 = vld [vmem:[#allocation8 + $0x370] sm:$0xff]
    %v898 = vld [vmem:[#allocation8 + $0x378] sm:$0xff]
    %v899 = vld [vmem:[#allocation8 + $0x380] sm:$0xff]
    %v900 = vld [vmem:[#allocation8 + $0x388] sm:$0xff]
    %v901 = vld [vmem:[#allocation8 + $0x390] sm:$0xff]
    %v902 = vld [vmem:[#allocation8 + $0x398] sm:$0xff]
    %v903 = vld [vmem:[#allocation8 + $0x3a0] sm:$0xff]
    %v904 = vld [vmem:[#allocation8 + $0x3a8] sm:$0xff]
    %v905 = vld [vmem:[#allocation8 + $0x3b0] sm:$0xff]
    %v906 = vld [vmem:[#allocation8 + $0x3b8] sm:$0xff]
    %v907 = vld [vmem:[#allocation8 + $0x3c0] sm:$0xff]
    %v908 = vld [vmem:[#allocation8 + $0x3c8] sm:$0xff]
    %v909 = vld [vmem:[#allocation8 + $0x3d0] sm:$0xff]
    %v910 = vld [vmem:[#allocation8 + $0x3d8] sm:$0xff]
    %v911 = vld [vmem:[#allocation8 + $0x3e0] sm:$0xff]
    %v912 = vld [vmem:[#allocation8 + $0x3e8] sm:$0xff]
    %v913 = vld [vmem:[#allocation8 + $0x3f0] sm:$0xff]
    %v914 = vld [vmem:[#allocation8 + $0x3f8] sm:$0xff]
    %v915 = vld [vmem:[%s6] sm:$0xff]
    %v916 = vld [vmem:[%s6 + $0x8] sm:$0xff]
    %v919 = vlaneseq
    %v920 = vshrl.u32 %v919, 7
    %v921 = vsub.s32 0, %v920
    %v922 = vrot.slane %v915, %v921
    %v923 = vlaneseq
    %v924 = vshrl.u32 %v923, 7
    %v925 = vsub.s32 1, %v924
    %v926 = vrot.slane %v915, %v925
    %v927 = vlaneseq
    %v928 = vshrl.u32 %v927, 7
    %v929 = vsub.s32 2, %v928
    %v930 = vrot.slane %v915, %v929
    %v931 = vlaneseq
    %v932 = vshrl.u32 %v931, 7
    %v933 = vsub.s32 3, %v932
    %v934 = vrot.slane %v915, %v933
    %v935 = vlaneseq
    %v936 = vshrl.u32 %v935, 7
    %v937 = vsub.s32 4, %v936
    %v938 = vrot.slane %v915, %v937
    %v939 = vlaneseq
    %v940 = vshrl.u32 %v939, 7
    %v941 = vsub.s32 5, %v940
    %v942 = vrot.slane %v915, %v941
    %v943 = vlaneseq
    %v944 = vshrl.u32 %v943, 7
    %v945 = vsub.s32 6, %v944
    %v946 = vrot.slane %v915, %v945
    %v947 = vlaneseq
    %v948 = vshrl.u32 %v947, 7
    %v949 = vsub.s32 7, %v948
    %v950 = vrot.slane %v915, %v949
    %v951 = vlaneseq
    %v952 = vshrl.u32 %v951, 7
    %v953 = vsub.s32 0, %v952
    %v954 = vrot.slane %v916, %v953
    %v955 = vlaneseq
    %v956 = vshrl.u32 %v955, 7
    %v957 = vsub.s32 1, %v956
    %v958 = vrot.slane %v916, %v957
    %v959 = vlaneseq
    %v960 = vshrl.u32 %v959, 7
    %v961 = vsub.s32 2, %v960
    %v962 = vrot.slane %v916, %v961
    %v963 = vlaneseq
    %v964 = vshrl.u32 %v963, 7
    %v965 = vsub.s32 3, %v964
    %v966 = vrot.slane %v916, %v965
    %v967 = vlaneseq
    %v968 = vshrl.u32 %v967, 7
    %v969 = vsub.s32 4, %v968
    %v970 = vrot.slane %v916, %v969
    %v971 = vlaneseq
    %v972 = vshrl.u32 %v971, 7
    %v973 = vsub.s32 5, %v972
    %v974 = vrot.slane %v916, %v973
    %v975 = vlaneseq
    %v976 = vshrl.u32 %v975, 7
    %v977 = vsub.s32 6, %v976
    %v978 = vrot.slane %v916, %v977
    %v979 = vlaneseq
    %v980 = vshrl.u32 %v979, 7
    %v981 = vsub.s32 7, %v980
    %v982 = vrot.slane %v916, %v981
    %v1127 = vunpack.c.l.b16 %v787
    %v1128 = vunpack.c.h.b16 %v787
    %v1129 = vunpack.c.l.b16 %v788
    %v1130 = vunpack.c.h.b16 %v788
    %v1131 = vunpack.c.l.b16 %v789
    %v1132 = vunpack.c.h.b16 %v789
    %v1133 = vunpack.c.l.b16 %v790
    %v1134 = vunpack.c.h.b16 %v790
    %v1135 = vunpack.c.l.b16 %v791
    %v1136 = vunpack.c.h.b16 %v791
    %v1137 = vunpack.c.l.b16 %v792
    %v1138 = vunpack.c.h.b16 %v792
    %v1139 = vunpack.c.l.b16 %v793
    %v1140 = vunpack.c.h.b16 %v793
    %v1141 = vunpack.c.l.b16 %v794
    %v1142 = vunpack.c.h.b16 %v794
    %v1143 = vunpack.c.l.b16 %v795
    %v1144 = vunpack.c.h.b16 %v795
    %v1145 = vunpack.c.l.b16 %v796
    %v1146 = vunpack.c.h.b16 %v796
    %v1147 = vunpack.c.l.b16 %v797
    %v1148 = vunpack.c.h.b16 %v797
    %v1149 = vunpack.c.l.b16 %v798
    %v1150 = vunpack.c.h.b16 %v798
    %v1151 = vunpack.c.l.b16 %v799
    %v1152 = vunpack.c.h.b16 %v799
    %v1153 = vunpack.c.l.b16 %v800
    %v1154 = vunpack.c.h.b16 %v800
    %v1155 = vunpack.c.l.b16 %v801
    %v1156 = vunpack.c.h.b16 %v801
    %v1157 = vunpack.c.l.b16 %v802
    %v1158 = vunpack.c.h.b16 %v802
    %v1159 = vunpack.c.l.b16 %v803
    %v1160 = vunpack.c.h.b16 %v803
    %v1161 = vunpack.c.l.b16 %v804
    %v1162 = vunpack.c.h.b16 %v804
    %v1163 = vunpack.c.l.b16 %v805
    %v1164 = vunpack.c.h.b16 %v805
    %v1165 = vunpack.c.l.b16 %v806
    %v1166 = vunpack.c.h.b16 %v806
    %v1167 = vunpack.c.l.b16 %v807
    %v1168 = vunpack.c.h.b16 %v807
    %v1169 = vunpack.c.l.b16 %v808
    %v1170 = vunpack.c.h.b16 %v808
    %v1171 = vunpack.c.l.b16 %v809
    %v1172 = vunpack.c.h.b16 %v809
    %v1173 = vunpack.c.l.b16 %v810
    %v1174 = vunpack.c.h.b16 %v810
    %v1175 = vunpack.c.l.b16 %v811
    %v1176 = vunpack.c.h.b16 %v811
    %v1177 = vunpack.c.l.b16 %v812
    %v1178 = vunpack.c.h.b16 %v812
    %v1179 = vunpack.c.l.b16 %v813
    %v1180 = vunpack.c.h.b16 %v813
    %v1181 = vunpack.c.l.b16 %v814
    %v1182 = vunpack.c.h.b16 %v814
    %v1183 = vunpack.c.l.b16 %v815
    %v1184 = vunpack.c.h.b16 %v815
    %v1185 = vunpack.c.l.b16 %v816
    %v1186 = vunpack.c.h.b16 %v816
    %v1187 = vunpack.c.l.b16 %v817
    %v1188 = vunpack.c.h.b16 %v817
    %v1189 = vunpack.c.l.b16 %v818
    %v1190 = vunpack.c.h.b16 %v818
    %v1191 = vunpack.c.l.b16 %v819
    %v1192 = vunpack.c.h.b16 %v819
    %v1193 = vunpack.c.l.b16 %v820
    %v1194 = vunpack.c.h.b16 %v820
    %v1195 = vunpack.c.l.b16 %v821
    %v1196 = vunpack.c.h.b16 %v821
    %v1197 = vunpack.c.l.b16 %v822
    %v1198 = vunpack.c.h.b16 %v822
    %v1199 = vunpack.c.l.b16 %v823
    %v1200 = vunpack.c.h.b16 %v823
    %v1201 = vunpack.c.l.b16 %v824
    %v1202 = vunpack.c.h.b16 %v824
    %v1203 = vunpack.c.l.b16 %v825
    %v1204 = vunpack.c.h.b16 %v825
    %v1205 = vunpack.c.l.b16 %v826
    %v1206 = vunpack.c.h.b16 %v826
    %v1207 = vunpack.c.l.b16 %v827
    %v1208 = vunpack.c.h.b16 %v827
    %v1209 = vunpack.c.l.b16 %v828
    %v1210 = vunpack.c.h.b16 %v828
    %v1211 = vunpack.c.l.b16 %v829
    %v1212 = vunpack.c.h.b16 %v829
    %v1213 = vunpack.c.l.b16 %v830
    %v1214 = vunpack.c.h.b16 %v830
    %v1215 = vunpack.c.l.b16 %v831
    %v1216 = vunpack.c.h.b16 %v831
    %v1217 = vunpack.c.l.b16 %v832
    %v1218 = vunpack.c.h.b16 %v832
    %v1219 = vunpack.c.l.b16 %v833
    %v1220 = vunpack.c.h.b16 %v833
    %v1221 = vunpack.c.l.b16 %v834
    %v1222 = vunpack.c.h.b16 %v834
    %v1223 = vunpack.c.l.b16 %v835
    %v1224 = vunpack.c.h.b16 %v835
    %v1225 = vunpack.c.l.b16 %v836
    %v1226 = vunpack.c.h.b16 %v836
    %v1227 = vunpack.c.l.b16 %v837
    %v1228 = vunpack.c.h.b16 %v837
    %v1229 = vunpack.c.l.b16 %v838
    %v1230 = vunpack.c.h.b16 %v838
    %v1231 = vunpack.c.l.b16 %v839
    %v1232 = vunpack.c.h.b16 %v839
    %v1233 = vunpack.c.l.b16 %v840
    %v1234 = vunpack.c.h.b16 %v840
    %v1235 = vunpack.c.l.b16 %v841
    %v1236 = vunpack.c.h.b16 %v841
    %v1237 = vunpack.c.l.b16 %v842
    %v1238 = vunpack.c.h.b16 %v842
    %v1239 = vunpack.c.l.b16 %v843
    %v1240 = vunpack.c.h.b16 %v843
    %v1241 = vunpack.c.l.b16 %v844
    %v1242 = vunpack.c.h.b16 %v844
    %v1243 = vunpack.c.l.b16 %v845
    %v1244 = vunpack.c.h.b16 %v845
    %v1245 = vunpack.c.l.b16 %v846
    %v1246 = vunpack.c.h.b16 %v846
    %v1247 = vunpack.c.l.b16 %v847
    %v1248 = vunpack.c.h.b16 %v847
    %v1249 = vunpack.c.l.b16 %v848
    %v1250 = vunpack.c.h.b16 %v848
    %v1251 = vunpack.c.l.b16 %v849
    %v1252 = vunpack.c.h.b16 %v849
    %v1253 = vunpack.c.l.b16 %v850
    %v1254 = vunpack.c.h.b16 %v850
    %v1255 = vunpack.c.l.b16 %v851
    %v1256 = vunpack.c.h.b16 %v851
    %v1257 = vunpack.c.l.b16 %v852
    %v1258 = vunpack.c.h.b16 %v852
    %v1259 = vunpack.c.l.b16 %v853
    %v1260 = vunpack.c.h.b16 %v853
    %v1261 = vunpack.c.l.b16 %v854
    %v1262 = vunpack.c.h.b16 %v854
    %v1263 = vunpack.c.l.b16 %v855
    %v1264 = vunpack.c.h.b16 %v855
    %v1265 = vunpack.c.l.b16 %v856
    %v1266 = vunpack.c.h.b16 %v856
    %v1267 = vunpack.c.l.b16 %v857
    %v1268 = vunpack.c.h.b16 %v857
    %v1269 = vunpack.c.l.b16 %v858
    %v1270 = vunpack.c.h.b16 %v858
    %v1271 = vunpack.c.l.b16 %v859
    %v1272 = vunpack.c.h.b16 %v859
    %v1273 = vunpack.c.l.b16 %v860
    %v1274 = vunpack.c.h.b16 %v860
    %v1275 = vunpack.c.l.b16 %v861
    %v1276 = vunpack.c.h.b16 %v861
    %v1277 = vunpack.c.l.b16 %v862
    %v1278 = vunpack.c.h.b16 %v862
    %v1279 = vunpack.c.l.b16 %v863
    %v1280 = vunpack.c.h.b16 %v863
    %v1281 = vunpack.c.l.b16 %v864
    %v1282 = vunpack.c.h.b16 %v864
    %v1283 = vunpack.c.l.b16 %v865
    %v1284 = vunpack.c.h.b16 %v865
    %v1285 = vunpack.c.l.b16 %v866
    %v1286 = vunpack.c.h.b16 %v866
    %v1287 = vunpack.c.l.b16 %v867
    %v1288 = vunpack.c.h.b16 %v867
    %v1289 = vunpack.c.l.b16 %v868
    %v1290 = vunpack.c.h.b16 %v868
    %v1291 = vunpack.c.l.b16 %v869
    %v1292 = vunpack.c.h.b16 %v869
    %v1293 = vunpack.c.l.b16 %v870
    %v1294 = vunpack.c.h.b16 %v870
    %v1295 = vunpack.c.l.b16 %v871
    %v1296 = vunpack.c.h.b16 %v871
    %v1297 = vunpack.c.l.b16 %v872
    %v1298 = vunpack.c.h.b16 %v872
    %v1299 = vunpack.c.l.b16 %v873
    %v1300 = vunpack.c.h.b16 %v873
    %v1301 = vunpack.c.l.b16 %v874
    %v1302 = vunpack.c.h.b16 %v874
    %v1303 = vunpack.c.l.b16 %v875
    %v1304 = vunpack.c.h.b16 %v875
    %v1305 = vunpack.c.l.b16 %v876
    %v1306 = vunpack.c.h.b16 %v876
    %v1307 = vunpack.c.l.b16 %v877
    %v1308 = vunpack.c.h.b16 %v877
    %v1309 = vunpack.c.l.b16 %v878
    %v1310 = vunpack.c.h.b16 %v878
    %v1311 = vunpack.c.l.b16 %v879
    %v1312 = vunpack.c.h.b16 %v879
    %v1313 = vunpack.c.l.b16 %v880
    %v1314 = vunpack.c.h.b16 %v880
    %v1315 = vunpack.c.l.b16 %v881
    %v1316 = vunpack.c.h.b16 %v881
    %v1317 = vunpack.c.l.b16 %v882
    %v1318 = vunpack.c.h.b16 %v882
    %v1319 = vunpack.c.l.b16 %v883
    %v1320 = vunpack.c.h.b16 %v883
    %v1321 = vunpack.c.l.b16 %v884
    %v1322 = vunpack.c.h.b16 %v884
    %v1323 = vunpack.c.l.b16 %v885
    %v1324 = vunpack.c.h.b16 %v885
    %v1325 = vunpack.c.l.b16 %v886
    %v1326 = vunpack.c.h.b16 %v886
    %v1327 = vunpack.c.l.b16 %v887
    %v1328 = vunpack.c.h.b16 %v887
    %v1329 = vunpack.c.l.b16 %v888
    %v1330 = vunpack.c.h.b16 %v888
    %v1331 = vunpack.c.l.b16 %v889
    %v1332 = vunpack.c.h.b16 %v889
    %v1333 = vunpack.c.l.b16 %v890
    %v1334 = vunpack.c.h.b16 %v890
    %v1335 = vunpack.c.l.b16 %v891
    %v1336 = vunpack.c.h.b16 %v891
    %v1337 = vunpack.c.l.b16 %v892
    %v1338 = vunpack.c.h.b16 %v892
    %v1339 = vunpack.c.l.b16 %v893
    %v1340 = vunpack.c.h.b16 %v893
    %v1341 = vunpack.c.l.b16 %v894
    %v1342 = vunpack.c.h.b16 %v894
    %v1343 = vunpack.c.l.b16 %v895
    %v1344 = vunpack.c.h.b16 %v895
    %v1345 = vunpack.c.l.b16 %v896
    %v1346 = vunpack.c.h.b16 %v896
    %v1347 = vunpack.c.l.b16 %v897
    %v1348 = vunpack.c.h.b16 %v897
    %v1349 = vunpack.c.l.b16 %v898
    %v1350 = vunpack.c.h.b16 %v898
    %v1351 = vunpack.c.l.b16 %v899
    %v1352 = vunpack.c.h.b16 %v899
    %v1353 = vunpack.c.l.b16 %v900
    %v1354 = vunpack.c.h.b16 %v900
    %v1355 = vunpack.c.l.b16 %v901
    %v1356 = vunpack.c.h.b16 %v901
    %v1357 = vunpack.c.l.b16 %v902
    %v1358 = vunpack.c.h.b16 %v902
    %v1359 = vunpack.c.l.b16 %v903
    %v1360 = vunpack.c.h.b16 %v903
    %v1361 = vunpack.c.l.b16 %v904
    %v1362 = vunpack.c.h.b16 %v904
    %v1363 = vunpack.c.l.b16 %v905
    %v1364 = vunpack.c.h.b16 %v905
    %v1365 = vunpack.c.l.b16 %v906
    %v1366 = vunpack.c.h.b16 %v906
    %v1367 = vunpack.c.l.b16 %v907
    %v1368 = vunpack.c.h.b16 %v907
    %v1369 = vunpack.c.l.b16 %v908
    %v1370 = vunpack.c.h.b16 %v908
    %v1371 = vunpack.c.l.b16 %v909
    %v1372 = vunpack.c.h.b16 %v909
    %v1373 = vunpack.c.l.b16 %v910
    %v1374 = vunpack.c.h.b16 %v910
    %v1375 = vunpack.c.l.b16 %v911
    %v1376 = vunpack.c.h.b16 %v911
    %v1377 = vunpack.c.l.b16 %v912
    %v1378 = vunpack.c.h.b16 %v912
    %v1379 = vunpack.c.l.b16 %v913
    %v1380 = vunpack.c.h.b16 %v913
    %v1381 = vunpack.c.l.b16 %v914
    %v1382 = vunpack.c.h.b16 %v914
    %v1383 = vpack.c.b16 %v1143, %v1127
    %v1384 = vpack.c.b16 %v1144, %v1128
    %v1385 = vpack.c.b16 %v1145, %v1129
    %v1386 = vpack.c.b16 %v1146, %v1130
    %v1387 = vpack.c.b16 %v1147, %v1131
    %v1388 = vpack.c.b16 %v1148, %v1132
    %v1389 = vpack.c.b16 %v1149, %v1133
    %v1390 = vpack.c.b16 %v1150, %v1134
    %v1391 = vpack.c.b16 %v1151, %v1135
    %v1392 = vpack.c.b16 %v1152, %v1136
    %v1393 = vpack.c.b16 %v1153, %v1137
    %v1394 = vpack.c.b16 %v1154, %v1138
    %v1395 = vpack.c.b16 %v1155, %v1139
    %v1396 = vpack.c.b16 %v1156, %v1140
    %v1397 = vpack.c.b16 %v1157, %v1141
    %v1398 = vpack.c.b16 %v1158, %v1142
    %v1399 = vpack.c.b16 %v1175, %v1159
    %v1400 = vpack.c.b16 %v1176, %v1160
    %v1401 = vpack.c.b16 %v1177, %v1161
    %v1402 = vpack.c.b16 %v1178, %v1162
    %v1403 = vpack.c.b16 %v1179, %v1163
    %v1404 = vpack.c.b16 %v1180, %v1164
    %v1405 = vpack.c.b16 %v1181, %v1165
    %v1406 = vpack.c.b16 %v1182, %v1166
    %v1407 = vpack.c.b16 %v1183, %v1167
    %v1408 = vpack.c.b16 %v1184, %v1168
    %v1409 = vpack.c.b16 %v1185, %v1169
    %v1410 = vpack.c.b16 %v1186, %v1170
    %v1411 = vpack.c.b16 %v1187, %v1171
    %v1412 = vpack.c.b16 %v1188, %v1172
    %v1413 = vpack.c.b16 %v1189, %v1173
    %v1414 = vpack.c.b16 %v1190, %v1174
    %v1415 = vpack.c.b16 %v1207, %v1191
    %v1416 = vpack.c.b16 %v1208, %v1192
    %v1417 = vpack.c.b16 %v1209, %v1193
    %v1418 = vpack.c.b16 %v1210, %v1194
    %v1419 = vpack.c.b16 %v1211, %v1195
    %v1420 = vpack.c.b16 %v1212, %v1196
    %v1421 = vpack.c.b16 %v1213, %v1197
    %v1422 = vpack.c.b16 %v1214, %v1198
    %v1423 = vpack.c.b16 %v1215, %v1199
    %v1424 = vpack.c.b16 %v1216, %v1200
    %v1425 = vpack.c.b16 %v1217, %v1201
    %v1426 = vpack.c.b16 %v1218, %v1202
    %v1427 = vpack.c.b16 %v1219, %v1203
    %v1428 = vpack.c.b16 %v1220, %v1204
    %v1429 = vpack.c.b16 %v1221, %v1205
    %v1430 = vpack.c.b16 %v1222, %v1206
    %v1431 = vpack.c.b16 %v1239, %v1223
    %v1432 = vpack.c.b16 %v1240, %v1224
    %v1433 = vpack.c.b16 %v1241, %v1225
    %v1434 = vpack.c.b16 %v1242, %v1226
    %v1435 = vpack.c.b16 %v1243, %v1227
    %v1436 = vpack.c.b16 %v1244, %v1228
    %v1437 = vpack.c.b16 %v1245, %v1229
    %v1438 = vpack.c.b16 %v1246, %v1230
    %v1439 = vpack.c.b16 %v1247, %v1231
    %v1440 = vpack.c.b16 %v1248, %v1232
    %v1441 = vpack.c.b16 %v1249, %v1233
    %v1442 = vpack.c.b16 %v1250, %v1234
    %v1443 = vpack.c.b16 %v1251, %v1235
    %v1444 = vpack.c.b16 %v1252, %v1236
    %v1445 = vpack.c.b16 %v1253, %v1237
    %v1446 = vpack.c.b16 %v1254, %v1238
    %v1447 = vpack.c.b16 %v1271, %v1255
    %v1448 = vpack.c.b16 %v1272, %v1256
    %v1449 = vpack.c.b16 %v1273, %v1257
    %v1450 = vpack.c.b16 %v1274, %v1258
    %v1451 = vpack.c.b16 %v1275, %v1259
    %v1452 = vpack.c.b16 %v1276, %v1260
    %v1453 = vpack.c.b16 %v1277, %v1261
    %v1454 = vpack.c.b16 %v1278, %v1262
    %v1455 = vpack.c.b16 %v1279, %v1263
    %v1456 = vpack.c.b16 %v1280, %v1264
    %v1457 = vpack.c.b16 %v1281, %v1265
    %v1458 = vpack.c.b16 %v1282, %v1266
    %v1459 = vpack.c.b16 %v1283, %v1267
    %v1460 = vpack.c.b16 %v1284, %v1268
    %v1461 = vpack.c.b16 %v1285, %v1269
    %v1462 = vpack.c.b16 %v1286, %v1270
    %v1463 = vpack.c.b16 %v1303, %v1287
    %v1464 = vpack.c.b16 %v1304, %v1288
    %v1465 = vpack.c.b16 %v1305, %v1289
    %v1466 = vpack.c.b16 %v1306, %v1290
    %v1467 = vpack.c.b16 %v1307, %v1291
    %v1468 = vpack.c.b16 %v1308, %v1292
    %v1469 = vpack.c.b16 %v1309, %v1293
    %v1470 = vpack.c.b16 %v1310, %v1294
    %v1471 = vpack.c.b16 %v1311, %v1295
    %v1472 = vpack.c.b16 %v1312, %v1296
    %v1473 = vpack.c.b16 %v1313, %v1297
    %v1474 = vpack.c.b16 %v1314, %v1298
    %v1475 = vpack.c.b16 %v1315, %v1299
    %v1476 = vpack.c.b16 %v1316, %v1300
    %v1477 = vpack.c.b16 %v1317, %v1301
    %v1478 = vpack.c.b16 %v1318, %v1302
    %v1479 = vpack.c.b16 %v1335, %v1319
    %v1480 = vpack.c.b16 %v1336, %v1320
    %v1481 = vpack.c.b16 %v1337, %v1321
    %v1482 = vpack.c.b16 %v1338, %v1322
    %v1483 = vpack.c.b16 %v1339, %v1323
    %v1484 = vpack.c.b16 %v1340, %v1324
    %v1485 = vpack.c.b16 %v1341, %v1325
    %v1486 = vpack.c.b16 %v1342, %v1326
    %v1487 = vpack.c.b16 %v1343, %v1327
    %v1488 = vpack.c.b16 %v1344, %v1328
    %v1489 = vpack.c.b16 %v1345, %v1329
    %v1490 = vpack.c.b16 %v1346, %v1330
    %v1491 = vpack.c.b16 %v1347, %v1331
    %v1492 = vpack.c.b16 %v1348, %v1332
    %v1493 = vpack.c.b16 %v1349, %v1333
    %v1494 = vpack.c.b16 %v1350, %v1334
    %v1495 = vpack.c.b16 %v1367, %v1351
    %v1496 = vpack.c.b16 %v1368, %v1352
    %v1497 = vpack.c.b16 %v1369, %v1353
    %v1498 = vpack.c.b16 %v1370, %v1354
    %v1499 = vpack.c.b16 %v1371, %v1355
    %v1500 = vpack.c.b16 %v1372, %v1356
    %v1501 = vpack.c.b16 %v1373, %v1357
    %v1502 = vpack.c.b16 %v1374, %v1358
    %v1503 = vpack.c.b16 %v1375, %v1359
    %v1504 = vpack.c.b16 %v1376, %v1360
    %v1505 = vpack.c.b16 %v1377, %v1361
    %v1506 = vpack.c.b16 %v1378, %v1362
    %v1507 = vpack.c.b16 %v1379, %v1363
    %v1508 = vpack.c.b16 %v1380, %v1364
    %v1509 = vpack.c.b16 %v1381, %v1365
    %v1510 = vpack.c.b16 %v1382, %v1366
    %1639 = vmatprep.subr.bf16.mxu0 %v1384
    %1640 = vmatpush1.bf16.msra.mxu0 %v1383
    %1641 = vmatprep.subr.bf16.mxu0 %v1400
    %1642 = vmatpush1.bf16.msra.mxu0 %v1399
    %1643 = vmatprep.subr.bf16.mxu0 %v1416
    %1644 = vmatpush1.bf16.msra.mxu0 %v1415
    %1645 = vmatprep.subr.bf16.mxu0 %v1432
    %1646 = vmatpush1.bf16.msra.mxu0 %v1431
    %1647 = vmatprep.subr.bf16.mxu0 %v1448
    %1648 = vmatpush1.bf16.msra.mxu0 %v1447
    %1649 = vmatprep.subr.bf16.mxu0 %v1464
    %1650 = vmatpush1.bf16.msra.mxu0 %v1463
    %1651 = vmatprep.subr.bf16.mxu0 %v1480
    %1652 = vmatpush1.bf16.msra.mxu0 %v1479
    %1653 = vmatprep.subr.bf16.mxu0 %v1496
    %1654 = vmatpush1.bf16.msra.mxu0 %v1495
    %1655 = vmatprep.subr.bf16.mxu0 0
    %1656 = vmatpush1.bf16.msra.mxu0 0
    %1657 = vmatprep.subr.bf16.mxu0 0
    %1658 = vmatpush1.bf16.msra.mxu0 0
    %1659 = vmatprep.subr.bf16.mxu0 0
    %1660 = vmatpush1.bf16.msra.mxu0 0
    %1661 = vmatprep.subr.bf16.mxu0 0
    %1662 = vmatpush1.bf16.msra.mxu0 0
    %1663 = vmatprep.subr.bf16.mxu0 0
    %1664 = vmatpush1.bf16.msra.mxu0 0
    %1665 = vmatprep.subr.bf16.mxu0 0
    %1666 = vmatpush1.bf16.msra.mxu0 0
    %1667 = vmatprep.subr.bf16.mxu0 0
    %1668 = vmatpush1.bf16.msra.mxu0 0
    %1669 = vmatprep.subr.bf16.mxu0 0
    %1670 = vmatpush1.bf16.msra.mxu0 0
    %1671 = vmatprep.mubr.bf16.mxu0 0
    %1672 = vmatmul.mubr.bf16.gmra.mrb[0].mxu0 %v786
    %v1673 = vpop.f32.mrb[0].mxu0
    %v1674 = vadd.f32 %v922, %v1673
    %v1675 = vpop.f32.mrb[0].mxu0
    %v1676 = vadd.f32 %v926, %v1675
    %v1677 = vpop.f32.mrb[0].mxu0
    %v1678 = vadd.f32 %v922, %v1677
    %v1679 = vpop.f32.mrb[0].mxu0
    %v1680 = vadd.f32 %v926, %v1679
    %1681 = vdwg.mxu0
    %1682 = vmatprep.subr.bf16.mxu0 %v1386
    %1683 = vmatpush1.bf16.msra.mxu0 %v1385
    %1684 = vmatprep.subr.bf16.mxu0 %v1402
    %1685 = vmatpush1.bf16.msra.mxu0 %v1401
    %1686 = vmatprep.subr.bf16.mxu0 %v1418
    %1687 = vmatpush1.bf16.msra.mxu0 %v1417
    %1688 = vmatprep.subr.bf16.mxu0 %v1434
    %1689 = vmatpush1.bf16.msra.mxu0 %v1433
    %1690 = vmatprep.subr.bf16.mxu0 %v1450
    %1691 = vmatpush1.bf16.msra.mxu0 %v1449
    %1692 = vmatprep.subr.bf16.mxu0 %v1466
    %1693 = vmatpush1.bf16.msra.mxu0 %v1465
    %1694 = vmatprep.subr.bf16.mxu0 %v1482
    %1695 = vmatpush1.bf16.msra.mxu0 %v1481
    %1696 = vmatprep.subr.bf16.mxu0 %v1498
    %1697 = vmatpush1.bf16.msra.mxu0 %v1497
    %1698 = vmatprep.subr.bf16.mxu0 0
    %1699 = vmatpush1.bf16.msra.mxu0 0
    %1700 = vmatprep.subr.bf16.mxu0 0
    %1701 = vmatpush1.bf16.msra.mxu0 0
    %1702 = vmatprep.subr.bf16.mxu0 0
    %1703 = vmatpush1.bf16.msra.mxu0 0
    %1704 = vmatprep.subr.bf16.mxu0 0
    %1705 = vmatpush1.bf16.msra.mxu0 0
    %1706 = vmatprep.subr.bf16.mxu0 0
    %1707 = vmatpush1.bf16.msra.mxu0 0
    %1708 = vmatprep.subr.bf16.mxu0 0
    %1709 = vmatpush1.bf16.msra.mxu0 0
    %1710 = vmatprep.subr.bf16.mxu0 0
    %1711 = vmatpush1.bf16.msra.mxu0 0
    %1712 = vmatprep.subr.bf16.mxu0 0
    %1713 = vmatpush1.bf16.msra.mxu0 0
    %1714 = vmatprep.mubr.bf16.mxu0 0
    %1715 = vmatmul.mubr.bf16.gmra.mrb[0].mxu0 %v786
    %v1716 = vpop.f32.mrb[0].mxu0
    %v1717 = vadd.f32 %v930, %v1716
    %v1718 = vpop.f32.mrb[0].mxu0
    %v1719 = vadd.f32 %v934, %v1718
    %v1720 = vpop.f32.mrb[0].mxu0
    %v1721 = vadd.f32 %v930, %v1720
    %v1722 = vpop.f32.mrb[0].mxu0
    %v1723 = vadd.f32 %v934, %v1722
    %1724 = vdwg.mxu0
    %1725 = vmatprep.subr.bf16.mxu0 %v1388
    %1726 = vmatpush1.bf16.msra.mxu0 %v1387
    %1727 = vmatprep.subr.bf16.mxu0 %v1404
    %1728 = vmatpush1.bf16.msra.mxu0 %v1403
    %1729 = vmatprep.subr.bf16.mxu0 %v1420
    %1730 = vmatpush1.bf16.msra.mxu0 %v1419
    %1731 = vmatprep.subr.bf16.mxu0 %v1436
    %1732 = vmatpush1.bf16.msra.mxu0 %v1435
    %1733 = vmatprep.subr.bf16.mxu0 %v1452
    %1734 = vmatpush1.bf16.msra.mxu0 %v1451
    %1735 = vmatprep.subr.bf16.mxu0 %v1468
    %1736 = vmatpush1.bf16.msra.mxu0 %v1467
    %1737 = vmatprep.subr.bf16.mxu0 %v1484
    %1738 = vmatpush1.bf16.msra.mxu0 %v1483
    %1739 = vmatprep.subr.bf16.mxu0 %v1500
    %1740 = vmatpush1.bf16.msra.mxu0 %v1499
    %1741 = vmatprep.subr.bf16.mxu0 0
    %1742 = vmatpush1.bf16.msra.mxu0 0
    %1743 = vmatprep.subr.bf16.mxu0 0
    %1744 = vmatpush1.bf16.msra.mxu0 0
    %1745 = vmatprep.subr.bf16.mxu0 0
    %1746 = vmatpush1.bf16.msra.mxu0 0
    %1747 = vmatprep.subr.bf16.mxu0 0
    %1748 = vmatpush1.bf16.msra.mxu0 0
    %1749 = vmatprep.subr.bf16.mxu0 0
    %1750 = vmatpush1.bf16.msra.mxu0 0
    %1751 = vmatprep.subr.bf16.mxu0 0
    %1752 = vmatpush1.bf16.msra.mxu0 0
    %1753 = vmatprep.subr.bf16.mxu0 0
    %1754 = vmatpush1.bf16.msra.mxu0 0
    %1755 = vmatprep.subr.bf16.mxu0 0
    %1756 = vmatpush1.bf16.msra.mxu0 0
    %1757 = vmatprep.mubr.bf16.mxu0 0
    %1758 = vmatmul.mubr.bf16.gmra.mrb[0].mxu0 %v786
    %v1759 = vpop.f32.mrb[0].mxu0
    %v1760 = vadd.f32 %v938, %v1759
    %v1761 = vpop.f32.mrb[0].mxu0
    %v1762 = vadd.f32 %v942, %v1761
    %v1763 = vpop.f32.mrb[0].mxu0
    %v1764 = vadd.f32 %v938, %v1763
    %v1765 = vpop.f32.mrb[0].mxu0
    %v1766 = vadd.f32 %v942, %v1765
    %1767 = vdwg.mxu0
    %1768 = vmatprep.subr.bf16.mxu0 %v1390
    %1769 = vmatpush1.bf16.msra.mxu0 %v1389
    %1770 = vmatprep.subr.bf16.mxu0 %v1406
    %1771 = vmatpush1.bf16.msra.mxu0 %v1405
    %1772 = vmatprep.subr.bf16.mxu0 %v1422
    %1773 = vmatpush1.bf16.msra.mxu0 %v1421
    %1774 = vmatprep.subr.bf16.mxu0 %v1438
    %1775 = vmatpush1.bf16.msra.mxu0 %v1437
    %1776 = vmatprep.subr.bf16.mxu0 %v1454
    %1777 = vmatpush1.bf16.msra.mxu0 %v1453
    %1778 = vmatprep.subr.bf16.mxu0 %v1470
    %1779 = vmatpush1.bf16.msra.mxu0 %v1469
    %1780 = vmatprep.subr.bf16.mxu0 %v1486
    %1781 = vmatpush1.bf16.msra.mxu0 %v1485
    %1782 = vmatprep.subr.bf16.mxu0 %v1502
    %1783 = vmatpush1.bf16.msra.mxu0 %v1501
    %1784 = vmatprep.subr.bf16.mxu0 0
    %1785 = vmatpush1.bf16.msra.mxu0 0
    %1786 = vmatprep.subr.bf16.mxu0 0
    %1787 = vmatpush1.bf16.msra.mxu0 0
    %1788 = vmatprep.subr.bf16.mxu0 0
    %1789 = vmatpush1.bf16.msra.mxu0 0
    %1790 = vmatprep.subr.bf16.mxu0 0
    %1791 = vmatpush1.bf16.msra.mxu0 0
    %1792 = vmatprep.subr.bf16.mxu0 0
    %1793 = vmatpush1.bf16.msra.mxu0 0
    %1794 = vmatprep.subr.bf16.mxu0 0
    %1795 = vmatpush1.bf16.msra.mxu0 0
    %1796 = vmatprep.subr.bf16.mxu0 0
    %1797 = vmatpush1.bf16.msra.mxu0 0
    %1798 = vmatprep.subr.bf16.mxu0 0
    %1799 = vmatpush1.bf16.msra.mxu0 0
    %1800 = vmatprep.mubr.bf16.mxu0 0
    %1801 = vmatmul.mubr.bf16.gmra.mrb[0].mxu0 %v786
    %v1802 = vpop.f32.mrb[0].mxu0
    %v1803 = vadd.f32 %v946, %v1802
    %v1804 = vpop.f32.mrb[0].mxu0
    %v1805 = vadd.f32 %v950, %v1804
    %v1806 = vpop.f32.mrb[0].mxu0
    %v1807 = vadd.f32 %v946, %v1806
    %v1808 = vpop.f32.mrb[0].mxu0
    %v1809 = vadd.f32 %v950, %v1808
    %1810 = vdwg.mxu0
    %1811 = vmatprep.subr.bf16.mxu0 %v1392
    %1812 = vmatpush1.bf16.msra.mxu0 %v1391
    %1813 = vmatprep.subr.bf16.mxu0 %v1408
    %1814 = vmatpush1.bf16.msra.mxu0 %v1407
    %1815 = vmatprep.subr.bf16.mxu0 %v1424
    %1816 = vmatpush1.bf16.msra.mxu0 %v1423
    %1817 = vmatprep.subr.bf16.mxu0 %v1440
    %1818 = vmatpush1.bf16.msra.mxu0 %v1439
    %1819 = vmatprep.subr.bf16.mxu0 %v1456
    %1820 = vmatpush1.bf16.msra.mxu0 %v1455
    %1821 = vmatprep.subr.bf16.mxu0 %v1472
    %1822 = vmatpush1.bf16.msra.mxu0 %v1471
    %1823 = vmatprep.subr.bf16.mxu0 %v1488
    %1824 = vmatpush1.bf16.msra.mxu0 %v1487
    %1825 = vmatprep.subr.bf16.mxu0 %v1504
    %1826 = vmatpush1.bf16.msra.mxu0 %v1503
    %1827 = vmatprep.subr.bf16.mxu0 0
    %1828 = vmatpush1.bf16.msra.mxu0 0
    %1829 = vmatprep.subr.bf16.mxu0 0
    %1830 = vmatpush1.bf16.msra.mxu0 0
    %1831 = vmatprep.subr.bf16.mxu0 0
    %1832 = vmatpush1.bf16.msra.mxu0 0
    %1833 = vmatprep.subr.bf16.mxu0 0
    %1834 = vmatpush1.bf16.msra.mxu0 0
    %1835 = vmatprep.subr.bf16.mxu0 0
    %1836 = vmatpush1.bf16.msra.mxu0 0
    %1837 = vmatprep.subr.bf16.mxu0 0
    %1838 = vmatpush1.bf16.msra.mxu0 0
    %1839 = vmatprep.subr.bf16.mxu0 0
    %1840 = vmatpush1.bf16.msra.mxu0 0
    %1841 = vmatprep.subr.bf16.mxu0 0
    %1842 = vmatpush1.bf16.msra.mxu0 0
    %1843 = vmatprep.mubr.bf16.mxu0 0
    %1844 = vmatmul.mubr.bf16.gmra.mrb[0].mxu0 %v786
    %v1845 = vpop.f32.mrb[0].mxu0
    %v1846 = vadd.f32 %v954, %v1845
    %v1847 = vpop.f32.mrb[0].mxu0
    %v1848 = vadd.f32 %v958, %v1847
    %v1849 = vpop.f32.mrb[0].mxu0
    %v1850 = vadd.f32 %v954, %v1849
    %v1851 = vpop.f32.mrb[0].mxu0
    %v1852 = vadd.f32 %v958, %v1851
    %1853 = vdwg.mxu0
    %1854 = vmatprep.subr.bf16.mxu0 %v1394
    %1855 = vmatpush1.bf16.msra.mxu0 %v1393
    %1856 = vmatprep.subr.bf16.mxu0 %v1410
    %1857 = vmatpush1.bf16.msra.mxu0 %v1409
    %1858 = vmatprep.subr.bf16.mxu0 %v1426
    %1859 = vmatpush1.bf16.msra.mxu0 %v1425
    %1860 = vmatprep.subr.bf16.mxu0 %v1442
    %1861 = vmatpush1.bf16.msra.mxu0 %v1441
    %1862 = vmatprep.subr.bf16.mxu0 %v1458
    %1863 = vmatpush1.bf16.msra.mxu0 %v1457
    %1864 = vmatprep.subr.bf16.mxu0 %v1474
    %1865 = vmatpush1.bf16.msra.mxu0 %v1473
    %1866 = vmatprep.subr.bf16.mxu0 %v1490
    %1867 = vmatpush1.bf16.msra.mxu0 %v1489
    %1868 = vmatprep.subr.bf16.mxu0 %v1506
    %1869 = vmatpush1.bf16.msra.mxu0 %v1505
    %1870 = vmatprep.subr.bf16.mxu0 0
    %1871 = vmatpush1.bf16.msra.mxu0 0
    %1872 = vmatprep.subr.bf16.mxu0 0
    %1873 = vmatpush1.bf16.msra.mxu0 0
    %1874 = vmatprep.subr.bf16.mxu0 0
    %1875 = vmatpush1.bf16.msra.mxu0 0
    %1876 = vmatprep.subr.bf16.mxu0 0
    %1877 = vmatpush1.bf16.msra.mxu0 0
    %1878 = vmatprep.subr.bf16.mxu0 0
    %1879 = vmatpush1.bf16.msra.mxu0 0
    %1880 = vmatprep.subr.bf16.mxu0 0
    %1881 = vmatpush1.bf16.msra.mxu0 0
    %1882 = vmatprep.subr.bf16.mxu0 0
    %1883 = vmatpush1.bf16.msra.mxu0 0
    %1884 = vmatprep.subr.bf16.mxu0 0
    %1885 = vmatpush1.bf16.msra.mxu0 0
    %1886 = vmatprep.mubr.bf16.mxu0 0
    %1887 = vmatmul.mubr.bf16.gmra.mrb[0].mxu0 %v786
    %v1888 = vpop.f32.mrb[0].mxu0
    %v1889 = vadd.f32 %v962, %v1888
    %v1890 = vpop.f32.mrb[0].mxu0
    %v1891 = vadd.f32 %v966, %v1890
    %v1892 = vpop.f32.mrb[0].mxu0
    %v1893 = vadd.f32 %v962, %v1892
    %v1894 = vpop.f32.mrb[0].mxu0
    %v1895 = vadd.f32 %v966, %v1894
    %1896 = vdwg.mxu0
    %1897 = vmatprep.subr.bf16.mxu0 %v1396
    %1898 = vmatpush1.bf16.msra.mxu0 %v1395
    %1899 = vmatprep.subr.bf16.mxu0 %v1412
    %1900 = vmatpush1.bf16.msra.mxu0 %v1411
    %1901 = vmatprep.subr.bf16.mxu0 %v1428
    %1902 = vmatpush1.bf16.msra.mxu0 %v1427
    %1903 = vmatprep.subr.bf16.mxu0 %v1444
    %1904 = vmatpush1.bf16.msra.mxu0 %v1443
    %1905 = vmatprep.subr.bf16.mxu0 %v1460
    %1906 = vmatpush1.bf16.msra.mxu0 %v1459
    %1907 = vmatprep.subr.bf16.mxu0 %v1476
    %1908 = vmatpush1.bf16.msra.mxu0 %v1475
    %1909 = vmatprep.subr.bf16.mxu0 %v1492
    %1910 = vmatpush1.bf16.msra.mxu0 %v1491
    %1911 = vmatprep.subr.bf16.mxu0 %v1508
    %1912 = vmatpush1.bf16.msra.mxu0 %v1507
    %1913 = vmatprep.subr.bf16.mxu0 0
    %1914 = vmatpush1.bf16.msra.mxu0 0
    %1915 = vmatprep.subr.bf16.mxu0 0
    %1916 = vmatpush1.bf16.msra.mxu0 0
    %1917 = vmatprep.subr.bf16.mxu0 0
    %1918 = vmatpush1.bf16.msra.mxu0 0
    %1919 = vmatprep.subr.bf16.mxu0 0
    %1920 = vmatpush1.bf16.msra.mxu0 0
    %1921 = vmatprep.subr.bf16.mxu0 0
    %1922 = vmatpush1.bf16.msra.mxu0 0
    %1923 = vmatprep.subr.bf16.mxu0 0
    %1924 = vmatpush1.bf16.msra.mxu0 0
    %1925 = vmatprep.subr.bf16.mxu0 0
    %1926 = vmatpush1.bf16.msra.mxu0 0
    %1927 = vmatprep.subr.bf16.mxu0 0
    %1928 = vmatpush1.bf16.msra.mxu0 0
    %1929 = vmatprep.mubr.bf16.mxu0 0
    %1930 = vmatmul.mubr.bf16.gmra.mrb[0].mxu0 %v786
    %v1931 = vpop.f32.mrb[0].mxu0
    %v1932 = vadd.f32 %v970, %v1931
    %v1933 = vpop.f32.mrb[0].mxu0
    %v1934 = vadd.f32 %v974, %v1933
    %v1935 = vpop.f32.mrb[0].mxu0
    %v1936 = vadd.f32 %v970, %v1935
    %v1937 = vpop.f32.mrb[0].mxu0
    %v1938 = vadd.f32 %v974, %v1937
    %1939 = vdwg.mxu0
    %1940 = vmatprep.subr.bf16.mxu0 %v1398
    %1941 = vmatpush1.bf16.msra.mxu0 %v1397
    %1942 = vmatprep.subr.bf16.mxu0 %v1414
    %1943 = vmatpush1.bf16.msra.mxu0 %v1413
    %1944 = vmatprep.subr.bf16.mxu0 %v1430
    %1945 = vmatpush1.bf16.msra.mxu0 %v1429
    %1946 = vmatprep.subr.bf16.mxu0 %v1446
    %1947 = vmatpush1.bf16.msra.mxu0 %v1445
    %1948 = vmatprep.subr.bf16.mxu0 %v1462
    %1949 = vmatpush1.bf16.msra.mxu0 %v1461
    %1950 = vmatprep.subr.bf16.mxu0 %v1478
    %1951 = vmatpush1.bf16.msra.mxu0 %v1477
    %1952 = vmatprep.subr.bf16.mxu0 %v1494
    %1953 = vmatpush1.bf16.msra.mxu0 %v1493
    %1954 = vmatprep.subr.bf16.mxu0 %v1510
    %1955 = vmatpush1.bf16.msra.mxu0 %v1509
    %1956 = vmatprep.subr.bf16.mxu0 0
    %1957 = vmatpush1.bf16.msra.mxu0 0
    %1958 = vmatprep.subr.bf16.mxu0 0
    %1959 = vmatpush1.bf16.msra.mxu0 0
    %1960 = vmatprep.subr.bf16.mxu0 0
    %1961 = vmatpush1.bf16.msra.mxu0 0
    %1962 = vmatprep.subr.bf16.mxu0 0
    %1963 = vmatpush1.bf16.msra.mxu0 0
    %1964 = vmatprep.subr.bf16.mxu0 0
    %1965 = vmatpush1.bf16.msra.mxu0 0
    %1966 = vmatprep.subr.bf16.mxu0 0
    %1967 = vmatpush1.bf16.msra.mxu0 0
    %1968 = vmatprep.subr.bf16.mxu0 0
    %1969 = vmatpush1.bf16.msra.mxu0 0
    %1970 = vmatprep.subr.bf16.mxu0 0
    %1971 = vmatpush1.bf16.msra.mxu0 0
    %1972 = vmatprep.mubr.bf16.mxu0 0
    %1973 = vmatmul.mubr.bf16.gmra.mrb[0].mxu0 %v786
    %v1974 = vpop.f32.mrb[0].mxu0
    %v1975 = vadd.f32 %v978, %v1974
    %v1976 = vpop.f32.mrb[0].mxu0
    %v1977 = vadd.f32 %v982, %v1976
    %v1978 = vpop.f32.mrb[0].mxu0
    %v1979 = vadd.f32 %v978, %v1978
    %v1980 = vpop.f32.mrb[0].mxu0
    %v1981 = vadd.f32 %v982, %v1980
    %1982 = vdwg.mxu0
    %1983 = vst [vmem:[#allocation2] sm:$0x3] %v1674
    %1984 = vst [vmem:[#allocation2 + $0x8] sm:$0x3] %v1676
    %1985 = vst [vmem:[#allocation2 + $0x10] sm:$0x3] %v1717
    %1986 = vst [vmem:[#allocation2 + $0x18] sm:$0x3] %v1719
    %1987 = vst [vmem:[#allocation2 + $0x20] sm:$0x3] %v1760
    %1988 = vst [vmem:[#allocation2 + $0x28] sm:$0x3] %v1762
    %1989 = vst [vmem:[#allocation2 + $0x30] sm:$0x3] %v1803
    %1990 = vst [vmem:[#allocation2 + $0x38] sm:$0x3] %v1805
    %v1999 = vrot.slane %v1850, 4
    %v2000 = vrot.slane %v1852, 4
    %v2001 = vrot.slane %v1893, 4
    %v2002 = vrot.slane %v1895, 4
    %v2003 = vrot.slane %v1936, 4
    %v2004 = vrot.slane %v1938, 4
    %v2005 = vrot.slane %v1979, 4
    %v2006 = vrot.slane %v1981, 4
    %2015 = vst [vmem:[#allocation2] sm:$0xc] %v1999
    %2016 = vst [vmem:[#allocation2 + $0x8] sm:$0xc] %v2000
    %2017 = vst [vmem:[#allocation2 + $0x10] sm:$0xc] %v2001
    %2018 = vst [vmem:[#allocation2 + $0x18] sm:$0xc] %v2002
    %2019 = vst [vmem:[#allocation2 + $0x20] sm:$0xc] %v2003
    %2020 = vst [vmem:[#allocation2 + $0x28] sm:$0xc] %v2004
    %2021 = vst [vmem:[#allocation2 + $0x30] sm:$0xc] %v2005
    %2022 = vst [vmem:[#allocation2 + $0x38] sm:$0xc] %v2006
    %v2031 = vrot.slane %v1674, 6
    %v2032 = vrot.slane %v1676, 6
    %v2033 = vrot.slane %v1717, 6
    %v2034 = vrot.slane %v1719, 6
    %v2035 = vrot.slane %v1760, 6
    %v2036 = vrot.slane %v1762, 6
    %v2037 = vrot.slane %v1803, 6
    %v2038 = vrot.slane %v1805, 6
    %2047 = vst [vmem:[#allocation2] sm:$0x30] %v2031
    %2048 = vst [vmem:[#allocation2 + $0x8] sm:$0x30] %v2032
    %2049 = vst [vmem:[#allocation2 + $0x10] sm:$0x30] %v2033
    %2050 = vst [vmem:[#allocation2 + $0x18] sm:$0x30] %v2034
    %2051 = vst [vmem:[#allocation2 + $0x20] sm:$0x30] %v2035
    %2052 = vst [vmem:[#allocation2 + $0x28] sm:$0x30] %v2036
    %2053 = vst [vmem:[#allocation2 + $0x30] sm:$0x30] %v2037
    %2054 = vst [vmem:[#allocation2 + $0x38] sm:$0x30] %v2038
    %v2055 = vrot.slane %v1850, 6
    %v2056 = vrot.slane %v1852, 6
    %v2057 = vrot.slane %v1893, 6
    %v2058 = vrot.slane %v1895, 6
    %v2059 = vrot.slane %v1936, 6
    %v2060 = vrot.slane %v1938, 6
    %v2061 = vrot.slane %v1979, 6
    %v2062 = vrot.slane %v1981, 6
    %2071 = vst [vmem:[#allocation2] sm:$0xc0] %v2055
    %2072 = vst [vmem:[#allocation2 + $0x8] sm:$0xc0] %v2056
    %2073 = vst [vmem:[#allocation2 + $0x10] sm:$0xc0] %v2057
    %2074 = vst [vmem:[#allocation2 + $0x18] sm:$0xc0] %v2058
    %2075 = vst [vmem:[#allocation2 + $0x20] sm:$0xc0] %v2059
    %2076 = vst [vmem:[#allocation2 + $0x28] sm:$0xc0] %v2060
    %2077 = vst [vmem:[#allocation2 + $0x30] sm:$0xc0] %v2061
    %2078 = vst [vmem:[#allocation2 + $0x38] sm:$0xc0] %v2062
    %v2079 = vrot.slane %v1674, 4
    %v2080 = vrot.slane %v1676, 4
    %v2081 = vrot.slane %v1717, 4
    %v2082 = vrot.slane %v1719, 4
    %v2083 = vrot.slane %v1760, 4
    %v2084 = vrot.slane %v1762, 4
    %v2085 = vrot.slane %v1803, 4
    %v2086 = vrot.slane %v1805, 4
    %2095 = vst [vmem:[#allocation2 + $0x40] sm:$0x3] %v2079
    %2096 = vst [vmem:[#allocation2 + $0x48] sm:$0x3] %v2080
    %2097 = vst [vmem:[#allocation2 + $0x50] sm:$0x3] %v2081
    %2098 = vst [vmem:[#allocation2 + $0x58] sm:$0x3] %v2082
    %2099 = vst [vmem:[#allocation2 + $0x60] sm:$0x3] %v2083
    %2100 = vst [vmem:[#allocation2 + $0x68] sm:$0x3] %v2084
    %2101 = vst [vmem:[#allocation2 + $0x70] sm:$0x3] %v2085
    %2102 = vst [vmem:[#allocation2 + $0x78] sm:$0x3] %v2086
    %2103 = vst [vmem:[#allocation2 + $0x40] sm:$0xc] %v1850
    %2104 = vst [vmem:[#allocation2 + $0x48] sm:$0xc] %v1852
    %2105 = vst [vmem:[#allocation2 + $0x50] sm:$0xc] %v1893
    %2106 = vst [vmem:[#allocation2 + $0x58] sm:$0xc] %v1895
    %2107 = vst [vmem:[#allocation2 + $0x60] sm:$0xc] %v1936
    %2108 = vst [vmem:[#allocation2 + $0x68] sm:$0xc] %v1938
    %2109 = vst [vmem:[#allocation2 + $0x70] sm:$0xc] %v1979
    %2110 = vst [vmem:[#allocation2 + $0x78] sm:$0xc] %v1981
    %v2111 = vrot.slane %v1674, 2
    %v2112 = vrot.slane %v1676, 2
    %v2113 = vrot.slane %v1717, 2
    %v2114 = vrot.slane %v1719, 2
    %v2115 = vrot.slane %v1760, 2
    %v2116 = vrot.slane %v1762, 2
    %v2117 = vrot.slane %v1803, 2
    %v2118 = vrot.slane %v1805, 2
    %2127 = vst [vmem:[#allocation2 + $0x40] sm:$0x30] %v2111
    %2128 = vst [vmem:[#allocation2 + $0x48] sm:$0x30] %v2112
    %2129 = vst [vmem:[#allocation2 + $0x50] sm:$0x30] %v2113
    %2130 = vst [vmem:[#allocation2 + $0x58] sm:$0x30] %v2114
    %2131 = vst [vmem:[#allocation2 + $0x60] sm:$0x30] %v2115
    %2132 = vst [vmem:[#allocation2 + $0x68] sm:$0x30] %v2116
    %2133 = vst [vmem:[#allocation2 + $0x70] sm:$0x30] %v2117
    %2134 = vst [vmem:[#allocation2 + $0x78] sm:$0x30] %v2118
    %v2135 = vrot.slane %v1850, 2
    %v2136 = vrot.slane %v1852, 2
    %v2137 = vrot.slane %v1893, 2
    %v2138 = vrot.slane %v1895, 2
    %v2139 = vrot.slane %v1936, 2
    %v2140 = vrot.slane %v1938, 2
    %v2141 = vrot.slane %v1979, 2
    %v2142 = vrot.slane %v1981, 2
    %2151 = vst [vmem:[#allocation2 + $0x40] sm:$0xc0] %v2135
    %2152 = vst [vmem:[#allocation2 + $0x48] sm:$0xc0] %v2136
    %2153 = vst [vmem:[#allocation2 + $0x50] sm:$0xc0] %v2137
    %2154 = vst [vmem:[#allocation2 + $0x58] sm:$0xc0] %v2138
    %2155 = vst [vmem:[#allocation2 + $0x60] sm:$0xc0] %v2139
    %2156 = vst [vmem:[#allocation2 + $0x68] sm:$0xc0] %v2140
    %2157 = vst [vmem:[#allocation2 + $0x70] sm:$0xc0] %v2141
    %2158 = vst [vmem:[#allocation2 + $0x78] sm:$0xc0] %v2142
    %2159 = vst [vmem:[#allocation2 + $0x80] sm:$0x3] %v1678
    %2160 = vst [vmem:[#allocation2 + $0x88] sm:$0x3] %v1680
    %2161 = vst [vmem:[#allocation2 + $0x90] sm:$0x3] %v1721
    %2162 = vst [vmem:[#allocation2 + $0x98] sm:$0x3] %v1723
    %2163 = vst [vmem:[#allocation2 + $0xa0] sm:$0x3] %v1764
    %2164 = vst [vmem:[#allocation2 + $0xa8] sm:$0x3] %v1766
    %2165 = vst [vmem:[#allocation2 + $0xb0] sm:$0x3] %v1807
    %2166 = vst [vmem:[#allocation2 + $0xb8] sm:$0x3] %v1809
    %v2175 = vrot.slane %v1846, 4
    %v2176 = vrot.slane %v1848, 4
    %v2177 = vrot.slane %v1889, 4
    %v2178 = vrot.slane %v1891, 4
    %v2179 = vrot.slane %v1932, 4
    %v2180 = vrot.slane %v1934, 4
    %v2181 = vrot.slane %v1975, 4
    %v2182 = vrot.slane %v1977, 4
    %2191 = vst [vmem:[#allocation2 + $0x80] sm:$0xc] %v2175
    %2192 = vst [vmem:[#allocation2 + $0x88] sm:$0xc] %v2176
    %2193 = vst [vmem:[#allocation2 + $0x90] sm:$0xc] %v2177
    %2194 = vst [vmem:[#allocation2 + $0x98] sm:$0xc] %v2178
    %2195 = vst [vmem:[#allocation2 + $0xa0] sm:$0xc] %v2179
    %2196 = vst [vmem:[#allocation2 + $0xa8] sm:$0xc] %v2180
    %2197 = vst [vmem:[#allocation2 + $0xb0] sm:$0xc] %v2181
    %2198 = vst [vmem:[#allocation2 + $0xb8] sm:$0xc] %v2182
    %v2207 = vrot.slane %v1678, 6
    %v2208 = vrot.slane %v1680, 6
    %v2209 = vrot.slane %v1721, 6
    %v2210 = vrot.slane %v1723, 6
    %v2211 = vrot.slane %v1764, 6
    %v2212 = vrot.slane %v1766, 6
    %v2213 = vrot.slane %v1807, 6
    %v2214 = vrot.slane %v1809, 6
    %2223 = vst [vmem:[#allocation2 + $0x80] sm:$0x30] %v2207
    %2224 = vst [vmem:[#allocation2 + $0x88] sm:$0x30] %v2208
    %2225 = vst [vmem:[#allocation2 + $0x90] sm:$0x30] %v2209
    %2226 = vst [vmem:[#allocation2 + $0x98] sm:$0x30] %v2210
    %2227 = vst [vmem:[#allocation2 + $0xa0] sm:$0x30] %v2211
    %2228 = vst [vmem:[#allocation2 + $0xa8] sm:$0x30] %v2212
    %2229 = vst [vmem:[#allocation2 + $0xb0] sm:$0x30] %v2213
    %2230 = vst [vmem:[#allocation2 + $0xb8] sm:$0x30] %v2214
    %v2231 = vrot.slane %v1846, 6
    %v2232 = vrot.slane %v1848, 6
    %v2233 = vrot.slane %v1889, 6
    %v2234 = vrot.slane %v1891, 6
    %v2235 = vrot.slane %v1932, 6
    %v2236 = vrot.slane %v1934, 6
    %v2237 = vrot.slane %v1975, 6
    %v2238 = vrot.slane %v1977, 6
    %2247 = vst [vmem:[#allocation2 + $0x80] sm:$0xc0] %v2231
    %2248 = vst [vmem:[#allocation2 + $0x88] sm:$0xc0] %v2232
    %2249 = vst [vmem:[#allocation2 + $0x90] sm:$0xc0] %v2233
    %2250 = vst [vmem:[#allocation2 + $0x98] sm:$0xc0] %v2234
    %2251 = vst [vmem:[#allocation2 + $0xa0] sm:$0xc0] %v2235
    %2252 = vst [vmem:[#allocation2 + $0xa8] sm:$0xc0] %v2236
    %2253 = vst [vmem:[#allocation2 + $0xb0] sm:$0xc0] %v2237
    %2254 = vst [vmem:[#allocation2 + $0xb8] sm:$0xc0] %v2238
    %v2255 = vrot.slane %v1678, 4
    %v2256 = vrot.slane %v1680, 4
    %v2257 = vrot.slane %v1721, 4
    %v2258 = vrot.slane %v1723, 4
    %v2259 = vrot.slane %v1764, 4
    %v2260 = vrot.slane %v1766, 4
    %v2261 = vrot.slane %v1807, 4
    %v2262 = vrot.slane %v1809, 4
    %2271 = vst [vmem:[#allocation2 + $0xc0] sm:$0x3] %v2255
    %2272 = vst [vmem:[#allocation2 + $0xc8] sm:$0x3] %v2256
    %2273 = vst [vmem:[#allocation2 + $0xd0] sm:$0x3] %v2257
    %2274 = vst [vmem:[#allocation2 + $0xd8] sm:$0x3] %v2258
    %2275 = vst [vmem:[#allocation2 + $0xe0] sm:$0x3] %v2259
    %2276 = vst [vmem:[#allocation2 + $0xe8] sm:$0x3] %v2260
    %2277 = vst [vmem:[#allocation2 + $0xf0] sm:$0x3] %v2261
    %2278 = vst [vmem:[#allocation2 + $0xf8] sm:$0x3] %v2262
    %2279 = vst [vmem:[#allocation2 + $0xc0] sm:$0xc] %v1846
    %2280 = vst [vmem:[#allocation2 + $0xc8] sm:$0xc] %v1848
    %2281 = vst [vmem:[#allocation2 + $0xd0] sm:$0xc] %v1889
    %2282 = vst [vmem:[#allocation2 + $0xd8] sm:$0xc] %v1891
    %2283 = vst [vmem:[#allocation2 + $0xe0] sm:$0xc] %v1932
    %2284 = vst [vmem:[#allocation2 + $0xe8] sm:$0xc] %v1934
    %2285 = vst [vmem:[#allocation2 + $0xf0] sm:$0xc] %v1975
    %2286 = vst [vmem:[#allocation2 + $0xf8] sm:$0xc] %v1977
    %v2287 = vrot.slane %v1678, 2
    %v2288 = vrot.slane %v1680, 2
    %v2289 = vrot.slane %v1721, 2
    %v2290 = vrot.slane %v1723, 2
    %v2291 = vrot.slane %v1764, 2
    %v2292 = vrot.slane %v1766, 2
    %v2293 = vrot.slane %v1807, 2
    %v2294 = vrot.slane %v1809, 2
    %2303 = vst [vmem:[#allocation2 + $0xc0] sm:$0x30] %v2287
    %2304 = vst [vmem:[#allocation2 + $0xc8] sm:$0x30] %v2288
    %2305 = vst [vmem:[#allocation2 + $0xd0] sm:$0x30] %v2289
    %2306 = vst [vmem:[#allocation2 + $0xd8] sm:$0x30] %v2290
    %2307 = vst [vmem:[#allocation2 + $0xe0] sm:$0x30] %v2291
    %2308 = vst [vmem:[#allocation2 + $0xe8] sm:$0x30] %v2292
    %2309 = vst [vmem:[#allocation2 + $0xf0] sm:$0x30] %v2293
    %2310 = vst [vmem:[#allocation2 + $0xf8] sm:$0x30] %v2294
    %v2311 = vrot.slane %v1846, 2
    %v2312 = vrot.slane %v1848, 2
    %v2313 = vrot.slane %v1889, 2
    %v2314 = vrot.slane %v1891, 2
    %v2315 = vrot.slane %v1932, 2
    %v2316 = vrot.slane %v1934, 2
    %v2317 = vrot.slane %v1975, 2
    %v2318 = vrot.slane %v1977, 2
    %2327 = vst [vmem:[#allocation2 + $0xc0] sm:$0xc0] %v2311
    %2328 = vst [vmem:[#allocation2 + $0xc8] sm:$0xc0] %v2312
    %2329 = vst [vmem:[#allocation2 + $0xd0] sm:$0xc0] %v2313
    %2330 = vst [vmem:[#allocation2 + $0xd8] sm:$0xc0] %v2314
    %2331 = vst [vmem:[#allocation2 + $0xe0] sm:$0xc0] %v2315
    %2332 = vst [vmem:[#allocation2 + $0xe8] sm:$0xc0] %v2316
    %2333 = vst [vmem:[#allocation2 + $0xf0] sm:$0xc0] %v2317
    %2334 = vst [vmem:[#allocation2 + $0xf8] sm:$0xc0] %v2318
    %v2335 = vlaneseq
    %v2336 = vshrl.u32 %v2335, 7
    %vm2337 = vcmp.lt.s32.totalorder %v2336, 2
    %v2338 = vsel %vm2337, 1, 0
    %v2339 = vcvt.s32.f32 %v2338
    %v2340 = vsub.f32 1.0, %v2339
    %v2341 = vld [vmem:[#allocation2] sm:$0xf]
    %v2342 = vld [vmem:[#allocation2 + $0x8] sm:$0xf]
    %v2343 = vld [vmem:[#allocation2 + $0x10] sm:$0xf]
    %v2344 = vld [vmem:[#allocation2 + $0x18] sm:$0xf]
    %v2345 = vld [vmem:[#allocation2 + $0x20] sm:$0xf]
    %v2346 = vld [vmem:[#allocation2 + $0x28] sm:$0xf]
    %v2347 = vld [vmem:[#allocation2 + $0x30] sm:$0xf]
    %v2348 = vld [vmem:[#allocation2 + $0x38] sm:$0xf]
    %v2349 = vxor.u32 %v2341, 2147483648
    %v2350 = vxor.u32 %v2342, 2147483648
    %v2351 = vmul.f32 %v2349, 1.442695
    %v2352 = vpow.pop %v2351
    %v2353 = vmul.f32 %v2350, 1.442695
    %v2354 = vpow.pop %v2353
    %v2355 = vadd.f32 %v2352, 1.0
    %v2356 = vadd.f32 %v2354, 1.0
    %v2357 = vrcp.pop %v2355
    %v2358 = vmul.f32 1.0, %v2357
    %v2359 = vrcp.pop %v2356
    %v2360 = vmul.f32 1.0, %v2359
    %v2361 = vxor.u32 %v2343, 2147483648
    %v2362 = vxor.u32 %v2344, 2147483648
    %v2363 = vmul.f32 %v2361, 1.442695
    %v2364 = vpow.pop %v2363
    %v2365 = vmul.f32 %v2362, 1.442695
    %v2366 = vpow.pop %v2365
    %v2367 = vadd.f32 %v2364, 1.0
    %v2368 = vadd.f32 %v2366, 1.0
    %v2369 = vrcp.pop %v2367
    %v2370 = vmul.f32 1.0, %v2369
    %v2371 = vrcp.pop %v2368
    %v2372 = vmul.f32 1.0, %v2371
    %v2373 = vtanh.pop %v2345
    %v2374 = vtanh.pop %v2346
    %v2375 = vxor.u32 %v2347, 2147483648
    %v2376 = vxor.u32 %v2348, 2147483648
    %v2377 = vmul.f32 %v2375, 1.442695
    %v2378 = vpow.pop %v2377
    %v2379 = vmul.f32 %v2376, 1.442695
    %v2380 = vpow.pop %v2379
    %v2381 = vadd.f32 %v2378, 1.0
    %v2382 = vadd.f32 %v2380, 1.0
    %v2383 = vrcp.pop %v2381
    %v2384 = vmul.f32 1.0, %v2383
    %v2385 = vrcp.pop %v2382
    %v2386 = vmul.f32 1.0, %v2385
    %v2387 = vmul.f32 %v2370, 0.0
    %v2388 = vmul.f32 %v2372, 0.0
    %v2389 = vmul.f32 %v2358, %v2373
    %v2390 = vmul.f32 %v2360, %v2374
    %v2391 = vadd.f32 %v2387, %v2389
    %v2392 = vadd.f32 %v2388, %v2390
    %v2393 = vtanh.pop %v2391
    %v2394 = vtanh.pop %v2392
    %v2395 = vmul.f32 %v2384, %v2393
    %v2396 = vmul.f32 %v2386, %v2394
    %v2397 = vld [vmem:[#allocation2] sm:$0xf0]
    %v2398 = vld [vmem:[#allocation2 + $0x8] sm:$0xf0]
    %v2399 = vld [vmem:[#allocation2 + $0x10] sm:$0xf0]
    %v2400 = vld [vmem:[#allocation2 + $0x18] sm:$0xf0]
    %v2401 = vld [vmem:[#allocation2 + $0x20] sm:$0xf0]
    %v2402 = vld [vmem:[#allocation2 + $0x28] sm:$0xf0]
    %v2403 = vld [vmem:[#allocation2 + $0x30] sm:$0xf0]
    %v2404 = vld [vmem:[#allocation2 + $0x38] sm:$0xf0]
    %v2405 = vmul.f32 %v2395, %v2339
    %v2406 = vmul.f32 %v2396, %v2339
    %v2407 = vmul.f32 %v2395, %v2340
    %v2408 = vmul.f32 %v2396, %v2340
    %v2409 = vpack.c.bf16 %v2405, %v2405
    %v2410 = vpack.c.bf16 %v2406, %v2406
    %v2411 = vpack.c.bf16 %v2407, %v2407
    %v2412 = vpack.c.bf16 %v2408, %v2408
    %v2413 = vld [vmem:[#allocation9] sm:$0xff]
    %v2414 = vld [vmem:[#allocation9 + $0x8] sm:$0xff]
    %v2415 = vld [vmem:[#allocation9 + $0x10] sm:$0xff]
    %v2416 = vld [vmem:[#allocation9 + $0x18] sm:$0xff]
    %v2417 = vld [vmem:[#allocation9 + $0x20] sm:$0xff]
    %v2418 = vld [vmem:[#allocation9 + $0x28] sm:$0xff]
    %v2419 = vld [vmem:[#allocation9 + $0x30] sm:$0xff]
    %v2420 = vld [vmem:[#allocation9 + $0x38] sm:$0xff]
    %v2421 = vld [vmem:[#allocation9 + $0x40] sm:$0xff]
    %v2422 = vld [vmem:[#allocation9 + $0x48] sm:$0xff]
    %v2423 = vld [vmem:[#allocation9 + $0x50] sm:$0xff]
    %v2424 = vld [vmem:[#allocation9 + $0x58] sm:$0xff]
    %v2425 = vld [vmem:[#allocation9 + $0x60] sm:$0xff]
    %v2426 = vld [vmem:[#allocation9 + $0x68] sm:$0xff]
    %v2427 = vld [vmem:[#allocation9 + $0x70] sm:$0xff]
    %v2428 = vld [vmem:[#allocation9 + $0x78] sm:$0xff]
    %v2429 = vld [vmem:[#allocation9 + $0x80] sm:$0xff]
    %v2430 = vld [vmem:[#allocation9 + $0x88] sm:$0xff]
    %v2431 = vld [vmem:[#allocation9 + $0x90] sm:$0xff]
    %v2432 = vld [vmem:[#allocation9 + $0x98] sm:$0xff]
    %v2433 = vld [vmem:[#allocation9 + $0xa0] sm:$0xff]
    %v2434 = vld [vmem:[#allocation9 + $0xa8] sm:$0xff]
    %v2435 = vld [vmem:[#allocation9 + $0xb0] sm:$0xff]
    %v2436 = vld [vmem:[#allocation9 + $0xb8] sm:$0xff]
    %v2437 = vld [vmem:[#allocation9 + $0xc0] sm:$0xff]
    %v2438 = vld [vmem:[#allocation9 + $0xc8] sm:$0xff]
    %v2439 = vld [vmem:[#allocation9 + $0xd0] sm:$0xff]
    %v2440 = vld [vmem:[#allocation9 + $0xd8] sm:$0xff]
    %v2441 = vld [vmem:[#allocation9 + $0xe0] sm:$0xff]
    %v2442 = vld [vmem:[#allocation9 + $0xe8] sm:$0xff]
    %v2443 = vld [vmem:[#allocation9 + $0xf0] sm:$0xff]
    %v2444 = vld [vmem:[#allocation9 + $0xf8] sm:$0xff]
    %v2445 = vld [vmem:[#allocation9 + $0x100] sm:$0xff]
    %v2446 = vld [vmem:[#allocation9 + $0x108] sm:$0xff]
    %v2447 = vld [vmem:[#allocation9 + $0x110] sm:$0xff]
    %v2448 = vld [vmem:[#allocation9 + $0x118] sm:$0xff]
    %v2449 = vld [vmem:[#allocation9 + $0x120] sm:$0xff]
    %v2450 = vld [vmem:[#allocation9 + $0x128] sm:$0xff]
    %v2451 = vld [vmem:[#allocation9 + $0x130] sm:$0xff]
    %v2452 = vld [vmem:[#allocation9 + $0x138] sm:$0xff]
    %v2453 = vld [vmem:[#allocation9 + $0x140] sm:$0xff]
    %v2454 = vld [vmem:[#allocation9 + $0x148] sm:$0xff]
    %v2455 = vld [vmem:[#allocation9 + $0x150] sm:$0xff]
    %v2456 = vld [vmem:[#allocation9 + $0x158] sm:$0xff]
    %v2457 = vld [vmem:[#allocation9 + $0x160] sm:$0xff]
    %v2458 = vld [vmem:[#allocation9 + $0x168] sm:$0xff]
    %v2459 = vld [vmem:[#allocation9 + $0x170] sm:$0xff]
    %v2460 = vld [vmem:[#allocation9 + $0x178] sm:$0xff]
    %v2461 = vld [vmem:[#allocation9 + $0x180] sm:$0xff]
    %v2462 = vld [vmem:[#allocation9 + $0x188] sm:$0xff]
    %v2463 = vld [vmem:[#allocation9 + $0x190] sm:$0xff]
    %v2464 = vld [vmem:[#allocation9 + $0x198] sm:$0xff]
    %v2465 = vld [vmem:[#allocation9 + $0x1a0] sm:$0xff]
    %v2466 = vld [vmem:[#allocation9 + $0x1a8] sm:$0xff]
    %v2467 = vld [vmem:[#allocation9 + $0x1b0] sm:$0xff]
    %v2468 = vld [vmem:[#allocation9 + $0x1b8] sm:$0xff]
    %v2469 = vld [vmem:[#allocation9 + $0x1c0] sm:$0xff]
    %v2470 = vld [vmem:[#allocation9 + $0x1c8] sm:$0xff]
    %v2471 = vld [vmem:[#allocation9 + $0x1d0] sm:$0xff]
    %v2472 = vld [vmem:[#allocation9 + $0x1d8] sm:$0xff]
    %v2473 = vld [vmem:[#allocation9 + $0x1e0] sm:$0xff]
    %v2474 = vld [vmem:[#allocation9 + $0x1e8] sm:$0xff]
    %v2475 = vld [vmem:[#allocation9 + $0x1f0] sm:$0xff]
    %v2476 = vld [vmem:[#allocation9 + $0x1f8] sm:$0xff]
    %v2477 = vld [vmem:[#allocation9 + $0x200] sm:$0xff]
    %v2478 = vld [vmem:[#allocation9 + $0x208] sm:$0xff]
    %v2479 = vld [vmem:[#allocation9 + $0x210] sm:$0xff]
    %v2480 = vld [vmem:[#allocation9 + $0x218] sm:$0xff]
    %v2481 = vld [vmem:[#allocation9 + $0x220] sm:$0xff]
    %v2482 = vld [vmem:[#allocation9 + $0x228] sm:$0xff]
    %v2483 = vld [vmem:[#allocation9 + $0x230] sm:$0xff]
    %v2484 = vld [vmem:[#allocation9 + $0x238] sm:$0xff]
    %v2485 = vld [vmem:[#allocation9 + $0x240] sm:$0xff]
    %v2486 = vld [vmem:[#allocation9 + $0x248] sm:$0xff]
    %v2487 = vld [vmem:[#allocation9 + $0x250] sm:$0xff]
    %v2488 = vld [vmem:[#allocation9 + $0x258] sm:$0xff]
    %v2489 = vld [vmem:[#allocation9 + $0x260] sm:$0xff]
    %v2490 = vld [vmem:[#allocation9 + $0x268] sm:$0xff]
    %v2491 = vld [vmem:[#allocation9 + $0x270] sm:$0xff]
    %v2492 = vld [vmem:[#allocation9 + $0x278] sm:$0xff]
    %v2493 = vld [vmem:[#allocation9 + $0x280] sm:$0xff]
    %v2494 = vld [vmem:[#allocation9 + $0x288] sm:$0xff]
    %v2495 = vld [vmem:[#allocation9 + $0x290] sm:$0xff]
    %v2496 = vld [vmem:[#allocation9 + $0x298] sm:$0xff]
    %v2497 = vld [vmem:[#allocation9 + $0x2a0] sm:$0xff]
    %v2498 = vld [vmem:[#allocation9 + $0x2a8] sm:$0xff]
    %v2499 = vld [vmem:[#allocation9 + $0x2b0] sm:$0xff]
    %v2500 = vld [vmem:[#allocation9 + $0x2b8] sm:$0xff]
    %v2501 = vld [vmem:[#allocation9 + $0x2c0] sm:$0xff]
    %v2502 = vld [vmem:[#allocation9 + $0x2c8] sm:$0xff]
    %v2503 = vld [vmem:[#allocation9 + $0x2d0] sm:$0xff]
    %v2504 = vld [vmem:[#allocation9 + $0x2d8] sm:$0xff]
    %v2505 = vld [vmem:[#allocation9 + $0x2e0] sm:$0xff]
    %v2506 = vld [vmem:[#allocation9 + $0x2e8] sm:$0xff]
    %v2507 = vld [vmem:[#allocation9 + $0x2f0] sm:$0xff]
    %v2508 = vld [vmem:[#allocation9 + $0x2f8] sm:$0xff]
    %v2509 = vld [vmem:[#allocation9 + $0x300] sm:$0xff]
    %v2510 = vld [vmem:[#allocation9 + $0x308] sm:$0xff]
    %v2511 = vld [vmem:[#allocation9 + $0x310] sm:$0xff]
    %v2512 = vld [vmem:[#allocation9 + $0x318] sm:$0xff]
    %v2513 = vld [vmem:[#allocation9 + $0x320] sm:$0xff]
    %v2514 = vld [vmem:[#allocation9 + $0x328] sm:$0xff]
    %v2515 = vld [vmem:[#allocation9 + $0x330] sm:$0xff]
    %v2516 = vld [vmem:[#allocation9 + $0x338] sm:$0xff]
    %v2517 = vld [vmem:[#allocation9 + $0x340] sm:$0xff]
    %v2518 = vld [vmem:[#allocation9 + $0x348] sm:$0xff]
    %v2519 = vld [vmem:[#allocation9 + $0x350] sm:$0xff]
    %v2520 = vld [vmem:[#allocation9 + $0x358] sm:$0xff]
    %v2521 = vld [vmem:[#allocation9 + $0x360] sm:$0xff]
    %v2522 = vld [vmem:[#allocation9 + $0x368] sm:$0xff]
    %v2523 = vld [vmem:[#allocation9 + $0x370] sm:$0xff]
    %v2524 = vld [vmem:[#allocation9 + $0x378] sm:$0xff]
    %v2525 = vld [vmem:[#allocation9 + $0x380] sm:$0xff]
    %v2526 = vld [vmem:[#allocation9 + $0x388] sm:$0xff]
    %v2527 = vld [vmem:[#allocation9 + $0x390] sm:$0xff]
    %v2528 = vld [vmem:[#allocation9 + $0x398] sm:$0xff]
    %v2529 = vld [vmem:[#allocation9 + $0x3a0] sm:$0xff]
    %v2530 = vld [vmem:[#allocation9 + $0x3a8] sm:$0xff]
    %v2531 = vld [vmem:[#allocation9 + $0x3b0] sm:$0xff]
    %v2532 = vld [vmem:[#allocation9 + $0x3b8] sm:$0xff]
    %v2533 = vld [vmem:[#allocation9 + $0x3c0] sm:$0xff]
    %v2534 = vld [vmem:[#allocation9 + $0x3c8] sm:$0xff]
    %v2535 = vld [vmem:[#allocation9 + $0x3d0] sm:$0xff]
    %v2536 = vld [vmem:[#allocation9 + $0x3d8] sm:$0xff]
    %v2537 = vld [vmem:[#allocation9 + $0x3e0] sm:$0xff]
    %v2538 = vld [vmem:[#allocation9 + $0x3e8] sm:$0xff]
    %v2539 = vld [vmem:[#allocation9 + $0x3f0] sm:$0xff]
    %v2540 = vld [vmem:[#allocation9 + $0x3f8] sm:$0xff]
    %v2541 = vld [vmem:[#allocation9 + $0x400] sm:$0xff]
    %v2542 = vld [vmem:[#allocation9 + $0x408] sm:$0xff]
    %v2543 = vld [vmem:[#allocation9 + $0x410] sm:$0xff]
    %v2544 = vld [vmem:[#allocation9 + $0x418] sm:$0xff]
    %v2545 = vld [vmem:[#allocation9 + $0x420] sm:$0xff]
    %v2546 = vld [vmem:[#allocation9 + $0x428] sm:$0xff]
    %v2547 = vld [vmem:[#allocation9 + $0x430] sm:$0xff]
    %v2548 = vld [vmem:[#allocation9 + $0x438] sm:$0xff]
    %v2549 = vld [vmem:[#allocation9 + $0x440] sm:$0xff]
    %v2550 = vld [vmem:[#allocation9 + $0x448] sm:$0xff]
    %v2551 = vld [vmem:[#allocation9 + $0x450] sm:$0xff]
    %v2552 = vld [vmem:[#allocation9 + $0x458] sm:$0xff]
    %v2553 = vld [vmem:[#allocation9 + $0x460] sm:$0xff]
    %v2554 = vld [vmem:[#allocation9 + $0x468] sm:$0xff]
    %v2555 = vld [vmem:[#allocation9 + $0x470] sm:$0xff]
    %v2556 = vld [vmem:[#allocation9 + $0x478] sm:$0xff]
    %v2557 = vld [vmem:[#allocation9 + $0x480] sm:$0xff]
    %v2558 = vld [vmem:[#allocation9 + $0x488] sm:$0xff]
    %v2559 = vld [vmem:[#allocation9 + $0x490] sm:$0xff]
    %v2560 = vld [vmem:[#allocation9 + $0x498] sm:$0xff]
    %v2561 = vld [vmem:[#allocation9 + $0x4a0] sm:$0xff]
    %v2562 = vld [vmem:[#allocation9 + $0x4a8] sm:$0xff]
    %v2563 = vld [vmem:[#allocation9 + $0x4b0] sm:$0xff]
    %v2564 = vld [vmem:[#allocation9 + $0x4b8] sm:$0xff]
    %v2565 = vld [vmem:[#allocation9 + $0x4c0] sm:$0xff]
    %v2566 = vld [vmem:[#allocation9 + $0x4c8] sm:$0xff]
    %v2567 = vld [vmem:[#allocation9 + $0x4d0] sm:$0xff]
    %v2568 = vld [vmem:[#allocation9 + $0x4d8] sm:$0xff]
    %v2569 = vld [vmem:[#allocation9 + $0x4e0] sm:$0xff]
    %v2570 = vld [vmem:[#allocation9 + $0x4e8] sm:$0xff]
    %v2571 = vld [vmem:[#allocation9 + $0x4f0] sm:$0xff]
    %v2572 = vld [vmem:[#allocation9 + $0x4f8] sm:$0xff]
    %v2573 = vld [vmem:[#allocation9 + $0x500] sm:$0xff]
    %v2574 = vld [vmem:[#allocation9 + $0x508] sm:$0xff]
    %v2575 = vld [vmem:[#allocation9 + $0x510] sm:$0xff]
    %v2576 = vld [vmem:[#allocation9 + $0x518] sm:$0xff]
    %v2577 = vld [vmem:[#allocation9 + $0x520] sm:$0xff]
    %v2578 = vld [vmem:[#allocation9 + $0x528] sm:$0xff]
    %v2579 = vld [vmem:[#allocation9 + $0x530] sm:$0xff]
    %v2580 = vld [vmem:[#allocation9 + $0x538] sm:$0xff]
    %v2581 = vld [vmem:[#allocation9 + $0x540] sm:$0xff]
    %v2582 = vld [vmem:[#allocation9 + $0x548] sm:$0xff]
    %v2583 = vld [vmem:[#allocation9 + $0x550] sm:$0xff]
    %v2584 = vld [vmem:[#allocation9 + $0x558] sm:$0xff]
    %v2585 = vld [vmem:[#allocation9 + $0x560] sm:$0xff]
    %v2586 = vld [vmem:[#allocation9 + $0x568] sm:$0xff]
    %v2587 = vld [vmem:[#allocation9 + $0x570] sm:$0xff]
    %v2588 = vld [vmem:[#allocation9 + $0x578] sm:$0xff]
    %v2589 = vld [vmem:[#allocation9 + $0x580] sm:$0xff]
    %v2590 = vld [vmem:[#allocation9 + $0x588] sm:$0xff]
    %v2591 = vld [vmem:[#allocation9 + $0x590] sm:$0xff]
    %v2592 = vld [vmem:[#allocation9 + $0x598] sm:$0xff]
    %v2593 = vld [vmem:[#allocation9 + $0x5a0] sm:$0xff]
    %v2594 = vld [vmem:[#allocation9 + $0x5a8] sm:$0xff]
    %v2595 = vld [vmem:[#allocation9 + $0x5b0] sm:$0xff]
    %v2596 = vld [vmem:[#allocation9 + $0x5b8] sm:$0xff]
    %v2597 = vld [vmem:[#allocation9 + $0x5c0] sm:$0xff]
    %v2598 = vld [vmem:[#allocation9 + $0x5c8] sm:$0xff]
    %v2599 = vld [vmem:[#allocation9 + $0x5d0] sm:$0xff]
    %v2600 = vld [vmem:[#allocation9 + $0x5d8] sm:$0xff]
    %v2601 = vld [vmem:[#allocation9 + $0x5e0] sm:$0xff]
    %v2602 = vld [vmem:[#allocation9 + $0x5e8] sm:$0xff]
    %v2603 = vld [vmem:[#allocation9 + $0x5f0] sm:$0xff]
    %v2604 = vld [vmem:[#allocation9 + $0x5f8] sm:$0xff]
    %v2605 = vld [vmem:[#allocation9 + $0x600] sm:$0xff]
    %v2606 = vld [vmem:[#allocation9 + $0x608] sm:$0xff]
    %v2607 = vld [vmem:[#allocation9 + $0x610] sm:$0xff]
    %v2608 = vld [vmem:[#allocation9 + $0x618] sm:$0xff]
    %v2609 = vld [vmem:[#allocation9 + $0x620] sm:$0xff]
    %v2610 = vld [vmem:[#allocation9 + $0x628] sm:$0xff]
    %v2611 = vld [vmem:[#allocation9 + $0x630] sm:$0xff]
    %v2612 = vld [vmem:[#allocation9 + $0x638] sm:$0xff]
    %v2613 = vld [vmem:[#allocation9 + $0x640] sm:$0xff]
    %v2614 = vld [vmem:[#allocation9 + $0x648] sm:$0xff]
    %v2615 = vld [vmem:[#allocation9 + $0x650] sm:$0xff]
    %v2616 = vld [vmem:[#allocation9 + $0x658] sm:$0xff]
    %v2617 = vld [vmem:[#allocation9 + $0x660] sm:$0xff]
    %v2618 = vld [vmem:[#allocation9 + $0x668] sm:$0xff]
    %v2619 = vld [vmem:[#allocation9 + $0x670] sm:$0xff]
    %v2620 = vld [vmem:[#allocation9 + $0x678] sm:$0xff]
    %v2621 = vld [vmem:[#allocation9 + $0x680] sm:$0xff]
    %v2622 = vld [vmem:[#allocation9 + $0x688] sm:$0xff]
    %v2623 = vld [vmem:[#allocation9 + $0x690] sm:$0xff]
    %v2624 = vld [vmem:[#allocation9 + $0x698] sm:$0xff]
    %v2625 = vld [vmem:[#allocation9 + $0x6a0] sm:$0xff]
    %v2626 = vld [vmem:[#allocation9 + $0x6a8] sm:$0xff]
    %v2627 = vld [vmem:[#allocation9 + $0x6b0] sm:$0xff]
    %v2628 = vld [vmem:[#allocation9 + $0x6b8] sm:$0xff]
    %v2629 = vld [vmem:[#allocation9 + $0x6c0] sm:$0xff]
    %v2630 = vld [vmem:[#allocation9 + $0x6c8] sm:$0xff]
    %v2631 = vld [vmem:[#allocation9 + $0x6d0] sm:$0xff]
    %v2632 = vld [vmem:[#allocation9 + $0x6d8] sm:$0xff]
    %v2633 = vld [vmem:[#allocation9 + $0x6e0] sm:$0xff]
    %v2634 = vld [vmem:[#allocation9 + $0x6e8] sm:$0xff]
    %v2635 = vld [vmem:[#allocation9 + $0x6f0] sm:$0xff]
    %v2636 = vld [vmem:[#allocation9 + $0x6f8] sm:$0xff]
    %v2637 = vld [vmem:[#allocation9 + $0x700] sm:$0xff]
    %v2638 = vld [vmem:[#allocation9 + $0x708] sm:$0xff]
    %v2639 = vld [vmem:[#allocation9 + $0x710] sm:$0xff]
    %v2640 = vld [vmem:[#allocation9 + $0x718] sm:$0xff]
    %v2641 = vld [vmem:[#allocation9 + $0x720] sm:$0xff]
    %v2642 = vld [vmem:[#allocation9 + $0x728] sm:$0xff]
    %v2643 = vld [vmem:[#allocation9 + $0x730] sm:$0xff]
    %v2644 = vld [vmem:[#allocation9 + $0x738] sm:$0xff]
    %v2645 = vld [vmem:[#allocation9 + $0x740] sm:$0xff]
    %v2646 = vld [vmem:[#allocation9 + $0x748] sm:$0xff]
    %v2647 = vld [vmem:[#allocation9 + $0x750] sm:$0xff]
    %v2648 = vld [vmem:[#allocation9 + $0x758] sm:$0xff]
    %v2649 = vld [vmem:[#allocation9 + $0x760] sm:$0xff]
    %v2650 = vld [vmem:[#allocation9 + $0x768] sm:$0xff]
    %v2651 = vld [vmem:[#allocation9 + $0x770] sm:$0xff]
    %v2652 = vld [vmem:[#allocation9 + $0x778] sm:$0xff]
    %v2653 = vld [vmem:[#allocation9 + $0x780] sm:$0xff]
    %v2654 = vld [vmem:[#allocation9 + $0x788] sm:$0xff]
    %v2655 = vld [vmem:[#allocation9 + $0x790] sm:$0xff]
    %v2656 = vld [vmem:[#allocation9 + $0x798] sm:$0xff]
    %v2657 = vld [vmem:[#allocation9 + $0x7a0] sm:$0xff]
    %v2658 = vld [vmem:[#allocation9 + $0x7a8] sm:$0xff]
    %v2659 = vld [vmem:[#allocation9 + $0x7b0] sm:$0xff]
    %v2660 = vld [vmem:[#allocation9 + $0x7b8] sm:$0xff]
    %v2661 = vld [vmem:[#allocation9 + $0x7c0] sm:$0xff]
    %v2662 = vld [vmem:[#allocation9 + $0x7c8] sm:$0xff]
    %v2663 = vld [vmem:[#allocation9 + $0x7d0] sm:$0xff]
    %v2664 = vld [vmem:[#allocation9 + $0x7d8] sm:$0xff]
    %v2665 = vld [vmem:[#allocation9 + $0x7e0] sm:$0xff]
    %v2666 = vld [vmem:[#allocation9 + $0x7e8] sm:$0xff]
    %v2667 = vld [vmem:[#allocation9 + $0x7f0] sm:$0xff]
    %v2668 = vld [vmem:[#allocation9 + $0x7f8] sm:$0xff]
    %v2925 = vunpack.c.l.b16 %v2413
    %v2926 = vunpack.c.h.b16 %v2413
    %v2927 = vunpack.c.l.b16 %v2414
    %v2928 = vunpack.c.h.b16 %v2414
    %v2929 = vunpack.c.l.b16 %v2415
    %v2930 = vunpack.c.h.b16 %v2415
    %v2931 = vunpack.c.l.b16 %v2416
    %v2932 = vunpack.c.h.b16 %v2416
    %v2933 = vunpack.c.l.b16 %v2417
    %v2934 = vunpack.c.h.b16 %v2417
    %v2935 = vunpack.c.l.b16 %v2418
    %v2936 = vunpack.c.h.b16 %v2418
    %v2937 = vunpack.c.l.b16 %v2419
    %v2938 = vunpack.c.h.b16 %v2419
    %v2939 = vunpack.c.l.b16 %v2420
    %v2940 = vunpack.c.h.b16 %v2420
    %v2941 = vunpack.c.l.b16 %v2421
    %v2942 = vunpack.c.h.b16 %v2421
    %v2943 = vunpack.c.l.b16 %v2422
    %v2944 = vunpack.c.h.b16 %v2422
    %v2945 = vunpack.c.l.b16 %v2423
    %v2946 = vunpack.c.h.b16 %v2423
    %v2947 = vunpack.c.l.b16 %v2424
    %v2948 = vunpack.c.h.b16 %v2424
    %v2949 = vunpack.c.l.b16 %v2425
    %v2950 = vunpack.c.h.b16 %v2425
    %v2951 = vunpack.c.l.b16 %v2426
    %v2952 = vunpack.c.h.b16 %v2426
    %v2953 = vunpack.c.l.b16 %v2427
    %v2954 = vunpack.c.h.b16 %v2427
    %v2955 = vunpack.c.l.b16 %v2428
    %v2956 = vunpack.c.h.b16 %v2428
    %v2957 = vunpack.c.l.b16 %v2429
    %v2958 = vunpack.c.h.b16 %v2429
    %v2959 = vunpack.c.l.b16 %v2430
    %v2960 = vunpack.c.h.b16 %v2430
    %v2961 = vunpack.c.l.b16 %v2431
    %v2962 = vunpack.c.h.b16 %v2431
    %v2963 = vunpack.c.l.b16 %v2432
    %v2964 = vunpack.c.h.b16 %v2432
    %v2965 = vunpack.c.l.b16 %v2433
    %v2966 = vunpack.c.h.b16 %v2433
    %v2967 = vunpack.c.l.b16 %v2434
    %v2968 = vunpack.c.h.b16 %v2434
    %v2969 = vunpack.c.l.b16 %v2435
    %v2970 = vunpack.c.h.b16 %v2435
    %v2971 = vunpack.c.l.b16 %v2436
    %v2972 = vunpack.c.h.b16 %v2436
    %v2973 = vunpack.c.l.b16 %v2437
    %v2974 = vunpack.c.h.b16 %v2437
    %v2975 = vunpack.c.l.b16 %v2438
    %v2976 = vunpack.c.h.b16 %v2438
    %v2977 = vunpack.c.l.b16 %v2439
    %v2978 = vunpack.c.h.b16 %v2439
    %v2979 = vunpack.c.l.b16 %v2440
    %v2980 = vunpack.c.h.b16 %v2440
    %v2981 = vunpack.c.l.b16 %v2441
    %v2982 = vunpack.c.h.b16 %v2441
    %v2983 = vunpack.c.l.b16 %v2442
    %v2984 = vunpack.c.h.b16 %v2442
    %v2985 = vunpack.c.l.b16 %v2443
    %v2986 = vunpack.c.h.b16 %v2443
    %v2987 = vunpack.c.l.b16 %v2444
    %v2988 = vunpack.c.h.b16 %v2444
    %v2989 = vunpack.c.l.b16 %v2445
    %v2990 = vunpack.c.h.b16 %v2445
    %v2991 = vunpack.c.l.b16 %v2446
    %v2992 = vunpack.c.h.b16 %v2446
    %v2993 = vunpack.c.l.b16 %v2447
    %v2994 = vunpack.c.h.b16 %v2447
    %v2995 = vunpack.c.l.b16 %v2448
    %v2996 = vunpack.c.h.b16 %v2448
    %v2997 = vunpack.c.l.b16 %v2449
    %v2998 = vunpack.c.h.b16 %v2449
    %v2999 = vunpack.c.l.b16 %v2450
    %v3000 = vunpack.c.h.b16 %v2450
    %v3001 = vunpack.c.l.b16 %v2451
    %v3002 = vunpack.c.h.b16 %v2451
    %v3003 = vunpack.c.l.b16 %v2452
    %v3004 = vunpack.c.h.b16 %v2452
    %v3005 = vunpack.c.l.b16 %v2453
    %v3006 = vunpack.c.h.b16 %v2453
    %v3007 = vunpack.c.l.b16 %v2454
    %v3008 = vunpack.c.h.b16 %v2454
    %v3009 = vunpack.c.l.b16 %v2455
    %v3010 = vunpack.c.h.b16 %v2455
    %v3011 = vunpack.c.l.b16 %v2456
    %v3012 = vunpack.c.h.b16 %v2456
    %v3013 = vunpack.c.l.b16 %v2457
    %v3014 = vunpack.c.h.b16 %v2457
    %v3015 = vunpack.c.l.b16 %v2458
    %v3016 = vunpack.c.h.b16 %v2458
    %v3017 = vunpack.c.l.b16 %v2459
    %v3018 = vunpack.c.h.b16 %v2459
    %v3019 = vunpack.c.l.b16 %v2460
    %v3020 = vunpack.c.h.b16 %v2460
    %v3021 = vunpack.c.l.b16 %v2461
    %v3022 = vunpack.c.h.b16 %v2461
    %v3023 = vunpack.c.l.b16 %v2462
    %v3024 = vunpack.c.h.b16 %v2462
    %v3025 = vunpack.c.l.b16 %v2463
    %v3026 = vunpack.c.h.b16 %v2463
    %v3027 = vunpack.c.l.b16 %v2464
    %v3028 = vunpack.c.h.b16 %v2464
    %v3029 = vunpack.c.l.b16 %v2465
    %v3030 = vunpack.c.h.b16 %v2465
    %v3031 = vunpack.c.l.b16 %v2466
    %v3032 = vunpack.c.h.b16 %v2466
    %v3033 = vunpack.c.l.b16 %v2467
    %v3034 = vunpack.c.h.b16 %v2467
    %v3035 = vunpack.c.l.b16 %v2468
    %v3036 = vunpack.c.h.b16 %v2468
    %v3037 = vunpack.c.l.b16 %v2469
    %v3038 = vunpack.c.h.b16 %v2469
    %v3039 = vunpack.c.l.b16 %v2470
    %v3040 = vunpack.c.h.b16 %v2470
    %v3041 = vunpack.c.l.b16 %v2471
    %v3042 = vunpack.c.h.b16 %v2471
    %v3043 = vunpack.c.l.b16 %v2472
    %v3044 = vunpack.c.h.b16 %v2472
    %v3045 = vunpack.c.l.b16 %v2473
    %v3046 = vunpack.c.h.b16 %v2473
    %v3047 = vunpack.c.l.b16 %v2474
    %v3048 = vunpack.c.h.b16 %v2474
    %v3049 = vunpack.c.l.b16 %v2475
    %v3050 = vunpack.c.h.b16 %v2475
    %v3051 = vunpack.c.l.b16 %v2476
    %v3052 = vunpack.c.h.b16 %v2476
    %v3053 = vunpack.c.l.b16 %v2477
    %v3054 = vunpack.c.h.b16 %v2477
    %v3055 = vunpack.c.l.b16 %v2478
    %v3056 = vunpack.c.h.b16 %v2478
    %v3057 = vunpack.c.l.b16 %v2479
    %v3058 = vunpack.c.h.b16 %v2479
    %v3059 = vunpack.c.l.b16 %v2480
    %v3060 = vunpack.c.h.b16 %v2480
    %v3061 = vunpack.c.l.b16 %v2481
    %v3062 = vunpack.c.h.b16 %v2481
    %v3063 = vunpack.c.l.b16 %v2482
    %v3064 = vunpack.c.h.b16 %v2482
    %v3065 = vunpack.c.l.b16 %v2483
    %v3066 = vunpack.c.h.b16 %v2483
    %v3067 = vunpack.c.l.b16 %v2484
    %v3068 = vunpack.c.h.b16 %v2484
    %v3069 = vunpack.c.l.b16 %v2485
    %v3070 = vunpack.c.h.b16 %v2485
    %v3071 = vunpack.c.l.b16 %v2486
    %v3072 = vunpack.c.h.b16 %v2486
    %v3073 = vunpack.c.l.b16 %v2487
    %v3074 = vunpack.c.h.b16 %v2487
    %v3075 = vunpack.c.l.b16 %v2488
    %v3076 = vunpack.c.h.b16 %v2488
    %v3077 = vunpack.c.l.b16 %v2489
    %v3078 = vunpack.c.h.b16 %v2489
    %v3079 = vunpack.c.l.b16 %v2490
    %v3080 = vunpack.c.h.b16 %v2490
    %v3081 = vunpack.c.l.b16 %v2491
    %v3082 = vunpack.c.h.b16 %v2491
    %v3083 = vunpack.c.l.b16 %v2492
    %v3084 = vunpack.c.h.b16 %v2492
    %v3085 = vunpack.c.l.b16 %v2493
    %v3086 = vunpack.c.h.b16 %v2493
    %v3087 = vunpack.c.l.b16 %v2494
    %v3088 = vunpack.c.h.b16 %v2494
    %v3089 = vunpack.c.l.b16 %v2495
    %v3090 = vunpack.c.h.b16 %v2495
    %v3091 = vunpack.c.l.b16 %v2496
    %v3092 = vunpack.c.h.b16 %v2496
    %v3093 = vunpack.c.l.b16 %v2497
    %v3094 = vunpack.c.h.b16 %v2497
    %v3095 = vunpack.c.l.b16 %v2498
    %v3096 = vunpack.c.h.b16 %v2498
    %v3097 = vunpack.c.l.b16 %v2499
    %v3098 = vunpack.c.h.b16 %v2499
    %v3099 = vunpack.c.l.b16 %v2500
    %v3100 = vunpack.c.h.b16 %v2500
    %v3101 = vunpack.c.l.b16 %v2501
    %v3102 = vunpack.c.h.b16 %v2501
    %v3103 = vunpack.c.l.b16 %v2502
    %v3104 = vunpack.c.h.b16 %v2502
    %v3105 = vunpack.c.l.b16 %v2503
    %v3106 = vunpack.c.h.b16 %v2503
    %v3107 = vunpack.c.l.b16 %v2504
    %v3108 = vunpack.c.h.b16 %v2504
    %v3109 = vunpack.c.l.b16 %v2505
    %v3110 = vunpack.c.h.b16 %v2505
    %v3111 = vunpack.c.l.b16 %v2506
    %v3112 = vunpack.c.h.b16 %v2506
    %v3113 = vunpack.c.l.b16 %v2507
    %v3114 = vunpack.c.h.b16 %v2507
    %v3115 = vunpack.c.l.b16 %v2508
    %v3116 = vunpack.c.h.b16 %v2508
    %v3117 = vunpack.c.l.b16 %v2509
    %v3118 = vunpack.c.h.b16 %v2509
    %v3119 = vunpack.c.l.b16 %v2510
    %v3120 = vunpack.c.h.b16 %v2510
    %v3121 = vunpack.c.l.b16 %v2511
    %v3122 = vunpack.c.h.b16 %v2511
    %v3123 = vunpack.c.l.b16 %v2512
    %v3124 = vunpack.c.h.b16 %v2512
    %v3125 = vunpack.c.l.b16 %v2513
    %v3126 = vunpack.c.h.b16 %v2513
    %v3127 = vunpack.c.l.b16 %v2514
    %v3128 = vunpack.c.h.b16 %v2514
    %v3129 = vunpack.c.l.b16 %v2515
    %v3130 = vunpack.c.h.b16 %v2515
    %v3131 = vunpack.c.l.b16 %v2516
    %v3132 = vunpack.c.h.b16 %v2516
    %v3133 = vunpack.c.l.b16 %v2517
    %v3134 = vunpack.c.h.b16 %v2517
    %v3135 = vunpack.c.l.b16 %v2518
    %v3136 = vunpack.c.h.b16 %v2518
    %v3137 = vunpack.c.l.b16 %v2519
    %v3138 = vunpack.c.h.b16 %v2519
    %v3139 = vunpack.c.l.b16 %v2520
    %v3140 = vunpack.c.h.b16 %v2520
    %v3141 = vunpack.c.l.b16 %v2521
    %v3142 = vunpack.c.h.b16 %v2521
    %v3143 = vunpack.c.l.b16 %v2522
    %v3144 = vunpack.c.h.b16 %v2522
    %v3145 = vunpack.c.l.b16 %v2523
    %v3146 = vunpack.c.h.b16 %v2523
    %v3147 = vunpack.c.l.b16 %v2524
    %v3148 = vunpack.c.h.b16 %v2524
    %v3149 = vunpack.c.l.b16 %v2525
    %v3150 = vunpack.c.h.b16 %v2525
    %v3151 = vunpack.c.l.b16 %v2526
    %v3152 = vunpack.c.h.b16 %v2526
    %v3153 = vunpack.c.l.b16 %v2527
    %v3154 = vunpack.c.h.b16 %v2527
    %v3155 = vunpack.c.l.b16 %v2528
    %v3156 = vunpack.c.h.b16 %v2528
    %v3157 = vunpack.c.l.b16 %v2529
    %v3158 = vunpack.c.h.b16 %v2529
    %v3159 = vunpack.c.l.b16 %v2530
    %v3160 = vunpack.c.h.b16 %v2530
    %v3161 = vunpack.c.l.b16 %v2531
    %v3162 = vunpack.c.h.b16 %v2531
    %v3163 = vunpack.c.l.b16 %v2532
    %v3164 = vunpack.c.h.b16 %v2532
    %v3165 = vunpack.c.l.b16 %v2533
    %v3166 = vunpack.c.h.b16 %v2533
    %v3167 = vunpack.c.l.b16 %v2534
    %v3168 = vunpack.c.h.b16 %v2534
    %v3169 = vunpack.c.l.b16 %v2535
    %v3170 = vunpack.c.h.b16 %v2535
    %v3171 = vunpack.c.l.b16 %v2536
    %v3172 = vunpack.c.h.b16 %v2536
    %v3173 = vunpack.c.l.b16 %v2537
    %v3174 = vunpack.c.h.b16 %v2537
    %v3175 = vunpack.c.l.b16 %v2538
    %v3176 = vunpack.c.h.b16 %v2538
    %v3177 = vunpack.c.l.b16 %v2539
    %v3178 = vunpack.c.h.b16 %v2539
    %v3179 = vunpack.c.l.b16 %v2540
    %v3180 = vunpack.c.h.b16 %v2540
    %v3181 = vunpack.c.l.b16 %v2541
    %v3182 = vunpack.c.h.b16 %v2541
    %v3183 = vunpack.c.l.b16 %v2542
    %v3184 = vunpack.c.h.b16 %v2542
    %v3185 = vunpack.c.l.b16 %v2543
    %v3186 = vunpack.c.h.b16 %v2543
    %v3187 = vunpack.c.l.b16 %v2544
    %v3188 = vunpack.c.h.b16 %v2544
    %v3189 = vunpack.c.l.b16 %v2545
    %v3190 = vunpack.c.h.b16 %v2545
    %v3191 = vunpack.c.l.b16 %v2546
    %v3192 = vunpack.c.h.b16 %v2546
    %v3193 = vunpack.c.l.b16 %v2547
    %v3194 = vunpack.c.h.b16 %v2547
    %v3195 = vunpack.c.l.b16 %v2548
    %v3196 = vunpack.c.h.b16 %v2548
    %v3197 = vunpack.c.l.b16 %v2549
    %v3198 = vunpack.c.h.b16 %v2549
    %v3199 = vunpack.c.l.b16 %v2550
    %v3200 = vunpack.c.h.b16 %v2550
    %v3201 = vunpack.c.l.b16 %v2551
    %v3202 = vunpack.c.h.b16 %v2551
    %v3203 = vunpack.c.l.b16 %v2552
    %v3204 = vunpack.c.h.b16 %v2552
    %v3205 = vunpack.c.l.b16 %v2553
    %v3206 = vunpack.c.h.b16 %v2553
    %v3207 = vunpack.c.l.b16 %v2554
    %v3208 = vunpack.c.h.b16 %v2554
    %v3209 = vunpack.c.l.b16 %v2555
    %v3210 = vunpack.c.h.b16 %v2555
    %v3211 = vunpack.c.l.b16 %v2556
    %v3212 = vunpack.c.h.b16 %v2556
    %v3213 = vunpack.c.l.b16 %v2557
    %v3214 = vunpack.c.h.b16 %v2557
    %v3215 = vunpack.c.l.b16 %v2558
    %v3216 = vunpack.c.h.b16 %v2558
    %v3217 = vunpack.c.l.b16 %v2559
    %v3218 = vunpack.c.h.b16 %v2559
    %v3219 = vunpack.c.l.b16 %v2560
    %v3220 = vunpack.c.h.b16 %v2560
    %v3221 = vunpack.c.l.b16 %v2561
    %v3222 = vunpack.c.h.b16 %v2561
    %v3223 = vunpack.c.l.b16 %v2562
    %v3224 = vunpack.c.h.b16 %v2562
    %v3225 = vunpack.c.l.b16 %v2563
    %v3226 = vunpack.c.h.b16 %v2563
    %v3227 = vunpack.c.l.b16 %v2564
    %v3228 = vunpack.c.h.b16 %v2564
    %v3229 = vunpack.c.l.b16 %v2565
    %v3230 = vunpack.c.h.b16 %v2565
    %v3231 = vunpack.c.l.b16 %v2566
    %v3232 = vunpack.c.h.b16 %v2566
    %v3233 = vunpack.c.l.b16 %v2567
    %v3234 = vunpack.c.h.b16 %v2567
    %v3235 = vunpack.c.l.b16 %v2568
    %v3236 = vunpack.c.h.b16 %v2568
    %v3237 = vunpack.c.l.b16 %v2569
    %v3238 = vunpack.c.h.b16 %v2569
    %v3239 = vunpack.c.l.b16 %v2570
    %v3240 = vunpack.c.h.b16 %v2570
    %v3241 = vunpack.c.l.b16 %v2571
    %v3242 = vunpack.c.h.b16 %v2571
    %v3243 = vunpack.c.l.b16 %v2572
    %v3244 = vunpack.c.h.b16 %v2572
    %v3245 = vunpack.c.l.b16 %v2573
    %v3246 = vunpack.c.h.b16 %v2573
    %v3247 = vunpack.c.l.b16 %v2574
    %v3248 = vunpack.c.h.b16 %v2574
    %v3249 = vunpack.c.l.b16 %v2575
    %v3250 = vunpack.c.h.b16 %v2575
    %v3251 = vunpack.c.l.b16 %v2576
    %v3252 = vunpack.c.h.b16 %v2576
    %v3253 = vunpack.c.l.b16 %v2577
    %v3254 = vunpack.c.h.b16 %v2577
    %v3255 = vunpack.c.l.b16 %v2578
    %v3256 = vunpack.c.h.b16 %v2578
    %v3257 = vunpack.c.l.b16 %v2579
    %v3258 = vunpack.c.h.b16 %v2579
    %v3259 = vunpack.c.l.b16 %v2580
    %v3260 = vunpack.c.h.b16 %v2580
    %v3261 = vunpack.c.l.b16 %v2581
    %v3262 = vunpack.c.h.b16 %v2581
    %v3263 = vunpack.c.l.b16 %v2582
    %v3264 = vunpack.c.h.b16 %v2582
    %v3265 = vunpack.c.l.b16 %v2583
    %v3266 = vunpack.c.h.b16 %v2583
    %v3267 = vunpack.c.l.b16 %v2584
    %v3268 = vunpack.c.h.b16 %v2584
    %v3269 = vunpack.c.l.b16 %v2585
    %v3270 = vunpack.c.h.b16 %v2585
    %v3271 = vunpack.c.l.b16 %v2586
    %v3272 = vunpack.c.h.b16 %v2586
    %v3273 = vunpack.c.l.b16 %v2587
    %v3274 = vunpack.c.h.b16 %v2587
    %v3275 = vunpack.c.l.b16 %v2588
    %v3276 = vunpack.c.h.b16 %v2588
    %v3277 = vunpack.c.l.b16 %v2589
    %v3278 = vunpack.c.h.b16 %v2589
    %v3279 = vunpack.c.l.b16 %v2590
    %v3280 = vunpack.c.h.b16 %v2590
    %v3281 = vunpack.c.l.b16 %v2591
    %v3282 = vunpack.c.h.b16 %v2591
    %v3283 = vunpack.c.l.b16 %v2592
    %v3284 = vunpack.c.h.b16 %v2592
    %v3285 = vunpack.c.l.b16 %v2593
    %v3286 = vunpack.c.h.b16 %v2593
    %v3287 = vunpack.c.l.b16 %v2594
    %v3288 = vunpack.c.h.b16 %v2594
    %v3289 = vunpack.c.l.b16 %v2595
    %v3290 = vunpack.c.h.b16 %v2595
    %v3291 = vunpack.c.l.b16 %v2596
    %v3292 = vunpack.c.h.b16 %v2596
    %v3293 = vunpack.c.l.b16 %v2597
    %v3294 = vunpack.c.h.b16 %v2597
    %v3295 = vunpack.c.l.b16 %v2598
    %v3296 = vunpack.c.h.b16 %v2598
    %v3297 = vunpack.c.l.b16 %v2599
    %v3298 = vunpack.c.h.b16 %v2599
    %v3299 = vunpack.c.l.b16 %v2600
    %v3300 = vunpack.c.h.b16 %v2600
    %v3301 = vunpack.c.l.b16 %v2601
    %v3302 = vunpack.c.h.b16 %v2601
    %v3303 = vunpack.c.l.b16 %v2602
    %v3304 = vunpack.c.h.b16 %v2602
    %v3305 = vunpack.c.l.b16 %v2603
    %v3306 = vunpack.c.h.b16 %v2603
    %v3307 = vunpack.c.l.b16 %v2604
    %v3308 = vunpack.c.h.b16 %v2604
    %v3309 = vunpack.c.l.b16 %v2605
    %v3310 = vunpack.c.h.b16 %v2605
    %v3311 = vunpack.c.l.b16 %v2606
    %v3312 = vunpack.c.h.b16 %v2606
    %v3313 = vunpack.c.l.b16 %v2607
    %v3314 = vunpack.c.h.b16 %v2607
    %v3315 = vunpack.c.l.b16 %v2608
    %v3316 = vunpack.c.h.b16 %v2608
    %v3317 = vunpack.c.l.b16 %v2609
    %v3318 = vunpack.c.h.b16 %v2609
    %v3319 = vunpack.c.l.b16 %v2610
    %v3320 = vunpack.c.h.b16 %v2610
    %v3321 = vunpack.c.l.b16 %v2611
    %v3322 = vunpack.c.h.b16 %v2611
    %v3323 = vunpack.c.l.b16 %v2612
    %v3324 = vunpack.c.h.b16 %v2612
    %v3325 = vunpack.c.l.b16 %v2613
    %v3326 = vunpack.c.h.b16 %v2613
    %v3327 = vunpack.c.l.b16 %v2614
    %v3328 = vunpack.c.h.b16 %v2614
    %v3329 = vunpack.c.l.b16 %v2615
    %v3330 = vunpack.c.h.b16 %v2615
    %v3331 = vunpack.c.l.b16 %v2616
    %v3332 = vunpack.c.h.b16 %v2616
    %v3333 = vunpack.c.l.b16 %v2617
    %v3334 = vunpack.c.h.b16 %v2617
    %v3335 = vunpack.c.l.b16 %v2618
    %v3336 = vunpack.c.h.b16 %v2618
    %v3337 = vunpack.c.l.b16 %v2619
    %v3338 = vunpack.c.h.b16 %v2619
    %v3339 = vunpack.c.l.b16 %v2620
    %v3340 = vunpack.c.h.b16 %v2620
    %v3341 = vunpack.c.l.b16 %v2621
    %v3342 = vunpack.c.h.b16 %v2621
    %v3343 = vunpack.c.l.b16 %v2622
    %v3344 = vunpack.c.h.b16 %v2622
    %v3345 = vunpack.c.l.b16 %v2623
    %v3346 = vunpack.c.h.b16 %v2623
    %v3347 = vunpack.c.l.b16 %v2624
    %v3348 = vunpack.c.h.b16 %v2624
    %v3349 = vunpack.c.l.b16 %v2625
    %v3350 = vunpack.c.h.b16 %v2625
    %v3351 = vunpack.c.l.b16 %v2626
    %v3352 = vunpack.c.h.b16 %v2626
    %v3353 = vunpack.c.l.b16 %v2627
    %v3354 = vunpack.c.h.b16 %v2627
    %v3355 = vunpack.c.l.b16 %v2628
    %v3356 = vunpack.c.h.b16 %v2628
    %v3357 = vunpack.c.l.b16 %v2629
    %v3358 = vunpack.c.h.b16 %v2629
    %v3359 = vunpack.c.l.b16 %v2630
    %v3360 = vunpack.c.h.b16 %v2630
    %v3361 = vunpack.c.l.b16 %v2631
    %v3362 = vunpack.c.h.b16 %v2631
    %v3363 = vunpack.c.l.b16 %v2632
    %v3364 = vunpack.c.h.b16 %v2632
    %v3365 = vunpack.c.l.b16 %v2633
    %v3366 = vunpack.c.h.b16 %v2633
    %v3367 = vunpack.c.l.b16 %v2634
    %v3368 = vunpack.c.h.b16 %v2634
    %v3369 = vunpack.c.l.b16 %v2635
    %v3370 = vunpack.c.h.b16 %v2635
    %v3371 = vunpack.c.l.b16 %v2636
    %v3372 = vunpack.c.h.b16 %v2636
    %v3373 = vunpack.c.l.b16 %v2637
    %v3374 = vunpack.c.h.b16 %v2637
    %v3375 = vunpack.c.l.b16 %v2638
    %v3376 = vunpack.c.h.b16 %v2638
    %v3377 = vunpack.c.l.b16 %v2639
    %v3378 = vunpack.c.h.b16 %v2639
    %v3379 = vunpack.c.l.b16 %v2640
    %v3380 = vunpack.c.h.b16 %v2640
    %v3381 = vunpack.c.l.b16 %v2641
    %v3382 = vunpack.c.h.b16 %v2641
    %v3383 = vunpack.c.l.b16 %v2642
    %v3384 = vunpack.c.h.b16 %v2642
    %v3385 = vunpack.c.l.b16 %v2643
    %v3386 = vunpack.c.h.b16 %v2643
    %v3387 = vunpack.c.l.b16 %v2644
    %v3388 = vunpack.c.h.b16 %v2644
    %v3389 = vunpack.c.l.b16 %v2645
    %v3390 = vunpack.c.h.b16 %v2645
    %v3391 = vunpack.c.l.b16 %v2646
    %v3392 = vunpack.c.h.b16 %v2646
    %v3393 = vunpack.c.l.b16 %v2647
    %v3394 = vunpack.c.h.b16 %v2647
    %v3395 = vunpack.c.l.b16 %v2648
    %v3396 = vunpack.c.h.b16 %v2648
    %v3397 = vunpack.c.l.b16 %v2649
    %v3398 = vunpack.c.h.b16 %v2649
    %v3399 = vunpack.c.l.b16 %v2650
    %v3400 = vunpack.c.h.b16 %v2650
    %v3401 = vunpack.c.l.b16 %v2651
    %v3402 = vunpack.c.h.b16 %v2651
    %v3403 = vunpack.c.l.b16 %v2652
    %v3404 = vunpack.c.h.b16 %v2652
    %v3405 = vunpack.c.l.b16 %v2653
    %v3406 = vunpack.c.h.b16 %v2653
    %v3407 = vunpack.c.l.b16 %v2654
    %v3408 = vunpack.c.h.b16 %v2654
    %v3409 = vunpack.c.l.b16 %v2655
    %v3410 = vunpack.c.h.b16 %v2655
    %v3411 = vunpack.c.l.b16 %v2656
    %v3412 = vunpack.c.h.b16 %v2656
    %v3413 = vunpack.c.l.b16 %v2657
    %v3414 = vunpack.c.h.b16 %v2657
    %v3415 = vunpack.c.l.b16 %v2658
    %v3416 = vunpack.c.h.b16 %v2658
    %v3417 = vunpack.c.l.b16 %v2659
    %v3418 = vunpack.c.h.b16 %v2659
    %v3419 = vunpack.c.l.b16 %v2660
    %v3420 = vunpack.c.h.b16 %v2660
    %v3421 = vunpack.c.l.b16 %v2661
    %v3422 = vunpack.c.h.b16 %v2661
    %v3423 = vunpack.c.l.b16 %v2662
    %v3424 = vunpack.c.h.b16 %v2662
    %v3425 = vunpack.c.l.b16 %v2663
    %v3426 = vunpack.c.h.b16 %v2663
    %v3427 = vunpack.c.l.b16 %v2664
    %v3428 = vunpack.c.h.b16 %v2664
    %v3429 = vunpack.c.l.b16 %v2665
    %v3430 = vunpack.c.h.b16 %v2665
    %v3431 = vunpack.c.l.b16 %v2666
    %v3432 = vunpack.c.h.b16 %v2666
    %v3433 = vunpack.c.l.b16 %v2667
    %v3434 = vunpack.c.h.b16 %v2667
    %v3435 = vunpack.c.l.b16 %v2668
    %v3436 = vunpack.c.h.b16 %v2668
    %v3437 = vpack.c.b16 %v2933, %v2925
    %v3438 = vpack.c.b16 %v2934, %v2926
    %v3439 = vpack.c.b16 %v2935, %v2927
    %v3440 = vpack.c.b16 %v2936, %v2928
    %v3441 = vpack.c.b16 %v2937, %v2929
    %v3442 = vpack.c.b16 %v2938, %v2930
    %v3443 = vpack.c.b16 %v2939, %v2931
    %v3444 = vpack.c.b16 %v2940, %v2932
    %v3445 = vpack.c.b16 %v2949, %v2941
    %v3446 = vpack.c.b16 %v2950, %v2942
    %v3447 = vpack.c.b16 %v2951, %v2943
    %v3448 = vpack.c.b16 %v2952, %v2944
    %v3449 = vpack.c.b16 %v2953, %v2945
    %v3450 = vpack.c.b16 %v2954, %v2946
    %v3451 = vpack.c.b16 %v2955, %v2947
    %v3452 = vpack.c.b16 %v2956, %v2948
    %v3453 = vpack.c.b16 %v2965, %v2957
    %v3454 = vpack.c.b16 %v2966, %v2958
    %v3455 = vpack.c.b16 %v2967, %v2959
    %v3456 = vpack.c.b16 %v2968, %v2960
    %v3457 = vpack.c.b16 %v2969, %v2961
    %v3458 = vpack.c.b16 %v2970, %v2962
    %v3459 = vpack.c.b16 %v2971, %v2963
    %v3460 = vpack.c.b16 %v2972, %v2964
    %v3461 = vpack.c.b16 %v2981, %v2973
    %v3462 = vpack.c.b16 %v2982, %v2974
    %v3463 = vpack.c.b16 %v2983, %v2975
    %v3464 = vpack.c.b16 %v2984, %v2976
    %v3465 = vpack.c.b16 %v2985, %v2977
    %v3466 = vpack.c.b16 %v2986, %v2978
    %v3467 = vpack.c.b16 %v2987, %v2979
    %v3468 = vpack.c.b16 %v2988, %v2980
    %v3469 = vpack.c.b16 %v2997, %v2989
    %v3470 = vpack.c.b16 %v2998, %v2990
    %v3471 = vpack.c.b16 %v2999, %v2991
    %v3472 = vpack.c.b16 %v3000, %v2992
    %v3473 = vpack.c.b16 %v3001, %v2993
    %v3474 = vpack.c.b16 %v3002, %v2994
    %v3475 = vpack.c.b16 %v3003, %v2995
    %v3476 = vpack.c.b16 %v3004, %v2996
    %v3477 = vpack.c.b16 %v3013, %v3005
    %v3478 = vpack.c.b16 %v3014, %v3006
    %v3479 = vpack.c.b16 %v3015, %v3007
    %v3480 = vpack.c.b16 %v3016, %v3008
    %v3481 = vpack.c.b16 %v3017, %v3009
    %v3482 = vpack.c.b16 %v3018, %v3010
    %v3483 = vpack.c.b16 %v3019, %v3011
    %v3484 = vpack.c.b16 %v3020, %v3012
    %v3485 = vpack.c.b16 %v3029, %v3021
    %v3486 = vpack.c.b16 %v3030, %v3022
    %v3487 = vpack.c.b16 %v3031, %v3023
    %v3488 = vpack.c.b16 %v3032, %v3024
    %v3489 = vpack.c.b16 %v3033, %v3025
    %v3490 = vpack.c.b16 %v3034, %v3026
    %v3491 = vpack.c.b16 %v3035, %v3027
    %v3492 = vpack.c.b16 %v3036, %v3028
    %v3493 = vpack.c.b16 %v3045, %v3037
    %v3494 = vpack.c.b16 %v3046, %v3038
    %v3495 = vpack.c.b16 %v3047, %v3039
    %v3496 = vpack.c.b16 %v3048, %v3040
    %v3497 = vpack.c.b16 %v3049, %v3041
    %v3498 = vpack.c.b16 %v3050, %v3042
    %v3499 = vpack.c.b16 %v3051, %v3043
    %v3500 = vpack.c.b16 %v3052, %v3044
    %v3501 = vpack.c.b16 %v3061, %v3053
    %v3502 = vpack.c.b16 %v3062, %v3054
    %v3503 = vpack.c.b16 %v3063, %v3055
    %v3504 = vpack.c.b16 %v3064, %v3056
    %v3505 = vpack.c.b16 %v3065, %v3057
    %v3506 = vpack.c.b16 %v3066, %v3058
    %v3507 = vpack.c.b16 %v3067, %v3059
    %v3508 = vpack.c.b16 %v3068, %v3060
    %v3509 = vpack.c.b16 %v3077, %v3069
    %v3510 = vpack.c.b16 %v3078, %v3070
    %v3511 = vpack.c.b16 %v3079, %v3071
    %v3512 = vpack.c.b16 %v3080, %v3072
    %v3513 = vpack.c.b16 %v3081, %v3073
    %v3514 = vpack.c.b16 %v3082, %v3074
    %v3515 = vpack.c.b16 %v3083, %v3075
    %v3516 = vpack.c.b16 %v3084, %v3076
    %v3517 = vpack.c.b16 %v3093, %v3085
    %v3518 = vpack.c.b16 %v3094, %v3086
    %v3519 = vpack.c.b16 %v3095, %v3087
    %v3520 = vpack.c.b16 %v3096, %v3088
    %v3521 = vpack.c.b16 %v3097, %v3089
    %v3522 = vpack.c.b16 %v3098, %v3090
    %v3523 = vpack.c.b16 %v3099, %v3091
    %v3524 = vpack.c.b16 %v3100, %v3092
    %v3525 = vpack.c.b16 %v3109, %v3101
    %v3526 = vpack.c.b16 %v3110, %v3102
    %v3527 = vpack.c.b16 %v3111, %v3103
    %v3528 = vpack.c.b16 %v3112, %v3104
    %v3529 = vpack.c.b16 %v3113, %v3105
    %v3530 = vpack.c.b16 %v3114, %v3106
    %v3531 = vpack.c.b16 %v3115, %v3107
    %v3532 = vpack.c.b16 %v3116, %v3108
    %v3533 = vpack.c.b16 %v3125, %v3117
    %v3534 = vpack.c.b16 %v3126, %v3118
    %v3535 = vpack.c.b16 %v3127, %v3119
    %v3536 = vpack.c.b16 %v3128, %v3120
    %v3537 = vpack.c.b16 %v3129, %v3121
    %v3538 = vpack.c.b16 %v3130, %v3122
    %v3539 = vpack.c.b16 %v3131, %v3123
    %v3540 = vpack.c.b16 %v3132, %v3124
    %v3541 = vpack.c.b16 %v3141, %v3133
    %v3542 = vpack.c.b16 %v3142, %v3134
    %v3543 = vpack.c.b16 %v3143, %v3135
    %v3544 = vpack.c.b16 %v3144, %v3136
    %v3545 = vpack.c.b16 %v3145, %v3137
    %v3546 = vpack.c.b16 %v3146, %v3138
    %v3547 = vpack.c.b16 %v3147, %v3139
    %v3548 = vpack.c.b16 %v3148, %v3140
    %v3549 = vpack.c.b16 %v3157, %v3149
    %v3550 = vpack.c.b16 %v3158, %v3150
    %v3551 = vpack.c.b16 %v3159, %v3151
    %v3552 = vpack.c.b16 %v3160, %v3152
    %v3553 = vpack.c.b16 %v3161, %v3153
    %v3554 = vpack.c.b16 %v3162, %v3154
    %v3555 = vpack.c.b16 %v3163, %v3155
    %v3556 = vpack.c.b16 %v3164, %v3156
    %v3557 = vpack.c.b16 %v3173, %v3165
    %v3558 = vpack.c.b16 %v3174, %v3166
    %v3559 = vpack.c.b16 %v3175, %v3167
    %v3560 = vpack.c.b16 %v3176, %v3168
    %v3561 = vpack.c.b16 %v3177, %v3169
    %v3562 = vpack.c.b16 %v3178, %v3170
    %v3563 = vpack.c.b16 %v3179, %v3171
    %v3564 = vpack.c.b16 %v3180, %v3172
    %v3565 = vpack.c.b16 %v3189, %v3181
    %v3566 = vpack.c.b16 %v3190, %v3182
    %v3567 = vpack.c.b16 %v3191, %v3183
    %v3568 = vpack.c.b16 %v3192, %v3184
    %v3569 = vpack.c.b16 %v3193, %v3185
    %v3570 = vpack.c.b16 %v3194, %v3186
    %v3571 = vpack.c.b16 %v3195, %v3187
    %v3572 = vpack.c.b16 %v3196, %v3188
    %v3573 = vpack.c.b16 %v3205, %v3197
    %v3574 = vpack.c.b16 %v3206, %v3198
    %v3575 = vpack.c.b16 %v3207, %v3199
    %v3576 = vpack.c.b16 %v3208, %v3200
    %v3577 = vpack.c.b16 %v3209, %v3201
    %v3578 = vpack.c.b16 %v3210, %v3202
    %v3579 = vpack.c.b16 %v3211, %v3203
    %v3580 = vpack.c.b16 %v3212, %v3204
    %v3581 = vpack.c.b16 %v3221, %v3213
    %v3582 = vpack.c.b16 %v3222, %v3214
    %v3583 = vpack.c.b16 %v3223, %v3215
    %v3584 = vpack.c.b16 %v3224, %v3216
    %v3585 = vpack.c.b16 %v3225, %v3217
    %v3586 = vpack.c.b16 %v3226, %v3218
    %v3587 = vpack.c.b16 %v3227, %v3219
    %v3588 = vpack.c.b16 %v3228, %v3220
    %v3589 = vpack.c.b16 %v3237, %v3229
    %v3590 = vpack.c.b16 %v3238, %v3230
    %v3591 = vpack.c.b16 %v3239, %v3231
    %v3592 = vpack.c.b16 %v3240, %v3232
    %v3593 = vpack.c.b16 %v3241, %v3233
    %v3594 = vpack.c.b16 %v3242, %v3234
    %v3595 = vpack.c.b16 %v3243, %v3235
    %v3596 = vpack.c.b16 %v3244, %v3236
    %v3597 = vpack.c.b16 %v3253, %v3245
    %v3598 = vpack.c.b16 %v3254, %v3246
    %v3599 = vpack.c.b16 %v3255, %v3247
    %v3600 = vpack.c.b16 %v3256, %v3248
    %v3601 = vpack.c.b16 %v3257, %v3249
    %v3602 = vpack.c.b16 %v3258, %v3250
    %v3603 = vpack.c.b16 %v3259, %v3251
    %v3604 = vpack.c.b16 %v3260, %v3252
    %v3605 = vpack.c.b16 %v3269, %v3261
    %v3606 = vpack.c.b16 %v3270, %v3262
    %v3607 = vpack.c.b16 %v3271, %v3263
    %v3608 = vpack.c.b16 %v3272, %v3264
    %v3609 = vpack.c.b16 %v3273, %v3265
    %v3610 = vpack.c.b16 %v3274, %v3266
    %v3611 = vpack.c.b16 %v3275, %v3267
    %v3612 = vpack.c.b16 %v3276, %v3268
    %v3613 = vpack.c.b16 %v3285, %v3277
    %v3614 = vpack.c.b16 %v3286, %v3278
    %v3615 = vpack.c.b16 %v3287, %v3279
    %v3616 = vpack.c.b16 %v3288, %v3280
    %v3617 = vpack.c.b16 %v3289, %v3281
    %v3618 = vpack.c.b16 %v3290, %v3282
    %v3619 = vpack.c.b16 %v3291, %v3283
    %v3620 = vpack.c.b16 %v3292, %v3284
    %v3621 = vpack.c.b16 %v3301, %v3293
    %v3622 = vpack.c.b16 %v3302, %v3294
    %v3623 = vpack.c.b16 %v3303, %v3295
    %v3624 = vpack.c.b16 %v3304, %v3296
    %v3625 = vpack.c.b16 %v3305, %v3297
    %v3626 = vpack.c.b16 %v3306, %v3298
    %v3627 = vpack.c.b16 %v3307, %v3299
    %v3628 = vpack.c.b16 %v3308, %v3300
    %v3629 = vpack.c.b16 %v3317, %v3309
    %v3630 = vpack.c.b16 %v3318, %v3310
    %v3631 = vpack.c.b16 %v3319, %v3311
    %v3632 = vpack.c.b16 %v3320, %v3312
    %v3633 = vpack.c.b16 %v3321, %v3313
    %v3634 = vpack.c.b16 %v3322, %v3314
    %v3635 = vpack.c.b16 %v3323, %v3315
    %v3636 = vpack.c.b16 %v3324, %v3316
    %v3637 = vpack.c.b16 %v3333, %v3325
    %v3638 = vpack.c.b16 %v3334, %v3326
    %v3639 = vpack.c.b16 %v3335, %v3327
    %v3640 = vpack.c.b16 %v3336, %v3328
    %v3641 = vpack.c.b16 %v3337, %v3329
    %v3642 = vpack.c.b16 %v3338, %v3330
    %v3643 = vpack.c.b16 %v3339, %v3331
    %v3644 = vpack.c.b16 %v3340, %v3332
    %v3645 = vpack.c.b16 %v3349, %v3341
    %v3646 = vpack.c.b16 %v3350, %v3342
    %v3647 = vpack.c.b16 %v3351, %v3343
    %v3648 = vpack.c.b16 %v3352, %v3344
    %v3649 = vpack.c.b16 %v3353, %v3345
    %v3650 = vpack.c.b16 %v3354, %v3346
    %v3651 = vpack.c.b16 %v3355, %v3347
    %v3652 = vpack.c.b16 %v3356, %v3348
    %v3653 = vpack.c.b16 %v3365, %v3357
    %v3654 = vpack.c.b16 %v3366, %v3358
    %v3655 = vpack.c.b16 %v3367, %v3359
    %v3656 = vpack.c.b16 %v3368, %v3360
    %v3657 = vpack.c.b16 %v3369, %v3361
    %v3658 = vpack.c.b16 %v3370, %v3362
    %v3659 = vpack.c.b16 %v3371, %v3363
    %v3660 = vpack.c.b16 %v3372, %v3364
    %v3661 = vpack.c.b16 %v3381, %v3373
    %v3662 = vpack.c.b16 %v3382, %v3374
    %v3663 = vpack.c.b16 %v3383, %v3375
    %v3664 = vpack.c.b16 %v3384, %v3376
    %v3665 = vpack.c.b16 %v3385, %v3377
    %v3666 = vpack.c.b16 %v3386, %v3378
    %v3667 = vpack.c.b16 %v3387, %v3379
    %v3668 = vpack.c.b16 %v3388, %v3380
    %v3669 = vpack.c.b16 %v3397, %v3389
    %v3670 = vpack.c.b16 %v3398, %v3390
    %v3671 = vpack.c.b16 %v3399, %v3391
    %v3672 = vpack.c.b16 %v3400, %v3392
    %v3673 = vpack.c.b16 %v3401, %v3393
    %v3674 = vpack.c.b16 %v3402, %v3394
    %v3675 = vpack.c.b16 %v3403, %v3395
    %v3676 = vpack.c.b16 %v3404, %v3396
    %v3677 = vpack.c.b16 %v3413, %v3405
    %v3678 = vpack.c.b16 %v3414, %v3406
    %v3679 = vpack.c.b16 %v3415, %v3407
    %v3680 = vpack.c.b16 %v3416, %v3408
    %v3681 = vpack.c.b16 %v3417, %v3409
    %v3682 = vpack.c.b16 %v3418, %v3410
    %v3683 = vpack.c.b16 %v3419, %v3411
    %v3684 = vpack.c.b16 %v3420, %v3412
    %v3685 = vpack.c.b16 %v3429, %v3421
    %v3686 = vpack.c.b16 %v3430, %v3422
    %v3687 = vpack.c.b16 %v3431, %v3423
    %v3688 = vpack.c.b16 %v3432, %v3424
    %v3689 = vpack.c.b16 %v3433, %v3425
    %v3690 = vpack.c.b16 %v3434, %v3426
    %v3691 = vpack.c.b16 %v3435, %v3427
    %v3692 = vpack.c.b16 %v3436, %v3428
    %3949 = vmatprep.subr.bf16.mxu0 %v3438
    %3950 = vmatpush1.bf16.msra.mxu0 %v3437
    %3951 = vmatprep.subr.bf16.mxu0 %v3446
    %3952 = vmatpush1.bf16.msra.mxu0 %v3445
    %3953 = vmatprep.subr.bf16.mxu0 %v3454
    %3954 = vmatpush1.bf16.msra.mxu0 %v3453
    %3955 = vmatprep.subr.bf16.mxu0 %v3462
    %3956 = vmatpush1.bf16.msra.mxu0 %v3461
    %3957 = vmatprep.subr.bf16.mxu0 %v3470
    %3958 = vmatpush1.bf16.msra.mxu0 %v3469
    %3959 = vmatprep.subr.bf16.mxu0 %v3478
    %3960 = vmatpush1.bf16.msra.mxu0 %v3477
    %3961 = vmatprep.subr.bf16.mxu0 %v3486
    %3962 = vmatpush1.bf16.msra.mxu0 %v3485
    %3963 = vmatprep.subr.bf16.mxu0 %v3494
    %3964 = vmatpush1.bf16.msra.mxu0 %v3493
    %3965 = vmatprep.subr.bf16.mxu0 %v3502
    %3966 = vmatpush1.bf16.msra.mxu0 %v3501
    %3967 = vmatprep.subr.bf16.mxu0 %v3510
    %3968 = vmatpush1.bf16.msra.mxu0 %v3509
    %3969 = vmatprep.subr.bf16.mxu0 %v3518
    %3970 = vmatpush1.bf16.msra.mxu0 %v3517
    %3971 = vmatprep.subr.bf16.mxu0 %v3526
    %3972 = vmatpush1.bf16.msra.mxu0 %v3525
    %3973 = vmatprep.subr.bf16.mxu0 %v3534
    %3974 = vmatpush1.bf16.msra.mxu0 %v3533
    %3975 = vmatprep.subr.bf16.mxu0 %v3542
    %3976 = vmatpush1.bf16.msra.mxu0 %v3541
    %3977 = vmatprep.subr.bf16.mxu0 %v3550
    %3978 = vmatpush1.bf16.msra.mxu0 %v3549
    %3979 = vmatprep.subr.bf16.mxu0 %v3558
    %3980 = vmatpush1.bf16.msra.mxu0 %v3557
    %3981 = vmatprep.mubr.bf16.mxu0 %v2410
    %3982 = vmatmul.mubr.bf16.gmra.mrb[0].mxu0 %v2409
    %v3983 = vpop.f32.mrb[0].mxu0
    %v3984 = vadd.f32 0.0, %v3983
    %v3985 = vpop.f32.mrb[0].mxu0
    %v3986 = vadd.f32 0.0, %v3985
    %v3987 = vpop.f32.mrb[0].mxu0
    %v3988 = vpop.f32.mrb[0].mxu0
    %3989 = vdwg.mxu0
    %3990 = vmatprep.subr.bf16.mxu0 %v3566
    %3991 = vmatpush1.bf16.msra.mxu0 %v3565
    %3992 = vmatprep.subr.bf16.mxu0 %v3574
    %3993 = vmatpush1.bf16.msra.mxu0 %v3573
    %3994 = vmatprep.subr.bf16.mxu0 %v3582
    %3995 = vmatpush1.bf16.msra.mxu0 %v3581
    %3996 = vmatprep.subr.bf16.mxu0 %v3590
    %3997 = vmatpush1.bf16.msra.mxu0 %v3589
    %3998 = vmatprep.subr.bf16.mxu0 %v3598
    %3999 = vmatpush1.bf16.msra.mxu0 %v3597
    %4000 = vmatprep.subr.bf16.mxu0 %v3606
    %4001 = vmatpush1.bf16.msra.mxu0 %v3605
    %4002 = vmatprep.subr.bf16.mxu0 %v3614
    %4003 = vmatpush1.bf16.msra.mxu0 %v3613
    %4004 = vmatprep.subr.bf16.mxu0 %v3622
    %4005 = vmatpush1.bf16.msra.mxu0 %v3621
    %4006 = vmatprep.subr.bf16.mxu0 %v3630
    %4007 = vmatpush1.bf16.msra.mxu0 %v3629
    %4008 = vmatprep.subr.bf16.mxu0 %v3638
    %4009 = vmatpush1.bf16.msra.mxu0 %v3637
    %4010 = vmatprep.subr.bf16.mxu0 %v3646
    %4011 = vmatpush1.bf16.msra.mxu0 %v3645
    %4012 = vmatprep.subr.bf16.mxu0 %v3654
    %4013 = vmatpush1.bf16.msra.mxu0 %v3653
    %4014 = vmatprep.subr.bf16.mxu0 %v3662
    %4015 = vmatpush1.bf16.msra.mxu0 %v3661
    %4016 = vmatprep.subr.bf16.mxu0 %v3670
    %4017 = vmatpush1.bf16.msra.mxu0 %v3669
    %4018 = vmatprep.subr.bf16.mxu0 %v3678
    %4019 = vmatpush1.bf16.msra.mxu0 %v3677
    %4020 = vmatprep.subr.bf16.mxu0 %v3686
    %4021 = vmatpush1.bf16.msra.mxu0 %v3685
    %4022 = vmatprep.mubr.bf16.mxu0 %v2412
    %4023 = vmatmul.mubr.bf16.gmra.mrb[0].mxu0 %v2411
    %v4024 = vpop.f32.mrb[0].mxu0
    %v4025 = vadd.f32 %v3984, %v4024
    %v4026 = vpop.f32.mrb[0].mxu0
    %v4027 = vadd.f32 %v3986, %v4026
    %v4028 = vpop.f32.mrb[0].mxu0
    %v4029 = vpop.f32.mrb[0].mxu0
    %4030 = vdwg.mxu0
    %4031 = vmatprep.subr.bf16.mxu0 %v3440
    %4032 = vmatpush1.bf16.msra.mxu0 %v3439
    %4033 = vmatprep.subr.bf16.mxu0 %v3448
    %4034 = vmatpush1.bf16.msra.mxu0 %v3447
    %4035 = vmatprep.subr.bf16.mxu0 %v3456
    %4036 = vmatpush1.bf16.msra.mxu0 %v3455
    %4037 = vmatprep.subr.bf16.mxu0 %v3464
    %4038 = vmatpush1.bf16.msra.mxu0 %v3463
    %4039 = vmatprep.subr.bf16.mxu0 %v3472
    %4040 = vmatpush1.bf16.msra.mxu0 %v3471
    %4041 = vmatprep.subr.bf16.mxu0 %v3480
    %4042 = vmatpush1.bf16.msra.mxu0 %v3479
    %4043 = vmatprep.subr.bf16.mxu0 %v3488
    %4044 = vmatpush1.bf16.msra.mxu0 %v3487
    %4045 = vmatprep.subr.bf16.mxu0 %v3496
    %4046 = vmatpush1.bf16.msra.mxu0 %v3495
    %4047 = vmatprep.subr.bf16.mxu0 %v3504
    %4048 = vmatpush1.bf16.msra.mxu0 %v3503
    %4049 = vmatprep.subr.bf16.mxu0 %v3512
    %4050 = vmatpush1.bf16.msra.mxu0 %v3511
    %4051 = vmatprep.subr.bf16.mxu0 %v3520
    %4052 = vmatpush1.bf16.msra.mxu0 %v3519
    %4053 = vmatprep.subr.bf16.mxu0 %v3528
    %4054 = vmatpush1.bf16.msra.mxu0 %v3527
    %4055 = vmatprep.subr.bf16.mxu0 %v3536
    %4056 = vmatpush1.bf16.msra.mxu0 %v3535
    %4057 = vmatprep.subr.bf16.mxu0 %v3544
    %4058 = vmatpush1.bf16.msra.mxu0 %v3543
    %4059 = vmatprep.subr.bf16.mxu0 %v3552
    %4060 = vmatpush1.bf16.msra.mxu0 %v3551
    %4061 = vmatprep.subr.bf16.mxu0 %v3560
    %4062 = vmatpush1.bf16.msra.mxu0 %v3559
    %4063 = vmatprep.mubr.bf16.mxu0 %v2410
    %4064 = vmatmul.mubr.bf16.gmra.mrb[0].mxu0 %v2409
    %v4065 = vpop.f32.mrb[0].mxu0
    %v4066 = vadd.f32 0.0, %v4065
    %v4067 = vpop.f32.mrb[0].mxu0
    %v4068 = vadd.f32 0.0, %v4067
    %v4069 = vpop.f32.mrb[0].mxu0
    %v4070 = vpop.f32.mrb[0].mxu0
    %4071 = vdwg.mxu0
    %4072 = vmatprep.subr.bf16.mxu0 %v3568
    %4073 = vmatpush1.bf16.msra.mxu0 %v3567
    %4074 = vmatprep.subr.bf16.mxu0 %v3576
    %4075 = vmatpush1.bf16.msra.mxu0 %v3575
    %4076 = vmatprep.subr.bf16.mxu0 %v3584
    %4077 = vmatpush1.bf16.msra.mxu0 %v3583
    %4078 = vmatprep.subr.bf16.mxu0 %v3592
    %4079 = vmatpush1.bf16.msra.mxu0 %v3591
    %4080 = vmatprep.subr.bf16.mxu0 %v3600
    %4081 = vmatpush1.bf16.msra.mxu0 %v3599
    %4082 = vmatprep.subr.bf16.mxu0 %v3608
    %4083 = vmatpush1.bf16.msra.mxu0 %v3607
    %4084 = vmatprep.subr.bf16.mxu0 %v3616
    %4085 = vmatpush1.bf16.msra.mxu0 %v3615
    %4086 = vmatprep.subr.bf16.mxu0 %v3624
    %4087 = vmatpush1.bf16.msra.mxu0 %v3623
    %4088 = vmatprep.subr.bf16.mxu0 %v3632
    %4089 = vmatpush1.bf16.msra.mxu0 %v3631
    %4090 = vmatprep.subr.bf16.mxu0 %v3640
    %4091 = vmatpush1.bf16.msra.mxu0 %v3639
    %4092 = vmatprep.subr.bf16.mxu0 %v3648
    %4093 = vmatpush1.bf16.msra.mxu0 %v3647
    %4094 = vmatprep.subr.bf16.mxu0 %v3656
    %4095 = vmatpush1.bf16.msra.mxu0 %v3655
    %4096 = vmatprep.subr.bf16.mxu0 %v3664
    %4097 = vmatpush1.bf16.msra.mxu0 %v3663
    %4098 = vmatprep.subr.bf16.mxu0 %v3672
    %4099 = vmatpush1.bf16.msra.mxu0 %v3671
    %4100 = vmatprep.subr.bf16.mxu0 %v3680
    %4101 = vmatpush1.bf16.msra.mxu0 %v3679
    %4102 = vmatprep.subr.bf16.mxu0 %v3688
    %4103 = vmatpush1.bf16.msra.mxu0 %v3687
    %4104 = vmatprep.mubr.bf16.mxu0 %v2412
    %4105 = vmatmul.mubr.bf16.gmra.mrb[0].mxu0 %v2411
    %v4106 = vpop.f32.mrb[0].mxu0
    %v4107 = vadd.f32 %v4066, %v4106
    %v4108 = vpop.f32.mrb[0].mxu0
    %v4109 = vadd.f32 %v4068, %v4108
    %v4110 = vpop.f32.mrb[0].mxu0
    %v4111 = vpop.f32.mrb[0].mxu0
    %4112 = vdwg.mxu0
    %4113 = vmatprep.subr.bf16.mxu0 %v3442
    %4114 = vmatpush1.bf16.msra.mxu0 %v3441
    %4115 = vmatprep.subr.bf16.mxu0 %v3450
    %4116 = vmatpush1.bf16.msra.mxu0 %v3449
    %4117 = vmatprep.subr.bf16.mxu0 %v3458
    %4118 = vmatpush1.bf16.msra.mxu0 %v3457
    %4119 = vmatprep.subr.bf16.mxu0 %v3466
    %4120 = vmatpush1.bf16.msra.mxu0 %v3465
    %4121 = vmatprep.subr.bf16.mxu0 %v3474
    %4122 = vmatpush1.bf16.msra.mxu0 %v3473
    %4123 = vmatprep.subr.bf16.mxu0 %v3482
    %4124 = vmatpush1.bf16.msra.mxu0 %v3481
    %4125 = vmatprep.subr.bf16.mxu0 %v3490
    %4126 = vmatpush1.bf16.msra.mxu0 %v3489
    %4127 = vmatprep.subr.bf16.mxu0 %v3498
    %4128 = vmatpush1.bf16.msra.mxu0 %v3497
    %4129 = vmatprep.subr.bf16.mxu0 %v3506
    %4130 = vmatpush1.bf16.msra.mxu0 %v3505
    %4131 = vmatprep.subr.bf16.mxu0 %v3514
    %4132 = vmatpush1.bf16.msra.mxu0 %v3513
    %4133 = vmatprep.subr.bf16.mxu0 %v3522
    %4134 = vmatpush1.bf16.msra.mxu0 %v3521
    %4135 = vmatprep.subr.bf16.mxu0 %v3530
    %4136 = vmatpush1.bf16.msra.mxu0 %v3529
    %4137 = vmatprep.subr.bf16.mxu0 %v3538
    %4138 = vmatpush1.bf16.msra.mxu0 %v3537
    %4139 = vmatprep.subr.bf16.mxu0 %v3546
    %4140 = vmatpush1.bf16.msra.mxu0 %v3545
    %4141 = vmatprep.subr.bf16.mxu0 %v3554
    %4142 = vmatpush1.bf16.msra.mxu0 %v3553
    %4143 = vmatprep.subr.bf16.mxu0 %v3562
    %4144 = vmatpush1.bf16.msra.mxu0 %v3561
    %4145 = vmatprep.mubr.bf16.mxu0 %v2410
    %4146 = vmatmul.mubr.bf16.gmra.mrb[0].mxu0 %v2409
    %v4147 = vpop.f32.mrb[0].mxu0
    %v4148 = vadd.f32 0.0, %v4147
    %v4149 = vpop.f32.mrb[0].mxu0
    %v4150 = vadd.f32 0.0, %v4149
    %v4151 = vpop.f32.mrb[0].mxu0
    %v4152 = vpop.f32.mrb[0].mxu0
    %4153 = vdwg.mxu0
    %4154 = vmatprep.subr.bf16.mxu0 %v3570
    %4155 = vmatpush1.bf16.msra.mxu0 %v3569
    %4156 = vmatprep.subr.bf16.mxu0 %v3578
    %4157 = vmatpush1.bf16.msra.mxu0 %v3577
    %4158 = vmatprep.subr.bf16.mxu0 %v3586
    %4159 = vmatpush1.bf16.msra.mxu0 %v3585
    %4160 = vmatprep.subr.bf16.mxu0 %v3594
    %4161 = vmatpush1.bf16.msra.mxu0 %v3593
    %4162 = vmatprep.subr.bf16.mxu0 %v3602
    %4163 = vmatpush1.bf16.msra.mxu0 %v3601
    %4164 = vmatprep.subr.bf16.mxu0 %v3610
    %4165 = vmatpush1.bf16.msra.mxu0 %v3609
    %4166 = vmatprep.subr.bf16.mxu0 %v3618
    %4167 = vmatpush1.bf16.msra.mxu0 %v3617
    %4168 = vmatprep.subr.bf16.mxu0 %v3626
    %4169 = vmatpush1.bf16.msra.mxu0 %v3625
    %4170 = vmatprep.subr.bf16.mxu0 %v3634
    %4171 = vmatpush1.bf16.msra.mxu0 %v3633
    %4172 = vmatprep.subr.bf16.mxu0 %v3642
    %4173 = vmatpush1.bf16.msra.mxu0 %v3641
    %4174 = vmatprep.subr.bf16.mxu0 %v3650
    %4175 = vmatpush1.bf16.msra.mxu0 %v3649
    %4176 = vmatprep.subr.bf16.mxu0 %v3658
    %4177 = vmatpush1.bf16.msra.mxu0 %v3657
    %4178 = vmatprep.subr.bf16.mxu0 %v3666
    %4179 = vmatpush1.bf16.msra.mxu0 %v3665
    %4180 = vmatprep.subr.bf16.mxu0 %v3674
    %4181 = vmatpush1.bf16.msra.mxu0 %v3673
    %4182 = vmatprep.subr.bf16.mxu0 %v3682
    %4183 = vmatpush1.bf16.msra.mxu0 %v3681
    %4184 = vmatprep.subr.bf16.mxu0 %v3690
    %4185 = vmatpush1.bf16.msra.mxu0 %v3689
    %4186 = vmatprep.mubr.bf16.mxu0 %v2412
    %4187 = vmatmul.mubr.bf16.gmra.mrb[0].mxu0 %v2411
    %v4188 = vpop.f32.mrb[0].mxu0
    %v4189 = vadd.f32 %v4148, %v4188
    %v4190 = vpop.f32.mrb[0].mxu0
    %v4191 = vadd.f32 %v4150, %v4190
    %v4192 = vpop.f32.mrb[0].mxu0
    %v4193 = vpop.f32.mrb[0].mxu0
    %4194 = vdwg.mxu0
    %4195 = vmatprep.subr.bf16.mxu0 %v3444
    %4196 = vmatpush1.bf16.msra.mxu0 %v3443
    %4197 = vmatprep.subr.bf16.mxu0 %v3452
    %4198 = vmatpush1.bf16.msra.mxu0 %v3451
    %4199 = vmatprep.subr.bf16.mxu0 %v3460
    %4200 = vmatpush1.bf16.msra.mxu0 %v3459
    %4201 = vmatprep.subr.bf16.mxu0 %v3468
    %4202 = vmatpush1.bf16.msra.mxu0 %v3467
    %4203 = vmatprep.subr.bf16.mxu0 %v3476
    %4204 = vmatpush1.bf16.msra.mxu0 %v3475
    %4205 = vmatprep.subr.bf16.mxu0 %v3484
    %4206 = vmatpush1.bf16.msra.mxu0 %v3483
    %4207 = vmatprep.subr.bf16.mxu0 %v3492
    %4208 = vmatpush1.bf16.msra.mxu0 %v3491
    %4209 = vmatprep.subr.bf16.mxu0 %v3500
    %4210 = vmatpush1.bf16.msra.mxu0 %v3499
    %4211 = vmatprep.subr.bf16.mxu0 %v3508
    %4212 = vmatpush1.bf16.msra.mxu0 %v3507
    %4213 = vmatprep.subr.bf16.mxu0 %v3516
    %4214 = vmatpush1.bf16.msra.mxu0 %v3515
    %4215 = vmatprep.subr.bf16.mxu0 %v3524
    %4216 = vmatpush1.bf16.msra.mxu0 %v3523
    %4217 = vmatprep.subr.bf16.mxu0 %v3532
    %4218 = vmatpush1.bf16.msra.mxu0 %v3531
    %4219 = vmatprep.subr.bf16.mxu0 %v3540
    %4220 = vmatpush1.bf16.msra.mxu0 %v3539
    %4221 = vmatprep.subr.bf16.mxu0 %v3548
    %4222 = vmatpush1.bf16.msra.mxu0 %v3547
    %4223 = vmatprep.subr.bf16.mxu0 %v3556
    %4224 = vmatpush1.bf16.msra.mxu0 %v3555
    %4225 = vmatprep.subr.bf16.mxu0 %v3564
    %4226 = vmatpush1.bf16.msra.mxu0 %v3563
    %4227 = vmatprep.mubr.bf16.mxu0 %v2410
    %4228 = vmatmul.mubr.bf16.gmra.mrb[0].mxu0 %v2409
    %v4229 = vpop.f32.mrb[0].mxu0
    %v4230 = vadd.f32 0.0, %v4229
    %v4231 = vpop.f32.mrb[0].mxu0
    %v4232 = vadd.f32 0.0, %v4231
    %v4233 = vpop.f32.mrb[0].mxu0
    %v4234 = vpop.f32.mrb[0].mxu0
    %4235 = vdwg.mxu0
    %4236 = vmatprep.subr.bf16.mxu0 %v3572
    %4237 = vmatpush1.bf16.msra.mxu0 %v3571
    %4238 = vmatprep.subr.bf16.mxu0 %v3580
    %4239 = vmatpush1.bf16.msra.mxu0 %v3579
    %4240 = vmatprep.subr.bf16.mxu0 %v3588
    %4241 = vmatpush1.bf16.msra.mxu0 %v3587
    %4242 = vmatprep.subr.bf16.mxu0 %v3596
    %4243 = vmatpush1.bf16.msra.mxu0 %v3595
    %4244 = vmatprep.subr.bf16.mxu0 %v3604
    %4245 = vmatpush1.bf16.msra.mxu0 %v3603
    %4246 = vmatprep.subr.bf16.mxu0 %v3612
    %4247 = vmatpush1.bf16.msra.mxu0 %v3611
    %4248 = vmatprep.subr.bf16.mxu0 %v3620
    %4249 = vmatpush1.bf16.msra.mxu0 %v3619
    %4250 = vmatprep.subr.bf16.mxu0 %v3628
    %4251 = vmatpush1.bf16.msra.mxu0 %v3627
    %4252 = vmatprep.subr.bf16.mxu0 %v3636
    %4253 = vmatpush1.bf16.msra.mxu0 %v3635
    %4254 = vmatprep.subr.bf16.mxu0 %v3644
    %4255 = vmatpush1.bf16.msra.mxu0 %v3643
    %4256 = vmatprep.subr.bf16.mxu0 %v3652
    %4257 = vmatpush1.bf16.msra.mxu0 %v3651
    %4258 = vmatprep.subr.bf16.mxu0 %v3660
    %4259 = vmatpush1.bf16.msra.mxu0 %v3659
    %4260 = vmatprep.subr.bf16.mxu0 %v3668
    %4261 = vmatpush1.bf16.msra.mxu0 %v3667
    %4262 = vmatprep.subr.bf16.mxu0 %v3676
    %4263 = vmatpush1.bf16.msra.mxu0 %v3675
    %4264 = vmatprep.subr.bf16.mxu0 %v3684
    %4265 = vmatpush1.bf16.msra.mxu0 %v3683
    %4266 = vmatprep.subr.bf16.mxu0 %v3692
    %4267 = vmatpush1.bf16.msra.mxu0 %v3691
    %4268 = vmatprep.mubr.bf16.mxu0 %v2412
    %4269 = vmatmul.mubr.bf16.gmra.mrb[0].mxu0 %v2411
    %v4270 = vpop.f32.mrb[0].mxu0
    %v4271 = vadd.f32 %v4230, %v4270
    %v4272 = vpop.f32.mrb[0].mxu0
    %v4273 = vadd.f32 %v4232, %v4272
    %v4274 = vpop.f32.mrb[0].mxu0
    %v4275 = vpop.f32.mrb[0].mxu0
    %4276 = vdwg.mxu0
    %v4285 = vrot.slane %v4025, 4
    %v4286 = vrot.slane %v4027, 4
    %v4287 = vrot.slane %v4107, 4
    %v4288 = vrot.slane %v4109, 4
    %v4289 = vrot.slane %v4189, 4
    %v4290 = vrot.slane %v4191, 4
    %v4291 = vrot.slane %v4271, 4
    %v4292 = vrot.slane %v4273, 4
    %v4301 = vadd.f32 %v2397, %v4285
    %v4302 = vadd.f32 %v2398, %v4286
    %v4303 = vadd.f32 %v2399, %v4287
    %v4304 = vadd.f32 %v2400, %v4288
    %v4305 = vadd.f32 %v2401, %v4289
    %v4306 = vadd.f32 %v2402, %v4290
    %v4307 = vadd.f32 %v2403, %v4291
    %v4308 = vadd.f32 %v2404, %v4292
    %v4309 = vxor.u32 %v4301, 2147483648
    %v4310 = vxor.u32 %v4302, 2147483648
    %v4311 = vmul.f32 %v4309, 1.442695
    %v4312 = vpow.pop %v4311
    %v4313 = vmul.f32 %v4310, 1.442695
    %v4314 = vpow.pop %v4313
    %v4315 = vadd.f32 %v4312, 1.0
    %v4316 = vadd.f32 %v4314, 1.0
    %v4317 = vrcp.pop %v4315
    %v4318 = vmul.f32 1.0, %v4317
    %v4319 = vrcp.pop %v4316
    %v4320 = vmul.f32 1.0, %v4319
    %v4321 = vxor.u32 %v4303, 2147483648
    %v4322 = vxor.u32 %v4304, 2147483648
    %v4323 = vmul.f32 %v4321, 1.442695
    %v4324 = vpow.pop %v4323
    %v4325 = vmul.f32 %v4322, 1.442695
    %v4326 = vpow.pop %v4325
    %v4327 = vadd.f32 %v4324, 1.0
    %v4328 = vadd.f32 %v4326, 1.0
    %v4329 = vrcp.pop %v4327
    %v4330 = vmul.f32 1.0, %v4329
    %v4331 = vrcp.pop %v4328
    %v4332 = vmul.f32 1.0, %v4331
    %v4333 = vtanh.pop %v4305
    %v4334 = vtanh.pop %v4306
    %v4335 = vxor.u32 %v4307, 2147483648
    %v4336 = vxor.u32 %v4308, 2147483648
    %v4337 = vmul.f32 %v4335, 1.442695
    %v4338 = vpow.pop %v4337
    %v4339 = vmul.f32 %v4336, 1.442695
    %v4340 = vpow.pop %v4339
    %v4341 = vadd.f32 %v4338, 1.0
    %v4342 = vadd.f32 %v4340, 1.0
    %v4343 = vrcp.pop %v4341
    %v4344 = vmul.f32 1.0, %v4343
    %v4345 = vrcp.pop %v4342
    %v4346 = vmul.f32 1.0, %v4345
    %v4349 = vrot.slane %v2391, 4
    %v4350 = vrot.slane %v2392, 4
    %v4353 = vmul.f32 %v4330, %v4349
    %v4354 = vmul.f32 %v4332, %v4350
    %v4355 = vmul.f32 %v4318, %v4333
    %v4356 = vmul.f32 %v4320, %v4334
    %v4357 = vadd.f32 %v4353, %v4355
    %v4358 = vadd.f32 %v4354, %v4356
    %v4359 = vtanh.pop %v4357
    %v4360 = vtanh.pop %v4358
    %v4361 = vmul.f32 %v4344, %v4359
    %v4362 = vmul.f32 %v4346, %v4360
    %v4363 = vld [vmem:[#allocation2 + $0x40] sm:$0xf]
    %v4364 = vld [vmem:[#allocation2 + $0x48] sm:$0xf]
    %v4365 = vld [vmem:[#allocation2 + $0x50] sm:$0xf]
    %v4366 = vld [vmem:[#allocation2 + $0x58] sm:$0xf]
    %v4367 = vld [vmem:[#allocation2 + $0x60] sm:$0xf]
    %v4368 = vld [vmem:[#allocation2 + $0x68] sm:$0xf]
    %v4369 = vld [vmem:[#allocation2 + $0x70] sm:$0xf]
    %v4370 = vld [vmem:[#allocation2 + $0x78] sm:$0xf]
    %v4372 = vrot.slane %v2339, 4
    %v4374 = vmul.f32 %v4361, %v4372
    %v4375 = vmul.f32 %v4362, %v4372
    %v4377 = vrot.slane %v2340, 4
    %v4379 = vmul.f32 %v4361, %v4377
    %v4380 = vmul.f32 %v4362, %v4377
    %v4381 = vpack.c.bf16 %v4374, %v4374
    %v4382 = vpack.c.bf16 %v4375, %v4375
    %v4383 = vpack.c.bf16 %v4379, %v4379
    %v4384 = vpack.c.bf16 %v4380, %v4380
    %v4389 = vrot.slane %v4381, 2
    %v4390 = vrot.slane %v4382, 2
    %v4391 = vrot.slane %v4383, 2
    %v4392 = vrot.slane %v4384, 2
    %4397 = vmatprep.subr.bf16.mxu0 %v3438
    %4398 = vmatpush1.bf16.msra.mxu0 %v3437
    %4399 = vmatprep.subr.bf16.mxu0 %v3446
    %4400 = vmatpush1.bf16.msra.mxu0 %v3445
    %4401 = vmatprep.subr.bf16.mxu0 %v3454
    %4402 = vmatpush1.bf16.msra.mxu0 %v3453
    %4403 = vmatprep.subr.bf16.mxu0 %v3462
    %4404 = vmatpush1.bf16.msra.mxu0 %v3461
    %4405 = vmatprep.subr.bf16.mxu0 %v3470
    %4406 = vmatpush1.bf16.msra.mxu0 %v3469
    %4407 = vmatprep.subr.bf16.mxu0 %v3478
    %4408 = vmatpush1.bf16.msra.mxu0 %v3477
    %4409 = vmatprep.subr.bf16.mxu0 %v3486
    %4410 = vmatpush1.bf16.msra.mxu0 %v3485
    %4411 = vmatprep.subr.bf16.mxu0 %v3494
    %4412 = vmatpush1.bf16.msra.mxu0 %v3493
    %4413 = vmatprep.subr.bf16.mxu0 %v3502
    %4414 = vmatpush1.bf16.msra.mxu0 %v3501
    %4415 = vmatprep.subr.bf16.mxu0 %v3510
    %4416 = vmatpush1.bf16.msra.mxu0 %v3509
    %4417 = vmatprep.subr.bf16.mxu0 %v3518
    %4418 = vmatpush1.bf16.msra.mxu0 %v3517
    %4419 = vmatprep.subr.bf16.mxu0 %v3526
    %4420 = vmatpush1.bf16.msra.mxu0 %v3525
    %4421 = vmatprep.subr.bf16.mxu0 %v3534
    %4422 = vmatpush1.bf16.msra.mxu0 %v3533
    %4423 = vmatprep.subr.bf16.mxu0 %v3542
    %4424 = vmatpush1.bf16.msra.mxu0 %v3541
    %4425 = vmatprep.subr.bf16.mxu0 %v3550
    %4426 = vmatpush1.bf16.msra.mxu0 %v3549
    %4427 = vmatprep.subr.bf16.mxu0 %v3558
    %4428 = vmatpush1.bf16.msra.mxu0 %v3557
    %4429 = vmatprep.mubr.bf16.mxu0 %v4390
    %4430 = vmatmul.mubr.bf16.gmra.mrb[0].mxu0 %v4389
    %v4431 = vpop.f32.mrb[0].mxu0
    %v4432 = vadd.f32 0.0, %v4431
    %v4433 = vpop.f32.mrb[0].mxu0
    %v4434 = vadd.f32 0.0, %v4433
    %v4435 = vpop.f32.mrb[0].mxu0
    %v4436 = vpop.f32.mrb[0].mxu0
    %4437 = vdwg.mxu0
    %4438 = vmatprep.subr.bf16.mxu0 %v3566
    %4439 = vmatpush1.bf16.msra.mxu0 %v3565
    %4440 = vmatprep.subr.bf16.mxu0 %v3574
    %4441 = vmatpush1.bf16.msra.mxu0 %v3573
    %4442 = vmatprep.subr.bf16.mxu0 %v3582
    %4443 = vmatpush1.bf16.msra.mxu0 %v3581
    %4444 = vmatprep.subr.bf16.mxu0 %v3590
    %4445 = vmatpush1.bf16.msra.mxu0 %v3589
    %4446 = vmatprep.subr.bf16.mxu0 %v3598
    %4447 = vmatpush1.bf16.msra.mxu0 %v3597
    %4448 = vmatprep.subr.bf16.mxu0 %v3606
    %4449 = vmatpush1.bf16.msra.mxu0 %v3605
    %4450 = vmatprep.subr.bf16.mxu0 %v3614
    %4451 = vmatpush1.bf16.msra.mxu0 %v3613
    %4452 = vmatprep.subr.bf16.mxu0 %v3622
    %4453 = vmatpush1.bf16.msra.mxu0 %v3621
    %4454 = vmatprep.subr.bf16.mxu0 %v3630
    %4455 = vmatpush1.bf16.msra.mxu0 %v3629
    %4456 = vmatprep.subr.bf16.mxu0 %v3638
    %4457 = vmatpush1.bf16.msra.mxu0 %v3637
    %4458 = vmatprep.subr.bf16.mxu0 %v3646
    %4459 = vmatpush1.bf16.msra.mxu0 %v3645
    %4460 = vmatprep.subr.bf16.mxu0 %v3654
    %4461 = vmatpush1.bf16.msra.mxu0 %v3653
    %4462 = vmatprep.subr.bf16.mxu0 %v3662
    %4463 = vmatpush1.bf16.msra.mxu0 %v3661
    %4464 = vmatprep.subr.bf16.mxu0 %v3670
    %4465 = vmatpush1.bf16.msra.mxu0 %v3669
    %4466 = vmatprep.subr.bf16.mxu0 %v3678
    %4467 = vmatpush1.bf16.msra.mxu0 %v3677
    %4468 = vmatprep.subr.bf16.mxu0 %v3686
    %4469 = vmatpush1.bf16.msra.mxu0 %v3685
    %4470 = vmatprep.mubr.bf16.mxu0 %v4392
    %4471 = vmatmul.mubr.bf16.gmra.mrb[0].mxu0 %v4391
    %v4472 = vpop.f32.mrb[0].mxu0
    %v4473 = vadd.f32 %v4432, %v4472
    %v4474 = vpop.f32.mrb[0].mxu0
    %v4475 = vadd.f32 %v4434, %v4474
    %v4476 = vpop.f32.mrb[0].mxu0
    %v4477 = vpop.f32.mrb[0].mxu0
    %4478 = vdwg.mxu0
    %4479 = vmatprep.subr.bf16.mxu0 %v3440
    %4480 = vmatpush1.bf16.msra.mxu0 %v3439
    %4481 = vmatprep.subr.bf16.mxu0 %v3448
    %4482 = vmatpush1.bf16.msra.mxu0 %v3447
    %4483 = vmatprep.subr.bf16.mxu0 %v3456
    %4484 = vmatpush1.bf16.msra.mxu0 %v3455
    %4485 = vmatprep.subr.bf16.mxu0 %v3464
    %4486 = vmatpush1.bf16.msra.mxu0 %v3463
    %4487 = vmatprep.subr.bf16.mxu0 %v3472
    %4488 = vmatpush1.bf16.msra.mxu0 %v3471
    %4489 = vmatprep.subr.bf16.mxu0 %v3480
    %4490 = vmatpush1.bf16.msra.mxu0 %v3479
    %4491 = vmatprep.subr.bf16.mxu0 %v3488
    %4492 = vmatpush1.bf16.msra.mxu0 %v3487
    %4493 = vmatprep.subr.bf16.mxu0 %v3496
    %4494 = vmatpush1.bf16.msra.mxu0 %v3495
    %4495 = vmatprep.subr.bf16.mxu0 %v3504
    %4496 = vmatpush1.bf16.msra.mxu0 %v3503
    %4497 = vmatprep.subr.bf16.mxu0 %v3512
    %4498 = vmatpush1.bf16.msra.mxu0 %v3511
    %4499 = vmatprep.subr.bf16.mxu0 %v3520
    %4500 = vmatpush1.bf16.msra.mxu0 %v3519
    %4501 = vmatprep.subr.bf16.mxu0 %v3528
    %4502 = vmatpush1.bf16.msra.mxu0 %v3527
    %4503 = vmatprep.subr.bf16.mxu0 %v3536
    %4504 = vmatpush1.bf16.msra.mxu0 %v3535
    %4505 = vmatprep.subr.bf16.mxu0 %v3544
    %4506 = vmatpush1.bf16.msra.mxu0 %v3543
    %4507 = vmatprep.subr.bf16.mxu0 %v3552
    %4508 = vmatpush1.bf16.msra.mxu0 %v3551
    %4509 = vmatprep.subr.bf16.mxu0 %v3560
    %4510 = vmatpush1.bf16.msra.mxu0 %v3559
    %4511 = vmatprep.mubr.bf16.mxu0 %v4390
    %4512 = vmatmul.mubr.bf16.gmra.mrb[0].mxu0 %v4389
    %v4513 = vpop.f32.mrb[0].mxu0
    %v4514 = vadd.f32 0.0, %v4513
    %v4515 = vpop.f32.mrb[0].mxu0
    %v4516 = vadd.f32 0.0, %v4515
    %v4517 = vpop.f32.mrb[0].mxu0
    %v4518 = vpop.f32.mrb[0].mxu0
    %4519 = vdwg.mxu0
    %4520 = vmatprep.subr.bf16.mxu0 %v3568
    %4521 = vmatpush1.bf16.msra.mxu0 %v3567
    %4522 = vmatprep.subr.bf16.mxu0 %v3576
    %4523 = vmatpush1.bf16.msra.mxu0 %v3575
    %4524 = vmatprep.subr.bf16.mxu0 %v3584
    %4525 = vmatpush1.bf16.msra.mxu0 %v3583
    %4526 = vmatprep.subr.bf16.mxu0 %v3592
    %4527 = vmatpush1.bf16.msra.mxu0 %v3591
    %4528 = vmatprep.subr.bf16.mxu0 %v3600
    %4529 = vmatpush1.bf16.msra.mxu0 %v3599
    %4530 = vmatprep.subr.bf16.mxu0 %v3608
    %4531 = vmatpush1.bf16.msra.mxu0 %v3607
    %4532 = vmatprep.subr.bf16.mxu0 %v3616
    %4533 = vmatpush1.bf16.msra.mxu0 %v3615
    %4534 = vmatprep.subr.bf16.mxu0 %v3624
    %4535 = vmatpush1.bf16.msra.mxu0 %v3623
    %4536 = vmatprep.subr.bf16.mxu0 %v3632
    %4537 = vmatpush1.bf16.msra.mxu0 %v3631
    %4538 = vmatprep.subr.bf16.mxu0 %v3640
    %4539 = vmatpush1.bf16.msra.mxu0 %v3639
    %4540 = vmatprep.subr.bf16.mxu0 %v3648
    %4541 = vmatpush1.bf16.msra.mxu0 %v3647
    %4542 = vmatprep.subr.bf16.mxu0 %v3656
    %4543 = vmatpush1.bf16.msra.mxu0 %v3655
    %4544 = vmatprep.subr.bf16.mxu0 %v3664
    %4545 = vmatpush1.bf16.msra.mxu0 %v3663
    %4546 = vmatprep.subr.bf16.mxu0 %v3672
    %4547 = vmatpush1.bf16.msra.mxu0 %v3671
    %4548 = vmatprep.subr.bf16.mxu0 %v3680
    %4549 = vmatpush1.bf16.msra.mxu0 %v3679
    %4550 = vmatprep.subr.bf16.mxu0 %v3688
    %4551 = vmatpush1.bf16.msra.mxu0 %v3687
    %4552 = vmatprep.mubr.bf16.mxu0 %v4392
    %4553 = vmatmul.mubr.bf16.gmra.mrb[0].mxu0 %v4391
    %v4554 = vpop.f32.mrb[0].mxu0
    %v4555 = vadd.f32 %v4514, %v4554
    %v4556 = vpop.f32.mrb[0].mxu0
    %v4557 = vadd.f32 %v4516, %v4556
    %v4558 = vpop.f32.mrb[0].mxu0
    %v4559 = vpop.f32.mrb[0].mxu0
    %4560 = vdwg.mxu0
    %4561 = vmatprep.subr.bf16.mxu0 %v3442
    %4562 = vmatpush1.bf16.msra.mxu0 %v3441
    %4563 = vmatprep.subr.bf16.mxu0 %v3450
    %4564 = vmatpush1.bf16.msra.mxu0 %v3449
    %4565 = vmatprep.subr.bf16.mxu0 %v3458
    %4566 = vmatpush1.bf16.msra.mxu0 %v3457
    %4567 = vmatprep.subr.bf16.mxu0 %v3466
    %4568 = vmatpush1.bf16.msra.mxu0 %v3465
    %4569 = vmatprep.subr.bf16.mxu0 %v3474
    %4570 = vmatpush1.bf16.msra.mxu0 %v3473
    %4571 = vmatprep.subr.bf16.mxu0 %v3482
    %4572 = vmatpush1.bf16.msra.mxu0 %v3481
    %4573 = vmatprep.subr.bf16.mxu0 %v3490
    %4574 = vmatpush1.bf16.msra.mxu0 %v3489
    %4575 = vmatprep.subr.bf16.mxu0 %v3498
    %4576 = vmatpush1.bf16.msra.mxu0 %v3497
    %4577 = vmatprep.subr.bf16.mxu0 %v3506
    %4578 = vmatpush1.bf16.msra.mxu0 %v3505
    %4579 = vmatprep.subr.bf16.mxu0 %v3514
    %4580 = vmatpush1.bf16.msra.mxu0 %v3513
    %4581 = vmatprep.subr.bf16.mxu0 %v3522
    %4582 = vmatpush1.bf16.msra.mxu0 %v3521
    %4583 = vmatprep.subr.bf16.mxu0 %v3530
    %4584 = vmatpush1.bf16.msra.mxu0 %v3529
    %4585 = vmatprep.subr.bf16.mxu0 %v3538
    %4586 = vmatpush1.bf16.msra.mxu0 %v3537
    %4587 = vmatprep.subr.bf16.mxu0 %v3546
    %4588 = vmatpush1.bf16.msra.mxu0 %v3545
    %4589 = vmatprep.subr.bf16.mxu0 %v3554
    %4590 = vmatpush1.bf16.msra.mxu0 %v3553
    %4591 = vmatprep.subr.bf16.mxu0 %v3562
    %4592 = vmatpush1.bf16.msra.mxu0 %v3561
    %4593 = vmatprep.mubr.bf16.mxu0 %v4390
    %4594 = vmatmul.mubr.bf16.gmra.mrb[0].mxu0 %v4389
    %v4595 = vpop.f32.mrb[0].mxu0
    %v4596 = vadd.f32 0.0, %v4595
    %v4597 = vpop.f32.mrb[0].mxu0
    %v4598 = vadd.f32 0.0, %v4597
    %v4599 = vpop.f32.mrb[0].mxu0
    %v4600 = vpop.f32.mrb[0].mxu0
    %4601 = vdwg.mxu0
    %4602 = vmatprep.subr.bf16.mxu0 %v3570
    %4603 = vmatpush1.bf16.msra.mxu0 %v3569
    %4604 = vmatprep.subr.bf16.mxu0 %v3578
    %4605 = vmatpush1.bf16.msra.mxu0 %v3577
    %4606 = vmatprep.subr.bf16.mxu0 %v3586
    %4607 = vmatpush1.bf16.msra.mxu0 %v3585
    %4608 = vmatprep.subr.bf16.mxu0 %v3594
    %4609 = vmatpush1.bf16.msra.mxu0 %v3593
    %4610 = vmatprep.subr.bf16.mxu0 %v3602
    %4611 = vmatpush1.bf16.msra.mxu0 %v3601
    %4612 = vmatprep.subr.bf16.mxu0 %v3610
    %4613 = vmatpush1.bf16.msra.mxu0 %v3609
    %4614 = vmatprep.subr.bf16.mxu0 %v3618
    %4615 = vmatpush1.bf16.msra.mxu0 %v3617
    %4616 = vmatprep.subr.bf16.mxu0 %v3626
    %4617 = vmatpush1.bf16.msra.mxu0 %v3625
    %4618 = vmatprep.subr.bf16.mxu0 %v3634
    %4619 = vmatpush1.bf16.msra.mxu0 %v3633
    %4620 = vmatprep.subr.bf16.mxu0 %v3642
    %4621 = vmatpush1.bf16.msra.mxu0 %v3641
    %4622 = vmatprep.subr.bf16.mxu0 %v3650
    %4623 = vmatpush1.bf16.msra.mxu0 %v3649
    %4624 = vmatprep.subr.bf16.mxu0 %v3658
    %4625 = vmatpush1.bf16.msra.mxu0 %v3657
    %4626 = vmatprep.subr.bf16.mxu0 %v3666
    %4627 = vmatpush1.bf16.msra.mxu0 %v3665
    %4628 = vmatprep.subr.bf16.mxu0 %v3674
    %4629 = vmatpush1.bf16.msra.mxu0 %v3673
    %4630 = vmatprep.subr.bf16.mxu0 %v3682
    %4631 = vmatpush1.bf16.msra.mxu0 %v3681
    %4632 = vmatprep.subr.bf16.mxu0 %v3690
    %4633 = vmatpush1.bf16.msra.mxu0 %v3689
    %4634 = vmatprep.mubr.bf16.mxu0 %v4392
    %4635 = vmatmul.mubr.bf16.gmra.mrb[0].mxu0 %v4391
    %v4636 = vpop.f32.mrb[0].mxu0
    %v4637 = vadd.f32 %v4596, %v4636
    %v4638 = vpop.f32.mrb[0].mxu0
    %v4639 = vadd.f32 %v4598, %v4638
    %v4640 = vpop.f32.mrb[0].mxu0
    %v4641 = vpop.f32.mrb[0].mxu0
    %4642 = vdwg.mxu0
    %4643 = vmatprep.subr.bf16.mxu0 %v3444
    %4644 = vmatpush1.bf16.msra.mxu0 %v3443
    %4645 = vmatprep.subr.bf16.mxu0 %v3452
    %4646 = vmatpush1.bf16.msra.mxu0 %v3451
    %4647 = vmatprep.subr.bf16.mxu0 %v3460
    %4648 = vmatpush1.bf16.msra.mxu0 %v3459
    %4649 = vmatprep.subr.bf16.mxu0 %v3468
    %4650 = vmatpush1.bf16.msra.mxu0 %v3467
    %4651 = vmatprep.subr.bf16.mxu0 %v3476
    %4652 = vmatpush1.bf16.msra.mxu0 %v3475
    %4653 = vmatprep.subr.bf16.mxu0 %v3484
    %4654 = vmatpush1.bf16.msra.mxu0 %v3483
    %4655 = vmatprep.subr.bf16.mxu0 %v3492
    %4656 = vmatpush1.bf16.msra.mxu0 %v3491
    %4657 = vmatprep.subr.bf16.mxu0 %v3500
    %4658 = vmatpush1.bf16.msra.mxu0 %v3499
    %4659 = vmatprep.subr.bf16.mxu0 %v3508
    %4660 = vmatpush1.bf16.msra.mxu0 %v3507
    %4661 = vmatprep.subr.bf16.mxu0 %v3516
    %4662 = vmatpush1.bf16.msra.mxu0 %v3515
    %4663 = vmatprep.subr.bf16.mxu0 %v3524
    %4664 = vmatpush1.bf16.msra.mxu0 %v3523
    %4665 = vmatprep.subr.bf16.mxu0 %v3532
    %4666 = vmatpush1.bf16.msra.mxu0 %v3531
    %4667 = vmatprep.subr.bf16.mxu0 %v3540
    %4668 = vmatpush1.bf16.msra.mxu0 %v3539
    %4669 = vmatprep.subr.bf16.mxu0 %v3548
    %4670 = vmatpush1.bf16.msra.mxu0 %v3547
    %4671 = vmatprep.subr.bf16.mxu0 %v3556
    %4672 = vmatpush1.bf16.msra.mxu0 %v3555
    %4673 = vmatprep.subr.bf16.mxu0 %v3564
    %4674 = vmatpush1.bf16.msra.mxu0 %v3563
    %4675 = vmatprep.mubr.bf16.mxu0 %v4390
    %4676 = vmatmul.mubr.bf16.gmra.mrb[0].mxu0 %v4389
    %v4677 = vpop.f32.mrb[0].mxu0
    %v4678 = vadd.f32 0.0, %v4677
    %v4679 = vpop.f32.mrb[0].mxu0
    %v4680 = vadd.f32 0.0, %v4679
    %v4681 = vpop.f32.mrb[0].mxu0
    %v4682 = vpop.f32.mrb[0].mxu0
    %4683 = vdwg.mxu0
    %4684 = vmatprep.subr.bf16.mxu0 %v3572
    %4685 = vmatpush1.bf16.msra.mxu0 %v3571
    %4686 = vmatprep.subr.bf16.mxu0 %v3580
    %4687 = vmatpush1.bf16.msra.mxu0 %v3579
    %4688 = vmatprep.subr.bf16.mxu0 %v3588
    %4689 = vmatpush1.bf16.msra.mxu0 %v3587
    %4690 = vmatprep.subr.bf16.mxu0 %v3596
    %4691 = vmatpush1.bf16.msra.mxu0 %v3595
    %4692 = vmatprep.subr.bf16.mxu0 %v3604
    %4693 = vmatpush1.bf16.msra.mxu0 %v3603
    %4694 = vmatprep.subr.bf16.mxu0 %v3612
    %4695 = vmatpush1.bf16.msra.mxu0 %v3611
    %4696 = vmatprep.subr.bf16.mxu0 %v3620
    %4697 = vmatpush1.bf16.msra.mxu0 %v3619
    %4698 = vmatprep.subr.bf16.mxu0 %v3628
    %4699 = vmatpush1.bf16.msra.mxu0 %v3627
    %4700 = vmatprep.subr.bf16.mxu0 %v3636
    %4701 = vmatpush1.bf16.msra.mxu0 %v3635
    %4702 = vmatprep.subr.bf16.mxu0 %v3644
    %4703 = vmatpush1.bf16.msra.mxu0 %v3643
    %4704 = vmatprep.subr.bf16.mxu0 %v3652
    %4705 = vmatpush1.bf16.msra.mxu0 %v3651
    %4706 = vmatprep.subr.bf16.mxu0 %v3660
    %4707 = vmatpush1.bf16.msra.mxu0 %v3659
    %4708 = vmatprep.subr.bf16.mxu0 %v3668
    %4709 = vmatpush1.bf16.msra.mxu0 %v3667
    %4710 = vmatprep.subr.bf16.mxu0 %v3676
    %4711 = vmatpush1.bf16.msra.mxu0 %v3675
    %4712 = vmatprep.subr.bf16.mxu0 %v3684
    %4713 = vmatpush1.bf16.msra.mxu0 %v3683
    %4714 = vmatprep.subr.bf16.mxu0 %v3692
    %4715 = vmatpush1.bf16.msra.mxu0 %v3691
    %4716 = vmatprep.mubr.bf16.mxu0 %v4392
    %4717 = vmatmul.mubr.bf16.gmra.mrb[0].mxu0 %v4391
    %v4718 = vpop.f32.mrb[0].mxu0
    %v4719 = vadd.f32 %v4678, %v4718
    %v4720 = vpop.f32.mrb[0].mxu0
    %v4721 = vadd.f32 %v4680, %v4720
    %v4722 = vpop.f32.mrb[0].mxu0
    %v4723 = vpop.f32.mrb[0].mxu0
    %4724 = vdwg.mxu0
    %v4725 = vadd.f32 %v4363, %v4473
    %v4726 = vadd.f32 %v4364, %v4475
    %v4727 = vadd.f32 %v4365, %v4555
    %v4728 = vadd.f32 %v4366, %v4557
    %v4729 = vadd.f32 %v4367, %v4637
    %v4730 = vadd.f32 %v4368, %v4639
    %v4731 = vadd.f32 %v4369, %v4719
    %v4732 = vadd.f32 %v4370, %v4721
    %v4733 = vxor.u32 %v4725, 2147483648
    %v4734 = vxor.u32 %v4726, 2147483648
    %v4735 = vmul.f32 %v4733, 1.442695
    %v4736 = vpow.pop %v4735
    %v4737 = vmul.f32 %v4734, 1.442695
    %v4738 = vpow.pop %v4737
    %v4739 = vadd.f32 %v4736, 1.0
    %v4740 = vadd.f32 %v4738, 1.0
    %v4741 = vrcp.pop %v4739
    %v4742 = vmul.f32 1.0, %v4741
    %v4743 = vrcp.pop %v4740
    %v4744 = vmul.f32 1.0, %v4743
    %v4745 = vxor.u32 %v4727, 2147483648
    %v4746 = vxor.u32 %v4728, 2147483648
    %v4747 = vmul.f32 %v4745, 1.442695
    %v4748 = vpow.pop %v4747
    %v4749 = vmul.f32 %v4746, 1.442695
    %v4750 = vpow.pop %v4749
    %v4751 = vadd.f32 %v4748, 1.0
    %v4752 = vadd.f32 %v4750, 1.0
    %v4753 = vrcp.pop %v4751
    %v4754 = vmul.f32 1.0, %v4753
    %v4755 = vrcp.pop %v4752
    %v4756 = vmul.f32 1.0, %v4755
    %v4757 = vtanh.pop %v4729
    %v4758 = vtanh.pop %v4730
    %v4759 = vxor.u32 %v4731, 2147483648
    %v4760 = vxor.u32 %v4732, 2147483648
    %v4761 = vmul.f32 %v4759, 1.442695
    %v4762 = vpow.pop %v4761
    %v4763 = vmul.f32 %v4760, 1.442695
    %v4764 = vpow.pop %v4763
    %v4765 = vadd.f32 %v4762, 1.0
    %v4766 = vadd.f32 %v4764, 1.0
    %v4767 = vrcp.pop %v4765
    %v4768 = vmul.f32 1.0, %v4767
    %v4769 = vrcp.pop %v4766
    %v4770 = vmul.f32 1.0, %v4769
    %v4773 = vrot.slane %v4357, 4
    %v4774 = vrot.slane %v4358, 4
    %v4777 = vmul.f32 %v4754, %v4773
    %v4778 = vmul.f32 %v4756, %v4774
    %v4779 = vmul.f32 %v4742, %v4757
    %v4780 = vmul.f32 %v4744, %v4758
    %v4781 = vadd.f32 %v4777, %v4779
    %v4782 = vadd.f32 %v4778, %v4780
    %v4783 = vtanh.pop %v4781
    %v4784 = vtanh.pop %v4782
    %v4785 = vmul.f32 %v4768, %v4783
    %v4786 = vmul.f32 %v4770, %v4784
    %v4787 = vld [vmem:[#allocation2 + $0x40] sm:$0xf0]
    %v4788 = vld [vmem:[#allocation2 + $0x48] sm:$0xf0]
    %v4789 = vld [vmem:[#allocation2 + $0x50] sm:$0xf0]
    %v4790 = vld [vmem:[#allocation2 + $0x58] sm:$0xf0]
    %v4791 = vld [vmem:[#allocation2 + $0x60] sm:$0xf0]
    %v4792 = vld [vmem:[#allocation2 + $0x68] sm:$0xf0]
    %v4793 = vld [vmem:[#allocation2 + $0x70] sm:$0xf0]
    %v4794 = vld [vmem:[#allocation2 + $0x78] sm:$0xf0]
    %v4795 = vmul.f32 %v4785, %v2339
    %v4796 = vmul.f32 %v4786, %v2339
    %v4797 = vmul.f32 %v4785, %v2340
    %v4798 = vmul.f32 %v4786, %v2340
    %v4799 = vpack.c.bf16 %v4795, %v4795
    %v4800 = vpack.c.bf16 %v4796, %v4796
    %v4801 = vpack.c.bf16 %v4797, %v4797
    %v4802 = vpack.c.bf16 %v4798, %v4798
    %4803 = vmatprep.subr.bf16.mxu0 %v3438
    %4804 = vmatpush1.bf16.msra.mxu0 %v3437
    %4805 = vmatprep.subr.bf16.mxu0 %v3446
    %4806 = vmatpush1.bf16.msra.mxu0 %v3445
    %4807 = vmatprep.subr.bf16.mxu0 %v3454
    %4808 = vmatpush1.bf16.msra.mxu0 %v3453
    %4809 = vmatprep.subr.bf16.mxu0 %v3462
    %4810 = vmatpush1.bf16.msra.mxu0 %v3461
    %4811 = vmatprep.subr.bf16.mxu0 %v3470
    %4812 = vmatpush1.bf16.msra.mxu0 %v3469
    %4813 = vmatprep.subr.bf16.mxu0 %v3478
    %4814 = vmatpush1.bf16.msra.mxu0 %v3477
    %4815 = vmatprep.subr.bf16.mxu0 %v3486
    %4816 = vmatpush1.bf16.msra.mxu0 %v3485
    %4817 = vmatprep.subr.bf16.mxu0 %v3494
    %4818 = vmatpush1.bf16.msra.mxu0 %v3493
    %4819 = vmatprep.subr.bf16.mxu0 %v3502
    %4820 = vmatpush1.bf16.msra.mxu0 %v3501
    %4821 = vmatprep.subr.bf16.mxu0 %v3510
    %4822 = vmatpush1.bf16.msra.mxu0 %v3509
    %4823 = vmatprep.subr.bf16.mxu0 %v3518
    %4824 = vmatpush1.bf16.msra.mxu0 %v3517
    %4825 = vmatprep.subr.bf16.mxu0 %v3526
    %4826 = vmatpush1.bf16.msra.mxu0 %v3525
    %4827 = vmatprep.subr.bf16.mxu0 %v3534
    %4828 = vmatpush1.bf16.msra.mxu0 %v3533
    %4829 = vmatprep.subr.bf16.mxu0 %v3542
    %4830 = vmatpush1.bf16.msra.mxu0 %v3541
    %4831 = vmatprep.subr.bf16.mxu0 %v3550
    %4832 = vmatpush1.bf16.msra.mxu0 %v3549
    %4833 = vmatprep.subr.bf16.mxu0 %v3558
    %4834 = vmatpush1.bf16.msra.mxu0 %v3557
    %4835 = vmatprep.mubr.bf16.mxu0 %v4800
    %4836 = vmatmul.mubr.bf16.gmra.mrb[0].mxu0 %v4799
    %v4837 = vpop.f32.mrb[0].mxu0
    %v4838 = vadd.f32 0.0, %v4837
    %v4839 = vpop.f32.mrb[0].mxu0
    %v4840 = vadd.f32 0.0, %v4839
    %v4841 = vpop.f32.mrb[0].mxu0
    %v4842 = vpop.f32.mrb[0].mxu0
    %4843 = vdwg.mxu0
    %4844 = vmatprep.subr.bf16.mxu0 %v3566
    %4845 = vmatpush1.bf16.msra.mxu0 %v3565
    %4846 = vmatprep.subr.bf16.mxu0 %v3574
    %4847 = vmatpush1.bf16.msra.mxu0 %v3573
    %4848 = vmatprep.subr.bf16.mxu0 %v3582
    %4849 = vmatpush1.bf16.msra.mxu0 %v3581
    %4850 = vmatprep.subr.bf16.mxu0 %v3590
    %4851 = vmatpush1.bf16.msra.mxu0 %v3589
    %4852 = vmatprep.subr.bf16.mxu0 %v3598
    %4853 = vmatpush1.bf16.msra.mxu0 %v3597
    %4854 = vmatprep.subr.bf16.mxu0 %v3606
    %4855 = vmatpush1.bf16.msra.mxu0 %v3605
    %4856 = vmatprep.subr.bf16.mxu0 %v3614
    %4857 = vmatpush1.bf16.msra.mxu0 %v3613
    %4858 = vmatprep.subr.bf16.mxu0 %v3622
    %4859 = vmatpush1.bf16.msra.mxu0 %v3621
    %4860 = vmatprep.subr.bf16.mxu0 %v3630
    %4861 = vmatpush1.bf16.msra.mxu0 %v3629
    %4862 = vmatprep.subr.bf16.mxu0 %v3638
    %4863 = vmatpush1.bf16.msra.mxu0 %v3637
    %4864 = vmatprep.subr.bf16.mxu0 %v3646
    %4865 = vmatpush1.bf16.msra.mxu0 %v3645
    %4866 = vmatprep.subr.bf16.mxu0 %v3654
    %4867 = vmatpush1.bf16.msra.mxu0 %v3653
    %4868 = vmatprep.subr.bf16.mxu0 %v3662
    %4869 = vmatpush1.bf16.msra.mxu0 %v3661
    %4870 = vmatprep.subr.bf16.mxu0 %v3670
    %4871 = vmatpush1.bf16.msra.mxu0 %v3669
    %4872 = vmatprep.subr.bf16.mxu0 %v3678
    %4873 = vmatpush1.bf16.msra.mxu0 %v3677
    %4874 = vmatprep.subr.bf16.mxu0 %v3686
    %4875 = vmatpush1.bf16.msra.mxu0 %v3685
    %4876 = vmatprep.mubr.bf16.mxu0 %v4802
    %4877 = vmatmul.mubr.bf16.gmra.mrb[0].mxu0 %v4801
    %v4878 = vpop.f32.mrb[0].mxu0
    %v4879 = vadd.f32 %v4838, %v4878
    %v4880 = vpop.f32.mrb[0].mxu0
    %v4881 = vadd.f32 %v4840, %v4880
    %v4882 = vpop.f32.mrb[0].mxu0
    %v4883 = vpop.f32.mrb[0].mxu0
    %4884 = vdwg.mxu0
    %4885 = vmatprep.subr.bf16.mxu0 %v3440
    %4886 = vmatpush1.bf16.msra.mxu0 %v3439
    %4887 = vmatprep.subr.bf16.mxu0 %v3448
    %4888 = vmatpush1.bf16.msra.mxu0 %v3447
    %4889 = vmatprep.subr.bf16.mxu0 %v3456
    %4890 = vmatpush1.bf16.msra.mxu0 %v3455
    %4891 = vmatprep.subr.bf16.mxu0 %v3464
    %4892 = vmatpush1.bf16.msra.mxu0 %v3463
    %4893 = vmatprep.subr.bf16.mxu0 %v3472
    %4894 = vmatpush1.bf16.msra.mxu0 %v3471
    %4895 = vmatprep.subr.bf16.mxu0 %v3480
    %4896 = vmatpush1.bf16.msra.mxu0 %v3479
    %4897 = vmatprep.subr.bf16.mxu0 %v3488
    %4898 = vmatpush1.bf16.msra.mxu0 %v3487
    %4899 = vmatprep.subr.bf16.mxu0 %v3496
    %4900 = vmatpush1.bf16.msra.mxu0 %v3495
    %4901 = vmatprep.subr.bf16.mxu0 %v3504
    %4902 = vmatpush1.bf16.msra.mxu0 %v3503
    %4903 = vmatprep.subr.bf16.mxu0 %v3512
    %4904 = vmatpush1.bf16.msra.mxu0 %v3511
    %4905 = vmatprep.subr.bf16.mxu0 %v3520
    %4906 = vmatpush1.bf16.msra.mxu0 %v3519
    %4907 = vmatprep.subr.bf16.mxu0 %v3528
    %4908 = vmatpush1.bf16.msra.mxu0 %v3527
    %4909 = vmatprep.subr.bf16.mxu0 %v3536
    %4910 = vmatpush1.bf16.msra.mxu0 %v3535
    %4911 = vmatprep.subr.bf16.mxu0 %v3544
    %4912 = vmatpush1.bf16.msra.mxu0 %v3543
    %4913 = vmatprep.subr.bf16.mxu0 %v3552
    %4914 = vmatpush1.bf16.msra.mxu0 %v3551
    %4915 = vmatprep.subr.bf16.mxu0 %v3560
    %4916 = vmatpush1.bf16.msra.mxu0 %v3559
    %4917 = vmatprep.mubr.bf16.mxu0 %v4800
    %4918 = vmatmul.mubr.bf16.gmra.mrb[0].mxu0 %v4799
    %v4919 = vpop.f32.mrb[0].mxu0
    %v4920 = vadd.f32 0.0, %v4919
    %v4921 = vpop.f32.mrb[0].mxu0
    %v4922 = vadd.f32 0.0, %v4921
    %v4923 = vpop.f32.mrb[0].mxu0
    %v4924 = vpop.f32.mrb[0].mxu0
    %4925 = vdwg.mxu0
    %4926 = vmatprep.subr.bf16.mxu0 %v3568
    %4927 = vmatpush1.bf16.msra.mxu0 %v3567
    %4928 = vmatprep.subr.bf16.mxu0 %v3576
    %4929 = vmatpush1.bf16.msra.mxu0 %v3575
    %4930 = vmatprep.subr.bf16.mxu0 %v3584
    %4931 = vmatpush1.bf16.msra.mxu0 %v3583
    %4932 = vmatprep.subr.bf16.mxu0 %v3592
    %4933 = vmatpush1.bf16.msra.mxu0 %v3591
    %4934 = vmatprep.subr.bf16.mxu0 %v3600
    %4935 = vmatpush1.bf16.msra.mxu0 %v3599
    %4936 = vmatprep.subr.bf16.mxu0 %v3608
    %4937 = vmatpush1.bf16.msra.mxu0 %v3607
    %4938 = vmatprep.subr.bf16.mxu0 %v3616
    %4939 = vmatpush1.bf16.msra.mxu0 %v3615
    %4940 = vmatprep.subr.bf16.mxu0 %v3624
    %4941 = vmatpush1.bf16.msra.mxu0 %v3623
    %4942 = vmatprep.subr.bf16.mxu0 %v3632
    %4943 = vmatpush1.bf16.msra.mxu0 %v3631
    %4944 = vmatprep.subr.bf16.mxu0 %v3640
    %4945 = vmatpush1.bf16.msra.mxu0 %v3639
    %4946 = vmatprep.subr.bf16.mxu0 %v3648
    %4947 = vmatpush1.bf16.msra.mxu0 %v3647
    %4948 = vmatprep.subr.bf16.mxu0 %v3656
    %4949 = vmatpush1.bf16.msra.mxu0 %v3655
    %4950 = vmatprep.subr.bf16.mxu0 %v3664
    %4951 = vmatpush1.bf16.msra.mxu0 %v3663
    %4952 = vmatprep.subr.bf16.mxu0 %v3672
    %4953 = vmatpush1.bf16.msra.mxu0 %v3671
    %4954 = vmatprep.subr.bf16.mxu0 %v3680
    %4955 = vmatpush1.bf16.msra.mxu0 %v3679
    %4956 = vmatprep.subr.bf16.mxu0 %v3688
    %4957 = vmatpush1.bf16.msra.mxu0 %v3687
    %4958 = vmatprep.mubr.bf16.mxu0 %v4802
    %4959 = vmatmul.mubr.bf16.gmra.mrb[0].mxu0 %v4801
    %v4960 = vpop.f32.mrb[0].mxu0
    %v4961 = vadd.f32 %v4920, %v4960
    %v4962 = vpop.f32.mrb[0].mxu0
    %v4963 = vadd.f32 %v4922, %v4962
    %v4964 = vpop.f32.mrb[0].mxu0
    %v4965 = vpop.f32.mrb[0].mxu0
    %4966 = vdwg.mxu0
    %4967 = vmatprep.subr.bf16.mxu0 %v3442
    %4968 = vmatpush1.bf16.msra.mxu0 %v3441
    %4969 = vmatprep.subr.bf16.mxu0 %v3450
    %4970 = vmatpush1.bf16.msra.mxu0 %v3449
    %4971 = vmatprep.subr.bf16.mxu0 %v3458
    %4972 = vmatpush1.bf16.msra.mxu0 %v3457
    %4973 = vmatprep.subr.bf16.mxu0 %v3466
    %4974 = vmatpush1.bf16.msra.mxu0 %v3465
    %4975 = vmatprep.subr.bf16.mxu0 %v3474
    %4976 = vmatpush1.bf16.msra.mxu0 %v3473
    %4977 = vmatprep.subr.bf16.mxu0 %v3482
    %4978 = vmatpush1.bf16.msra.mxu0 %v3481
    %4979 = vmatprep.subr.bf16.mxu0 %v3490
    %4980 = vmatpush1.bf16.msra.mxu0 %v3489
    %4981 = vmatprep.subr.bf16.mxu0 %v3498
    %4982 = vmatpush1.bf16.msra.mxu0 %v3497
    %4983 = vmatprep.subr.bf16.mxu0 %v3506
    %4984 = vmatpush1.bf16.msra.mxu0 %v3505
    %4985 = vmatprep.subr.bf16.mxu0 %v3514
    %4986 = vmatpush1.bf16.msra.mxu0 %v3513
    %4987 = vmatprep.subr.bf16.mxu0 %v3522
    %4988 = vmatpush1.bf16.msra.mxu0 %v3521
    %4989 = vmatprep.subr.bf16.mxu0 %v3530
    %4990 = vmatpush1.bf16.msra.mxu0 %v3529
    %4991 = vmatprep.subr.bf16.mxu0 %v3538
    %4992 = vmatpush1.bf16.msra.mxu0 %v3537
    %4993 = vmatprep.subr.bf16.mxu0 %v3546
    %4994 = vmatpush1.bf16.msra.mxu0 %v3545
    %4995 = vmatprep.subr.bf16.mxu0 %v3554
    %4996 = vmatpush1.bf16.msra.mxu0 %v3553
    %4997 = vmatprep.subr.bf16.mxu0 %v3562
    %4998 = vmatpush1.bf16.msra.mxu0 %v3561
    %4999 = vmatprep.mubr.bf16.mxu0 %v4800
    %5000 = vmatmul.mubr.bf16.gmra.mrb[0].mxu0 %v4799
    %v5001 = vpop.f32.mrb[0].mxu0
    %v5002 = vadd.f32 0.0, %v5001
    %v5003 = vpop.f32.mrb[0].mxu0
    %v5004 = vadd.f32 0.0, %v5003
    %v5005 = vpop.f32.mrb[0].mxu0
    %v5006 = vpop.f32.mrb[0].mxu0
    %5007 = vdwg.mxu0
    %5008 = vmatprep.subr.bf16.mxu0 %v3570
    %5009 = vmatpush1.bf16.msra.mxu0 %v3569
    %5010 = vmatprep.subr.bf16.mxu0 %v3578
    %5011 = vmatpush1.bf16.msra.mxu0 %v3577
    %5012 = vmatprep.subr.bf16.mxu0 %v3586
    %5013 = vmatpush1.bf16.msra.mxu0 %v3585
    %5014 = vmatprep.subr.bf16.mxu0 %v3594
    %5015 = vmatpush1.bf16.msra.mxu0 %v3593
    %5016 = vmatprep.subr.bf16.mxu0 %v3602
    %5017 = vmatpush1.bf16.msra.mxu0 %v3601
    %5018 = vmatprep.subr.bf16.mxu0 %v3610
    %5019 = vmatpush1.bf16.msra.mxu0 %v3609
    %5020 = vmatprep.subr.bf16.mxu0 %v3618
    %5021 = vmatpush1.bf16.msra.mxu0 %v3617
    %5022 = vmatprep.subr.bf16.mxu0 %v3626
    %5023 = vmatpush1.bf16.msra.mxu0 %v3625
    %5024 = vmatprep.subr.bf16.mxu0 %v3634
    %5025 = vmatpush1.bf16.msra.mxu0 %v3633
    %5026 = vmatprep.subr.bf16.mxu0 %v3642
    %5027 = vmatpush1.bf16.msra.mxu0 %v3641
    %5028 = vmatprep.subr.bf16.mxu0 %v3650
    %5029 = vmatpush1.bf16.msra.mxu0 %v3649
    %5030 = vmatprep.subr.bf16.mxu0 %v3658
    %5031 = vmatpush1.bf16.msra.mxu0 %v3657
    %5032 = vmatprep.subr.bf16.mxu0 %v3666
    %5033 = vmatpush1.bf16.msra.mxu0 %v3665
    %5034 = vmatprep.subr.bf16.mxu0 %v3674
    %5035 = vmatpush1.bf16.msra.mxu0 %v3673
    %5036 = vmatprep.subr.bf16.mxu0 %v3682
    %5037 = vmatpush1.bf16.msra.mxu0 %v3681
    %5038 = vmatprep.subr.bf16.mxu0 %v3690
    %5039 = vmatpush1.bf16.msra.mxu0 %v3689
    %5040 = vmatprep.mubr.bf16.mxu0 %v4802
    %5041 = vmatmul.mubr.bf16.gmra.mrb[0].mxu0 %v4801
    %v5042 = vpop.f32.mrb[0].mxu0
    %v5043 = vadd.f32 %v5002, %v5042
    %v5044 = vpop.f32.mrb[0].mxu0
    %v5045 = vadd.f32 %v5004, %v5044
    %v5046 = vpop.f32.mrb[0].mxu0
    %v5047 = vpop.f32.mrb[0].mxu0
    %5048 = vdwg.mxu0
    %5049 = vmatprep.subr.bf16.mxu0 %v3444
    %5050 = vmatpush1.bf16.msra.mxu0 %v3443
    %5051 = vmatprep.subr.bf16.mxu0 %v3452
    %5052 = vmatpush1.bf16.msra.mxu0 %v3451
    %5053 = vmatprep.subr.bf16.mxu0 %v3460
    %5054 = vmatpush1.bf16.msra.mxu0 %v3459
    %5055 = vmatprep.subr.bf16.mxu0 %v3468
    %5056 = vmatpush1.bf16.msra.mxu0 %v3467
    %5057 = vmatprep.subr.bf16.mxu0 %v3476
    %5058 = vmatpush1.bf16.msra.mxu0 %v3475
    %5059 = vmatprep.subr.bf16.mxu0 %v3484
    %5060 = vmatpush1.bf16.msra.mxu0 %v3483
    %5061 = vmatprep.subr.bf16.mxu0 %v3492
    %5062 = vmatpush1.bf16.msra.mxu0 %v3491
    %5063 = vmatprep.subr.bf16.mxu0 %v3500
    %5064 = vmatpush1.bf16.msra.mxu0 %v3499
    %5065 = vmatprep.subr.bf16.mxu0 %v3508
    %5066 = vmatpush1.bf16.msra.mxu0 %v3507
    %5067 = vmatprep.subr.bf16.mxu0 %v3516
    %5068 = vmatpush1.bf16.msra.mxu0 %v3515
    %5069 = vmatprep.subr.bf16.mxu0 %v3524
    %5070 = vmatpush1.bf16.msra.mxu0 %v3523
    %5071 = vmatprep.subr.bf16.mxu0 %v3532
    %5072 = vmatpush1.bf16.msra.mxu0 %v3531
    %5073 = vmatprep.subr.bf16.mxu0 %v3540
    %5074 = vmatpush1.bf16.msra.mxu0 %v3539
    %5075 = vmatprep.subr.bf16.mxu0 %v3548
    %5076 = vmatpush1.bf16.msra.mxu0 %v3547
    %5077 = vmatprep.subr.bf16.mxu0 %v3556
    %5078 = vmatpush1.bf16.msra.mxu0 %v3555
    %5079 = vmatprep.subr.bf16.mxu0 %v3564
    %5080 = vmatpush1.bf16.msra.mxu0 %v3563
    %5081 = vmatprep.mubr.bf16.mxu0 %v4800
    %5082 = vmatmul.mubr.bf16.gmra.mrb[0].mxu0 %v4799
    %v5083 = vpop.f32.mrb[0].mxu0
    %v5084 = vadd.f32 0.0, %v5083
    %v5085 = vpop.f32.mrb[0].mxu0
    %v5086 = vadd.f32 0.0, %v5085
    %v5087 = vpop.f32.mrb[0].mxu0
    %v5088 = vpop.f32.mrb[0].mxu0
    %5089 = vdwg.mxu0
    %5090 = vmatprep.subr.bf16.mxu0 %v3572
    %5091 = vmatpush1.bf16.msra.mxu0 %v3571
    %5092 = vmatprep.subr.bf16.mxu0 %v3580
    %5093 = vmatpush1.bf16.msra.mxu0 %v3579
    %5094 = vmatprep.subr.bf16.mxu0 %v3588
    %5095 = vmatpush1.bf16.msra.mxu0 %v3587
    %5096 = vmatprep.subr.bf16.mxu0 %v3596
    %5097 = vmatpush1.bf16.msra.mxu0 %v3595
    %5098 = vmatprep.subr.bf16.mxu0 %v3604
    %5099 = vmatpush1.bf16.msra.mxu0 %v3603
    %5100 = vmatprep.subr.bf16.mxu0 %v3612
    %5101 = vmatpush1.bf16.msra.mxu0 %v3611
    %5102 = vmatprep.subr.bf16.mxu0 %v3620
    %5103 = vmatpush1.bf16.msra.mxu0 %v3619
    %5104 = vmatprep.subr.bf16.mxu0 %v3628
    %5105 = vmatpush1.bf16.msra.mxu0 %v3627
    %5106 = vmatprep.subr.bf16.mxu0 %v3636
    %5107 = vmatpush1.bf16.msra.mxu0 %v3635
    %5108 = vmatprep.subr.bf16.mxu0 %v3644
    %5109 = vmatpush1.bf16.msra.mxu0 %v3643
    %5110 = vmatprep.subr.bf16.mxu0 %v3652
    %5111 = vmatpush1.bf16.msra.mxu0 %v3651
    %5112 = vmatprep.subr.bf16.mxu0 %v3660
    %5113 = vmatpush1.bf16.msra.mxu0 %v3659
    %5114 = vmatprep.subr.bf16.mxu0 %v3668
    %5115 = vmatpush1.bf16.msra.mxu0 %v3667
    %5116 = vmatprep.subr.bf16.mxu0 %v3676
    %5117 = vmatpush1.bf16.msra.mxu0 %v3675
    %5118 = vmatprep.subr.bf16.mxu0 %v3684
    %5119 = vmatpush1.bf16.msra.mxu0 %v3683
    %5120 = vmatprep.subr.bf16.mxu0 %v3692
    %5121 = vmatpush1.bf16.msra.mxu0 %v3691
    %5122 = vmatprep.mubr.bf16.mxu0 %v4802
    %5123 = vmatmul.mubr.bf16.gmra.mrb[0].mxu0 %v4801
    %v5124 = vpop.f32.mrb[0].mxu0
    %v5125 = vadd.f32 %v5084, %v5124
    %v5126 = vpop.f32.mrb[0].mxu0
    %v5127 = vadd.f32 %v5086, %v5126
    %v5128 = vpop.f32.mrb[0].mxu0
    %v5129 = vpop.f32.mrb[0].mxu0
    %5130 = vdwg.mxu0
    %v5139 = vrot.slane %v4879, 4
    %v5140 = vrot.slane %v4881, 4
    %v5141 = vrot.slane %v4961, 4
    %v5142 = vrot.slane %v4963, 4
    %v5143 = vrot.slane %v5043, 4
    %v5144 = vrot.slane %v5045, 4
    %v5145 = vrot.slane %v5125, 4
    %v5146 = vrot.slane %v5127, 4
    %v5155 = vadd.f32 %v4787, %v5139
    %v5156 = vadd.f32 %v4788, %v5140
    %v5157 = vadd.f32 %v4789, %v5141
    %v5158 = vadd.f32 %v4790, %v5142
    %v5159 = vadd.f32 %v4791, %v5143
    %v5160 = vadd.f32 %v4792, %v5144
    %v5161 = vadd.f32 %v4793, %v5145
    %v5162 = vadd.f32 %v4794, %v5146
    %v5163 = vxor.u32 %v5155, 2147483648
    %v5164 = vxor.u32 %v5156, 2147483648
    %v5165 = vmul.f32 %v5163, 1.442695
    %v5166 = vpow.pop %v5165
    %v5167 = vmul.f32 %v5164, 1.442695
    %v5168 = vpow.pop %v5167
    %v5169 = vadd.f32 %v5166, 1.0
    %v5170 = vadd.f32 %v5168, 1.0
    %v5171 = vrcp.pop %v5169
    %v5172 = vmul.f32 1.0, %v5171
    %v5173 = vrcp.pop %v5170
    %v5174 = vmul.f32 1.0, %v5173
    %v5175 = vxor.u32 %v5157, 2147483648
    %v5176 = vxor.u32 %v5158, 2147483648
    %v5177 = vmul.f32 %v5175, 1.442695
    %v5178 = vpow.pop %v5177
    %v5179 = vmul.f32 %v5176, 1.442695
    %v5180 = vpow.pop %v5179
    %v5181 = vadd.f32 %v5178, 1.0
    %v5182 = vadd.f32 %v5180, 1.0
    %v5183 = vrcp.pop %v5181
    %v5184 = vmul.f32 1.0, %v5183
    %v5185 = vrcp.pop %v5182
    %v5186 = vmul.f32 1.0, %v5185
    %v5187 = vtanh.pop %v5159
    %v5188 = vtanh.pop %v5160
    %v5189 = vxor.u32 %v5161, 2147483648
    %v5190 = vxor.u32 %v5162, 2147483648
    %v5191 = vmul.f32 %v5189, 1.442695
    %v5192 = vpow.pop %v5191
    %v5193 = vmul.f32 %v5190, 1.442695
    %v5194 = vpow.pop %v5193
    %v5195 = vadd.f32 %v5192, 1.0
    %v5196 = vadd.f32 %v5194, 1.0
    %v5197 = vrcp.pop %v5195
    %v5198 = vmul.f32 1.0, %v5197
    %v5199 = vrcp.pop %v5196
    %v5200 = vmul.f32 1.0, %v5199
    %v5203 = vrot.slane %v4781, 4
    %v5204 = vrot.slane %v4782, 4
    %v5207 = vmul.f32 %v5184, %v5203
    %v5208 = vmul.f32 %v5186, %v5204
    %v5209 = vmul.f32 %v5172, %v5187
    %v5210 = vmul.f32 %v5174, %v5188
    %v5211 = vadd.f32 %v5207, %v5209
    %v5212 = vadd.f32 %v5208, %v5210
    %v5213 = vtanh.pop %v5211
    %v5214 = vtanh.pop %v5212
    %v5215 = vmul.f32 %v5198, %v5213
    %v5216 = vmul.f32 %v5200, %v5214
    %v5217 = vld [vmem:[#allocation2 + $0x80] sm:$0xf]
    %v5218 = vld [vmem:[#allocation2 + $0x88] sm:$0xf]
    %v5219 = vld [vmem:[#allocation2 + $0x90] sm:$0xf]
    %v5220 = vld [vmem:[#allocation2 + $0x98] sm:$0xf]
    %v5221 = vld [vmem:[#allocation2 + $0xa0] sm:$0xf]
    %v5222 = vld [vmem:[#allocation2 + $0xa8] sm:$0xf]
    %v5223 = vld [vmem:[#allocation2 + $0xb0] sm:$0xf]
    %v5224 = vld [vmem:[#allocation2 + $0xb8] sm:$0xf]
    %v5225 = vmul.f32 %v5215, %v4372
    %v5226 = vmul.f32 %v5216, %v4372
    %v5227 = vmul.f32 %v5215, %v4377
    %v5228 = vmul.f32 %v5216, %v4377
    %v5229 = vpack.c.bf16 %v5225, %v5225
    %v5230 = vpack.c.bf16 %v5226, %v5226
    %v5231 = vpack.c.bf16 %v5227, %v5227
    %v5232 = vpack.c.bf16 %v5228, %v5228
    %v5237 = vrot.slane %v5229, 2
    %v5238 = vrot.slane %v5230, 2
    %v5239 = vrot.slane %v5231, 2
    %v5240 = vrot.slane %v5232, 2
    %5245 = vmatprep.subr.bf16.mxu0 %v3438
    %5246 = vmatpush1.bf16.msra.mxu0 %v3437
    %5247 = vmatprep.subr.bf16.mxu0 %v3446
    %5248 = vmatpush1.bf16.msra.mxu0 %v3445
    %5249 = vmatprep.subr.bf16.mxu0 %v3454
    %5250 = vmatpush1.bf16.msra.mxu0 %v3453
    %5251 = vmatprep.subr.bf16.mxu0 %v3462
    %5252 = vmatpush1.bf16.msra.mxu0 %v3461
    %5253 = vmatprep.subr.bf16.mxu0 %v3470
    %5254 = vmatpush1.bf16.msra.mxu0 %v3469
    %5255 = vmatprep.subr.bf16.mxu0 %v3478
    %5256 = vmatpush1.bf16.msra.mxu0 %v3477
    %5257 = vmatprep.subr.bf16.mxu0 %v3486
    %5258 = vmatpush1.bf16.msra.mxu0 %v3485
    %5259 = vmatprep.subr.bf16.mxu0 %v3494
    %5260 = vmatpush1.bf16.msra.mxu0 %v3493
    %5261 = vmatprep.subr.bf16.mxu0 %v3502
    %5262 = vmatpush1.bf16.msra.mxu0 %v3501
    %5263 = vmatprep.subr.bf16.mxu0 %v3510
    %5264 = vmatpush1.bf16.msra.mxu0 %v3509
    %5265 = vmatprep.subr.bf16.mxu0 %v3518
    %5266 = vmatpush1.bf16.msra.mxu0 %v3517
    %5267 = vmatprep.subr.bf16.mxu0 %v3526
    %5268 = vmatpush1.bf16.msra.mxu0 %v3525
    %5269 = vmatprep.subr.bf16.mxu0 %v3534
    %5270 = vmatpush1.bf16.msra.mxu0 %v3533
    %5271 = vmatprep.subr.bf16.mxu0 %v3542
    %5272 = vmatpush1.bf16.msra.mxu0 %v3541
    %5273 = vmatprep.subr.bf16.mxu0 %v3550
    %5274 = vmatpush1.bf16.msra.mxu0 %v3549
    %5275 = vmatprep.subr.bf16.mxu0 %v3558
    %5276 = vmatpush1.bf16.msra.mxu0 %v3557
    %5277 = vmatprep.mubr.bf16.mxu0 %v5238
    %5278 = vmatmul.mubr.bf16.gmra.mrb[0].mxu0 %v5237
    %v5279 = vpop.f32.mrb[0].mxu0
    %v5280 = vadd.f32 0.0, %v5279
    %v5281 = vpop.f32.mrb[0].mxu0
    %v5282 = vadd.f32 0.0, %v5281
    %v5283 = vpop.f32.mrb[0].mxu0
    %v5284 = vpop.f32.mrb[0].mxu0
    %5285 = vdwg.mxu0
    %5286 = vmatprep.subr.bf16.mxu0 %v3566
    %5287 = vmatpush1.bf16.msra.mxu0 %v3565
    %5288 = vmatprep.subr.bf16.mxu0 %v3574
    %5289 = vmatpush1.bf16.msra.mxu0 %v3573
    %5290 = vmatprep.subr.bf16.mxu0 %v3582
    %5291 = vmatpush1.bf16.msra.mxu0 %v3581
    %5292 = vmatprep.subr.bf16.mxu0 %v3590
    %5293 = vmatpush1.bf16.msra.mxu0 %v3589
    %5294 = vmatprep.subr.bf16.mxu0 %v3598
    %5295 = vmatpush1.bf16.msra.mxu0 %v3597
    %5296 = vmatprep.subr.bf16.mxu0 %v3606
    %5297 = vmatpush1.bf16.msra.mxu0 %v3605
    %5298 = vmatprep.subr.bf16.mxu0 %v3614
    %5299 = vmatpush1.bf16.msra.mxu0 %v3613
    %5300 = vmatprep.subr.bf16.mxu0 %v3622
    %5301 = vmatpush1.bf16.msra.mxu0 %v3621
    %5302 = vmatprep.subr.bf16.mxu0 %v3630
    %5303 = vmatpush1.bf16.msra.mxu0 %v3629
    %5304 = vmatprep.subr.bf16.mxu0 %v3638
    %5305 = vmatpush1.bf16.msra.mxu0 %v3637
    %5306 = vmatprep.subr.bf16.mxu0 %v3646
    %5307 = vmatpush1.bf16.msra.mxu0 %v3645
    %5308 = vmatprep.subr.bf16.mxu0 %v3654
    %5309 = vmatpush1.bf16.msra.mxu0 %v3653
    %5310 = vmatprep.subr.bf16.mxu0 %v3662
    %5311 = vmatpush1.bf16.msra.mxu0 %v3661
    %5312 = vmatprep.subr.bf16.mxu0 %v3670
    %5313 = vmatpush1.bf16.msra.mxu0 %v3669
    %5314 = vmatprep.subr.bf16.mxu0 %v3678
    %5315 = vmatpush1.bf16.msra.mxu0 %v3677
    %5316 = vmatprep.subr.bf16.mxu0 %v3686
    %5317 = vmatpush1.bf16.msra.mxu0 %v3685
    %5318 = vmatprep.mubr.bf16.mxu0 %v5240
    %5319 = vmatmul.mubr.bf16.gmra.mrb[0].mxu0 %v5239
    %v5320 = vpop.f32.mrb[0].mxu0
    %v5321 = vadd.f32 %v5280, %v5320
    %v5322 = vpop.f32.mrb[0].mxu0
    %v5323 = vadd.f32 %v5282, %v5322
    %v5324 = vpop.f32.mrb[0].mxu0
    %v5325 = vpop.f32.mrb[0].mxu0
    %5326 = vdwg.mxu0
    %5327 = vmatprep.subr.bf16.mxu0 %v3440
    %5328 = vmatpush1.bf16.msra.mxu0 %v3439
    %5329 = vmatprep.subr.bf16.mxu0 %v3448
    %5330 = vmatpush1.bf16.msra.mxu0 %v3447
    %5331 = vmatprep.subr.bf16.mxu0 %v3456
    %5332 = vmatpush1.bf16.msra.mxu0 %v3455
    %5333 = vmatprep.subr.bf16.mxu0 %v3464
    %5334 = vmatpush1.bf16.msra.mxu0 %v3463
    %5335 = vmatprep.subr.bf16.mxu0 %v3472
    %5336 = vmatpush1.bf16.msra.mxu0 %v3471
    %5337 = vmatprep.subr.bf16.mxu0 %v3480
    %5338 = vmatpush1.bf16.msra.mxu0 %v3479
    %5339 = vmatprep.subr.bf16.mxu0 %v3488
    %5340 = vmatpush1.bf16.msra.mxu0 %v3487
    %5341 = vmatprep.subr.bf16.mxu0 %v3496
    %5342 = vmatpush1.bf16.msra.mxu0 %v3495
    %5343 = vmatprep.subr.bf16.mxu0 %v3504
    %5344 = vmatpush1.bf16.msra.mxu0 %v3503
    %5345 = vmatprep.subr.bf16.mxu0 %v3512
    %5346 = vmatpush1.bf16.msra.mxu0 %v3511
    %5347 = vmatprep.subr.bf16.mxu0 %v3520
    %5348 = vmatpush1.bf16.msra.mxu0 %v3519
    %5349 = vmatprep.subr.bf16.mxu0 %v3528
    %5350 = vmatpush1.bf16.msra.mxu0 %v3527
    %5351 = vmatprep.subr.bf16.mxu0 %v3536
    %5352 = vmatpush1.bf16.msra.mxu0 %v3535
    %5353 = vmatprep.subr.bf16.mxu0 %v3544
    %5354 = vmatpush1.bf16.msra.mxu0 %v3543
    %5355 = vmatprep.subr.bf16.mxu0 %v3552
    %5356 = vmatpush1.bf16.msra.mxu0 %v3551
    %5357 = vmatprep.subr.bf16.mxu0 %v3560
    %5358 = vmatpush1.bf16.msra.mxu0 %v3559
    %5359 = vmatprep.mubr.bf16.mxu0 %v5238
    %5360 = vmatmul.mubr.bf16.gmra.mrb[0].mxu0 %v5237
    %v5361 = vpop.f32.mrb[0].mxu0
    %v5362 = vadd.f32 0.0, %v5361
    %v5363 = vpop.f32.mrb[0].mxu0
    %v5364 = vadd.f32 0.0, %v5363
    %v5365 = vpop.f32.mrb[0].mxu0
    %v5366 = vpop.f32.mrb[0].mxu0
    %5367 = vdwg.mxu0
    %5368 = vmatprep.subr.bf16.mxu0 %v3568
    %5369 = vmatpush1.bf16.msra.mxu0 %v3567
    %5370 = vmatprep.subr.bf16.mxu0 %v3576
    %5371 = vmatpush1.bf16.msra.mxu0 %v3575
    %5372 = vmatprep.subr.bf16.mxu0 %v3584
    %5373 = vmatpush1.bf16.msra.mxu0 %v3583
    %5374 = vmatprep.subr.bf16.mxu0 %v3592
    %5375 = vmatpush1.bf16.msra.mxu0 %v3591
    %5376 = vmatprep.subr.bf16.mxu0 %v3600
    %5377 = vmatpush1.bf16.msra.mxu0 %v3599
    %5378 = vmatprep.subr.bf16.mxu0 %v3608
    %5379 = vmatpush1.bf16.msra.mxu0 %v3607
    %5380 = vmatprep.subr.bf16.mxu0 %v3616
    %5381 = vmatpush1.bf16.msra.mxu0 %v3615
    %5382 = vmatprep.subr.bf16.mxu0 %v3624
    %5383 = vmatpush1.bf16.msra.mxu0 %v3623
    %5384 = vmatprep.subr.bf16.mxu0 %v3632
    %5385 = vmatpush1.bf16.msra.mxu0 %v3631
    %5386 = vmatprep.subr.bf16.mxu0 %v3640
    %5387 = vmatpush1.bf16.msra.mxu0 %v3639
    %5388 = vmatprep.subr.bf16.mxu0 %v3648
    %5389 = vmatpush1.bf16.msra.mxu0 %v3647
    %5390 = vmatprep.subr.bf16.mxu0 %v3656
    %5391 = vmatpush1.bf16.msra.mxu0 %v3655
    %5392 = vmatprep.subr.bf16.mxu0 %v3664
    %5393 = vmatpush1.bf16.msra.mxu0 %v3663
    %5394 = vmatprep.subr.bf16.mxu0 %v3672
    %5395 = vmatpush1.bf16.msra.mxu0 %v3671
    %5396 = vmatprep.subr.bf16.mxu0 %v3680
    %5397 = vmatpush1.bf16.msra.mxu0 %v3679
    %5398 = vmatprep.subr.bf16.mxu0 %v3688
    %5399 = vmatpush1.bf16.msra.mxu0 %v3687
    %5400 = vmatprep.mubr.bf16.mxu0 %v5240
    %5401 = vmatmul.mubr.bf16.gmra.mrb[0].mxu0 %v5239
    %v5402 = vpop.f32.mrb[0].mxu0
    %v5403 = vadd.f32 %v5362, %v5402
    %v5404 = vpop.f32.mrb[0].mxu0
    %v5405 = vadd.f32 %v5364, %v5404
    %v5406 = vpop.f32.mrb[0].mxu0
    %v5407 = vpop.f32.mrb[0].mxu0
    %5408 = vdwg.mxu0
    %5409 = vmatprep.subr.bf16.mxu0 %v3442
    %5410 = vmatpush1.bf16.msra.mxu0 %v3441
    %5411 = vmatprep.subr.bf16.mxu0 %v3450
    %5412 = vmatpush1.bf16.msra.mxu0 %v3449
    %5413 = vmatprep.subr.bf16.mxu0 %v3458
    %5414 = vmatpush1.bf16.msra.mxu0 %v3457
    %5415 = vmatprep.subr.bf16.mxu0 %v3466
    %5416 = vmatpush1.bf16.msra.mxu0 %v3465
    %5417 = vmatprep.subr.bf16.mxu0 %v3474
    %5418 = vmatpush1.bf16.msra.mxu0 %v3473
    %5419 = vmatprep.subr.bf16.mxu0 %v3482
    %5420 = vmatpush1.bf16.msra.mxu0 %v3481
    %5421 = vmatprep.subr.bf16.mxu0 %v3490
    %5422 = vmatpush1.bf16.msra.mxu0 %v3489
    %5423 = vmatprep.subr.bf16.mxu0 %v3498
    %5424 = vmatpush1.bf16.msra.mxu0 %v3497
    %5425 = vmatprep.subr.bf16.mxu0 %v3506
    %5426 = vmatpush1.bf16.msra.mxu0 %v3505
    %5427 = vmatprep.subr.bf16.mxu0 %v3514
    %5428 = vmatpush1.bf16.msra.mxu0 %v3513
    %5429 = vmatprep.subr.bf16.mxu0 %v3522
    %5430 = vmatpush1.bf16.msra.mxu0 %v3521
    %5431 = vmatprep.subr.bf16.mxu0 %v3530
    %5432 = vmatpush1.bf16.msra.mxu0 %v3529
    %5433 = vmatprep.subr.bf16.mxu0 %v3538
    %5434 = vmatpush1.bf16.msra.mxu0 %v3537
    %5435 = vmatprep.subr.bf16.mxu0 %v3546
    %5436 = vmatpush1.bf16.msra.mxu0 %v3545
    %5437 = vmatprep.subr.bf16.mxu0 %v3554
    %5438 = vmatpush1.bf16.msra.mxu0 %v3553
    %5439 = vmatprep.subr.bf16.mxu0 %v3562
    %5440 = vmatpush1.bf16.msra.mxu0 %v3561
    %5441 = vmatprep.mubr.bf16.mxu0 %v5238
    %5442 = vmatmul.mubr.bf16.gmra.mrb[0].mxu0 %v5237
    %v5443 = vpop.f32.mrb[0].mxu0
    %v5444 = vadd.f32 0.0, %v5443
    %v5445 = vpop.f32.mrb[0].mxu0
    %v5446 = vadd.f32 0.0, %v5445
    %v5447 = vpop.f32.mrb[0].mxu0
    %v5448 = vpop.f32.mrb[0].mxu0
    %5449 = vdwg.mxu0
    %5450 = vmatprep.subr.bf16.mxu0 %v3570
    %5451 = vmatpush1.bf16.msra.mxu0 %v3569
    %5452 = vmatprep.subr.bf16.mxu0 %v3578
    %5453 = vmatpush1.bf16.msra.mxu0 %v3577
    %5454 = vmatprep.subr.bf16.mxu0 %v3586
    %5455 = vmatpush1.bf16.msra.mxu0 %v3585
    %5456 = vmatprep.subr.bf16.mxu0 %v3594
    %5457 = vmatpush1.bf16.msra.mxu0 %v3593
    %5458 = vmatprep.subr.bf16.mxu0 %v3602
    %5459 = vmatpush1.bf16.msra.mxu0 %v3601
    %5460 = vmatprep.subr.bf16.mxu0 %v3610
    %5461 = vmatpush1.bf16.msra.mxu0 %v3609
    %5462 = vmatprep.subr.bf16.mxu0 %v3618
    %5463 = vmatpush1.bf16.msra.mxu0 %v3617
    %5464 = vmatprep.subr.bf16.mxu0 %v3626
    %5465 = vmatpush1.bf16.msra.mxu0 %v3625
    %5466 = vmatprep.subr.bf16.mxu0 %v3634
    %5467 = vmatpush1.bf16.msra.mxu0 %v3633
    %5468 = vmatprep.subr.bf16.mxu0 %v3642
    %5469 = vmatpush1.bf16.msra.mxu0 %v3641
    %5470 = vmatprep.subr.bf16.mxu0 %v3650
    %5471 = vmatpush1.bf16.msra.mxu0 %v3649
    %5472 = vmatprep.subr.bf16.mxu0 %v3658
    %5473 = vmatpush1.bf16.msra.mxu0 %v3657
    %5474 = vmatprep.subr.bf16.mxu0 %v3666
    %5475 = vmatpush1.bf16.msra.mxu0 %v3665
    %5476 = vmatprep.subr.bf16.mxu0 %v3674
    %5477 = vmatpush1.bf16.msra.mxu0 %v3673
    %5478 = vmatprep.subr.bf16.mxu0 %v3682
    %5479 = vmatpush1.bf16.msra.mxu0 %v3681
    %5480 = vmatprep.subr.bf16.mxu0 %v3690
    %5481 = vmatpush1.bf16.msra.mxu0 %v3689
    %5482 = vmatprep.mubr.bf16.mxu0 %v5240
    %5483 = vmatmul.mubr.bf16.gmra.mrb[0].mxu0 %v5239
    %v5484 = vpop.f32.mrb[0].mxu0
    %v5485 = vadd.f32 %v5444, %v5484
    %v5486 = vpop.f32.mrb[0].mxu0
    %v5487 = vadd.f32 %v5446, %v5486
    %v5488 = vpop.f32.mrb[0].mxu0
    %v5489 = vpop.f32.mrb[0].mxu0
    %5490 = vdwg.mxu0
    %5491 = vmatprep.subr.bf16.mxu0 %v3444
    %5492 = vmatpush1.bf16.msra.mxu0 %v3443
    %5493 = vmatprep.subr.bf16.mxu0 %v3452
    %5494 = vmatpush1.bf16.msra.mxu0 %v3451
    %5495 = vmatprep.subr.bf16.mxu0 %v3460
    %5496 = vmatpush1.bf16.msra.mxu0 %v3459
    %5497 = vmatprep.subr.bf16.mxu0 %v3468
    %5498 = vmatpush1.bf16.msra.mxu0 %v3467
    %5499 = vmatprep.subr.bf16.mxu0 %v3476
    %5500 = vmatpush1.bf16.msra.mxu0 %v3475
    %5501 = vmatprep.subr.bf16.mxu0 %v3484
    %5502 = vmatpush1.bf16.msra.mxu0 %v3483
    %5503 = vmatprep.subr.bf16.mxu0 %v3492
    %5504 = vmatpush1.bf16.msra.mxu0 %v3491
    %5505 = vmatprep.subr.bf16.mxu0 %v3500
    %5506 = vmatpush1.bf16.msra.mxu0 %v3499
    %5507 = vmatprep.subr.bf16.mxu0 %v3508
    %5508 = vmatpush1.bf16.msra.mxu0 %v3507
    %5509 = vmatprep.subr.bf16.mxu0 %v3516
    %5510 = vmatpush1.bf16.msra.mxu0 %v3515
    %5511 = vmatprep.subr.bf16.mxu0 %v3524
    %5512 = vmatpush1.bf16.msra.mxu0 %v3523
    %5513 = vmatprep.subr.bf16.mxu0 %v3532
    %5514 = vmatpush1.bf16.msra.mxu0 %v3531
    %5515 = vmatprep.subr.bf16.mxu0 %v3540
    %5516 = vmatpush1.bf16.msra.mxu0 %v3539
    %5517 = vmatprep.subr.bf16.mxu0 %v3548
    %5518 = vmatpush1.bf16.msra.mxu0 %v3547
    %5519 = vmatprep.subr.bf16.mxu0 %v3556
    %5520 = vmatpush1.bf16.msra.mxu0 %v3555
    %5521 = vmatprep.subr.bf16.mxu0 %v3564
    %5522 = vmatpush1.bf16.msra.mxu0 %v3563
    %5523 = vmatprep.mubr.bf16.mxu0 %v5238
    %5524 = vmatmul.mubr.bf16.gmra.mrb[0].mxu0 %v5237
    %v5525 = vpop.f32.mrb[0].mxu0
    %v5526 = vadd.f32 0.0, %v5525
    %v5527 = vpop.f32.mrb[0].mxu0
    %v5528 = vadd.f32 0.0, %v5527
    %v5529 = vpop.f32.mrb[0].mxu0
    %v5530 = vpop.f32.mrb[0].mxu0
    %5531 = vdwg.mxu0
    %5532 = vmatprep.subr.bf16.mxu0 %v3572
    %5533 = vmatpush1.bf16.msra.mxu0 %v3571
    %5534 = vmatprep.subr.bf16.mxu0 %v3580
    %5535 = vmatpush1.bf16.msra.mxu0 %v3579
    %5536 = vmatprep.subr.bf16.mxu0 %v3588
    %5537 = vmatpush1.bf16.msra.mxu0 %v3587
    %5538 = vmatprep.subr.bf16.mxu0 %v3596
    %5539 = vmatpush1.bf16.msra.mxu0 %v3595
    %5540 = vmatprep.subr.bf16.mxu0 %v3604
    %5541 = vmatpush1.bf16.msra.mxu0 %v3603
    %5542 = vmatprep.subr.bf16.mxu0 %v3612
    %5543 = vmatpush1.bf16.msra.mxu0 %v3611
    %5544 = vmatprep.subr.bf16.mxu0 %v3620
    %5545 = vmatpush1.bf16.msra.mxu0 %v3619
    %5546 = vmatprep.subr.bf16.mxu0 %v3628
    %5547 = vmatpush1.bf16.msra.mxu0 %v3627
    %5548 = vmatprep.subr.bf16.mxu0 %v3636
    %5549 = vmatpush1.bf16.msra.mxu0 %v3635
    %5550 = vmatprep.subr.bf16.mxu0 %v3644
    %5551 = vmatpush1.bf16.msra.mxu0 %v3643
    %5552 = vmatprep.subr.bf16.mxu0 %v3652
    %5553 = vmatpush1.bf16.msra.mxu0 %v3651
    %5554 = vmatprep.subr.bf16.mxu0 %v3660
    %5555 = vmatpush1.bf16.msra.mxu0 %v3659
    %5556 = vmatprep.subr.bf16.mxu0 %v3668
    %5557 = vmatpush1.bf16.msra.mxu0 %v3667
    %5558 = vmatprep.subr.bf16.mxu0 %v3676
    %5559 = vmatpush1.bf16.msra.mxu0 %v3675
    %5560 = vmatprep.subr.bf16.mxu0 %v3684
    %5561 = vmatpush1.bf16.msra.mxu0 %v3683
    %5562 = vmatprep.subr.bf16.mxu0 %v3692
    %5563 = vmatpush1.bf16.msra.mxu0 %v3691
    %5564 = vmatprep.mubr.bf16.mxu0 %v5240
    %5565 = vmatmul.mubr.bf16.gmra.mrb[0].mxu0 %v5239
    %v5566 = vpop.f32.mrb[0].mxu0
    %v5567 = vadd.f32 %v5526, %v5566
    %v5568 = vpop.f32.mrb[0].mxu0
    %v5569 = vadd.f32 %v5528, %v5568
    %v5570 = vpop.f32.mrb[0].mxu0
    %v5571 = vpop.f32.mrb[0].mxu0
    %5572 = vdwg.mxu0
    %v5573 = vadd.f32 %v5217, %v5321
    %v5574 = vadd.f32 %v5218, %v5323
    %v5575 = vadd.f32 %v5219, %v5403
    %v5576 = vadd.f32 %v5220, %v5405
    %v5577 = vadd.f32 %v5221, %v5485
    %v5578 = vadd.f32 %v5222, %v5487
    %v5579 = vadd.f32 %v5223, %v5567
    %v5580 = vadd.f32 %v5224, %v5569
    %v5581 = vxor.u32 %v5573, 2147483648
    %v5582 = vxor.u32 %v5574, 2147483648
    %v5583 = vmul.f32 %v5581, 1.442695
    %v5584 = vpow.pop %v5583
    %v5585 = vmul.f32 %v5582, 1.442695
    %v5586 = vpow.pop %v5585
    %v5587 = vadd.f32 %v5584, 1.0
    %v5588 = vadd.f32 %v5586, 1.0
    %v5589 = vrcp.pop %v5587
    %v5590 = vmul.f32 1.0, %v5589
    %v5591 = vrcp.pop %v5588
    %v5592 = vmul.f32 1.0, %v5591
    %v5593 = vxor.u32 %v5575, 2147483648
    %v5594 = vxor.u32 %v5576, 2147483648
    %v5595 = vmul.f32 %v5593, 1.442695
    %v5596 = vpow.pop %v5595
    %v5597 = vmul.f32 %v5594, 1.442695
    %v5598 = vpow.pop %v5597
    %v5599 = vadd.f32 %v5596, 1.0
    %v5600 = vadd.f32 %v5598, 1.0
    %v5601 = vrcp.pop %v5599
    %v5602 = vmul.f32 1.0, %v5601
    %v5603 = vrcp.pop %v5600
    %v5604 = vmul.f32 1.0, %v5603
    %v5605 = vtanh.pop %v5577
    %v5606 = vtanh.pop %v5578
    %v5607 = vxor.u32 %v5579, 2147483648
    %v5608 = vxor.u32 %v5580, 2147483648
    %v5609 = vmul.f32 %v5607, 1.442695
    %v5610 = vpow.pop %v5609
    %v5611 = vmul.f32 %v5608, 1.442695
    %v5612 = vpow.pop %v5611
    %v5613 = vadd.f32 %v5610, 1.0
    %v5614 = vadd.f32 %v5612, 1.0
    %v5615 = vrcp.pop %v5613
    %v5616 = vmul.f32 1.0, %v5615
    %v5617 = vrcp.pop %v5614
    %v5618 = vmul.f32 1.0, %v5617
    %v5621 = vrot.slane %v5211, 4
    %v5622 = vrot.slane %v5212, 4
    %v5625 = vmul.f32 %v5602, %v5621
    %v5626 = vmul.f32 %v5604, %v5622
    %v5627 = vmul.f32 %v5590, %v5605
    %v5628 = vmul.f32 %v5592, %v5606
    %v5629 = vadd.f32 %v5625, %v5627
    %v5630 = vadd.f32 %v5626, %v5628
    %v5631 = vtanh.pop %v5629
    %v5632 = vtanh.pop %v5630
    %v5633 = vmul.f32 %v5616, %v5631
    %v5634 = vmul.f32 %v5618, %v5632
    %v5635 = vld [vmem:[#allocation2 + $0x80] sm:$0xf0]
    %v5636 = vld [vmem:[#allocation2 + $0x88] sm:$0xf0]
    %v5637 = vld [vmem:[#allocation2 + $0x90] sm:$0xf0]
    %v5638 = vld [vmem:[#allocation2 + $0x98] sm:$0xf0]
    %v5639 = vld [vmem:[#allocation2 + $0xa0] sm:$0xf0]
    %v5640 = vld [vmem:[#allocation2 + $0xa8] sm:$0xf0]
    %v5641 = vld [vmem:[#allocation2 + $0xb0] sm:$0xf0]
    %v5642 = vld [vmem:[#allocation2 + $0xb8] sm:$0xf0]
    %v5643 = vmul.f32 %v5633, %v2339
    %v5644 = vmul.f32 %v5634, %v2339
    %v5645 = vmul.f32 %v5633, %v2340
    %v5646 = vmul.f32 %v5634, %v2340
    %v5647 = vpack.c.bf16 %v5643, %v5643
    %v5648 = vpack.c.bf16 %v5644, %v5644
    %v5649 = vpack.c.bf16 %v5645, %v5645
    %v5650 = vpack.c.bf16 %v5646, %v5646
    %5651 = vmatprep.subr.bf16.mxu0 %v3438
    %5652 = vmatpush1.bf16.msra.mxu0 %v3437
    %5653 = vmatprep.subr.bf16.mxu0 %v3446
    %5654 = vmatpush1.bf16.msra.mxu0 %v3445
    %5655 = vmatprep.subr.bf16.mxu0 %v3454
    %5656 = vmatpush1.bf16.msra.mxu0 %v3453
    %5657 = vmatprep.subr.bf16.mxu0 %v3462
    %5658 = vmatpush1.bf16.msra.mxu0 %v3461
    %5659 = vmatprep.subr.bf16.mxu0 %v3470
    %5660 = vmatpush1.bf16.msra.mxu0 %v3469
    %5661 = vmatprep.subr.bf16.mxu0 %v3478
    %5662 = vmatpush1.bf16.msra.mxu0 %v3477
    %5663 = vmatprep.subr.bf16.mxu0 %v3486
    %5664 = vmatpush1.bf16.msra.mxu0 %v3485
    %5665 = vmatprep.subr.bf16.mxu0 %v3494
    %5666 = vmatpush1.bf16.msra.mxu0 %v3493
    %5667 = vmatprep.subr.bf16.mxu0 %v3502
    %5668 = vmatpush1.bf16.msra.mxu0 %v3501
    %5669 = vmatprep.subr.bf16.mxu0 %v3510
    %5670 = vmatpush1.bf16.msra.mxu0 %v3509
    %5671 = vmatprep.subr.bf16.mxu0 %v3518
    %5672 = vmatpush1.bf16.msra.mxu0 %v3517
    %5673 = vmatprep.subr.bf16.mxu0 %v3526
    %5674 = vmatpush1.bf16.msra.mxu0 %v3525
    %5675 = vmatprep.subr.bf16.mxu0 %v3534
    %5676 = vmatpush1.bf16.msra.mxu0 %v3533
    %5677 = vmatprep.subr.bf16.mxu0 %v3542
    %5678 = vmatpush1.bf16.msra.mxu0 %v3541
    %5679 = vmatprep.subr.bf16.mxu0 %v3550
    %5680 = vmatpush1.bf16.msra.mxu0 %v3549
    %5681 = vmatprep.subr.bf16.mxu0 %v3558
    %5682 = vmatpush1.bf16.msra.mxu0 %v3557
    %5683 = vmatprep.mubr.bf16.mxu0 %v5648
    %5684 = vmatmul.mubr.bf16.gmra.mrb[0].mxu0 %v5647
    %v5685 = vpop.f32.mrb[0].mxu0
    %v5686 = vadd.f32 0.0, %v5685
    %v5687 = vpop.f32.mrb[0].mxu0
    %v5688 = vadd.f32 0.0, %v5687
    %v5689 = vpop.f32.mrb[0].mxu0
    %v5690 = vpop.f32.mrb[0].mxu0
    %5691 = vdwg.mxu0
    %5692 = vmatprep.subr.bf16.mxu0 %v3566
    %5693 = vmatpush1.bf16.msra.mxu0 %v3565
    %5694 = vmatprep.subr.bf16.mxu0 %v3574
    %5695 = vmatpush1.bf16.msra.mxu0 %v3573
    %5696 = vmatprep.subr.bf16.mxu0 %v3582
    %5697 = vmatpush1.bf16.msra.mxu0 %v3581
    %5698 = vmatprep.subr.bf16.mxu0 %v3590
    %5699 = vmatpush1.bf16.msra.mxu0 %v3589
    %5700 = vmatprep.subr.bf16.mxu0 %v3598
    %5701 = vmatpush1.bf16.msra.mxu0 %v3597
    %5702 = vmatprep.subr.bf16.mxu0 %v3606
    %5703 = vmatpush1.bf16.msra.mxu0 %v3605
    %5704 = vmatprep.subr.bf16.mxu0 %v3614
    %5705 = vmatpush1.bf16.msra.mxu0 %v3613
    %5706 = vmatprep.subr.bf16.mxu0 %v3622
    %5707 = vmatpush1.bf16.msra.mxu0 %v3621
    %5708 = vmatprep.subr.bf16.mxu0 %v3630
    %5709 = vmatpush1.bf16.msra.mxu0 %v3629
    %5710 = vmatprep.subr.bf16.mxu0 %v3638
    %5711 = vmatpush1.bf16.msra.mxu0 %v3637
    %5712 = vmatprep.subr.bf16.mxu0 %v3646
    %5713 = vmatpush1.bf16.msra.mxu0 %v3645
    %5714 = vmatprep.subr.bf16.mxu0 %v3654
    %5715 = vmatpush1.bf16.msra.mxu0 %v3653
    %5716 = vmatprep.subr.bf16.mxu0 %v3662
    %5717 = vmatpush1.bf16.msra.mxu0 %v3661
    %5718 = vmatprep.subr.bf16.mxu0 %v3670
    %5719 = vmatpush1.bf16.msra.mxu0 %v3669
    %5720 = vmatprep.subr.bf16.mxu0 %v3678
    %5721 = vmatpush1.bf16.msra.mxu0 %v3677
    %5722 = vmatprep.subr.bf16.mxu0 %v3686
    %5723 = vmatpush1.bf16.msra.mxu0 %v3685
    %5724 = vmatprep.mubr.bf16.mxu0 %v5650
    %5725 = vmatmul.mubr.bf16.gmra.mrb[0].mxu0 %v5649
    %v5726 = vpop.f32.mrb[0].mxu0
    %v5727 = vadd.f32 %v5686, %v5726
    %v5728 = vpop.f32.mrb[0].mxu0
    %v5729 = vadd.f32 %v5688, %v5728
    %v5730 = vpop.f32.mrb[0].mxu0
    %v5731 = vpop.f32.mrb[0].mxu0
    %5732 = vdwg.mxu0
    %5733 = vmatprep.subr.bf16.mxu0 %v3440
    %5734 = vmatpush1.bf16.msra.mxu0 %v3439
    %5735 = vmatprep.subr.bf16.mxu0 %v3448
    %5736 = vmatpush1.bf16.msra.mxu0 %v3447
    %5737 = vmatprep.subr.bf16.mxu0 %v3456
    %5738 = vmatpush1.bf16.msra.mxu0 %v3455
    %5739 = vmatprep.subr.bf16.mxu0 %v3464
    %5740 = vmatpush1.bf16.msra.mxu0 %v3463
    %5741 = vmatprep.subr.bf16.mxu0 %v3472
    %5742 = vmatpush1.bf16.msra.mxu0 %v3471
    %5743 = vmatprep.subr.bf16.mxu0 %v3480
    %5744 = vmatpush1.bf16.msra.mxu0 %v3479
    %5745 = vmatprep.subr.bf16.mxu0 %v3488
    %5746 = vmatpush1.bf16.msra.mxu0 %v3487
    %5747 = vmatprep.subr.bf16.mxu0 %v3496
    %5748 = vmatpush1.bf16.msra.mxu0 %v3495
    %5749 = vmatprep.subr.bf16.mxu0 %v3504
    %5750 = vmatpush1.bf16.msra.mxu0 %v3503
    %5751 = vmatprep.subr.bf16.mxu0 %v3512
    %5752 = vmatpush1.bf16.msra.mxu0 %v3511
    %5753 = vmatprep.subr.bf16.mxu0 %v3520
    %5754 = vmatpush1.bf16.msra.mxu0 %v3519
    %5755 = vmatprep.subr.bf16.mxu0 %v3528
    %5756 = vmatpush1.bf16.msra.mxu0 %v3527
    %5757 = vmatprep.subr.bf16.mxu0 %v3536
    %5758 = vmatpush1.bf16.msra.mxu0 %v3535
    %5759 = vmatprep.subr.bf16.mxu0 %v3544
    %5760 = vmatpush1.bf16.msra.mxu0 %v3543
    %5761 = vmatprep.subr.bf16.mxu0 %v3552
    %5762 = vmatpush1.bf16.msra.mxu0 %v3551
    %5763 = vmatprep.subr.bf16.mxu0 %v3560
    %5764 = vmatpush1.bf16.msra.mxu0 %v3559
    %5765 = vmatprep.mubr.bf16.mxu0 %v5648
    %5766 = vmatmul.mubr.bf16.gmra.mrb[0].mxu0 %v5647
    %v5767 = vpop.f32.mrb[0].mxu0
    %v5768 = vadd.f32 0.0, %v5767
    %v5769 = vpop.f32.mrb[0].mxu0
    %v5770 = vadd.f32 0.0, %v5769
    %v5771 = vpop.f32.mrb[0].mxu0
    %v5772 = vpop.f32.mrb[0].mxu0
    %5773 = vdwg.mxu0
    %5774 = vmatprep.subr.bf16.mxu0 %v3568
    %5775 = vmatpush1.bf16.msra.mxu0 %v3567
    %5776 = vmatprep.subr.bf16.mxu0 %v3576
    %5777 = vmatpush1.bf16.msra.mxu0 %v3575
    %5778 = vmatprep.subr.bf16.mxu0 %v3584
    %5779 = vmatpush1.bf16.msra.mxu0 %v3583
    %5780 = vmatprep.subr.bf16.mxu0 %v3592
    %5781 = vmatpush1.bf16.msra.mxu0 %v3591
    %5782 = vmatprep.subr.bf16.mxu0 %v3600
    %5783 = vmatpush1.bf16.msra.mxu0 %v3599
    %5784 = vmatprep.subr.bf16.mxu0 %v3608
    %5785 = vmatpush1.bf16.msra.mxu0 %v3607
    %5786 = vmatprep.subr.bf16.mxu0 %v3616
    %5787 = vmatpush1.bf16.msra.mxu0 %v3615
    %5788 = vmatprep.subr.bf16.mxu0 %v3624
    %5789 = vmatpush1.bf16.msra.mxu0 %v3623
    %5790 = vmatprep.subr.bf16.mxu0 %v3632
    %5791 = vmatpush1.bf16.msra.mxu0 %v3631
    %5792 = vmatprep.subr.bf16.mxu0 %v3640
    %5793 = vmatpush1.bf16.msra.mxu0 %v3639
    %5794 = vmatprep.subr.bf16.mxu0 %v3648
    %5795 = vmatpush1.bf16.msra.mxu0 %v3647
    %5796 = vmatprep.subr.bf16.mxu0 %v3656
    %5797 = vmatpush1.bf16.msra.mxu0 %v3655
    %5798 = vmatprep.subr.bf16.mxu0 %v3664
    %5799 = vmatpush1.bf16.msra.mxu0 %v3663
    %5800 = vmatprep.subr.bf16.mxu0 %v3672
    %5801 = vmatpush1.bf16.msra.mxu0 %v3671
    %5802 = vmatprep.subr.bf16.mxu0 %v3680
    %5803 = vmatpush1.bf16.msra.mxu0 %v3679
    %5804 = vmatprep.subr.bf16.mxu0 %v3688
    %5805 = vmatpush1.bf16.msra.mxu0 %v3687
    %5806 = vmatprep.mubr.bf16.mxu0 %v5650
    %5807 = vmatmul.mubr.bf16.gmra.mrb[0].mxu0 %v5649
    %v5808 = vpop.f32.mrb[0].mxu0
    %v5809 = vadd.f32 %v5768, %v5808
    %v5810 = vpop.f32.mrb[0].mxu0
    %v5811 = vadd.f32 %v5770, %v5810
    %v5812 = vpop.f32.mrb[0].mxu0
    %v5813 = vpop.f32.mrb[0].mxu0
    %5814 = vdwg.mxu0
    %5815 = vmatprep.subr.bf16.mxu0 %v3442
    %5816 = vmatpush1.bf16.msra.mxu0 %v3441
    %5817 = vmatprep.subr.bf16.mxu0 %v3450
    %5818 = vmatpush1.bf16.msra.mxu0 %v3449
    %5819 = vmatprep.subr.bf16.mxu0 %v3458
    %5820 = vmatpush1.bf16.msra.mxu0 %v3457
    %5821 = vmatprep.subr.bf16.mxu0 %v3466
    %5822 = vmatpush1.bf16.msra.mxu0 %v3465
    %5823 = vmatprep.subr.bf16.mxu0 %v3474
    %5824 = vmatpush1.bf16.msra.mxu0 %v3473
    %5825 = vmatprep.subr.bf16.mxu0 %v3482
    %5826 = vmatpush1.bf16.msra.mxu0 %v3481
    %5827 = vmatprep.subr.bf16.mxu0 %v3490
    %5828 = vmatpush1.bf16.msra.mxu0 %v3489
    %5829 = vmatprep.subr.bf16.mxu0 %v3498
    %5830 = vmatpush1.bf16.msra.mxu0 %v3497
    %5831 = vmatprep.subr.bf16.mxu0 %v3506
    %5832 = vmatpush1.bf16.msra.mxu0 %v3505
    %5833 = vmatprep.subr.bf16.mxu0 %v3514
    %5834 = vmatpush1.bf16.msra.mxu0 %v3513
    %5835 = vmatprep.subr.bf16.mxu0 %v3522
    %5836 = vmatpush1.bf16.msra.mxu0 %v3521
    %5837 = vmatprep.subr.bf16.mxu0 %v3530
    %5838 = vmatpush1.bf16.msra.mxu0 %v3529
    %5839 = vmatprep.subr.bf16.mxu0 %v3538
    %5840 = vmatpush1.bf16.msra.mxu0 %v3537
    %5841 = vmatprep.subr.bf16.mxu0 %v3546
    %5842 = vmatpush1.bf16.msra.mxu0 %v3545
    %5843 = vmatprep.subr.bf16.mxu0 %v3554
    %5844 = vmatpush1.bf16.msra.mxu0 %v3553
    %5845 = vmatprep.subr.bf16.mxu0 %v3562
    %5846 = vmatpush1.bf16.msra.mxu0 %v3561
    %5847 = vmatprep.mubr.bf16.mxu0 %v5648
    %5848 = vmatmul.mubr.bf16.gmra.mrb[0].mxu0 %v5647
    %v5849 = vpop.f32.mrb[0].mxu0
    %v5850 = vadd.f32 0.0, %v5849
    %v5851 = vpop.f32.mrb[0].mxu0
    %v5852 = vadd.f32 0.0, %v5851
    %v5853 = vpop.f32.mrb[0].mxu0
    %v5854 = vpop.f32.mrb[0].mxu0
    %5855 = vdwg.mxu0
    %5856 = vmatprep.subr.bf16.mxu0 %v3570
    %5857 = vmatpush1.bf16.msra.mxu0 %v3569
    %5858 = vmatprep.subr.bf16.mxu0 %v3578
    %5859 = vmatpush1.bf16.msra.mxu0 %v3577
    %5860 = vmatprep.subr.bf16.mxu0 %v3586
    %5861 = vmatpush1.bf16.msra.mxu0 %v3585
    %5862 = vmatprep.subr.bf16.mxu0 %v3594
    %5863 = vmatpush1.bf16.msra.mxu0 %v3593
    %5864 = vmatprep.subr.bf16.mxu0 %v3602
    %5865 = vmatpush1.bf16.msra.mxu0 %v3601
    %5866 = vmatprep.subr.bf16.mxu0 %v3610
    %5867 = vmatpush1.bf16.msra.mxu0 %v3609
    %5868 = vmatprep.subr.bf16.mxu0 %v3618
    %5869 = vmatpush1.bf16.msra.mxu0 %v3617
    %5870 = vmatprep.subr.bf16.mxu0 %v3626
    %5871 = vmatpush1.bf16.msra.mxu0 %v3625
    %5872 = vmatprep.subr.bf16.mxu0 %v3634
    %5873 = vmatpush1.bf16.msra.mxu0 %v3633
    %5874 = vmatprep.subr.bf16.mxu0 %v3642
    %5875 = vmatpush1.bf16.msra.mxu0 %v3641
    %5876 = vmatprep.subr.bf16.mxu0 %v3650
    %5877 = vmatpush1.bf16.msra.mxu0 %v3649
    %5878 = vmatprep.subr.bf16.mxu0 %v3658
    %5879 = vmatpush1.bf16.msra.mxu0 %v3657
    %5880 = vmatprep.subr.bf16.mxu0 %v3666
    %5881 = vmatpush1.bf16.msra.mxu0 %v3665
    %5882 = vmatprep.subr.bf16.mxu0 %v3674
    %5883 = vmatpush1.bf16.msra.mxu0 %v3673
    %5884 = vmatprep.subr.bf16.mxu0 %v3682
    %5885 = vmatpush1.bf16.msra.mxu0 %v3681
    %5886 = vmatprep.subr.bf16.mxu0 %v3690
    %5887 = vmatpush1.bf16.msra.mxu0 %v3689
    %5888 = vmatprep.mubr.bf16.mxu0 %v5650
    %5889 = vmatmul.mubr.bf16.gmra.mrb[0].mxu0 %v5649
    %v5890 = vpop.f32.mrb[0].mxu0
    %v5891 = vadd.f32 %v5850, %v5890
    %v5892 = vpop.f32.mrb[0].mxu0
    %v5893 = vadd.f32 %v5852, %v5892
    %v5894 = vpop.f32.mrb[0].mxu0
    %v5895 = vpop.f32.mrb[0].mxu0
    %5896 = vdwg.mxu0
    %5897 = vmatprep.subr.bf16.mxu0 %v3444
    %5898 = vmatpush1.bf16.msra.mxu0 %v3443
    %5899 = vmatprep.subr.bf16.mxu0 %v3452
    %5900 = vmatpush1.bf16.msra.mxu0 %v3451
    %5901 = vmatprep.subr.bf16.mxu0 %v3460
    %5902 = vmatpush1.bf16.msra.mxu0 %v3459
    %5903 = vmatprep.subr.bf16.mxu0 %v3468
    %5904 = vmatpush1.bf16.msra.mxu0 %v3467
    %5905 = vmatprep.subr.bf16.mxu0 %v3476
    %5906 = vmatpush1.bf16.msra.mxu0 %v3475
    %5907 = vmatprep.subr.bf16.mxu0 %v3484
    %5908 = vmatpush1.bf16.msra.mxu0 %v3483
    %5909 = vmatprep.subr.bf16.mxu0 %v3492
    %5910 = vmatpush1.bf16.msra.mxu0 %v3491
    %5911 = vmatprep.subr.bf16.mxu0 %v3500
    %5912 = vmatpush1.bf16.msra.mxu0 %v3499
    %5913 = vmatprep.subr.bf16.mxu0 %v3508
    %5914 = vmatpush1.bf16.msra.mxu0 %v3507
    %5915 = vmatprep.subr.bf16.mxu0 %v3516
    %5916 = vmatpush1.bf16.msra.mxu0 %v3515
    %5917 = vmatprep.subr.bf16.mxu0 %v3524
    %5918 = vmatpush1.bf16.msra.mxu0 %v3523
    %5919 = vmatprep.subr.bf16.mxu0 %v3532
    %5920 = vmatpush1.bf16.msra.mxu0 %v3531
    %5921 = vmatprep.subr.bf16.mxu0 %v3540
    %5922 = vmatpush1.bf16.msra.mxu0 %v3539
    %5923 = vmatprep.subr.bf16.mxu0 %v3548
    %5924 = vmatpush1.bf16.msra.mxu0 %v3547
    %5925 = vmatprep.subr.bf16.mxu0 %v3556
    %5926 = vmatpush1.bf16.msra.mxu0 %v3555
    %5927 = vmatprep.subr.bf16.mxu0 %v3564
    %5928 = vmatpush1.bf16.msra.mxu0 %v3563
    %5929 = vmatprep.mubr.bf16.mxu0 %v5648
    %5930 = vmatmul.mubr.bf16.gmra.mrb[0].mxu0 %v5647
    %v5931 = vpop.f32.mrb[0].mxu0
    %v5932 = vadd.f32 0.0, %v5931
    %v5933 = vpop.f32.mrb[0].mxu0
    %v5934 = vadd.f32 0.0, %v5933
    %v5935 = vpop.f32.mrb[0].mxu0
    %v5936 = vpop.f32.mrb[0].mxu0
    %5937 = vdwg.mxu0
    %5938 = vmatprep.subr.bf16.mxu0 %v3572
    %5939 = vmatpush1.bf16.msra.mxu0 %v3571
    %5940 = vmatprep.subr.bf16.mxu0 %v3580
    %5941 = vmatpush1.bf16.msra.mxu0 %v3579
    %5942 = vmatprep.subr.bf16.mxu0 %v3588
    %5943 = vmatpush1.bf16.msra.mxu0 %v3587
    %5944 = vmatprep.subr.bf16.mxu0 %v3596
    %5945 = vmatpush1.bf16.msra.mxu0 %v3595
    %5946 = vmatprep.subr.bf16.mxu0 %v3604
    %5947 = vmatpush1.bf16.msra.mxu0 %v3603
    %5948 = vmatprep.subr.bf16.mxu0 %v3612
    %5949 = vmatpush1.bf16.msra.mxu0 %v3611
    %5950 = vmatprep.subr.bf16.mxu0 %v3620
    %5951 = vmatpush1.bf16.msra.mxu0 %v3619
    %5952 = vmatprep.subr.bf16.mxu0 %v3628
    %5953 = vmatpush1.bf16.msra.mxu0 %v3627
    %5954 = vmatprep.subr.bf16.mxu0 %v3636
    %5955 = vmatpush1.bf16.msra.mxu0 %v3635
    %5956 = vmatprep.subr.bf16.mxu0 %v3644
    %5957 = vmatpush1.bf16.msra.mxu0 %v3643
    %5958 = vmatprep.subr.bf16.mxu0 %v3652
    %5959 = vmatpush1.bf16.msra.mxu0 %v3651
    %5960 = vmatprep.subr.bf16.mxu0 %v3660
    %5961 = vmatpush1.bf16.msra.mxu0 %v3659
    %5962 = vmatprep.subr.bf16.mxu0 %v3668
    %5963 = vmatpush1.bf16.msra.mxu0 %v3667
    %5964 = vmatprep.subr.bf16.mxu0 %v3676
    %5965 = vmatpush1.bf16.msra.mxu0 %v3675
    %5966 = vmatprep.subr.bf16.mxu0 %v3684
    %5967 = vmatpush1.bf16.msra.mxu0 %v3683
    %5968 = vmatprep.subr.bf16.mxu0 %v3692
    %5969 = vmatpush1.bf16.msra.mxu0 %v3691
    %5970 = vmatprep.mubr.bf16.mxu0 %v5650
    %5971 = vmatmul.mubr.bf16.gmra.mrb[0].mxu0 %v5649
    %v5972 = vpop.f32.mrb[0].mxu0
    %v5973 = vadd.f32 %v5932, %v5972
    %v5974 = vpop.f32.mrb[0].mxu0
    %v5975 = vadd.f32 %v5934, %v5974
    %v5976 = vpop.f32.mrb[0].mxu0
    %v5977 = vpop.f32.mrb[0].mxu0
    %5978 = vdwg.mxu0
    %v5987 = vrot.slane %v5727, 4
    %v5988 = vrot.slane %v5729, 4
    %v5989 = vrot.slane %v5809, 4
    %v5990 = vrot.slane %v5811, 4
    %v5991 = vrot.slane %v5891, 4
    %v5992 = vrot.slane %v5893, 4
    %v5993 = vrot.slane %v5973, 4
    %v5994 = vrot.slane %v5975, 4
    %v6003 = vadd.f32 %v5635, %v5987
    %v6004 = vadd.f32 %v5636, %v5988
    %v6005 = vadd.f32 %v5637, %v5989
    %v6006 = vadd.f32 %v5638, %v5990
    %v6007 = vadd.f32 %v5639, %v5991
    %v6008 = vadd.f32 %v5640, %v5992
    %v6009 = vadd.f32 %v5641, %v5993
    %v6010 = vadd.f32 %v5642, %v5994
    %v6011 = vxor.u32 %v6003, 2147483648
    %v6012 = vxor.u32 %v6004, 2147483648
    %v6013 = vmul.f32 %v6011, 1.442695
    %v6014 = vpow.pop %v6013
    %v6015 = vmul.f32 %v6012, 1.442695
    %v6016 = vpow.pop %v6015
    %v6017 = vadd.f32 %v6014, 1.0
    %v6018 = vadd.f32 %v6016, 1.0
    %v6019 = vrcp.pop %v6017
    %v6020 = vmul.f32 1.0, %v6019
    %v6021 = vrcp.pop %v6018
    %v6022 = vmul.f32 1.0, %v6021
    %v6023 = vxor.u32 %v6005, 2147483648
    %v6024 = vxor.u32 %v6006, 2147483648
    %v6025 = vmul.f32 %v6023, 1.442695
    %v6026 = vpow.pop %v6025
    %v6027 = vmul.f32 %v6024, 1.442695
    %v6028 = vpow.pop %v6027
    %v6029 = vadd.f32 %v6026, 1.0
    %v6030 = vadd.f32 %v6028, 1.0
    %v6031 = vrcp.pop %v6029
    %v6032 = vmul.f32 1.0, %v6031
    %v6033 = vrcp.pop %v6030
    %v6034 = vmul.f32 1.0, %v6033
    %v6035 = vtanh.pop %v6007
    %v6036 = vtanh.pop %v6008
    %v6037 = vxor.u32 %v6009, 2147483648
    %v6038 = vxor.u32 %v6010, 2147483648
    %v6039 = vmul.f32 %v6037, 1.442695
    %v6040 = vpow.pop %v6039
    %v6041 = vmul.f32 %v6038, 1.442695
    %v6042 = vpow.pop %v6041
    %v6043 = vadd.f32 %v6040, 1.0
    %v6044 = vadd.f32 %v6042, 1.0
    %v6045 = vrcp.pop %v6043
    %v6046 = vmul.f32 1.0, %v6045
    %v6047 = vrcp.pop %v6044
    %v6048 = vmul.f32 1.0, %v6047
    %v6051 = vrot.slane %v5629, 4
    %v6052 = vrot.slane %v5630, 4
    %v6055 = vmul.f32 %v6032, %v6051
    %v6056 = vmul.f32 %v6034, %v6052
    %v6057 = vmul.f32 %v6020, %v6035
    %v6058 = vmul.f32 %v6022, %v6036
    %v6059 = vadd.f32 %v6055, %v6057
    %v6060 = vadd.f32 %v6056, %v6058
    %v6061 = vtanh.pop %v6059
    %v6062 = vtanh.pop %v6060
    %v6063 = vmul.f32 %v6046, %v6061
    %v6064 = vmul.f32 %v6048, %v6062
    %v6065 = vld [vmem:[#allocation2 + $0xc0] sm:$0xf]
    %v6066 = vld [vmem:[#allocation2 + $0xc8] sm:$0xf]
    %v6067 = vld [vmem:[#allocation2 + $0xd0] sm:$0xf]
    %v6068 = vld [vmem:[#allocation2 + $0xd8] sm:$0xf]
    %v6069 = vld [vmem:[#allocation2 + $0xe0] sm:$0xf]
    %v6070 = vld [vmem:[#allocation2 + $0xe8] sm:$0xf]
    %v6071 = vld [vmem:[#allocation2 + $0xf0] sm:$0xf]
    %v6072 = vld [vmem:[#allocation2 + $0xf8] sm:$0xf]
    %v6073 = vmul.f32 %v6063, %v4372
    %v6074 = vmul.f32 %v6064, %v4372
    %v6075 = vmul.f32 %v6063, %v4377
    %v6076 = vmul.f32 %v6064, %v4377
    %v6077 = vpack.c.bf16 %v6073, %v6073
    %v6078 = vpack.c.bf16 %v6074, %v6074
    %v6079 = vpack.c.bf16 %v6075, %v6075
    %v6080 = vpack.c.bf16 %v6076, %v6076
    %v6085 = vrot.slane %v6077, 2
    %v6086 = vrot.slane %v6078, 2
    %v6087 = vrot.slane %v6079, 2
    %v6088 = vrot.slane %v6080, 2
    %6093 = vmatprep.subr.bf16.mxu0 %v3438
    %6094 = vmatpush1.bf16.msra.mxu0 %v3437
    %6095 = vmatprep.subr.bf16.mxu0 %v3446
    %6096 = vmatpush1.bf16.msra.mxu0 %v3445
    %6097 = vmatprep.subr.bf16.mxu0 %v3454
    %6098 = vmatpush1.bf16.msra.mxu0 %v3453
    %6099 = vmatprep.subr.bf16.mxu0 %v3462
    %6100 = vmatpush1.bf16.msra.mxu0 %v3461
    %6101 = vmatprep.subr.bf16.mxu0 %v3470
    %6102 = vmatpush1.bf16.msra.mxu0 %v3469
    %6103 = vmatprep.subr.bf16.mxu0 %v3478
    %6104 = vmatpush1.bf16.msra.mxu0 %v3477
    %6105 = vmatprep.subr.bf16.mxu0 %v3486
    %6106 = vmatpush1.bf16.msra.mxu0 %v3485
    %6107 = vmatprep.subr.bf16.mxu0 %v3494
    %6108 = vmatpush1.bf16.msra.mxu0 %v3493
    %6109 = vmatprep.subr.bf16.mxu0 %v3502
    %6110 = vmatpush1.bf16.msra.mxu0 %v3501
    %6111 = vmatprep.subr.bf16.mxu0 %v3510
    %6112 = vmatpush1.bf16.msra.mxu0 %v3509
    %6113 = vmatprep.subr.bf16.mxu0 %v3518
    %6114 = vmatpush1.bf16.msra.mxu0 %v3517
    %6115 = vmatprep.subr.bf16.mxu0 %v3526
    %6116 = vmatpush1.bf16.msra.mxu0 %v3525
    %6117 = vmatprep.subr.bf16.mxu0 %v3534
    %6118 = vmatpush1.bf16.msra.mxu0 %v3533
    %6119 = vmatprep.subr.bf16.mxu0 %v3542
    %6120 = vmatpush1.bf16.msra.mxu0 %v3541
    %6121 = vmatprep.subr.bf16.mxu0 %v3550
    %6122 = vmatpush1.bf16.msra.mxu0 %v3549
    %6123 = vmatprep.subr.bf16.mxu0 %v3558
    %6124 = vmatpush1.bf16.msra.mxu0 %v3557
    %6125 = vmatprep.mubr.bf16.mxu0 %v6086
    %6126 = vmatmul.mubr.bf16.gmra.mrb[0].mxu0 %v6085
    %v6127 = vpop.f32.mrb[0].mxu0
    %v6128 = vadd.f32 0.0, %v6127
    %v6129 = vpop.f32.mrb[0].mxu0
    %v6130 = vadd.f32 0.0, %v6129
    %v6131 = vpop.f32.mrb[0].mxu0
    %v6132 = vpop.f32.mrb[0].mxu0
    %6133 = vdwg.mxu0
    %6134 = vmatprep.subr.bf16.mxu0 %v3566
    %6135 = vmatpush1.bf16.msra.mxu0 %v3565
    %6136 = vmatprep.subr.bf16.mxu0 %v3574
    %6137 = vmatpush1.bf16.msra.mxu0 %v3573
    %6138 = vmatprep.subr.bf16.mxu0 %v3582
    %6139 = vmatpush1.bf16.msra.mxu0 %v3581
    %6140 = vmatprep.subr.bf16.mxu0 %v3590
    %6141 = vmatpush1.bf16.msra.mxu0 %v3589
    %6142 = vmatprep.subr.bf16.mxu0 %v3598
    %6143 = vmatpush1.bf16.msra.mxu0 %v3597
    %6144 = vmatprep.subr.bf16.mxu0 %v3606
    %6145 = vmatpush1.bf16.msra.mxu0 %v3605
    %6146 = vmatprep.subr.bf16.mxu0 %v3614
    %6147 = vmatpush1.bf16.msra.mxu0 %v3613
    %6148 = vmatprep.subr.bf16.mxu0 %v3622
    %6149 = vmatpush1.bf16.msra.mxu0 %v3621
    %6150 = vmatprep.subr.bf16.mxu0 %v3630
    %6151 = vmatpush1.bf16.msra.mxu0 %v3629
    %6152 = vmatprep.subr.bf16.mxu0 %v3638
    %6153 = vmatpush1.bf16.msra.mxu0 %v3637
    %6154 = vmatprep.subr.bf16.mxu0 %v3646
    %6155 = vmatpush1.bf16.msra.mxu0 %v3645
    %6156 = vmatprep.subr.bf16.mxu0 %v3654
    %6157 = vmatpush1.bf16.msra.mxu0 %v3653
    %6158 = vmatprep.subr.bf16.mxu0 %v3662
    %6159 = vmatpush1.bf16.msra.mxu0 %v3661
    %6160 = vmatprep.subr.bf16.mxu0 %v3670
    %6161 = vmatpush1.bf16.msra.mxu0 %v3669
    %6162 = vmatprep.subr.bf16.mxu0 %v3678
    %6163 = vmatpush1.bf16.msra.mxu0 %v3677
    %6164 = vmatprep.subr.bf16.mxu0 %v3686
    %6165 = vmatpush1.bf16.msra.mxu0 %v3685
    %6166 = vmatprep.mubr.bf16.mxu0 %v6088
    %6167 = vmatmul.mubr.bf16.gmra.mrb[0].mxu0 %v6087
    %v6168 = vpop.f32.mrb[0].mxu0
    %v6169 = vadd.f32 %v6128, %v6168
    %v6170 = vpop.f32.mrb[0].mxu0
    %v6171 = vadd.f32 %v6130, %v6170
    %v6172 = vpop.f32.mrb[0].mxu0
    %v6173 = vpop.f32.mrb[0].mxu0
    %6174 = vdwg.mxu0
    %6175 = vmatprep.subr.bf16.mxu0 %v3440
    %6176 = vmatpush1.bf16.msra.mxu0 %v3439
    %6177 = vmatprep.subr.bf16.mxu0 %v3448
    %6178 = vmatpush1.bf16.msra.mxu0 %v3447
    %6179 = vmatprep.subr.bf16.mxu0 %v3456
    %6180 = vmatpush1.bf16.msra.mxu0 %v3455
    %6181 = vmatprep.subr.bf16.mxu0 %v3464
    %6182 = vmatpush1.bf16.msra.mxu0 %v3463
    %6183 = vmatprep.subr.bf16.mxu0 %v3472
    %6184 = vmatpush1.bf16.msra.mxu0 %v3471
    %6185 = vmatprep.subr.bf16.mxu0 %v3480
    %6186 = vmatpush1.bf16.msra.mxu0 %v3479
    %6187 = vmatprep.subr.bf16.mxu0 %v3488
    %6188 = vmatpush1.bf16.msra.mxu0 %v3487
    %6189 = vmatprep.subr.bf16.mxu0 %v3496
    %6190 = vmatpush1.bf16.msra.mxu0 %v3495
    %6191 = vmatprep.subr.bf16.mxu0 %v3504
    %6192 = vmatpush1.bf16.msra.mxu0 %v3503
    %6193 = vmatprep.subr.bf16.mxu0 %v3512
    %6194 = vmatpush1.bf16.msra.mxu0 %v3511
    %6195 = vmatprep.subr.bf16.mxu0 %v3520
    %6196 = vmatpush1.bf16.msra.mxu0 %v3519
    %6197 = vmatprep.subr.bf16.mxu0 %v3528
    %6198 = vmatpush1.bf16.msra.mxu0 %v3527
    %6199 = vmatprep.subr.bf16.mxu0 %v3536
    %6200 = vmatpush1.bf16.msra.mxu0 %v3535
    %6201 = vmatprep.subr.bf16.mxu0 %v3544
    %6202 = vmatpush1.bf16.msra.mxu0 %v3543
    %6203 = vmatprep.subr.bf16.mxu0 %v3552
    %6204 = vmatpush1.bf16.msra.mxu0 %v3551
    %6205 = vmatprep.subr.bf16.mxu0 %v3560
    %6206 = vmatpush1.bf16.msra.mxu0 %v3559
    %6207 = vmatprep.mubr.bf16.mxu0 %v6086
    %6208 = vmatmul.mubr.bf16.gmra.mrb[0].mxu0 %v6085
    %v6209 = vpop.f32.mrb[0].mxu0
    %v6210 = vadd.f32 0.0, %v6209
    %v6211 = vpop.f32.mrb[0].mxu0
    %v6212 = vadd.f32 0.0, %v6211
    %v6213 = vpop.f32.mrb[0].mxu0
    %v6214 = vpop.f32.mrb[0].mxu0
    %6215 = vdwg.mxu0
    %6216 = vmatprep.subr.bf16.mxu0 %v3568
    %6217 = vmatpush1.bf16.msra.mxu0 %v3567
    %6218 = vmatprep.subr.bf16.mxu0 %v3576
    %6219 = vmatpush1.bf16.msra.mxu0 %v3575
    %6220 = vmatprep.subr.bf16.mxu0 %v3584
    %6221 = vmatpush1.bf16.msra.mxu0 %v3583
    %6222 = vmatprep.subr.bf16.mxu0 %v3592
    %6223 = vmatpush1.bf16.msra.mxu0 %v3591
    %6224 = vmatprep.subr.bf16.mxu0 %v3600
    %6225 = vmatpush1.bf16.msra.mxu0 %v3599
    %6226 = vmatprep.subr.bf16.mxu0 %v3608
    %6227 = vmatpush1.bf16.msra.mxu0 %v3607
    %6228 = vmatprep.subr.bf16.mxu0 %v3616
    %6229 = vmatpush1.bf16.msra.mxu0 %v3615
    %6230 = vmatprep.subr.bf16.mxu0 %v3624
    %6231 = vmatpush1.bf16.msra.mxu0 %v3623
    %6232 = vmatprep.subr.bf16.mxu0 %v3632
    %6233 = vmatpush1.bf16.msra.mxu0 %v3631
    %6234 = vmatprep.subr.bf16.mxu0 %v3640
    %6235 = vmatpush1.bf16.msra.mxu0 %v3639
    %6236 = vmatprep.subr.bf16.mxu0 %v3648
    %6237 = vmatpush1.bf16.msra.mxu0 %v3647
    %6238 = vmatprep.subr.bf16.mxu0 %v3656
    %6239 = vmatpush1.bf16.msra.mxu0 %v3655
    %6240 = vmatprep.subr.bf16.mxu0 %v3664
    %6241 = vmatpush1.bf16.msra.mxu0 %v3663
    %6242 = vmatprep.subr.bf16.mxu0 %v3672
    %6243 = vmatpush1.bf16.msra.mxu0 %v3671
    %6244 = vmatprep.subr.bf16.mxu0 %v3680
    %6245 = vmatpush1.bf16.msra.mxu0 %v3679
    %6246 = vmatprep.subr.bf16.mxu0 %v3688
    %6247 = vmatpush1.bf16.msra.mxu0 %v3687
    %6248 = vmatprep.mubr.bf16.mxu0 %v6088
    %6249 = vmatmul.mubr.bf16.gmra.mrb[0].mxu0 %v6087
    %v6250 = vpop.f32.mrb[0].mxu0
    %v6251 = vadd.f32 %v6210, %v6250
    %v6252 = vpop.f32.mrb[0].mxu0
    %v6253 = vadd.f32 %v6212, %v6252
    %v6254 = vpop.f32.mrb[0].mxu0
    %v6255 = vpop.f32.mrb[0].mxu0
    %6256 = vdwg.mxu0
    %6257 = vmatprep.subr.bf16.mxu0 %v3442
    %6258 = vmatpush1.bf16.msra.mxu0 %v3441
    %6259 = vmatprep.subr.bf16.mxu0 %v3450
    %6260 = vmatpush1.bf16.msra.mxu0 %v3449
    %6261 = vmatprep.subr.bf16.mxu0 %v3458
    %6262 = vmatpush1.bf16.msra.mxu0 %v3457
    %6263 = vmatprep.subr.bf16.mxu0 %v3466
    %6264 = vmatpush1.bf16.msra.mxu0 %v3465
    %6265 = vmatprep.subr.bf16.mxu0 %v3474
    %6266 = vmatpush1.bf16.msra.mxu0 %v3473
    %6267 = vmatprep.subr.bf16.mxu0 %v3482
    %6268 = vmatpush1.bf16.msra.mxu0 %v3481
    %6269 = vmatprep.subr.bf16.mxu0 %v3490
    %6270 = vmatpush1.bf16.msra.mxu0 %v3489
    %6271 = vmatprep.subr.bf16.mxu0 %v3498
    %6272 = vmatpush1.bf16.msra.mxu0 %v3497
    %6273 = vmatprep.subr.bf16.mxu0 %v3506
    %6274 = vmatpush1.bf16.msra.mxu0 %v3505
    %6275 = vmatprep.subr.bf16.mxu0 %v3514
    %6276 = vmatpush1.bf16.msra.mxu0 %v3513
    %6277 = vmatprep.subr.bf16.mxu0 %v3522
    %6278 = vmatpush1.bf16.msra.mxu0 %v3521
    %6279 = vmatprep.subr.bf16.mxu0 %v3530
    %6280 = vmatpush1.bf16.msra.mxu0 %v3529
    %6281 = vmatprep.subr.bf16.mxu0 %v3538
    %6282 = vmatpush1.bf16.msra.mxu0 %v3537
    %6283 = vmatprep.subr.bf16.mxu0 %v3546
    %6284 = vmatpush1.bf16.msra.mxu0 %v3545
    %6285 = vmatprep.subr.bf16.mxu0 %v3554
    %6286 = vmatpush1.bf16.msra.mxu0 %v3553
    %6287 = vmatprep.subr.bf16.mxu0 %v3562
    %6288 = vmatpush1.bf16.msra.mxu0 %v3561
    %6289 = vmatprep.mubr.bf16.mxu0 %v6086
    %6290 = vmatmul.mubr.bf16.gmra.mrb[0].mxu0 %v6085
    %v6291 = vpop.f32.mrb[0].mxu0
    %v6292 = vadd.f32 0.0, %v6291
    %v6293 = vpop.f32.mrb[0].mxu0
    %v6294 = vadd.f32 0.0, %v6293
    %v6295 = vpop.f32.mrb[0].mxu0
    %v6296 = vpop.f32.mrb[0].mxu0
    %6297 = vdwg.mxu0
    %6298 = vmatprep.subr.bf16.mxu0 %v3570
    %6299 = vmatpush1.bf16.msra.mxu0 %v3569
    %6300 = vmatprep.subr.bf16.mxu0 %v3578
    %6301 = vmatpush1.bf16.msra.mxu0 %v3577
    %6302 = vmatprep.subr.bf16.mxu0 %v3586
    %6303 = vmatpush1.bf16.msra.mxu0 %v3585
    %6304 = vmatprep.subr.bf16.mxu0 %v3594
    %6305 = vmatpush1.bf16.msra.mxu0 %v3593
    %6306 = vmatprep.subr.bf16.mxu0 %v3602
    %6307 = vmatpush1.bf16.msra.mxu0 %v3601
    %6308 = vmatprep.subr.bf16.mxu0 %v3610
    %6309 = vmatpush1.bf16.msra.mxu0 %v3609
    %6310 = vmatprep.subr.bf16.mxu0 %v3618
    %6311 = vmatpush1.bf16.msra.mxu0 %v3617
    %6312 = vmatprep.subr.bf16.mxu0 %v3626
    %6313 = vmatpush1.bf16.msra.mxu0 %v3625
    %6314 = vmatprep.subr.bf16.mxu0 %v3634
    %6315 = vmatpush1.bf16.msra.mxu0 %v3633
    %6316 = vmatprep.subr.bf16.mxu0 %v3642
    %6317 = vmatpush1.bf16.msra.mxu0 %v3641
    %6318 = vmatprep.subr.bf16.mxu0 %v3650
    %6319 = vmatpush1.bf16.msra.mxu0 %v3649
    %6320 = vmatprep.subr.bf16.mxu0 %v3658
    %6321 = vmatpush1.bf16.msra.mxu0 %v3657
    %6322 = vmatprep.subr.bf16.mxu0 %v3666
    %6323 = vmatpush1.bf16.msra.mxu0 %v3665
    %6324 = vmatprep.subr.bf16.mxu0 %v3674
    %6325 = vmatpush1.bf16.msra.mxu0 %v3673
    %6326 = vmatprep.subr.bf16.mxu0 %v3682
    %6327 = vmatpush1.bf16.msra.mxu0 %v3681
    %6328 = vmatprep.subr.bf16.mxu0 %v3690
    %6329 = vmatpush1.bf16.msra.mxu0 %v3689
    %6330 = vmatprep.mubr.bf16.mxu0 %v6088
    %6331 = vmatmul.mubr.bf16.gmra.mrb[0].mxu0 %v6087
    %v6332 = vpop.f32.mrb[0].mxu0
    %v6333 = vadd.f32 %v6292, %v6332
    %v6334 = vpop.f32.mrb[0].mxu0
    %v6335 = vadd.f32 %v6294, %v6334
    %v6336 = vpop.f32.mrb[0].mxu0
    %v6337 = vpop.f32.mrb[0].mxu0
    %6338 = vdwg.mxu0
    %6339 = vmatprep.subr.bf16.mxu0 %v3444
    %6340 = vmatpush1.bf16.msra.mxu0 %v3443
    %6341 = vmatprep.subr.bf16.mxu0 %v3452
    %6342 = vmatpush1.bf16.msra.mxu0 %v3451
    %6343 = vmatprep.subr.bf16.mxu0 %v3460
    %6344 = vmatpush1.bf16.msra.mxu0 %v3459
    %6345 = vmatprep.subr.bf16.mxu0 %v3468
    %6346 = vmatpush1.bf16.msra.mxu0 %v3467
    %6347 = vmatprep.subr.bf16.mxu0 %v3476
    %6348 = vmatpush1.bf16.msra.mxu0 %v3475
    %6349 = vmatprep.subr.bf16.mxu0 %v3484
    %6350 = vmatpush1.bf16.msra.mxu0 %v3483
    %6351 = vmatprep.subr.bf16.mxu0 %v3492
    %6352 = vmatpush1.bf16.msra.mxu0 %v3491
    %6353 = vmatprep.subr.bf16.mxu0 %v3500
    %6354 = vmatpush1.bf16.msra.mxu0 %v3499
    %6355 = vmatprep.subr.bf16.mxu0 %v3508
    %6356 = vmatpush1.bf16.msra.mxu0 %v3507
    %6357 = vmatprep.subr.bf16.mxu0 %v3516
    %6358 = vmatpush1.bf16.msra.mxu0 %v3515
    %6359 = vmatprep.subr.bf16.mxu0 %v3524
    %6360 = vmatpush1.bf16.msra.mxu0 %v3523
    %6361 = vmatprep.subr.bf16.mxu0 %v3532
    %6362 = vmatpush1.bf16.msra.mxu0 %v3531
    %6363 = vmatprep.subr.bf16.mxu0 %v3540
    %6364 = vmatpush1.bf16.msra.mxu0 %v3539
    %6365 = vmatprep.subr.bf16.mxu0 %v3548
    %6366 = vmatpush1.bf16.msra.mxu0 %v3547
    %6367 = vmatprep.subr.bf16.mxu0 %v3556
    %6368 = vmatpush1.bf16.msra.mxu0 %v3555
    %6369 = vmatprep.subr.bf16.mxu0 %v3564
    %6370 = vmatpush1.bf16.msra.mxu0 %v3563
    %6371 = vmatprep.mubr.bf16.mxu0 %v6086
    %6372 = vmatmul.mubr.bf16.gmra.mrb[0].mxu0 %v6085
    %v6373 = vpop.f32.mrb[0].mxu0
    %v6374 = vadd.f32 0.0, %v6373
    %v6375 = vpop.f32.mrb[0].mxu0
    %v6376 = vadd.f32 0.0, %v6375
    %v6377 = vpop.f32.mrb[0].mxu0
    %v6378 = vpop.f32.mrb[0].mxu0
    %6379 = vdwg.mxu0
    %6380 = vmatprep.subr.bf16.mxu0 %v3572
    %6381 = vmatpush1.bf16.msra.mxu0 %v3571
    %6382 = vmatprep.subr.bf16.mxu0 %v3580
    %6383 = vmatpush1.bf16.msra.mxu0 %v3579
    %6384 = vmatprep.subr.bf16.mxu0 %v3588
    %6385 = vmatpush1.bf16.msra.mxu0 %v3587
    %6386 = vmatprep.subr.bf16.mxu0 %v3596
    %6387 = vmatpush1.bf16.msra.mxu0 %v3595
    %6388 = vmatprep.subr.bf16.mxu0 %v3604
    %6389 = vmatpush1.bf16.msra.mxu0 %v3603
    %6390 = vmatprep.subr.bf16.mxu0 %v3612
    %6391 = vmatpush1.bf16.msra.mxu0 %v3611
    %6392 = vmatprep.subr.bf16.mxu0 %v3620
    %6393 = vmatpush1.bf16.msra.mxu0 %v3619
    %6394 = vmatprep.subr.bf16.mxu0 %v3628
    %6395 = vmatpush1.bf16.msra.mxu0 %v3627
    %6396 = vmatprep.subr.bf16.mxu0 %v3636
    %6397 = vmatpush1.bf16.msra.mxu0 %v3635
    %6398 = vmatprep.subr.bf16.mxu0 %v3644
    %6399 = vmatpush1.bf16.msra.mxu0 %v3643
    %6400 = vmatprep.subr.bf16.mxu0 %v3652
    %6401 = vmatpush1.bf16.msra.mxu0 %v3651
    %6402 = vmatprep.subr.bf16.mxu0 %v3660
    %6403 = vmatpush1.bf16.msra.mxu0 %v3659
    %6404 = vmatprep.subr.bf16.mxu0 %v3668
    %6405 = vmatpush1.bf16.msra.mxu0 %v3667
    %6406 = vmatprep.subr.bf16.mxu0 %v3676
    %6407 = vmatpush1.bf16.msra.mxu0 %v3675
    %6408 = vmatprep.subr.bf16.mxu0 %v3684
    %6409 = vmatpush1.bf16.msra.mxu0 %v3683
    %6410 = vmatprep.subr.bf16.mxu0 %v3692
    %6411 = vmatpush1.bf16.msra.mxu0 %v3691
    %6412 = vmatprep.mubr.bf16.mxu0 %v6088
    %6413 = vmatmul.mubr.bf16.gmra.mrb[0].mxu0 %v6087
    %v6414 = vpop.f32.mrb[0].mxu0
    %v6415 = vadd.f32 %v6374, %v6414
    %v6416 = vpop.f32.mrb[0].mxu0
    %v6417 = vadd.f32 %v6376, %v6416
    %v6418 = vpop.f32.mrb[0].mxu0
    %v6419 = vpop.f32.mrb[0].mxu0
    %6420 = vdwg.mxu0
    %v6421 = vadd.f32 %v6065, %v6169
    %v6422 = vadd.f32 %v6066, %v6171
    %v6423 = vadd.f32 %v6067, %v6251
    %v6424 = vadd.f32 %v6068, %v6253
    %v6425 = vadd.f32 %v6069, %v6333
    %v6426 = vadd.f32 %v6070, %v6335
    %v6427 = vadd.f32 %v6071, %v6415
    %v6428 = vadd.f32 %v6072, %v6417
    %v6429 = vxor.u32 %v6421, 2147483648
    %v6430 = vxor.u32 %v6422, 2147483648
    %v6431 = vmul.f32 %v6429, 1.442695
    %v6432 = vpow.pop %v6431
    %v6433 = vmul.f32 %v6430, 1.442695
    %v6434 = vpow.pop %v6433
    %v6435 = vadd.f32 %v6432, 1.0
    %v6436 = vadd.f32 %v6434, 1.0
    %v6437 = vrcp.pop %v6435
    %v6438 = vmul.f32 1.0, %v6437
    %v6439 = vrcp.pop %v6436
    %v6440 = vmul.f32 1.0, %v6439
    %v6441 = vxor.u32 %v6423, 2147483648
    %v6442 = vxor.u32 %v6424, 2147483648
    %v6443 = vmul.f32 %v6441, 1.442695
    %v6444 = vpow.pop %v6443
    %v6445 = vmul.f32 %v6442, 1.442695
    %v6446 = vpow.pop %v6445
    %v6447 = vadd.f32 %v6444, 1.0
    %v6448 = vadd.f32 %v6446, 1.0
    %v6449 = vrcp.pop %v6447
    %v6450 = vmul.f32 1.0, %v6449
    %v6451 = vrcp.pop %v6448
    %v6452 = vmul.f32 1.0, %v6451
    %v6453 = vtanh.pop %v6425
    %v6454 = vtanh.pop %v6426
    %v6455 = vxor.u32 %v6427, 2147483648
    %v6456 = vxor.u32 %v6428, 2147483648
    %v6457 = vmul.f32 %v6455, 1.442695
    %v6458 = vpow.pop %v6457
    %v6459 = vmul.f32 %v6456, 1.442695
    %v6460 = vpow.pop %v6459
    %v6461 = vadd.f32 %v6458, 1.0
    %v6462 = vadd.f32 %v6460, 1.0
    %v6463 = vrcp.pop %v6461
    %v6464 = vmul.f32 1.0, %v6463
    %v6465 = vrcp.pop %v6462
    %v6466 = vmul.f32 1.0, %v6465
    %v6469 = vrot.slane %v6059, 4
    %v6470 = vrot.slane %v6060, 4
    %v6473 = vmul.f32 %v6450, %v6469
    %v6474 = vmul.f32 %v6452, %v6470
    %v6475 = vmul.f32 %v6438, %v6453
    %v6476 = vmul.f32 %v6440, %v6454
    %v6477 = vadd.f32 %v6473, %v6475
    %v6478 = vadd.f32 %v6474, %v6476
    %v6479 = vtanh.pop %v6477
    %v6480 = vtanh.pop %v6478
    %v6481 = vmul.f32 %v6464, %v6479
    %v6482 = vmul.f32 %v6466, %v6480
    %v6483 = vld [vmem:[#allocation2 + $0xc0] sm:$0xf0]
    %v6484 = vld [vmem:[#allocation2 + $0xc8] sm:$0xf0]
    %v6485 = vld [vmem:[#allocation2 + $0xd0] sm:$0xf0]
    %v6486 = vld [vmem:[#allocation2 + $0xd8] sm:$0xf0]
    %v6487 = vld [vmem:[#allocation2 + $0xe0] sm:$0xf0]
    %v6488 = vld [vmem:[#allocation2 + $0xe8] sm:$0xf0]
    %v6489 = vld [vmem:[#allocation2 + $0xf0] sm:$0xf0]
    %v6490 = vld [vmem:[#allocation2 + $0xf8] sm:$0xf0]
    %v6491 = vmul.f32 %v6481, %v2339
    %v6492 = vmul.f32 %v6482, %v2339
    %v6493 = vmul.f32 %v6481, %v2340
    %v6494 = vmul.f32 %v6482, %v2340
    %v6495 = vpack.c.bf16 %v6491, %v6491
    %v6496 = vpack.c.bf16 %v6492, %v6492
    %v6497 = vpack.c.bf16 %v6493, %v6493
    %v6498 = vpack.c.bf16 %v6494, %v6494
    %6499 = vmatprep.subr.bf16.mxu0 %v3438
    %6500 = vmatpush1.bf16.msra.mxu0 %v3437
    %6501 = vmatprep.subr.bf16.mxu0 %v3446
    %6502 = vmatpush1.bf16.msra.mxu0 %v3445
    %6503 = vmatprep.subr.bf16.mxu0 %v3454
    %6504 = vmatpush1.bf16.msra.mxu0 %v3453
    %6505 = vmatprep.subr.bf16.mxu0 %v3462
    %6506 = vmatpush1.bf16.msra.mxu0 %v3461
    %6507 = vmatprep.subr.bf16.mxu0 %v3470
    %6508 = vmatpush1.bf16.msra.mxu0 %v3469
    %6509 = vmatprep.subr.bf16.mxu0 %v3478
    %6510 = vmatpush1.bf16.msra.mxu0 %v3477
    %6511 = vmatprep.subr.bf16.mxu0 %v3486
    %6512 = vmatpush1.bf16.msra.mxu0 %v3485
    %6513 = vmatprep.subr.bf16.mxu0 %v3494
    %6514 = vmatpush1.bf16.msra.mxu0 %v3493
    %6515 = vmatprep.subr.bf16.mxu0 %v3502
    %6516 = vmatpush1.bf16.msra.mxu0 %v3501
    %6517 = vmatprep.subr.bf16.mxu0 %v3510
    %6518 = vmatpush1.bf16.msra.mxu0 %v3509
    %6519 = vmatprep.subr.bf16.mxu0 %v3518
    %6520 = vmatpush1.bf16.msra.mxu0 %v3517
    %6521 = vmatprep.subr.bf16.mxu0 %v3526
    %6522 = vmatpush1.bf16.msra.mxu0 %v3525
    %6523 = vmatprep.subr.bf16.mxu0 %v3534
    %6524 = vmatpush1.bf16.msra.mxu0 %v3533
    %6525 = vmatprep.subr.bf16.mxu0 %v3542
    %6526 = vmatpush1.bf16.msra.mxu0 %v3541
    %6527 = vmatprep.subr.bf16.mxu0 %v3550
    %6528 = vmatpush1.bf16.msra.mxu0 %v3549
    %6529 = vmatprep.subr.bf16.mxu0 %v3558
    %6530 = vmatpush1.bf16.msra.mxu0 %v3557
    %6531 = vmatprep.mubr.bf16.mxu0 %v6496
    %6532 = vmatmul.mubr.bf16.gmra.mrb[0].mxu0 %v6495
    %v6533 = vpop.f32.mrb[0].mxu0
    %v6534 = vadd.f32 0.0, %v6533
    %v6535 = vpop.f32.mrb[0].mxu0
    %v6536 = vadd.f32 0.0, %v6535
    %v6537 = vpop.f32.mrb[0].mxu0
    %v6538 = vpop.f32.mrb[0].mxu0
    %6539 = vdwg.mxu0
    %6540 = vmatprep.subr.bf16.mxu0 %v3566
    %6541 = vmatpush1.bf16.msra.mxu0 %v3565
    %6542 = vmatprep.subr.bf16.mxu0 %v3574
    %6543 = vmatpush1.bf16.msra.mxu0 %v3573
    %6544 = vmatprep.subr.bf16.mxu0 %v3582
    %6545 = vmatpush1.bf16.msra.mxu0 %v3581
    %6546 = vmatprep.subr.bf16.mxu0 %v3590
    %6547 = vmatpush1.bf16.msra.mxu0 %v3589
    %6548 = vmatprep.subr.bf16.mxu0 %v3598
    %6549 = vmatpush1.bf16.msra.mxu0 %v3597
    %6550 = vmatprep.subr.bf16.mxu0 %v3606
    %6551 = vmatpush1.bf16.msra.mxu0 %v3605
    %6552 = vmatprep.subr.bf16.mxu0 %v3614
    %6553 = vmatpush1.bf16.msra.mxu0 %v3613
    %6554 = vmatprep.subr.bf16.mxu0 %v3622
    %6555 = vmatpush1.bf16.msra.mxu0 %v3621
    %6556 = vmatprep.subr.bf16.mxu0 %v3630
    %6557 = vmatpush1.bf16.msra.mxu0 %v3629
    %6558 = vmatprep.subr.bf16.mxu0 %v3638
    %6559 = vmatpush1.bf16.msra.mxu0 %v3637
    %6560 = vmatprep.subr.bf16.mxu0 %v3646
    %6561 = vmatpush1.bf16.msra.mxu0 %v3645
    %6562 = vmatprep.subr.bf16.mxu0 %v3654
    %6563 = vmatpush1.bf16.msra.mxu0 %v3653
    %6564 = vmatprep.subr.bf16.mxu0 %v3662
    %6565 = vmatpush1.bf16.msra.mxu0 %v3661
    %6566 = vmatprep.subr.bf16.mxu0 %v3670
    %6567 = vmatpush1.bf16.msra.mxu0 %v3669
    %6568 = vmatprep.subr.bf16.mxu0 %v3678
    %6569 = vmatpush1.bf16.msra.mxu0 %v3677
    %6570 = vmatprep.subr.bf16.mxu0 %v3686
    %6571 = vmatpush1.bf16.msra.mxu0 %v3685
    %6572 = vmatprep.mubr.bf16.mxu0 %v6498
    %6573 = vmatmul.mubr.bf16.gmra.mrb[0].mxu0 %v6497
    %v6574 = vpop.f32.mrb[0].mxu0
    %v6575 = vadd.f32 %v6534, %v6574
    %v6576 = vpop.f32.mrb[0].mxu0
    %v6577 = vadd.f32 %v6536, %v6576
    %v6578 = vpop.f32.mrb[0].mxu0
    %v6579 = vpop.f32.mrb[0].mxu0
    %6580 = vdwg.mxu0
    %6581 = vmatprep.subr.bf16.mxu0 %v3440
    %6582 = vmatpush1.bf16.msra.mxu0 %v3439
    %6583 = vmatprep.subr.bf16.mxu0 %v3448
    %6584 = vmatpush1.bf16.msra.mxu0 %v3447
    %6585 = vmatprep.subr.bf16.mxu0 %v3456
    %6586 = vmatpush1.bf16.msra.mxu0 %v3455
    %6587 = vmatprep.subr.bf16.mxu0 %v3464
    %6588 = vmatpush1.bf16.msra.mxu0 %v3463
    %6589 = vmatprep.subr.bf16.mxu0 %v3472
    %6590 = vmatpush1.bf16.msra.mxu0 %v3471
    %6591 = vmatprep.subr.bf16.mxu0 %v3480
    %6592 = vmatpush1.bf16.msra.mxu0 %v3479
    %6593 = vmatprep.subr.bf16.mxu0 %v3488
    %6594 = vmatpush1.bf16.msra.mxu0 %v3487
    %6595 = vmatprep.subr.bf16.mxu0 %v3496
    %6596 = vmatpush1.bf16.msra.mxu0 %v3495
    %6597 = vmatprep.subr.bf16.mxu0 %v3504
    %6598 = vmatpush1.bf16.msra.mxu0 %v3503
    %6599 = vmatprep.subr.bf16.mxu0 %v3512
    %6600 = vmatpush1.bf16.msra.mxu0 %v3511
    %6601 = vmatprep.subr.bf16.mxu0 %v3520
    %6602 = vmatpush1.bf16.msra.mxu0 %v3519
    %6603 = vmatprep.subr.bf16.mxu0 %v3528
    %6604 = vmatpush1.bf16.msra.mxu0 %v3527
    %6605 = vmatprep.subr.bf16.mxu0 %v3536
    %6606 = vmatpush1.bf16.msra.mxu0 %v3535
    %6607 = vmatprep.subr.bf16.mxu0 %v3544
    %6608 = vmatpush1.bf16.msra.mxu0 %v3543
    %6609 = vmatprep.subr.bf16.mxu0 %v3552
    %6610 = vmatpush1.bf16.msra.mxu0 %v3551
    %6611 = vmatprep.subr.bf16.mxu0 %v3560
    %6612 = vmatpush1.bf16.msra.mxu0 %v3559
    %6613 = vmatprep.mubr.bf16.mxu0 %v6496
    %6614 = vmatmul.mubr.bf16.gmra.mrb[0].mxu0 %v6495
    %v6615 = vpop.f32.mrb[0].mxu0
    %v6616 = vadd.f32 0.0, %v6615
    %v6617 = vpop.f32.mrb[0].mxu0
    %v6618 = vadd.f32 0.0, %v6617
    %v6619 = vpop.f32.mrb[0].mxu0
    %v6620 = vpop.f32.mrb[0].mxu0
    %6621 = vdwg.mxu0
    %6622 = vmatprep.subr.bf16.mxu0 %v3568
    %6623 = vmatpush1.bf16.msra.mxu0 %v3567
    %6624 = vmatprep.subr.bf16.mxu0 %v3576
    %6625 = vmatpush1.bf16.msra.mxu0 %v3575
    %6626 = vmatprep.subr.bf16.mxu0 %v3584
    %6627 = vmatpush1.bf16.msra.mxu0 %v3583
    %6628 = vmatprep.subr.bf16.mxu0 %v3592
    %6629 = vmatpush1.bf16.msra.mxu0 %v3591
    %6630 = vmatprep.subr.bf16.mxu0 %v3600
    %6631 = vmatpush1.bf16.msra.mxu0 %v3599
    %6632 = vmatprep.subr.bf16.mxu0 %v3608
    %6633 = vmatpush1.bf16.msra.mxu0 %v3607
    %6634 = vmatprep.subr.bf16.mxu0 %v3616
    %6635 = vmatpush1.bf16.msra.mxu0 %v3615
    %6636 = vmatprep.subr.bf16.mxu0 %v3624
    %6637 = vmatpush1.bf16.msra.mxu0 %v3623
    %6638 = vmatprep.subr.bf16.mxu0 %v3632
    %6639 = vmatpush1.bf16.msra.mxu0 %v3631
    %6640 = vmatprep.subr.bf16.mxu0 %v3640
    %6641 = vmatpush1.bf16.msra.mxu0 %v3639
    %6642 = vmatprep.subr.bf16.mxu0 %v3648
    %6643 = vmatpush1.bf16.msra.mxu0 %v3647
    %6644 = vmatprep.subr.bf16.mxu0 %v3656
    %6645 = vmatpush1.bf16.msra.mxu0 %v3655
    %6646 = vmatprep.subr.bf16.mxu0 %v3664
    %6647 = vmatpush1.bf16.msra.mxu0 %v3663
    %6648 = vmatprep.subr.bf16.mxu0 %v3672
    %6649 = vmatpush1.bf16.msra.mxu0 %v3671
    %6650 = vmatprep.subr.bf16.mxu0 %v3680
    %6651 = vmatpush1.bf16.msra.mxu0 %v3679
    %6652 = vmatprep.subr.bf16.mxu0 %v3688
    %6653 = vmatpush1.bf16.msra.mxu0 %v3687
    %6654 = vmatprep.mubr.bf16.mxu0 %v6498
    %6655 = vmatmul.mubr.bf16.gmra.mrb[0].mxu0 %v6497
    %v6656 = vpop.f32.mrb[0].mxu0
    %v6657 = vadd.f32 %v6616, %v6656
    %v6658 = vpop.f32.mrb[0].mxu0
    %v6659 = vadd.f32 %v6618, %v6658
    %v6660 = vpop.f32.mrb[0].mxu0
    %v6661 = vpop.f32.mrb[0].mxu0
    %6662 = vdwg.mxu0
    %6663 = vmatprep.subr.bf16.mxu0 %v3442
    %6664 = vmatpush1.bf16.msra.mxu0 %v3441
    %6665 = vmatprep.subr.bf16.mxu0 %v3450
    %6666 = vmatpush1.bf16.msra.mxu0 %v3449
    %6667 = vmatprep.subr.bf16.mxu0 %v3458
    %6668 = vmatpush1.bf16.msra.mxu0 %v3457
    %6669 = vmatprep.subr.bf16.mxu0 %v3466
    %6670 = vmatpush1.bf16.msra.mxu0 %v3465
    %6671 = vmatprep.subr.bf16.mxu0 %v3474
    %6672 = vmatpush1.bf16.msra.mxu0 %v3473
    %6673 = vmatprep.subr.bf16.mxu0 %v3482
    %6674 = vmatpush1.bf16.msra.mxu0 %v3481
    %6675 = vmatprep.subr.bf16.mxu0 %v3490
    %6676 = vmatpush1.bf16.msra.mxu0 %v3489
    %6677 = vmatprep.subr.bf16.mxu0 %v3498
    %6678 = vmatpush1.bf16.msra.mxu0 %v3497
    %6679 = vmatprep.subr.bf16.mxu0 %v3506
    %6680 = vmatpush1.bf16.msra.mxu0 %v3505
    %6681 = vmatprep.subr.bf16.mxu0 %v3514
    %6682 = vmatpush1.bf16.msra.mxu0 %v3513
    %6683 = vmatprep.subr.bf16.mxu0 %v3522
    %6684 = vmatpush1.bf16.msra.mxu0 %v3521
    %6685 = vmatprep.subr.bf16.mxu0 %v3530
    %6686 = vmatpush1.bf16.msra.mxu0 %v3529
    %6687 = vmatprep.subr.bf16.mxu0 %v3538
    %6688 = vmatpush1.bf16.msra.mxu0 %v3537
    %6689 = vmatprep.subr.bf16.mxu0 %v3546
    %6690 = vmatpush1.bf16.msra.mxu0 %v3545
    %6691 = vmatprep.subr.bf16.mxu0 %v3554
    %6692 = vmatpush1.bf16.msra.mxu0 %v3553
    %6693 = vmatprep.subr.bf16.mxu0 %v3562
    %6694 = vmatpush1.bf16.msra.mxu0 %v3561
    %6695 = vmatprep.mubr.bf16.mxu0 %v6496
    %6696 = vmatmul.mubr.bf16.gmra.mrb[0].mxu0 %v6495
    %v6697 = vpop.f32.mrb[0].mxu0
    %v6698 = vadd.f32 0.0, %v6697
    %v6699 = vpop.f32.mrb[0].mxu0
    %v6700 = vadd.f32 0.0, %v6699
    %v6701 = vpop.f32.mrb[0].mxu0
    %v6702 = vpop.f32.mrb[0].mxu0
    %6703 = vdwg.mxu0
    %6704 = vmatprep.subr.bf16.mxu0 %v3570
    %6705 = vmatpush1.bf16.msra.mxu0 %v3569
    %6706 = vmatprep.subr.bf16.mxu0 %v3578
    %6707 = vmatpush1.bf16.msra.mxu0 %v3577
    %6708 = vmatprep.subr.bf16.mxu0 %v3586
    %6709 = vmatpush1.bf16.msra.mxu0 %v3585
    %6710 = vmatprep.subr.bf16.mxu0 %v3594
    %6711 = vmatpush1.bf16.msra.mxu0 %v3593
    %6712 = vmatprep.subr.bf16.mxu0 %v3602
    %6713 = vmatpush1.bf16.msra.mxu0 %v3601
    %6714 = vmatprep.subr.bf16.mxu0 %v3610
    %6715 = vmatpush1.bf16.msra.mxu0 %v3609
    %6716 = vmatprep.subr.bf16.mxu0 %v3618
    %6717 = vmatpush1.bf16.msra.mxu0 %v3617
    %6718 = vmatprep.subr.bf16.mxu0 %v3626
    %6719 = vmatpush1.bf16.msra.mxu0 %v3625
    %6720 = vmatprep.subr.bf16.mxu0 %v3634
    %6721 = vmatpush1.bf16.msra.mxu0 %v3633
    %6722 = vmatprep.subr.bf16.mxu0 %v3642
    %6723 = vmatpush1.bf16.msra.mxu0 %v3641
    %6724 = vmatprep.subr.bf16.mxu0 %v3650
    %6725 = vmatpush1.bf16.msra.mxu0 %v3649
    %6726 = vmatprep.subr.bf16.mxu0 %v3658
    %6727 = vmatpush1.bf16.msra.mxu0 %v3657
    %6728 = vmatprep.subr.bf16.mxu0 %v3666
    %6729 = vmatpush1.bf16.msra.mxu0 %v3665
    %6730 = vmatprep.subr.bf16.mxu0 %v3674
    %6731 = vmatpush1.bf16.msra.mxu0 %v3673
    %6732 = vmatprep.subr.bf16.mxu0 %v3682
    %6733 = vmatpush1.bf16.msra.mxu0 %v3681
    %6734 = vmatprep.subr.bf16.mxu0 %v3690
    %6735 = vmatpush1.bf16.msra.mxu0 %v3689
    %6736 = vmatprep.mubr.bf16.mxu0 %v6498
    %6737 = vmatmul.mubr.bf16.gmra.mrb[0].mxu0 %v6497
    %v6738 = vpop.f32.mrb[0].mxu0
    %v6739 = vadd.f32 %v6698, %v6738
    %v6740 = vpop.f32.mrb[0].mxu0
    %v6741 = vadd.f32 %v6700, %v6740
    %v6742 = vpop.f32.mrb[0].mxu0
    %v6743 = vpop.f32.mrb[0].mxu0
    %6744 = vdwg.mxu0
    %6745 = vmatprep.subr.bf16.mxu0 %v3444
    %6746 = vmatpush1.bf16.msra.mxu0 %v3443
    %6747 = vmatprep.subr.bf16.mxu0 %v3452
    %6748 = vmatpush1.bf16.msra.mxu0 %v3451
    %6749 = vmatprep.subr.bf16.mxu0 %v3460
    %6750 = vmatpush1.bf16.msra.mxu0 %v3459
    %6751 = vmatprep.subr.bf16.mxu0 %v3468
    %6752 = vmatpush1.bf16.msra.mxu0 %v3467
    %6753 = vmatprep.subr.bf16.mxu0 %v3476
    %6754 = vmatpush1.bf16.msra.mxu0 %v3475
    %6755 = vmatprep.subr.bf16.mxu0 %v3484
    %6756 = vmatpush1.bf16.msra.mxu0 %v3483
    %6757 = vmatprep.subr.bf16.mxu0 %v3492
    %6758 = vmatpush1.bf16.msra.mxu0 %v3491
    %6759 = vmatprep.subr.bf16.mxu0 %v3500
    %6760 = vmatpush1.bf16.msra.mxu0 %v3499
    %6761 = vmatprep.subr.bf16.mxu0 %v3508
    %6762 = vmatpush1.bf16.msra.mxu0 %v3507
    %6763 = vmatprep.subr.bf16.mxu0 %v3516
    %6764 = vmatpush1.bf16.msra.mxu0 %v3515
    %6765 = vmatprep.subr.bf16.mxu0 %v3524
    %6766 = vmatpush1.bf16.msra.mxu0 %v3523
    %6767 = vmatprep.subr.bf16.mxu0 %v3532
    %6768 = vmatpush1.bf16.msra.mxu0 %v3531
    %6769 = vmatprep.subr.bf16.mxu0 %v3540
    %6770 = vmatpush1.bf16.msra.mxu0 %v3539
    %6771 = vmatprep.subr.bf16.mxu0 %v3548
    %6772 = vmatpush1.bf16.msra.mxu0 %v3547
    %6773 = vmatprep.subr.bf16.mxu0 %v3556
    %6774 = vmatpush1.bf16.msra.mxu0 %v3555
    %6775 = vmatprep.subr.bf16.mxu0 %v3564
    %6776 = vmatpush1.bf16.msra.mxu0 %v3563
    %6777 = vmatprep.mubr.bf16.mxu0 %v6496
    %6778 = vmatmul.mubr.bf16.gmra.mrb[0].mxu0 %v6495
    %v6779 = vpop.f32.mrb[0].mxu0
    %v6780 = vadd.f32 0.0, %v6779
    %v6781 = vpop.f32.mrb[0].mxu0
    %v6782 = vadd.f32 0.0, %v6781
    %v6783 = vpop.f32.mrb[0].mxu0
    %v6784 = vpop.f32.mrb[0].mxu0
    %6785 = vdwg.mxu0
    %6786 = vmatprep.subr.bf16.mxu0 %v3572
    %6787 = vmatpush1.bf16.msra.mxu0 %v3571
    %6788 = vmatprep.subr.bf16.mxu0 %v3580
    %6789 = vmatpush1.bf16.msra.mxu0 %v3579
    %6790 = vmatprep.subr.bf16.mxu0 %v3588
    %6791 = vmatpush1.bf16.msra.mxu0 %v3587
    %6792 = vmatprep.subr.bf16.mxu0 %v3596
    %6793 = vmatpush1.bf16.msra.mxu0 %v3595
    %6794 = vmatprep.subr.bf16.mxu0 %v3604
    %6795 = vmatpush1.bf16.msra.mxu0 %v3603
    %6796 = vmatprep.subr.bf16.mxu0 %v3612
    %6797 = vmatpush1.bf16.msra.mxu0 %v3611
    %6798 = vmatprep.subr.bf16.mxu0 %v3620
    %6799 = vmatpush1.bf16.msra.mxu0 %v3619
    %6800 = vmatprep.subr.bf16.mxu0 %v3628
    %6801 = vmatpush1.bf16.msra.mxu0 %v3627
    %6802 = vmatprep.subr.bf16.mxu0 %v3636
    %6803 = vmatpush1.bf16.msra.mxu0 %v3635
    %6804 = vmatprep.subr.bf16.mxu0 %v3644
    %6805 = vmatpush1.bf16.msra.mxu0 %v3643
    %6806 = vmatprep.subr.bf16.mxu0 %v3652
    %6807 = vmatpush1.bf16.msra.mxu0 %v3651
    %6808 = vmatprep.subr.bf16.mxu0 %v3660
    %6809 = vmatpush1.bf16.msra.mxu0 %v3659
    %6810 = vmatprep.subr.bf16.mxu0 %v3668
    %6811 = vmatpush1.bf16.msra.mxu0 %v3667
    %6812 = vmatprep.subr.bf16.mxu0 %v3676
    %6813 = vmatpush1.bf16.msra.mxu0 %v3675
    %6814 = vmatprep.subr.bf16.mxu0 %v3684
    %6815 = vmatpush1.bf16.msra.mxu0 %v3683
    %6816 = vmatprep.subr.bf16.mxu0 %v3692
    %6817 = vmatpush1.bf16.msra.mxu0 %v3691
    %6818 = vmatprep.mubr.bf16.mxu0 %v6498
    %6819 = vmatmul.mubr.bf16.gmra.mrb[0].mxu0 %v6497
    %v6820 = vpop.f32.mrb[0].mxu0
    %v6821 = vadd.f32 %v6780, %v6820
    %v6822 = vpop.f32.mrb[0].mxu0
    %v6823 = vadd.f32 %v6782, %v6822
    %v6824 = vpop.f32.mrb[0].mxu0
    %v6825 = vpop.f32.mrb[0].mxu0
    %6826 = vdwg.mxu0
    %v6835 = vrot.slane %v6575, 4
    %v6836 = vrot.slane %v6577, 4
    %v6837 = vrot.slane %v6657, 4
    %v6838 = vrot.slane %v6659, 4
    %v6839 = vrot.slane %v6739, 4
    %v6840 = vrot.slane %v6741, 4
    %v6841 = vrot.slane %v6821, 4
    %v6842 = vrot.slane %v6823, 4
    %v6851 = vadd.f32 %v6483, %v6835
    %v6852 = vadd.f32 %v6484, %v6836
    %v6853 = vadd.f32 %v6485, %v6837
    %v6854 = vadd.f32 %v6486, %v6838
    %v6855 = vadd.f32 %v6487, %v6839
    %v6856 = vadd.f32 %v6488, %v6840
    %v6857 = vadd.f32 %v6489, %v6841
    %v6858 = vadd.f32 %v6490, %v6842
    %v6859 = vxor.u32 %v6851, 2147483648
    %v6860 = vxor.u32 %v6852, 2147483648
    %v6861 = vmul.f32 %v6859, 1.442695
    %v6862 = vpow.pop %v6861
    %v6863 = vmul.f32 %v6860, 1.442695
    %v6864 = vpow.pop %v6863
    %v6865 = vadd.f32 %v6862, 1.0
    %v6866 = vadd.f32 %v6864, 1.0
    %v6867 = vrcp.pop %v6865
    %v6868 = vmul.f32 1.0, %v6867
    %v6869 = vrcp.pop %v6866
    %v6870 = vmul.f32 1.0, %v6869
    %v6871 = vxor.u32 %v6853, 2147483648
    %v6872 = vxor.u32 %v6854, 2147483648
    %v6873 = vmul.f32 %v6871, 1.442695
    %v6874 = vpow.pop %v6873
    %v6875 = vmul.f32 %v6872, 1.442695
    %v6876 = vpow.pop %v6875
    %v6877 = vadd.f32 %v6874, 1.0
    %v6878 = vadd.f32 %v6876, 1.0
    %v6879 = vrcp.pop %v6877
    %v6880 = vmul.f32 1.0, %v6879
    %v6881 = vrcp.pop %v6878
    %v6882 = vmul.f32 1.0, %v6881
    %v6883 = vtanh.pop %v6855
    %v6884 = vtanh.pop %v6856
    %v6885 = vxor.u32 %v6857, 2147483648
    %v6886 = vxor.u32 %v6858, 2147483648
    %v6887 = vmul.f32 %v6885, 1.442695
    %v6888 = vpow.pop %v6887
    %v6889 = vmul.f32 %v6886, 1.442695
    %v6890 = vpow.pop %v6889
    %v6891 = vadd.f32 %v6888, 1.0
    %v6892 = vadd.f32 %v6890, 1.0
    %v6893 = vrcp.pop %v6891
    %v6894 = vmul.f32 1.0, %v6893
    %v6895 = vrcp.pop %v6892
    %v6896 = vmul.f32 1.0, %v6895
    %v6899 = vrot.slane %v6477, 4
    %v6900 = vrot.slane %v6478, 4
    %v6903 = vmul.f32 %v6880, %v6899
    %v6904 = vmul.f32 %v6882, %v6900
    %v6905 = vmul.f32 %v6868, %v6883
    %v6906 = vmul.f32 %v6870, %v6884
    %v6907 = vadd.f32 %v6903, %v6905
    %v6908 = vadd.f32 %v6904, %v6906
    %v6909 = vtanh.pop %v6907
    %v6910 = vtanh.pop %v6908
    %v6911 = vmul.f32 %v6894, %v6909
    %v6912 = vmul.f32 %v6896, %v6910
    %v6915 = vrot.slane %v6911, 2
    %v6916 = vrot.slane %v6912, 2
    %v6919 = vpack.c.bf16 %v6911, %v6911
    %v6920 = vpack.c.bf16 %v6912, %v6912
    %v6921 = vpack.c.bf16 %v6915, %v6915
    %v6922 = vpack.c.bf16 %v6916, %v6916
    %v6923 = vld [vmem:[#allocation11] sm:$0xff]
    %v6924 = vld [vmem:[#allocation11 + $0x8] sm:$0xff]
    %v6925 = vld [vmem:[#allocation11 + $0x10] sm:$0xff]
    %v6926 = vld [vmem:[#allocation11 + $0x18] sm:$0xff]
    %v6927 = vld [vmem:[#allocation11 + $0x20] sm:$0xff]
    %v6928 = vld [vmem:[#allocation11 + $0x28] sm:$0xff]
    %v6929 = vld [vmem:[#allocation11 + $0x30] sm:$0xff]
    %v6930 = vld [vmem:[#allocation11 + $0x38] sm:$0xff]
    %v6931 = vld [vmem:[#allocation11 + $0x40] sm:$0xff]
    %v6932 = vld [vmem:[#allocation11 + $0x48] sm:$0xff]
    %v6933 = vld [vmem:[#allocation11 + $0x50] sm:$0xff]
    %v6934 = vld [vmem:[#allocation11 + $0x58] sm:$0xff]
    %v6935 = vld [vmem:[#allocation11 + $0x60] sm:$0xff]
    %v6936 = vld [vmem:[#allocation11 + $0x68] sm:$0xff]
    %v6937 = vld [vmem:[#allocation11 + $0x70] sm:$0xff]
    %v6938 = vld [vmem:[#allocation11 + $0x78] sm:$0xff]
    %v6939 = vld [vmem:[#allocation11 + $0x80] sm:$0xff]
    %v6940 = vld [vmem:[#allocation11 + $0x88] sm:$0xff]
    %v6941 = vld [vmem:[#allocation11 + $0x90] sm:$0xff]
    %v6942 = vld [vmem:[#allocation11 + $0x98] sm:$0xff]
    %v6943 = vld [vmem:[#allocation11 + $0xa0] sm:$0xff]
    %v6944 = vld [vmem:[#allocation11 + $0xa8] sm:$0xff]
    %v6945 = vld [vmem:[#allocation11 + $0xb0] sm:$0xff]
    %v6946 = vld [vmem:[#allocation11 + $0xb8] sm:$0xff]
    %v6947 = vld [vmem:[#allocation11 + $0xc0] sm:$0xff]
    %v6948 = vld [vmem:[#allocation11 + $0xc8] sm:$0xff]
    %v6949 = vld [vmem:[#allocation11 + $0xd0] sm:$0xff]
    %v6950 = vld [vmem:[#allocation11 + $0xd8] sm:$0xff]
    %v6951 = vld [vmem:[#allocation11 + $0xe0] sm:$0xff]
    %v6952 = vld [vmem:[#allocation11 + $0xe8] sm:$0xff]
    %v6953 = vld [vmem:[#allocation11 + $0xf0] sm:$0xff]
    %v6954 = vld [vmem:[#allocation11 + $0xf8] sm:$0xff]
    %v6955 = vld [vmem:[#allocation11 + $0x100] sm:$0xff]
    %v6956 = vld [vmem:[#allocation11 + $0x108] sm:$0xff]
    %v6957 = vld [vmem:[#allocation11 + $0x110] sm:$0xff]
    %v6958 = vld [vmem:[#allocation11 + $0x118] sm:$0xff]
    %v6959 = vld [vmem:[#allocation11 + $0x120] sm:$0xff]
    %v6960 = vld [vmem:[#allocation11 + $0x128] sm:$0xff]
    %v6961 = vld [vmem:[#allocation11 + $0x130] sm:$0xff]
    %v6962 = vld [vmem:[#allocation11 + $0x138] sm:$0xff]
    %v6963 = vld [vmem:[#allocation11 + $0x140] sm:$0xff]
    %v6964 = vld [vmem:[#allocation11 + $0x148] sm:$0xff]
    %v6965 = vld [vmem:[#allocation11 + $0x150] sm:$0xff]
    %v6966 = vld [vmem:[#allocation11 + $0x158] sm:$0xff]
    %v6967 = vld [vmem:[#allocation11 + $0x160] sm:$0xff]
    %v6968 = vld [vmem:[#allocation11 + $0x168] sm:$0xff]
    %v6969 = vld [vmem:[#allocation11 + $0x170] sm:$0xff]
    %v6970 = vld [vmem:[#allocation11 + $0x178] sm:$0xff]
    %v6971 = vld [vmem:[#allocation11 + $0x180] sm:$0xff]
    %v6972 = vld [vmem:[#allocation11 + $0x188] sm:$0xff]
    %v6973 = vld [vmem:[#allocation11 + $0x190] sm:$0xff]
    %v6974 = vld [vmem:[#allocation11 + $0x198] sm:$0xff]
    %v6975 = vld [vmem:[#allocation11 + $0x1a0] sm:$0xff]
    %v6976 = vld [vmem:[#allocation11 + $0x1a8] sm:$0xff]
    %v6977 = vld [vmem:[#allocation11 + $0x1b0] sm:$0xff]
    %v6978 = vld [vmem:[#allocation11 + $0x1b8] sm:$0xff]
    %v6979 = vld [vmem:[#allocation11 + $0x1c0] sm:$0xff]
    %v6980 = vld [vmem:[#allocation11 + $0x1c8] sm:$0xff]
    %v6981 = vld [vmem:[#allocation11 + $0x1d0] sm:$0xff]
    %v6982 = vld [vmem:[#allocation11 + $0x1d8] sm:$0xff]
    %v6983 = vld [vmem:[#allocation11 + $0x1e0] sm:$0xff]
    %v6984 = vld [vmem:[#allocation11 + $0x1e8] sm:$0xff]
    %v6985 = vld [vmem:[#allocation11 + $0x1f0] sm:$0xff]
    %v6986 = vld [vmem:[#allocation11 + $0x1f8] sm:$0xff]
    %v6987 = vld [vmem:[%s8] sm:$0x3]
    %v6989 = vlaneseq
    %v6990 = vshrl.u32 %v6989, 7
    %v6991 = vsub.s32 0, %v6990
    %v6992 = vrot.slane %v6987, %v6991
    %v6993 = vlaneseq
    %v6994 = vshrl.u32 %v6993, 7
    %v6995 = vsub.s32 1, %v6994
    %v6996 = vrot.slane %v6987, %v6995
    %v7003 = vrot.slane %v6919, 2
    %v7004 = vrot.slane %v6920, 2
    %v7005 = vrot.slane %v6921, 2
    %v7006 = vrot.slane %v6922, 2
    %v7075 = vunpack.c.l.b16 %v6923
    %v7076 = vunpack.c.h.b16 %v6923
    %v7077 = vunpack.c.l.b16 %v6924
    %v7078 = vunpack.c.h.b16 %v6924
    %v7079 = vunpack.c.l.b16 %v6925
    %v7080 = vunpack.c.h.b16 %v6925
    %v7081 = vunpack.c.l.b16 %v6926
    %v7082 = vunpack.c.h.b16 %v6926
    %v7083 = vunpack.c.l.b16 %v6927
    %v7084 = vunpack.c.h.b16 %v6927
    %v7085 = vunpack.c.l.b16 %v6928
    %v7086 = vunpack.c.h.b16 %v6928
    %v7087 = vunpack.c.l.b16 %v6929
    %v7088 = vunpack.c.h.b16 %v6929
    %v7089 = vunpack.c.l.b16 %v6930
    %v7090 = vunpack.c.h.b16 %v6930
    %v7091 = vunpack.c.l.b16 %v6931
    %v7092 = vunpack.c.h.b16 %v6931
    %v7093 = vunpack.c.l.b16 %v6932
    %v7094 = vunpack.c.h.b16 %v6932
    %v7095 = vunpack.c.l.b16 %v6933
    %v7096 = vunpack.c.h.b16 %v6933
    %v7097 = vunpack.c.l.b16 %v6934
    %v7098 = vunpack.c.h.b16 %v6934
    %v7099 = vunpack.c.l.b16 %v6935
    %v7100 = vunpack.c.h.b16 %v6935
    %v7101 = vunpack.c.l.b16 %v6936
    %v7102 = vunpack.c.h.b16 %v6936
    %v7103 = vunpack.c.l.b16 %v6937
    %v7104 = vunpack.c.h.b16 %v6937
    %v7105 = vunpack.c.l.b16 %v6938
    %v7106 = vunpack.c.h.b16 %v6938
    %v7107 = vunpack.c.l.b16 %v6939
    %v7108 = vunpack.c.h.b16 %v6939
    %v7109 = vunpack.c.l.b16 %v6940
    %v7110 = vunpack.c.h.b16 %v6940
    %v7111 = vunpack.c.l.b16 %v6941
    %v7112 = vunpack.c.h.b16 %v6941
    %v7113 = vunpack.c.l.b16 %v6942
    %v7114 = vunpack.c.h.b16 %v6942
    %v7115 = vunpack.c.l.b16 %v6943
    %v7116 = vunpack.c.h.b16 %v6943
    %v7117 = vunpack.c.l.b16 %v6944
    %v7118 = vunpack.c.h.b16 %v6944
    %v7119 = vunpack.c.l.b16 %v6945
    %v7120 = vunpack.c.h.b16 %v6945
    %v7121 = vunpack.c.l.b16 %v6946
    %v7122 = vunpack.c.h.b16 %v6946
    %v7123 = vunpack.c.l.b16 %v6947
    %v7124 = vunpack.c.h.b16 %v6947
    %v7125 = vunpack.c.l.b16 %v6948
    %v7126 = vunpack.c.h.b16 %v6948
    %v7127 = vunpack.c.l.b16 %v6949
    %v7128 = vunpack.c.h.b16 %v6949
    %v7129 = vunpack.c.l.b16 %v6950
    %v7130 = vunpack.c.h.b16 %v6950
    %v7131 = vunpack.c.l.b16 %v6951
    %v7132 = vunpack.c.h.b16 %v6951
    %v7133 = vunpack.c.l.b16 %v6952
    %v7134 = vunpack.c.h.b16 %v6952
    %v7135 = vunpack.c.l.b16 %v6953
    %v7136 = vunpack.c.h.b16 %v6953
    %v7137 = vunpack.c.l.b16 %v6954
    %v7138 = vunpack.c.h.b16 %v6954
    %v7139 = vunpack.c.l.b16 %v6955
    %v7140 = vunpack.c.h.b16 %v6955
    %v7141 = vunpack.c.l.b16 %v6956
    %v7142 = vunpack.c.h.b16 %v6956
    %v7143 = vunpack.c.l.b16 %v6957
    %v7144 = vunpack.c.h.b16 %v6957
    %v7145 = vunpack.c.l.b16 %v6958
    %v7146 = vunpack.c.h.b16 %v6958
    %v7147 = vunpack.c.l.b16 %v6959
    %v7148 = vunpack.c.h.b16 %v6959
    %v7149 = vunpack.c.l.b16 %v6960
    %v7150 = vunpack.c.h.b16 %v6960
    %v7151 = vunpack.c.l.b16 %v6961
    %v7152 = vunpack.c.h.b16 %v6961
    %v7153 = vunpack.c.l.b16 %v6962
    %v7154 = vunpack.c.h.b16 %v6962
    %v7155 = vunpack.c.l.b16 %v6963
    %v7156 = vunpack.c.h.b16 %v6963
    %v7157 = vunpack.c.l.b16 %v6964
    %v7158 = vunpack.c.h.b16 %v6964
    %v7159 = vunpack.c.l.b16 %v6965
    %v7160 = vunpack.c.h.b16 %v6965
    %v7161 = vunpack.c.l.b16 %v6966
    %v7162 = vunpack.c.h.b16 %v6966
    %v7163 = vunpack.c.l.b16 %v6967
    %v7164 = vunpack.c.h.b16 %v6967
    %v7165 = vunpack.c.l.b16 %v6968
    %v7166 = vunpack.c.h.b16 %v6968
    %v7167 = vunpack.c.l.b16 %v6969
    %v7168 = vunpack.c.h.b16 %v6969
    %v7169 = vunpack.c.l.b16 %v6970
    %v7170 = vunpack.c.h.b16 %v6970
    %v7171 = vunpack.c.l.b16 %v6971
    %v7172 = vunpack.c.h.b16 %v6971
    %v7173 = vunpack.c.l.b16 %v6972
    %v7174 = vunpack.c.h.b16 %v6972
    %v7175 = vunpack.c.l.b16 %v6973
    %v7176 = vunpack.c.h.b16 %v6973
    %v7177 = vunpack.c.l.b16 %v6974
    %v7178 = vunpack.c.h.b16 %v6974
    %v7179 = vunpack.c.l.b16 %v6975
    %v7180 = vunpack.c.h.b16 %v6975
    %v7181 = vunpack.c.l.b16 %v6976
    %v7182 = vunpack.c.h.b16 %v6976
    %v7183 = vunpack.c.l.b16 %v6977
    %v7184 = vunpack.c.h.b16 %v6977
    %v7185 = vunpack.c.l.b16 %v6978
    %v7186 = vunpack.c.h.b16 %v6978
    %v7187 = vunpack.c.l.b16 %v6979
    %v7188 = vunpack.c.h.b16 %v6979
    %v7189 = vunpack.c.l.b16 %v6980
    %v7190 = vunpack.c.h.b16 %v6980
    %v7191 = vunpack.c.l.b16 %v6981
    %v7192 = vunpack.c.h.b16 %v6981
    %v7193 = vunpack.c.l.b16 %v6982
    %v7194 = vunpack.c.h.b16 %v6982
    %v7195 = vunpack.c.l.b16 %v6983
    %v7196 = vunpack.c.h.b16 %v6983
    %v7197 = vunpack.c.l.b16 %v6984
    %v7198 = vunpack.c.h.b16 %v6984
    %v7199 = vunpack.c.l.b16 %v6985
    %v7200 = vunpack.c.h.b16 %v6985
    %v7201 = vunpack.c.l.b16 %v6986
    %v7202 = vunpack.c.h.b16 %v6986
    %v7203 = vpack.c.b16 %v7077, %v7075
    %v7204 = vpack.c.b16 %v7078, %v7076
    %v7205 = vpack.c.b16 %v7081, %v7079
    %v7206 = vpack.c.b16 %v7082, %v7080
    %v7207 = vpack.c.b16 %v7085, %v7083
    %v7208 = vpack.c.b16 %v7086, %v7084
    %v7209 = vpack.c.b16 %v7089, %v7087
    %v7210 = vpack.c.b16 %v7090, %v7088
    %v7211 = vpack.c.b16 %v7093, %v7091
    %v7212 = vpack.c.b16 %v7094, %v7092
    %v7213 = vpack.c.b16 %v7097, %v7095
    %v7214 = vpack.c.b16 %v7098, %v7096
    %v7215 = vpack.c.b16 %v7101, %v7099
    %v7216 = vpack.c.b16 %v7102, %v7100
    %v7217 = vpack.c.b16 %v7105, %v7103
    %v7218 = vpack.c.b16 %v7106, %v7104
    %v7219 = vpack.c.b16 %v7109, %v7107
    %v7220 = vpack.c.b16 %v7110, %v7108
    %v7221 = vpack.c.b16 %v7113, %v7111
    %v7222 = vpack.c.b16 %v7114, %v7112
    %v7223 = vpack.c.b16 %v7117, %v7115
    %v7224 = vpack.c.b16 %v7118, %v7116
    %v7225 = vpack.c.b16 %v7121, %v7119
    %v7226 = vpack.c.b16 %v7122, %v7120
    %v7227 = vpack.c.b16 %v7125, %v7123
    %v7228 = vpack.c.b16 %v7126, %v7124
    %v7229 = vpack.c.b16 %v7129, %v7127
    %v7230 = vpack.c.b16 %v7130, %v7128
    %v7231 = vpack.c.b16 %v7133, %v7131
    %v7232 = vpack.c.b16 %v7134, %v7132
    %v7233 = vpack.c.b16 %v7137, %v7135
    %v7234 = vpack.c.b16 %v7138, %v7136
    %v7235 = vpack.c.b16 %v7141, %v7139
    %v7236 = vpack.c.b16 %v7142, %v7140
    %v7237 = vpack.c.b16 %v7145, %v7143
    %v7238 = vpack.c.b16 %v7146, %v7144
    %v7239 = vpack.c.b16 %v7149, %v7147
    %v7240 = vpack.c.b16 %v7150, %v7148
    %v7241 = vpack.c.b16 %v7153, %v7151
    %v7242 = vpack.c.b16 %v7154, %v7152
    %v7243 = vpack.c.b16 %v7157, %v7155
    %v7244 = vpack.c.b16 %v7158, %v7156
    %v7245 = vpack.c.b16 %v7161, %v7159
    %v7246 = vpack.c.b16 %v7162, %v7160
    %v7247 = vpack.c.b16 %v7165, %v7163
    %v7248 = vpack.c.b16 %v7166, %v7164
    %v7249 = vpack.c.b16 %v7169, %v7167
    %v7250 = vpack.c.b16 %v7170, %v7168
    %v7251 = vpack.c.b16 %v7173, %v7171
    %v7252 = vpack.c.b16 %v7174, %v7172
    %v7253 = vpack.c.b16 %v7177, %v7175
    %v7254 = vpack.c.b16 %v7178, %v7176
    %v7255 = vpack.c.b16 %v7181, %v7179
    %v7256 = vpack.c.b16 %v7182, %v7180
    %v7257 = vpack.c.b16 %v7185, %v7183
    %v7258 = vpack.c.b16 %v7186, %v7184
    %v7259 = vpack.c.b16 %v7189, %v7187
    %v7260 = vpack.c.b16 %v7190, %v7188
    %v7261 = vpack.c.b16 %v7193, %v7191
    %v7262 = vpack.c.b16 %v7194, %v7192
    %v7263 = vpack.c.b16 %v7197, %v7195
    %v7264 = vpack.c.b16 %v7198, %v7196
    %v7265 = vpack.c.b16 %v7201, %v7199
    %v7266 = vpack.c.b16 %v7202, %v7200
    %7331 = vmatprep.subr.bf16.mxu0 %v7204
    %7332 = vmatpush1.bf16.msra.mxu0 %v7203
    %7333 = vmatprep.subr.bf16.mxu0 %v7206
    %7334 = vmatpush1.bf16.msra.mxu0 %v7205
    %7335 = vmatprep.subr.bf16.mxu0 %v7208
    %7336 = vmatpush1.bf16.msra.mxu0 %v7207
    %7337 = vmatprep.subr.bf16.mxu0 %v7210
    %7338 = vmatpush1.bf16.msra.mxu0 %v7209
    %7339 = vmatprep.subr.bf16.mxu0 %v7212
    %7340 = vmatpush1.bf16.msra.mxu0 %v7211
    %7341 = vmatprep.subr.bf16.mxu0 %v7214
    %7342 = vmatpush1.bf16.msra.mxu0 %v7213
    %7343 = vmatprep.subr.bf16.mxu0 %v7216
    %7344 = vmatpush1.bf16.msra.mxu0 %v7215
    %7345 = vmatprep.subr.bf16.mxu0 %v7218
    %7346 = vmatpush1.bf16.msra.mxu0 %v7217
    %7347 = vmatprep.subr.bf16.mxu0 %v7220
    %7348 = vmatpush1.bf16.msra.mxu0 %v7219
    %7349 = vmatprep.subr.bf16.mxu0 %v7222
    %7350 = vmatpush1.bf16.msra.mxu0 %v7221
    %7351 = vmatprep.subr.bf16.mxu0 %v7224
    %7352 = vmatpush1.bf16.msra.mxu0 %v7223
    %7353 = vmatprep.subr.bf16.mxu0 %v7226
    %7354 = vmatpush1.bf16.msra.mxu0 %v7225
    %7355 = vmatprep.subr.bf16.mxu0 %v7228
    %7356 = vmatpush1.bf16.msra.mxu0 %v7227
    %7357 = vmatprep.subr.bf16.mxu0 %v7230
    %7358 = vmatpush1.bf16.msra.mxu0 %v7229
    %7359 = vmatprep.subr.bf16.mxu0 %v7232
    %7360 = vmatpush1.bf16.msra.mxu0 %v7231
    %7361 = vmatprep.subr.bf16.mxu0 %v7234
    %7362 = vmatpush1.bf16.msra.mxu0 %v7233
    %7363 = vmatprep.mubr.bf16.mxu0 %v7004
    %7364 = vmatmul.mubr.bf16.gmra.mrb[0].mxu0 %v7003
    %v7365 = vpop.f32.mrb[0].mxu0
    %v7366 = vadd.f32 %v6992, %v7365
    %v7367 = vpop.f32.mrb[0].mxu0
    %v7368 = vadd.f32 %v6996, %v7367
    %v7369 = vpop.f32.mrb[0].mxu0
    %v7370 = vpop.f32.mrb[0].mxu0
    %7371 = vdwg.mxu0
    %7372 = vmatprep.subr.bf16.mxu0 %v7236
    %7373 = vmatpush1.bf16.msra.mxu0 %v7235
    %7374 = vmatprep.subr.bf16.mxu0 %v7238
    %7375 = vmatpush1.bf16.msra.mxu0 %v7237
    %7376 = vmatprep.subr.bf16.mxu0 %v7240
    %7377 = vmatpush1.bf16.msra.mxu0 %v7239
    %7378 = vmatprep.subr.bf16.mxu0 %v7242
    %7379 = vmatpush1.bf16.msra.mxu0 %v7241
    %7380 = vmatprep.subr.bf16.mxu0 %v7244
    %7381 = vmatpush1.bf16.msra.mxu0 %v7243
    %7382 = vmatprep.subr.bf16.mxu0 %v7246
    %7383 = vmatpush1.bf16.msra.mxu0 %v7245
    %7384 = vmatprep.subr.bf16.mxu0 %v7248
    %7385 = vmatpush1.bf16.msra.mxu0 %v7247
    %7386 = vmatprep.subr.bf16.mxu0 %v7250
    %7387 = vmatpush1.bf16.msra.mxu0 %v7249
    %7388 = vmatprep.subr.bf16.mxu0 %v7252
    %7389 = vmatpush1.bf16.msra.mxu0 %v7251
    %7390 = vmatprep.subr.bf16.mxu0 %v7254
    %7391 = vmatpush1.bf16.msra.mxu0 %v7253
    %7392 = vmatprep.subr.bf16.mxu0 %v7256
    %7393 = vmatpush1.bf16.msra.mxu0 %v7255
    %7394 = vmatprep.subr.bf16.mxu0 %v7258
    %7395 = vmatpush1.bf16.msra.mxu0 %v7257
    %7396 = vmatprep.subr.bf16.mxu0 %v7260
    %7397 = vmatpush1.bf16.msra.mxu0 %v7259
    %7398 = vmatprep.subr.bf16.mxu0 %v7262
    %7399 = vmatpush1.bf16.msra.mxu0 %v7261
    %7400 = vmatprep.subr.bf16.mxu0 %v7264
    %7401 = vmatpush1.bf16.msra.mxu0 %v7263
    %7402 = vmatprep.subr.bf16.mxu0 %v7266
    %7403 = vmatpush1.bf16.msra.mxu0 %v7265
    %7404 = vmatprep.mubr.bf16.mxu0 %v7006
    %7405 = vmatmul.mubr.bf16.gmra.mrb[0].mxu0 %v7005
    %v7406 = vpop.f32.mrb[0].mxu0
    %v7407 = vadd.f32 %v7366, %v7406
    %v7408 = vpop.f32.mrb[0].mxu0
    %v7409 = vadd.f32 %v7368, %v7408
    %v7410 = vpop.f32.mrb[0].mxu0
    %v7411 = vpop.f32.mrb[0].mxu0
    %7412 = vdwg.mxu0
    %v7413 = vmax.f32 %v7407, 0.0
    %v7414 = vmax.f32 %v7409, 0.0
    %v7415 = vpack.c.bf16 %v7413, %v7413
    %v7416 = vpack.c.bf16 %v7414, %v7414
    %v7417 = vld [vmem:[#allocation12] sm:$0xf]
    %v7418 = vld [vmem:[#allocation12 + $0x4] sm:$0xf]
    %v7419 = vld [vmem:[#allocation12 + $0x8] sm:$0xf]
    %v7420 = vld [vmem:[#allocation12 + $0xc] sm:$0xf]
    %v7421 = vld [vmem:[#allocation12 + $0x10] sm:$0xf]
    %v7422 = vld [vmem:[#allocation12 + $0x14] sm:$0xf]
    %v7423 = vld [vmem:[#allocation12 + $0x18] sm:$0xf]
    %v7424 = vld [vmem:[#allocation12 + $0x1c] sm:$0xf]
    %v7425 = vld [vmem:[#allocation12 + $0x20] sm:$0xf]
    %v7426 = vld [vmem:[#allocation12 + $0x24] sm:$0xf]
    %v7427 = vld [vmem:[#allocation12 + $0x28] sm:$0xf]
    %v7428 = vld [vmem:[#allocation12 + $0x2c] sm:$0xf]
    %v7429 = vld [vmem:[#allocation12 + $0x30] sm:$0xf]
    %v7430 = vld [vmem:[#allocation12 + $0x34] sm:$0xf]
    %v7431 = vld [vmem:[#allocation12 + $0x38] sm:$0xf]
    %v7432 = vld [vmem:[#allocation12 + $0x3c] sm:$0xf]
    %v7433 = vld [vmem:[#allocation12 + $0x40] sm:$0xf]
    %v7434 = vld [vmem:[#allocation12 + $0x44] sm:$0xf]
    %v7435 = vld [vmem:[#allocation12 + $0x48] sm:$0xf]
    %v7436 = vld [vmem:[#allocation12 + $0x4c] sm:$0xf]
    %v7437 = vld [vmem:[#allocation12 + $0x50] sm:$0xf]
    %v7438 = vld [vmem:[#allocation12 + $0x54] sm:$0xf]
    %v7439 = vld [vmem:[#allocation12 + $0x58] sm:$0xf]
    %v7440 = vld [vmem:[#allocation12 + $0x5c] sm:$0xf]
    %v7441 = vld [vmem:[#allocation12 + $0x60] sm:$0xf]
    %v7442 = vld [vmem:[#allocation12 + $0x64] sm:$0xf]
    %v7443 = vld [vmem:[#allocation12 + $0x68] sm:$0xf]
    %v7444 = vld [vmem:[#allocation12 + $0x6c] sm:$0xf]
    %v7445 = vld [vmem:[#allocation12 + $0x70] sm:$0xf]
    %v7446 = vld [vmem:[#allocation12 + $0x74] sm:$0xf]
    %v7447 = vld [vmem:[#allocation12 + $0x78] sm:$0xf]
    %v7448 = vld [vmem:[#allocation12 + $0x7c] sm:$0xf]
    %v7449 = vld [vmem:[%s10] sm:$0x1]
    %v7451 = vlaneseq
    %v7452 = vshrl.u32 %v7451, 7
    %v7453 = vsub.s32 0, %v7452
    %v7454 = vrot.slane %v7449, %v7453
    %v7488 = vunpack.c.l.b16 %v7417
    %v7489 = vunpack.c.l.b16 %v7418
    %v7490 = vunpack.c.l.b16 %v7419
    %v7491 = vunpack.c.l.b16 %v7420
    %v7492 = vunpack.c.l.b16 %v7421
    %v7493 = vunpack.c.l.b16 %v7422
    %v7494 = vunpack.c.l.b16 %v7423
    %v7495 = vunpack.c.l.b16 %v7424
    %v7496 = vunpack.c.l.b16 %v7425
    %v7497 = vunpack.c.l.b16 %v7426
    %v7498 = vunpack.c.l.b16 %v7427
    %v7499 = vunpack.c.l.b16 %v7428
    %v7500 = vunpack.c.l.b16 %v7429
    %v7501 = vunpack.c.l.b16 %v7430
    %v7502 = vunpack.c.l.b16 %v7431
    %v7503 = vunpack.c.l.b16 %v7432
    %v7504 = vunpack.c.l.b16 %v7433
    %v7505 = vunpack.c.l.b16 %v7434
    %v7506 = vunpack.c.l.b16 %v7435
    %v7507 = vunpack.c.l.b16 %v7436
    %v7508 = vunpack.c.l.b16 %v7437
    %v7509 = vunpack.c.l.b16 %v7438
    %v7510 = vunpack.c.l.b16 %v7439
    %v7511 = vunpack.c.l.b16 %v7440
    %v7512 = vunpack.c.l.b16 %v7441
    %v7513 = vunpack.c.l.b16 %v7442
    %v7514 = vunpack.c.l.b16 %v7443
    %v7515 = vunpack.c.l.b16 %v7444
    %v7516 = vunpack.c.l.b16 %v7445
    %v7517 = vunpack.c.l.b16 %v7446
    %v7518 = vunpack.c.l.b16 %v7447
    %v7519 = vunpack.c.l.b16 %v7448
    %v7520 = vpack.c.b16 %v7489, %v7488
    %v7521 = vpack.c.b16 %v7491, %v7490
    %v7522 = vpack.c.b16 %v7493, %v7492
    %v7523 = vpack.c.b16 %v7495, %v7494
    %v7524 = vpack.c.b16 %v7497, %v7496
    %v7525 = vpack.c.b16 %v7499, %v7498
    %v7526 = vpack.c.b16 %v7501, %v7500
    %v7527 = vpack.c.b16 %v7503, %v7502
    %v7528 = vpack.c.b16 %v7505, %v7504
    %v7529 = vpack.c.b16 %v7507, %v7506
    %v7530 = vpack.c.b16 %v7509, %v7508
    %v7531 = vpack.c.b16 %v7511, %v7510
    %v7532 = vpack.c.b16 %v7513, %v7512
    %v7533 = vpack.c.b16 %v7515, %v7514
    %v7534 = vpack.c.b16 %v7517, %v7516
    %v7535 = vpack.c.b16 %v7519, %v7518
    %7552 = vmatprep.subr.bf16.mxu0 0
    %7553 = vmatpush1.bf16.msra.mxu0 %v7520
    %7554 = vmatprep.subr.bf16.mxu0 0
    %7555 = vmatpush1.bf16.msra.mxu0 %v7521
    %7556 = vmatprep.subr.bf16.mxu0 0
    %7557 = vmatpush1.bf16.msra.mxu0 %v7522
    %7558 = vmatprep.subr.bf16.mxu0 0
    %7559 = vmatpush1.bf16.msra.mxu0 %v7523
    %7560 = vmatprep.subr.bf16.mxu0 0
    %7561 = vmatpush1.bf16.msra.mxu0 %v7524
    %7562 = vmatprep.subr.bf16.mxu0 0
    %7563 = vmatpush1.bf16.msra.mxu0 %v7525
    %7564 = vmatprep.subr.bf16.mxu0 0
    %7565 = vmatpush1.bf16.msra.mxu0 %v7526
    %7566 = vmatprep.subr.bf16.mxu0 0
    %7567 = vmatpush1.bf16.msra.mxu0 %v7527
    %7568 = vmatprep.subr.bf16.mxu0 0
    %7569 = vmatpush1.bf16.msra.mxu0 %v7528
    %7570 = vmatprep.subr.bf16.mxu0 0
    %7571 = vmatpush1.bf16.msra.mxu0 %v7529
    %7572 = vmatprep.subr.bf16.mxu0 0
    %7573 = vmatpush1.bf16.msra.mxu0 %v7530
    %7574 = vmatprep.subr.bf16.mxu0 0
    %7575 = vmatpush1.bf16.msra.mxu0 %v7531
    %7576 = vmatprep.subr.bf16.mxu0 0
    %7577 = vmatpush1.bf16.msra.mxu0 %v7532
    %7578 = vmatprep.subr.bf16.mxu0 0
    %7579 = vmatpush1.bf16.msra.mxu0 %v7533
    %7580 = vmatprep.subr.bf16.mxu0 0
    %7581 = vmatpush1.bf16.msra.mxu0 %v7534
    %7582 = vmatprep.subr.bf16.mxu0 0
    %7583 = vmatpush1.bf16.msra.mxu0 %v7535
    %7584 = vmatprep.mubr.bf16.mxu0 %v7416
    %7585 = vmatmul.mubr.bf16.gmra.mrb[0].mxu0 %v7415
    %v7586 = vpop.f32.mrb[0].mxu0
    %v7587 = vadd.f32 %v7454, %v7586
    %v7588 = vpop.f32.mrb[0].mxu0
    %v7589 = vpop.f32.mrb[0].mxu0
    %v7590 = vpop.f32.mrb[0].mxu0
    %7591 = vdwg.mxu0
    %v7592 = vmax.f32 %v7587, 0.0
    %v7593 = vpack.c.bf16 %v7592, %v7592
    %v7594 = vld [vmem:[#allocation14] sm:$0xf]
    %v7595 = vld [vmem:[#allocation14 + $0x4] sm:$0xf]
    %v7596 = vld [vmem:[#allocation14 + $0x8] sm:$0xf]
    %v7597 = vld [vmem:[#allocation14 + $0xc] sm:$0xf]
    %v7598 = vld [vmem:[#allocation14 + $0x10] sm:$0xf]
    %v7599 = vld [vmem:[#allocation14 + $0x14] sm:$0xf]
    %v7600 = vld [vmem:[#allocation14 + $0x18] sm:$0xf]
    %v7601 = vld [vmem:[#allocation14 + $0x1c] sm:$0xf]
    %v7602 = vld [vmem:[#allocation14 + $0x20] sm:$0xf]
    %v7603 = vld [vmem:[#allocation14 + $0x24] sm:$0xf]
    %v7604 = vld [vmem:[#allocation14 + $0x28] sm:$0xf]
    %v7605 = vld [vmem:[#allocation14 + $0x2c] sm:$0xf]
    %v7606 = vld [vmem:[#allocation14 + $0x30] sm:$0xf]
    %v7607 = vld [vmem:[#allocation14 + $0x34] sm:$0xf]
    %v7608 = vld [vmem:[#allocation14 + $0x38] sm:$0xf]
    %v7609 = vld [vmem:[#allocation14 + $0x3c] sm:$0xf]
    %v7610 = vld [vmem:[%s12] sm:$0x1]
    %v7612 = vlaneseq
    %v7613 = vshrl.u32 %v7612, 7
    %v7614 = vsub.s32 0, %v7613
    %v7615 = vrot.slane %v7610, %v7614
    %v7633 = vunpack.c.l.b16 %v7594
    %v7634 = vunpack.c.l.b16 %v7595
    %v7635 = vunpack.c.l.b16 %v7596
    %v7636 = vunpack.c.l.b16 %v7597
    %v7637 = vunpack.c.l.b16 %v7598
    %v7638 = vunpack.c.l.b16 %v7599
    %v7639 = vunpack.c.l.b16 %v7600
    %v7640 = vunpack.c.l.b16 %v7601
    %v7641 = vunpack.c.l.b16 %v7602
    %v7642 = vunpack.c.l.b16 %v7603
    %v7643 = vunpack.c.l.b16 %v7604
    %v7644 = vunpack.c.l.b16 %v7605
    %v7645 = vunpack.c.l.b16 %v7606
    %v7646 = vunpack.c.l.b16 %v7607
    %v7647 = vunpack.c.l.b16 %v7608
    %v7648 = vunpack.c.l.b16 %v7609
    %v7649 = vpack.c.b16 %v7634, %v7633
    %v7650 = vpack.c.b16 %v7636, %v7635
    %v7651 = vpack.c.b16 %v7638, %v7637
    %v7652 = vpack.c.b16 %v7640, %v7639
    %v7653 = vpack.c.b16 %v7642, %v7641
    %v7654 = vpack.c.b16 %v7644, %v7643
    %v7655 = vpack.c.b16 %v7646, %v7645
    %v7656 = vpack.c.b16 %v7648, %v7647
    %7665 = vmatprep.subr.bf16.mxu0 0
    %7666 = vmatpush1.bf16.msra.mxu0 %v7649
    %7667 = vmatprep.subr.bf16.mxu0 0
    %7668 = vmatpush1.bf16.msra.mxu0 %v7650
    %7669 = vmatprep.subr.bf16.mxu0 0
    %7670 = vmatpush1.bf16.msra.mxu0 %v7651
    %7671 = vmatprep.subr.bf16.mxu0 0
    %7672 = vmatpush1.bf16.msra.mxu0 %v7652
    %7673 = vmatprep.subr.bf16.mxu0 0
    %7674 = vmatpush1.bf16.msra.mxu0 %v7653
    %7675 = vmatprep.subr.bf16.mxu0 0
    %7676 = vmatpush1.bf16.msra.mxu0 %v7654
    %7677 = vmatprep.subr.bf16.mxu0 0
    %7678 = vmatpush1.bf16.msra.mxu0 %v7655
    %7679 = vmatprep.subr.bf16.mxu0 0
    %7680 = vmatpush1.bf16.msra.mxu0 %v7656
    %7681 = vmatprep.subr.bf16.mxu0 0
    %7682 = vmatpush1.bf16.msra.mxu0 0
    %7683 = vmatprep.subr.bf16.mxu0 0
    %7684 = vmatpush1.bf16.msra.mxu0 0
    %7685 = vmatprep.subr.bf16.mxu0 0
    %7686 = vmatpush1.bf16.msra.mxu0 0
    %7687 = vmatprep.subr.bf16.mxu0 0
    %7688 = vmatpush1.bf16.msra.mxu0 0
    %7689 = vmatprep.subr.bf16.mxu0 0
    %7690 = vmatpush1.bf16.msra.mxu0 0
    %7691 = vmatprep.subr.bf16.mxu0 0
    %7692 = vmatpush1.bf16.msra.mxu0 0
    %7693 = vmatprep.subr.bf16.mxu0 0
    %7694 = vmatpush1.bf16.msra.mxu0 0
    %7695 = vmatprep.subr.bf16.mxu0 0
    %7696 = vmatpush1.bf16.msra.mxu0 0
    %7697 = vmatprep.mubr.bf16.mxu0 0
    %7698 = vmatmul.mubr.bf16.gmra.mrb[0].mxu0 %v7593
    %v7699 = vpop.f32.mrb[0].mxu0
    %v7700 = vadd.f32 %v7615, %v7699
    %v7701 = vpop.f32.mrb[0].mxu0
    %v7702 = vpop.f32.mrb[0].mxu0
    %v7703 = vpop.f32.mrb[0].mxu0
    %7704 = vdwg.mxu0
    %v7705 = vmax.f32 %v7700, 0.0
    %vm7706 = vcmp.lt.s32.totalorder %v144, 6
    %v7707 = vsel %vm7706, %v7705, -1e+30
    %v7708 = vsel %vm768, %v7707, -inf
    %7709 = vmax.xlane.f32.xlu0 %v7708
    %v7710 = vpop.xlane.xlu0 %7709
    %v7711 = vsub.f32 %v7707, %v7710
    %v7712 = vmul.f32 %v7711, 1.442695
    %v7713 = vpow.pop %v7712
    %v7714 = vsel %vm768, %v7713, 0.0
    %7715 = vadd.xlane.f32.xlu0 %v7714
    %v7716 = vpop.xlane.xlu0 %7715
    %v7717 = vrcp.pop %v7716
    %v7718 = vmul.f32 %v7713, %v7717
    %7719 = vst [vmem:[#allocation15] sm:$0x3] %v7718
    // Predicated region
    $region82: #{forward.1} parent=1 // pred_check
      _
    $region83: #{forward.1} parent=1 // pred_check_branch
      %7721 = sbr.rel (0) target = $region85
    $region84: #{forward.1} parent=1 // pred_region
      %s7723 = ssub.s32 32, 32
      %7724 = vsyncadd [#allocation5], %s7723
      %s7726 = sshll.u32 [#allocation15], 4
      %s7727 = int_to_ptr.vmem [resolvable:$true] %s7726
      %7729 = dma.vmem_to_hbm [thread:$0]  %s7727, 32, %s13, [#allocation5]
    $region85: #{forward.1} parent=1 // pred_fallthru
      _
    // Predicated region
    $region86: #{forward.1} parent=1 // pred_check
      _
    $region87: #{forward.1} parent=1 // pred_check_branch
      %7731 = sbr.rel (0) target = $region89
    $region88: #{forward.1} parent=1 // pred_region
      %7732 = dma.done [#allocation5], 32
    $region89: #{forward.1} parent=1 // pred_fallthru
      _
    %7733 = vsyncpa [#allocation4], 1
    %7734 = vsyncpa [#allocation7], 1
    %7735 = vsyncpa [#allocation10], 1
    %7736 = vsyncpa [#allocation13], 1
    %7737 = vsyncpa [#allocation5], 1

</llo_original>
